<compile_context>
chip_gen: v7x
topology: tpu7x:2x2x1
jax: 0.10.0
libtpu: 0.0.40
codegen_flags: <defaults>
</compile_context>

<pallas_src>
import functools

import jax
import jax.numpy as jnp
from jax.experimental import pallas as pl
from jax.experimental.pallas import tpu as pltpu


# ------------------------- conv kernel (fused im2col) ---------------------- #
def _conv3x3s2_kernel(xph_ref, w_ref, b_ref, o_ref, *, ho, wo, hp2):
    """3x3 / stride-2 / pad-1 conv + bias + ReLU for one image.

    xph_ref : (4*hp2, wp2, Cin)  bf16 phase-split padded input
              (phase p = (row%2)*2 + (col%2) occupies rows [p*hp2, (p+1)*hp2))
    w_ref   : (9, Cin, Cout)     bf16 (tap index = kh*3 + kw)
    b_ref   : (1, Cout)          f32
    o_ref   : (ho*wo, Cout)      bf16
    """
    cin = w_ref.shape[1]
    cout = w_ref.shape[2]
    acc = jnp.zeros((ho * wo, cout), jnp.float32)
    for kh in range(3):
        for kw in range(3):
            p = (kh % 2) * 2 + (kw % 2)
            r0 = p * hp2 + kh // 2
            c0 = kw // 2
            patch = xph_ref[r0:r0 + ho, c0:c0 + wo, :]          # (ho, wo, cin)
            acc += jnp.dot(patch.reshape(ho * wo, cin),
                           w_ref[kh * 3 + kw],
                           preferred_element_type=jnp.float32)
    o_ref[...] = jnp.maximum(acc + b_ref[...], 0.0).astype(o_ref.dtype)


def _phase_split(x_nhwc, pad=1):
    """Pad and split into the 4 stride-2 phases; no 9x im2col inflation.

    Returns (N, 4*hp2, wp2, C) with phase p = r*2+s holding xp[2i+r, 2j+s]."""
    n, h, w, c = x_nhwc.shape
    xp = jnp.pad(x_nhwc, ((0, 0), (pad, pad), (pad, pad), (0, 0)))
    hp, wp = h + 2 * pad, w + 2 * pad
    ph = xp.reshape(n, hp // 2, 2, wp // 2, 2, c).transpose(0, 2, 4, 1, 3, 5)
    return ph.reshape(n, 4 * (hp // 2), wp // 2, c)


def conv3x3_s2_relu(x_nhwc, w9, b):
    """NHWC 3x3/stride-2/pad-1 conv + ReLU via one Pallas kernel per image."""
    n, h, w, c = x_nhwc.shape
    assert h % 2 == 0 and w % 2 == 0
    cout = w9.shape[-1]
    ho, wo = h // 2, w // 2
    ph = _phase_split(x_nhwc).astype(jnp.bfloat16)      # (n, 4*hp2, wp2, c)
    hp2, wp2 = ph.shape[1] // 4, ph.shape[2]
    # NOTE: for the real 1088x1920 input you would add an output-row-block grid
    # axis; the phase layout keeps that window a contiguous row slice that a
    # BlockSpec index_map / pl.ds can express directly.
    out = pl.pallas_call(
        functools.partial(_conv3x3s2_kernel, ho=ho, wo=wo, hp2=hp2),
        out_shape=jax.ShapeDtypeStruct((n, ho * wo, cout), jnp.bfloat16),
        grid=(n,),
        in_specs=[
            pl.BlockSpec((None, 4 * hp2, wp2, c), lambda i: (i, 0, 0, 0)),
            pl.BlockSpec((9, c, cout), lambda i: (0, 0, 0)),
            pl.BlockSpec((1, cout), lambda i: (0, 0)),
        ],
        out_specs=pl.BlockSpec((None, ho * wo, cout), lambda i: (i, 0, 0)),
        compiler_params=pltpu.CompilerParams(
            dimension_semantics=("parallel",)),
    )(ph, w9.astype(jnp.bfloat16), b.reshape(1, cout).astype(jnp.float32))
    return out.reshape(n, ho, wo, cout)


# ---------------------- fused fc (K-tiled) + value head -------------------- #
def _fc_head_kernel(x_ref, fw_ref, fb_ref, hw_ref, hb_ref, v_ref, acc_ref):
    k = pl.program_id(0)

    @pl.when(k == 0)
    def _():
        acc_ref[...] = jnp.zeros_like(acc_ref)

    acc_ref[...] += jnp.dot(x_ref[...], fw_ref[...],
                            preferred_element_type=jnp.float32)

    @pl.when(k == pl.num_programs(0) - 1)
    def _():
        h = jnp.maximum(acc_ref[...] + fb_ref[...], 0.0)        # (M, 128) f32
        v = jnp.dot(h, hw_ref[...], preferred_element_type=jnp.float32)
        v_ref[...] = v + hb_ref[...]


def fc_head(x, fc_w, fc_b, head_w, head_b, *, tk=256):
    m, k_total = x.shape
    nf = fc_w.shape[1]                       # 128
    assert k_total % tk == 0
    grid_k = k_total // tk
    flops = 2 * m * k_total * nf + 2 * m * nf
    bytes_accessed = 2 * m * k_total + 2 * k_total * nf + 4 * (m + nf + nf + 1)
    return pl.pallas_call(
        _fc_head_kernel,
        out_shape=jax.ShapeDtypeStruct((m, 1), jnp.float32),
        grid=(grid_k,),
        in_specs=[
            pl.BlockSpec((m, tk), lambda k: (0, k)),
            pl.BlockSpec((tk, nf), lambda k: (k, 0)),
            pl.BlockSpec((1, nf), lambda k: (0, 0)),
            pl.BlockSpec((nf, 1), lambda k: (0, 0)),
            pl.BlockSpec((1, 1), lambda k: (0, 0)),
        ],
        out_specs=pl.BlockSpec((m, 1), lambda k: (0, 0)),
        scratch_shapes=[pltpu.VMEM((m, nf), jnp.float32)],
        compiler_params=pltpu.CompilerParams(
            dimension_semantics=("arbitrary",)),
        cost_estimate=pl.CostEstimate(flops=flops, transcendentals=0,
                                      bytes_accessed=bytes_accessed),
    )(x.astype(jnp.bfloat16), fc_w.astype(jnp.bfloat16),
      fc_b.reshape(1, nf).astype(jnp.float32),
      head_w.astype(jnp.float32),
      head_b.reshape(1, 1).astype(jnp.float32))


# ------------------------------- JAX glue ---------------------------------- #
def avgpool2x2(x_nchw):
    n, c, h, w = x_nchw.shape
    return x_nchw.reshape(n, c, h // 2, 2, w // 2, 2).mean(axis=(3, 5))


# ------------------------------ parameters --------------------------------- #
def init_params(key, in_channels, fc_in_features):
    ks = jax.random.split(key, 10)

    def dense(k, shape):
        fan_in = shape[-2] if len(shape) == 2 else shape[1] * shape[2] * shape[3]
        return jax.random.normal(k, shape, jnp.float32) / jnp.sqrt(float(fan_in))

    p = {}
    conv_chs = [(in_channels, 32), (32, 64), (64, 128), (128, 256)]
    for i, (ci, co) in enumerate(conv_chs, start=1):
        p[f"conv{i}_w"] = dense(ks[2 * i - 2], (co, ci, 3, 3))   # torch layout
        p[f"conv{i}_b"] = jnp.zeros((co,), jnp.float32)
    p["fc_w"] = dense(ks[8], (fc_in_features, 128))              # (K, 128)
    p["fc_b"] = jnp.zeros((128,), jnp.float32)
    p["head_w"] = dense(ks[9], (128, 1))
    p["head_b"] = jnp.zeros((1,), jnp.float32)
    return p


def prepare_params(p):
    """One-time conversion from torch layouts to kernel-friendly bf16 layouts."""
    kp = {}
    for i in range(1, 5):
        w = p[f"conv{i}_w"]                            # (Cout, Cin, 3, 3)
        cout, cin = w.shape[0], w.shape[1]
        kp[f"conv{i}_w9"] = (w.transpose(2, 3, 1, 0)   # (kh, kw, Cin, Cout)
                              .reshape(9, cin, cout)
                              .astype(jnp.bfloat16))
        kp[f"conv{i}_b"] = p[f"conv{i}_b"].reshape(1, cout).astype(jnp.float32)
    kp["fc_w"] = p["fc_w"].astype(jnp.bfloat16)        # (K, 128)
    kp["fc_b"] = p["fc_b"].astype(jnp.float32)
    kp["head_w"] = p["head_w"].astype(jnp.float32)     # (128, 1)
    kp["head_b"] = p["head_b"].astype(jnp.float32)
    return kp


# ----------------------------- forward pass -------------------------------- #
def critic_forward(kparams, state):
    x = avgpool2x2(state)                              # NCHW f32
    x = x.transpose(0, 2, 3, 1)                        # NHWC once; lanes = C
    x = conv3x3_s2_relu(x, kparams["conv1_w9"], kparams["conv1_b"])
    x = conv3x3_s2_relu(x, kparams["conv2_w9"], kparams["conv2_b"])
    x = conv3x3_s2_relu(x, kparams["conv3_w9"], kparams["conv3_b"])
    x = conv3x3_s2_relu(x, kparams["conv4_w9"], kparams["conv4_b"])
    n = x.shape[0]
    # PyTorch nn.Flatten flattens in (C, H, W) order — tiny tensor, keep exact.
    x = x.transpose(0, 3, 1, 2).reshape(n, -1)
    # SharedCNN's squeeze(0) is a no-op for batch > 1.
    value = fc_head(x, kparams["fc_w"], kparams["fc_b"],
                    kparams["head_w"], kparams["head_b"], tk=256)
    return value                                       # (N, 1) f32


if __name__ == "__main__":
    key = jax.random.PRNGKey(0)
    k_param, k_data = jax.random.split(key)

    # small, shape-consistent input: batch=2, channels=4, 64x64 image
    batch, in_channels, H, W = 2, 4, 64, 64
    state = jax.random.normal(k_data, (batch, in_channels, H, W), jnp.float32)

    # 64 -> avgpool 32 -> conv x4 (stride 2) -> 2  => flatten = 256*2*2
    fc_in_features = 256 * 2 * 2
    params = init_params(k_param, in_channels, fc_in_features)
    kparams = prepare_params(params)

    value = jax.jit(critic_forward)(kparams, state)
    value = jax.block_until_ready(value)

    assert value.shape == (batch, 1), value.shape
    assert value.dtype == jnp.float32
    assert bool(jnp.all(jnp.isfinite(value)))
    print("KERNEL_OK")
</pallas_src>

<mosaic_0001>
module attributes {stable_mosaic.version = 11 : i64} {
  func.func @_conv3x3s2_kernel(%arg0: i32, %arg1: memref<1x68x17x4xbf16, #tpu.memory_space<vmem>>, %arg2: memref<9x4x32xbf16, #tpu.memory_space<vmem>>, %arg3: memref<1x32xf32, #tpu.memory_space<vmem>>, %arg4: memref<1x256x32xbf16, #tpu.memory_space<vmem>>) attributes {dimension_semantics = [#tpu.dimension_semantics<parallel>], iteration_bounds = array<i64: 2>, scalar_prefetch = 0 : i64, scratch_operands = 0 : i64, tpu.core_type = #tpu.core_type<tc>, window_params = [{transform_indices = @transform_0, window_bounds = array<i64: 1, 68, 17, 4>}, {pipeline_mode = #tpu.pipeline_mode<synchronous>, transform_indices = @transform_1, window_bounds = array<i64: 9, 4, 32>}, {pipeline_mode = #tpu.pipeline_mode<synchronous>, transform_indices = @transform_2, window_bounds = array<i64: 1, 32>}, {transform_indices = @transform_3, window_bounds = array<i64: 1, 256, 32>}]} {
    %cst = arith.constant 0.000000e+00 : f32
    %0 = vector.broadcast %cst : f32 to vector<256x32xf32>
    %c0 = arith.constant 0 : index
    %c0_0 = arith.constant 0 : index
    %c0_1 = arith.constant 0 : index
    %c0_2 = arith.constant 0 : index
    %1 = vector.load %arg1[%c0, %c0_0, %c0_1, %c0_2] : memref<1x68x17x4xbf16, #tpu.memory_space<vmem>>, vector<1x16x16x4xbf16>
    %2 = vector.shape_cast %1 : vector<1x16x16x4xbf16> to vector<16x16x4xbf16>
    %3 = vector.shape_cast %2 : vector<16x16x4xbf16> to vector<256x4xbf16>
    %c0_3 = arith.constant 0 : index
    %c0_4 = arith.constant 0 : index
    %c0_5 = arith.constant 0 : index
    %4 = vector.load %arg2[%c0_3, %c0_4, %c0_5] : memref<9x4x32xbf16, #tpu.memory_space<vmem>>, vector<1x4x32xbf16>
    %5 = vector.shape_cast %4 : vector<1x4x32xbf16> to vector<4x32xbf16>
    %cst_6 = arith.constant dense<0.000000e+00> : vector<256x32xf32>
    %6 = tpu.matmul %3, %5, %cst_6 {dimension_numbers = #tpu.dot_dimension_numbers<[1], [0], [0], [1], [0, 0, 1, 1], [], []>} : vector<256x4xbf16>, vector<4x32xbf16>, vector<256x32xf32> -> vector<256x32xf32>
    %7 = arith.addf %0, %6 : vector<256x32xf32>
    %c0_7 = arith.constant 0 : index
    %c17 = arith.constant 17 : index
    %c0_8 = arith.constant 0 : index
    %c0_9 = arith.constant 0 : index
    %8 = vector.load %arg1[%c0_7, %c17, %c0_8, %c0_9] : memref<1x68x17x4xbf16, #tpu.memory_space<vmem>>, vector<1x16x16x4xbf16>
    %9 = vector.shape_cast %8 : vector<1x16x16x4xbf16> to vector<16x16x4xbf16>
    %10 = vector.shape_cast %9 : vector<16x16x4xbf16> to vector<256x4xbf16>
    %c1 = arith.constant 1 : index
    %c0_10 = arith.constant 0 : index
    %c0_11 = arith.constant 0 : index
    %11 = vector.load %arg2[%c1, %c0_10, %c0_11] : memref<9x4x32xbf16, #tpu.memory_space<vmem>>, vector<1x4x32xbf16>
    %12 = vector.shape_cast %11 : vector<1x4x32xbf16> to vector<4x32xbf16>
    %cst_12 = arith.constant dense<0.000000e+00> : vector<256x32xf32>
    %13 = tpu.matmul %10, %12, %cst_12 {dimension_numbers = #tpu.dot_dimension_numbers<[1], [0], [0], [1], [0, 0, 1, 1], [], []>} : vector<256x4xbf16>, vector<4x32xbf16>, vector<256x32xf32> -> vector<256x32xf32>
    %14 = arith.addf %7, %13 : vector<256x32xf32>
    %c0_13 = arith.constant 0 : index
    %c0_14 = arith.constant 0 : index
    %c1_15 = arith.constant 1 : index
    %c0_16 = arith.constant 0 : index
    %15 = vector.load %arg1[%c0_13, %c0_14, %c1_15, %c0_16] : memref<1x68x17x4xbf16, #tpu.memory_space<vmem>>, vector<1x16x16x4xbf16>
    %16 = vector.shape_cast %15 : vector<1x16x16x4xbf16> to vector<16x16x4xbf16>
    %17 = vector.shape_cast %16 : vector<16x16x4xbf16> to vector<256x4xbf16>
    %c2 = arith.constant 2 : index
    %c0_17 = arith.constant 0 : index
    %c0_18 = arith.constant 0 : index
    %18 = vector.load %arg2[%c2, %c0_17, %c0_18] : memref<9x4x32xbf16, #tpu.memory_space<vmem>>, vector<1x4x32xbf16>
    %19 = vector.shape_cast %18 : vector<1x4x32xbf16> to vector<4x32xbf16>
    %cst_19 = arith.constant dense<0.000000e+00> : vector<256x32xf32>
    %20 = tpu.matmul %17, %19, %cst_19 {dimension_numbers = #tpu.dot_dimension_numbers<[1], [0], [0], [1], [0, 0, 1, 1], [], []>} : vector<256x4xbf16>, vector<4x32xbf16>, vector<256x32xf32> -> vector<256x32xf32>
    %21 = arith.addf %14, %20 : vector<256x32xf32>
    %c0_20 = arith.constant 0 : index
    %c34 = arith.constant 34 : index
    %c0_21 = arith.constant 0 : index
    %c0_22 = arith.constant 0 : index
    %22 = vector.load %arg1[%c0_20, %c34, %c0_21, %c0_22] : memref<1x68x17x4xbf16, #tpu.memory_space<vmem>>, vector<1x16x16x4xbf16>
    %23 = vector.shape_cast %22 : vector<1x16x16x4xbf16> to vector<16x16x4xbf16>
    %24 = vector.shape_cast %23 : vector<16x16x4xbf16> to vector<256x4xbf16>
    %c3 = arith.constant 3 : index
    %c0_23 = arith.constant 0 : index
    %c0_24 = arith.constant 0 : index
    %25 = vector.load %arg2[%c3, %c0_23, %c0_24] : memref<9x4x32xbf16, #tpu.memory_space<vmem>>, vector<1x4x32xbf16>
    %26 = vector.shape_cast %25 : vector<1x4x32xbf16> to vector<4x32xbf16>
    %cst_25 = arith.constant dense<0.000000e+00> : vector<256x32xf32>
    %27 = tpu.matmul %24, %26, %cst_25 {dimension_numbers = #tpu.dot_dimension_numbers<[1], [0], [0], [1], [0, 0, 1, 1], [], []>} : vector<256x4xbf16>, vector<4x32xbf16>, vector<256x32xf32> -> vector<256x32xf32>
    %28 = arith.addf %21, %27 : vector<256x32xf32>
    %c0_26 = arith.constant 0 : index
    %c51 = arith.constant 51 : index
    %c0_27 = arith.constant 0 : index
    %c0_28 = arith.constant 0 : index
    %29 = vector.load %arg1[%c0_26, %c51, %c0_27, %c0_28] : memref<1x68x17x4xbf16, #tpu.memory_space<vmem>>, vector<1x16x16x4xbf16>
    %30 = vector.shape_cast %29 : vector<1x16x16x4xbf16> to vector<16x16x4xbf16>
    %31 = vector.shape_cast %30 : vector<16x16x4xbf16> to vector<256x4xbf16>
    %c4 = arith.constant 4 : index
    %c0_29 = arith.constant 0 : index
    %c0_30 = arith.constant 0 : index
    %32 = vector.load %arg2[%c4, %c0_29, %c0_30] : memref<9x4x32xbf16, #tpu.memory_space<vmem>>, vector<1x4x32xbf16>
    %33 = vector.shape_cast %32 : vector<1x4x32xbf16> to vector<4x32xbf16>
    %cst_31 = arith.constant dense<0.000000e+00> : vector<256x32xf32>
    %34 = tpu.matmul %31, %33, %cst_31 {dimension_numbers = #tpu.dot_dimension_numbers<[1], [0], [0], [1], [0, 0, 1, 1], [], []>} : vector<256x4xbf16>, vector<4x32xbf16>, vector<256x32xf32> -> vector<256x32xf32>
    %35 = arith.addf %28, %34 : vector<256x32xf32>
    %c0_32 = arith.constant 0 : index
    %c34_33 = arith.constant 34 : index
    %c1_34 = arith.constant 1 : index
    %c0_35 = arith.constant 0 : index
    %36 = vector.load %arg1[%c0_32, %c34_33, %c1_34, %c0_35] : memref<1x68x17x4xbf16, #tpu.memory_space<vmem>>, vector<1x16x16x4xbf16>
    %37 = vector.shape_cast %36 : vector<1x16x16x4xbf16> to vector<16x16x4xbf16>
    %38 = vector.shape_cast %37 : vector<16x16x4xbf16> to vector<256x4xbf16>
    %c5 = arith.constant 5 : index
    %c0_36 = arith.constant 0 : index
    %c0_37 = arith.constant 0 : index
    %39 = vector.load %arg2[%c5, %c0_36, %c0_37] : memref<9x4x32xbf16, #tpu.memory_space<vmem>>, vector<1x4x32xbf16>
    %40 = vector.shape_cast %39 : vector<1x4x32xbf16> to vector<4x32xbf16>
    %cst_38 = arith.constant dense<0.000000e+00> : vector<256x32xf32>
    %41 = tpu.matmul %38, %40, %cst_38 {dimension_numbers = #tpu.dot_dimension_numbers<[1], [0], [0], [1], [0, 0, 1, 1], [], []>} : vector<256x4xbf16>, vector<4x32xbf16>, vector<256x32xf32> -> vector<256x32xf32>
    %42 = arith.addf %35, %41 : vector<256x32xf32>
    %c0_39 = arith.constant 0 : index
    %c1_40 = arith.constant 1 : index
    %c0_41 = arith.constant 0 : index
    %c0_42 = arith.constant 0 : index
    %43 = vector.load %arg1[%c0_39, %c1_40, %c0_41, %c0_42] : memref<1x68x17x4xbf16, #tpu.memory_space<vmem>>, vector<1x16x16x4xbf16>
    %44 = vector.shape_cast %43 : vector<1x16x16x4xbf16> to vector<16x16x4xbf16>
    %45 = vector.shape_cast %44 : vector<16x16x4xbf16> to vector<256x4xbf16>
    %c6 = arith.constant 6 : index
    %c0_43 = arith.constant 0 : index
    %c0_44 = arith.constant 0 : index
    %46 = vector.load %arg2[%c6, %c0_43, %c0_44] : memref<9x4x32xbf16, #tpu.memory_space<vmem>>, vector<1x4x32xbf16>
    %47 = vector.shape_cast %46 : vector<1x4x32xbf16> to vector<4x32xbf16>
    %cst_45 = arith.constant dense<0.000000e+00> : vector<256x32xf32>
    %48 = tpu.matmul %45, %47, %cst_45 {dimension_numbers = #tpu.dot_dimension_numbers<[1], [0], [0], [1], [0, 0, 1, 1], [], []>} : vector<256x4xbf16>, vector<4x32xbf16>, vector<256x32xf32> -> vector<256x32xf32>
    %49 = arith.addf %42, %48 : vector<256x32xf32>
    %c0_46 = arith.constant 0 : index
    %c18 = arith.constant 18 : index
    %c0_47 = arith.constant 0 : index
    %c0_48 = arith.constant 0 : index
    %50 = vector.load %arg1[%c0_46, %c18, %c0_47, %c0_48] : memref<1x68x17x4xbf16, #tpu.memory_space<vmem>>, vector<1x16x16x4xbf16>
    %51 = vector.shape_cast %50 : vector<1x16x16x4xbf16> to vector<16x16x4xbf16>
    %52 = vector.shape_cast %51 : vector<16x16x4xbf16> to vector<256x4xbf16>
    %c7 = arith.constant 7 : index
    %c0_49 = arith.constant 0 : index
    %c0_50 = arith.constant 0 : index
    %53 = vector.load %arg2[%c7, %c0_49, %c0_50] : memref<9x4x32xbf16, #tpu.memory_space<vmem>>, vector<1x4x32xbf16>
    %54 = vector.shape_cast %53 : vector<1x4x32xbf16> to vector<4x32xbf16>
    %cst_51 = arith.constant dense<0.000000e+00> : vector<256x32xf32>
    %55 = tpu.matmul %52, %54, %cst_51 {dimension_numbers = #tpu.dot_dimension_numbers<[1], [0], [0], [1], [0, 0, 1, 1], [], []>} : vector<256x4xbf16>, vector<4x32xbf16>, vector<256x32xf32> -> vector<256x32xf32>
    %56 = arith.addf %49, %55 : vector<256x32xf32>
    %c0_52 = arith.constant 0 : index
    %c1_53 = arith.constant 1 : index
    %c1_54 = arith.constant 1 : index
    %c0_55 = arith.constant 0 : index
    %57 = vector.load %arg1[%c0_52, %c1_53, %c1_54, %c0_55] : memref<1x68x17x4xbf16, #tpu.memory_space<vmem>>, vector<1x16x16x4xbf16>
    %58 = vector.shape_cast %57 : vector<1x16x16x4xbf16> to vector<16x16x4xbf16>
    %59 = vector.shape_cast %58 : vector<16x16x4xbf16> to vector<256x4xbf16>
    %c8 = arith.constant 8 : index
    %c0_56 = arith.constant 0 : index
    %c0_57 = arith.constant 0 : index
    %60 = vector.load %arg2[%c8, %c0_56, %c0_57] : memref<9x4x32xbf16, #tpu.memory_space<vmem>>, vector<1x4x32xbf16>
    %61 = vector.shape_cast %60 : vector<1x4x32xbf16> to vector<4x32xbf16>
    %cst_58 = arith.constant dense<0.000000e+00> : vector<256x32xf32>
    %62 = tpu.matmul %59, %61, %cst_58 {dimension_numbers = #tpu.dot_dimension_numbers<[1], [0], [0], [1], [0, 0, 1, 1], [], []>} : vector<256x4xbf16>, vector<4x32xbf16>, vector<256x32xf32> -> vector<256x32xf32>
    %63 = arith.addf %56, %62 : vector<256x32xf32>
    %c0_59 = arith.constant 0 : index
    %c0_60 = arith.constant 0 : index
    %64 = vector.load %arg3[%c0_59, %c0_60] : memref<1x32xf32, #tpu.memory_space<vmem>>, vector<1x32xf32>
    %65 = vector.broadcast %64 : vector<1x32xf32> to vector<256x32xf32>
    %66 = arith.addf %63, %65 : vector<256x32xf32>
    %cst_61 = arith.constant 0.000000e+00 : f32
    %67 = vector.broadcast %cst_61 : f32 to vector<256x32xf32>
    %68 = arith.maximumf %66, %67 : vector<256x32xf32>
    %69 = arith.truncf %68 : vector<256x32xf32> to vector<256x32xbf16>
    %c0_62 = arith.constant 0 : index
    %c0_63 = arith.constant 0 : index
    %c0_64 = arith.constant 0 : index
    %70 = vector.load %arg4[%c0_62, %c0_63, %c0_64] : memref<1x256x32xbf16, #tpu.memory_space<vmem>>, vector<1x256x32xbf16>
    %71 = vector.shape_cast %70 : vector<1x256x32xbf16> to vector<256x32xbf16>
    %72 = vector.shape_cast %69 : vector<256x32xbf16> to vector<1x256x32xbf16>
    tpu.vector_store %arg4[%c0_62, %c0_63, %c0_64], %72 {strides = array<i32>} : memref<1x256x32xbf16, #tpu.memory_space<vmem>>, vector<1x256x32xbf16>,
    return
  }
  func.func @transform_0(%arg0: i32) -> (i32, i32, i32, i32) {
    %c0_i32 = arith.constant 0 : i32
    %c0_i32_0 = arith.constant 0 : i32
    %c0_i32_1 = arith.constant 0 : i32
    %c0_i32_2 = arith.constant 0 : i32
    return %arg0, %c0_i32, %c0_i32_0, %c0_i32_1 : i32, i32, i32, i32
  }
  func.func @transform_1(%arg0: i32) -> (i32, i32, i32) {
    %c0_i32 = arith.constant 0 : i32
    %c0_i32_0 = arith.constant 0 : i32
    %c0_i32_1 = arith.constant 0 : i32
    %c0_i32_2 = arith.constant 0 : i32
    return %c0_i32, %c0_i32_0, %c0_i32_1 : i32, i32, i32
  }
  func.func @transform_2(%arg0: i32) -> (i32, i32) {
    %c0_i32 = arith.constant 0 : i32
    %c0_i32_0 = arith.constant 0 : i32
    %c0_i32_1 = arith.constant 0 : i32
    return %c0_i32, %c0_i32_0 : i32, i32
  }
  func.func @transform_3(%arg0: i32) -> (i32, i32, i32) {
    %c0_i32 = arith.constant 0 : i32
    %c0_i32_0 = arith.constant 0 : i32
    %c0_i32_1 = arith.constant 0 : i32
    return %arg0, %c0_i32, %c0_i32_0 : i32, i32, i32
  }
}

module attributes {stable_mosaic.version = 11 : i64} {
  func.func @_conv3x3s2_kernel(%arg0: i32, %arg1: memref<1x36x9x32xbf16, #tpu.memory_space<vmem>>, %arg2: memref<9x32x64xbf16, #tpu.memory_space<vmem>>, %arg3: memref<1x64xf32, #tpu.memory_space<vmem>>, %arg4: memref<1x64x64xbf16, #tpu.memory_space<vmem>>) attributes {dimension_semantics = [#tpu.dimension_semantics<parallel>], iteration_bounds = array<i64: 2>, scalar_prefetch = 0 : i64, scratch_operands = 0 : i64, tpu.core_type = #tpu.core_type<tc>, window_params = [{transform_indices = @transform_0, window_bounds = array<i64: 1, 36, 9, 32>}, {pipeline_mode = #tpu.pipeline_mode<synchronous>, transform_indices = @transform_1, window_bounds = array<i64: 9, 32, 64>}, {pipeline_mode = #tpu.pipeline_mode<synchronous>, transform_indices = @transform_2, window_bounds = array<i64: 1, 64>}, {transform_indices = @transform_3, window_bounds = array<i64: 1, 64, 64>}]} {
    %cst = arith.constant 0.000000e+00 : f32
    %0 = vector.broadcast %cst : f32 to vector<64x64xf32>
    %c0 = arith.constant 0 : index
    %c0_0 = arith.constant 0 : index
    %c0_1 = arith.constant 0 : index
    %c0_2 = arith.constant 0 : index
    %1 = vector.load %arg1[%c0, %c0_0, %c0_1, %c0_2] : memref<1x36x9x32xbf16, #tpu.memory_space<vmem>>, vector<1x8x8x32xbf16>
    %2 = vector.shape_cast %1 : vector<1x8x8x32xbf16> to vector<8x8x32xbf16>
    %3 = vector.shape_cast %2 : vector<8x8x32xbf16> to vector<64x32xbf16>
    %c0_3 = arith.constant 0 : index
    %c0_4 = arith.constant 0 : index
    %c0_5 = arith.constant 0 : index
    %4 = vector.load %arg2[%c0_3, %c0_4, %c0_5] : memref<9x32x64xbf16, #tpu.memory_space<vmem>>, vector<1x32x64xbf16>
    %5 = vector.shape_cast %4 : vector<1x32x64xbf16> to vector<32x64xbf16>
    %cst_6 = arith.constant dense<0.000000e+00> : vector<64x64xf32>
    %6 = tpu.matmul %3, %5, %cst_6 {dimension_numbers = #tpu.dot_dimension_numbers<[1], [0], [0], [1], [0, 0, 1, 1], [], []>} : vector<64x32xbf16>, vector<32x64xbf16>, vector<64x64xf32> -> vector<64x64xf32>
    %7 = arith.addf %0, %6 : vector<64x64xf32>
    %c0_7 = arith.constant 0 : index
    %c9 = arith.constant 9 : index
    %c0_8 = arith.constant 0 : index
    %c0_9 = arith.constant 0 : index
    %8 = vector.load %arg1[%c0_7, %c9, %c0_8, %c0_9] : memref<1x36x9x32xbf16, #tpu.memory_space<vmem>>, vector<1x8x8x32xbf16>
    %9 = vector.shape_cast %8 : vector<1x8x8x32xbf16> to vector<8x8x32xbf16>
    %10 = vector.shape_cast %9 : vector<8x8x32xbf16> to vector<64x32xbf16>
    %c1 = arith.constant 1 : index
    %c0_10 = arith.constant 0 : index
    %c0_11 = arith.constant 0 : index
    %11 = vector.load %arg2[%c1, %c0_10, %c0_11] : memref<9x32x64xbf16, #tpu.memory_space<vmem>>, vector<1x32x64xbf16>
    %12 = vector.shape_cast %11 : vector<1x32x64xbf16> to vector<32x64xbf16>
    %cst_12 = arith.constant dense<0.000000e+00> : vector<64x64xf32>
    %13 = tpu.matmul %10, %12, %cst_12 {dimension_numbers = #tpu.dot_dimension_numbers<[1], [0], [0], [1], [0, 0, 1, 1], [], []>} : vector<64x32xbf16>, vector<32x64xbf16>, vector<64x64xf32> -> vector<64x64xf32>
    %14 = arith.addf %7, %13 : vector<64x64xf32>
    %c0_13 = arith.constant 0 : index
    %c0_14 = arith.constant 0 : index
    %c1_15 = arith.constant 1 : index
    %c0_16 = arith.constant 0 : index
    %15 = vector.load %arg1[%c0_13, %c0_14, %c1_15, %c0_16] : memref<1x36x9x32xbf16, #tpu.memory_space<vmem>>, vector<1x8x8x32xbf16>
    %16 = vector.shape_cast %15 : vector<1x8x8x32xbf16> to vector<8x8x32xbf16>
    %17 = vector.shape_cast %16 : vector<8x8x32xbf16> to vector<64x32xbf16>
    %c2 = arith.constant 2 : index
    %c0_17 = arith.constant 0 : index
    %c0_18 = arith.constant 0 : index
    %18 = vector.load %arg2[%c2, %c0_17, %c0_18] : memref<9x32x64xbf16, #tpu.memory_space<vmem>>, vector<1x32x64xbf16>
    %19 = vector.shape_cast %18 : vector<1x32x64xbf16> to vector<32x64xbf16>
    %cst_19 = arith.constant dense<0.000000e+00> : vector<64x64xf32>
    %20 = tpu.matmul %17, %19, %cst_19 {dimension_numbers = #tpu.dot_dimension_numbers<[1], [0], [0], [1], [0, 0, 1, 1], [], []>} : vector<64x32xbf16>, vector<32x64xbf16>, vector<64x64xf32> -> vector<64x64xf32>
    %21 = arith.addf %14, %20 : vector<64x64xf32>
    %c0_20 = arith.constant 0 : index
    %c18 = arith.constant 18 : index
    %c0_21 = arith.constant 0 : index
    %c0_22 = arith.constant 0 : index
    %22 = vector.load %arg1[%c0_20, %c18, %c0_21, %c0_22] : memref<1x36x9x32xbf16, #tpu.memory_space<vmem>>, vector<1x8x8x32xbf16>
    %23 = vector.shape_cast %22 : vector<1x8x8x32xbf16> to vector<8x8x32xbf16>
    %24 = vector.shape_cast %23 : vector<8x8x32xbf16> to vector<64x32xbf16>
    %c3 = arith.constant 3 : index
    %c0_23 = arith.constant 0 : index
    %c0_24 = arith.constant 0 : index
    %25 = vector.load %arg2[%c3, %c0_23, %c0_24] : memref<9x32x64xbf16, #tpu.memory_space<vmem>>, vector<1x32x64xbf16>
    %26 = vector.shape_cast %25 : vector<1x32x64xbf16> to vector<32x64xbf16>
    %cst_25 = arith.constant dense<0.000000e+00> : vector<64x64xf32>
    %27 = tpu.matmul %24, %26, %cst_25 {dimension_numbers = #tpu.dot_dimension_numbers<[1], [0], [0], [1], [0, 0, 1, 1], [], []>} : vector<64x32xbf16>, vector<32x64xbf16>, vector<64x64xf32> -> vector<64x64xf32>
    %28 = arith.addf %21, %27 : vector<64x64xf32>
    %c0_26 = arith.constant 0 : index
    %c27 = arith.constant 27 : index
    %c0_27 = arith.constant 0 : index
    %c0_28 = arith.constant 0 : index
    %29 = vector.load %arg1[%c0_26, %c27, %c0_27, %c0_28] : memref<1x36x9x32xbf16, #tpu.memory_space<vmem>>, vector<1x8x8x32xbf16>
    %30 = vector.shape_cast %29 : vector<1x8x8x32xbf16> to vector<8x8x32xbf16>
    %31 = vector.shape_cast %30 : vector<8x8x32xbf16> to vector<64x32xbf16>
    %c4 = arith.constant 4 : index
    %c0_29 = arith.constant 0 : index
    %c0_30 = arith.constant 0 : index
    %32 = vector.load %arg2[%c4, %c0_29, %c0_30] : memref<9x32x64xbf16, #tpu.memory_space<vmem>>, vector<1x32x64xbf16>
    %33 = vector.shape_cast %32 : vector<1x32x64xbf16> to vector<32x64xbf16>
    %cst_31 = arith.constant dense<0.000000e+00> : vector<64x64xf32>
    %34 = tpu.matmul %31, %33, %cst_31 {dimension_numbers = #tpu.dot_dimension_numbers<[1], [0], [0], [1], [0, 0, 1, 1], [], []>} : vector<64x32xbf16>, vector<32x64xbf16>, vector<64x64xf32> -> vector<64x64xf32>
    %35 = arith.addf %28, %34 : vector<64x64xf32>
    %c0_32 = arith.constant 0 : index
    %c18_33 = arith.constant 18 : index
    %c1_34 = arith.constant 1 : index
    %c0_35 = arith.constant 0 : index
    %36 = vector.load %arg1[%c0_32, %c18_33, %c1_34, %c0_35] : memref<1x36x9x32xbf16, #tpu.memory_space<vmem>>, vector<1x8x8x32xbf16>
    %37 = vector.shape_cast %36 : vector<1x8x8x32xbf16> to vector<8x8x32xbf16>
    %38 = vector.shape_cast %37 : vector<8x8x32xbf16> to vector<64x32xbf16>
    %c5 = arith.constant 5 : index
    %c0_36 = arith.constant 0 : index
    %c0_37 = arith.constant 0 : index
    %39 = vector.load %arg2[%c5, %c0_36, %c0_37] : memref<9x32x64xbf16, #tpu.memory_space<vmem>>, vector<1x32x64xbf16>
    %40 = vector.shape_cast %39 : vector<1x32x64xbf16> to vector<32x64xbf16>
    %cst_38 = arith.constant dense<0.000000e+00> : vector<64x64xf32>
    %41 = tpu.matmul %38, %40, %cst_38 {dimension_numbers = #tpu.dot_dimension_numbers<[1], [0], [0], [1], [0, 0, 1, 1], [], []>} : vector<64x32xbf16>, vector<32x64xbf16>, vector<64x64xf32> -> vector<64x64xf32>
    %42 = arith.addf %35, %41 : vector<64x64xf32>
    %c0_39 = arith.constant 0 : index
    %c1_40 = arith.constant 1 : index
    %c0_41 = arith.constant 0 : index
    %c0_42 = arith.constant 0 : index
    %43 = vector.load %arg1[%c0_39, %c1_40, %c0_41, %c0_42] : memref<1x36x9x32xbf16, #tpu.memory_space<vmem>>, vector<1x8x8x32xbf16>
    %44 = vector.shape_cast %43 : vector<1x8x8x32xbf16> to vector<8x8x32xbf16>
    %45 = vector.shape_cast %44 : vector<8x8x32xbf16> to vector<64x32xbf16>
    %c6 = arith.constant 6 : index
    %c0_43 = arith.constant 0 : index
    %c0_44 = arith.constant 0 : index
    %46 = vector.load %arg2[%c6, %c0_43, %c0_44] : memref<9x32x64xbf16, #tpu.memory_space<vmem>>, vector<1x32x64xbf16>
    %47 = vector.shape_cast %46 : vector<1x32x64xbf16> to vector<32x64xbf16>
    %cst_45 = arith.constant dense<0.000000e+00> : vector<64x64xf32>
    %48 = tpu.matmul %45, %47, %cst_45 {dimension_numbers = #tpu.dot_dimension_numbers<[1], [0], [0], [1], [0, 0, 1, 1], [], []>} : vector<64x32xbf16>, vector<32x64xbf16>, vector<64x64xf32> -> vector<64x64xf32>
    %49 = arith.addf %42, %48 : vector<64x64xf32>
    %c0_46 = arith.constant 0 : index
    %c10 = arith.constant 10 : index
    %c0_47 = arith.constant 0 : index
    %c0_48 = arith.constant 0 : index
    %50 = vector.load %arg1[%c0_46, %c10, %c0_47, %c0_48] : memref<1x36x9x32xbf16, #tpu.memory_space<vmem>>, vector<1x8x8x32xbf16>
    %51 = vector.shape_cast %50 : vector<1x8x8x32xbf16> to vector<8x8x32xbf16>
    %52 = vector.shape_cast %51 : vector<8x8x32xbf16> to vector<64x32xbf16>
    %c7 = arith.constant 7 : index
    %c0_49 = arith.constant 0 : index
    %c0_50 = arith.constant 0 : index
    %53 = vector.load %arg2[%c7, %c0_49, %c0_50] : memref<9x32x64xbf16, #tpu.memory_space<vmem>>, vector<1x32x64xbf16>
    %54 = vector.shape_cast %53 : vector<1x32x64xbf16> to vector<32x64xbf16>
    %cst_51 = arith.constant dense<0.000000e+00> : vector<64x64xf32>
    %55 = tpu.matmul %52, %54, %cst_51 {dimension_numbers = #tpu.dot_dimension_numbers<[1], [0], [0], [1], [0, 0, 1, 1], [], []>} : vector<64x32xbf16>, vector<32x64xbf16>, vector<64x64xf32> -> vector<64x64xf32>
    %56 = arith.addf %49, %55 : vector<64x64xf32>
    %c0_52 = arith.constant 0 : index
    %c1_53 = arith.constant 1 : index
    %c1_54 = arith.constant 1 : index
    %c0_55 = arith.constant 0 : index
    %57 = vector.load %arg1[%c0_52, %c1_53, %c1_54, %c0_55] : memref<1x36x9x32xbf16, #tpu.memory_space<vmem>>, vector<1x8x8x32xbf16>
    %58 = vector.shape_cast %57 : vector<1x8x8x32xbf16> to vector<8x8x32xbf16>
    %59 = vector.shape_cast %58 : vector<8x8x32xbf16> to vector<64x32xbf16>
    %c8 = arith.constant 8 : index
    %c0_56 = arith.constant 0 : index
    %c0_57 = arith.constant 0 : index
    %60 = vector.load %arg2[%c8, %c0_56, %c0_57] : memref<9x32x64xbf16, #tpu.memory_space<vmem>>, vector<1x32x64xbf16>
    %61 = vector.shape_cast %60 : vector<1x32x64xbf16> to vector<32x64xbf16>
    %cst_58 = arith.constant dense<0.000000e+00> : vector<64x64xf32>
    %62 = tpu.matmul %59, %61, %cst_58 {dimension_numbers = #tpu.dot_dimension_numbers<[1], [0], [0], [1], [0, 0, 1, 1], [], []>} : vector<64x32xbf16>, vector<32x64xbf16>, vector<64x64xf32> -> vector<64x64xf32>
    %63 = arith.addf %56, %62 : vector<64x64xf32>
    %c0_59 = arith.constant 0 : index
    %c0_60 = arith.constant 0 : index
    %64 = vector.load %arg3[%c0_59, %c0_60] : memref<1x64xf32, #tpu.memory_space<vmem>>, vector<1x64xf32>
    %65 = vector.broadcast %64 : vector<1x64xf32> to vector<64x64xf32>
    %66 = arith.addf %63, %65 : vector<64x64xf32>
    %cst_61 = arith.constant 0.000000e+00 : f32
    %67 = vector.broadcast %cst_61 : f32 to vector<64x64xf32>
    %68 = arith.maximumf %66, %67 : vector<64x64xf32>
    %69 = arith.truncf %68 : vector<64x64xf32> to vector<64x64xbf16>
    %c0_62 = arith.constant 0 : index
    %c0_63 = arith.constant 0 : index
    %c0_64 = arith.constant 0 : index
    %70 = vector.load %arg4[%c0_62, %c0_63, %c0_64] : memref<1x64x64xbf16, #tpu.memory_space<vmem>>, vector<1x64x64xbf16>
    %71 = vector.shape_cast %70 : vector<1x64x64xbf16> to vector<64x64xbf16>
    %72 = vector.shape_cast %69 : vector<64x64xbf16> to vector<1x64x64xbf16>
    tpu.vector_store %arg4[%c0_62, %c0_63, %c0_64], %72 {strides = array<i32>} : memref<1x64x64xbf16, #tpu.memory_space<vmem>>, vector<1x64x64xbf16>,
    return
  }
  func.func @transform_0(%arg0: i32) -> (i32, i32, i32, i32) {
    %c0_i32 = arith.constant 0 : i32
    %c0_i32_0 = arith.constant 0 : i32
    %c0_i32_1 = arith.constant 0 : i32
    %c0_i32_2 = arith.constant 0 : i32
    return %arg0, %c0_i32, %c0_i32_0, %c0_i32_1 : i32, i32, i32, i32
  }
  func.func @transform_1(%arg0: i32) -> (i32, i32, i32) {
    %c0_i32 = arith.constant 0 : i32
    %c0_i32_0 = arith.constant 0 : i32
    %c0_i32_1 = arith.constant 0 : i32
    %c0_i32_2 = arith.constant 0 : i32
    return %c0_i32, %c0_i32_0, %c0_i32_1 : i32, i32, i32
  }
  func.func @transform_2(%arg0: i32) -> (i32, i32) {
    %c0_i32 = arith.constant 0 : i32
    %c0_i32_0 = arith.constant 0 : i32
    %c0_i32_1 = arith.constant 0 : i32
    return %c0_i32, %c0_i32_0 : i32, i32
  }
  func.func @transform_3(%arg0: i32) -> (i32, i32, i32) {
    %c0_i32 = arith.constant 0 : i32
    %c0_i32_0 = arith.constant 0 : i32
    %c0_i32_1 = arith.constant 0 : i32
    return %arg0, %c0_i32, %c0_i32_0 : i32, i32, i32
  }
}

module attributes {stable_mosaic.version = 11 : i64} {
  func.func @_conv3x3s2_kernel(%arg0: i32, %arg1: memref<1x20x5x64xbf16, #tpu.memory_space<vmem>>, %arg2: memref<9x64x128xbf16, #tpu.memory_space<vmem>>, %arg3: memref<1x128xf32, #tpu.memory_space<vmem>>, %arg4: memref<1x16x128xbf16, #tpu.memory_space<vmem>>) attributes {dimension_semantics = [#tpu.dimension_semantics<parallel>], iteration_bounds = array<i64: 2>, scalar_prefetch = 0 : i64, scratch_operands = 0 : i64, tpu.core_type = #tpu.core_type<tc>, window_params = [{transform_indices = @transform_0, window_bounds = array<i64: 1, 20, 5, 64>}, {pipeline_mode = #tpu.pipeline_mode<synchronous>, transform_indices = @transform_1, window_bounds = array<i64: 9, 64, 128>}, {pipeline_mode = #tpu.pipeline_mode<synchronous>, transform_indices = @transform_2, window_bounds = array<i64: 1, 128>}, {transform_indices = @transform_3, window_bounds = array<i64: 1, 16, 128>}]} {
    %cst = arith.constant 0.000000e+00 : f32
    %0 = vector.broadcast %cst : f32 to vector<16x128xf32>
    %c0 = arith.constant 0 : index
    %c0_0 = arith.constant 0 : index
    %c0_1 = arith.constant 0 : index
    %c0_2 = arith.constant 0 : index
    %1 = vector.load %arg1[%c0, %c0_0, %c0_1, %c0_2] : memref<1x20x5x64xbf16, #tpu.memory_space<vmem>>, vector<1x4x4x64xbf16>
    %2 = vector.shape_cast %1 : vector<1x4x4x64xbf16> to vector<4x4x64xbf16>
    %3 = vector.shape_cast %2 : vector<4x4x64xbf16> to vector<16x64xbf16>
    %c0_3 = arith.constant 0 : index
    %c0_4 = arith.constant 0 : index
    %c0_5 = arith.constant 0 : index
    %4 = vector.load %arg2[%c0_3, %c0_4, %c0_5] : memref<9x64x128xbf16, #tpu.memory_space<vmem>>, vector<1x64x128xbf16>
    %5 = vector.shape_cast %4 : vector<1x64x128xbf16> to vector<64x128xbf16>
    %cst_6 = arith.constant dense<0.000000e+00> : vector<16x128xf32>
    %6 = tpu.matmul %3, %5, %cst_6 {dimension_numbers = #tpu.dot_dimension_numbers<[1], [0], [0], [1], [0, 0, 1, 1], [], []>} : vector<16x64xbf16>, vector<64x128xbf16>, vector<16x128xf32> -> vector<16x128xf32>
    %7 = arith.addf %0, %6 : vector<16x128xf32>
    %c0_7 = arith.constant 0 : index
    %c5 = arith.constant 5 : index
    %c0_8 = arith.constant 0 : index
    %c0_9 = arith.constant 0 : index
    %8 = vector.load %arg1[%c0_7, %c5, %c0_8, %c0_9] : memref<1x20x5x64xbf16, #tpu.memory_space<vmem>>, vector<1x4x4x64xbf16>
    %9 = vector.shape_cast %8 : vector<1x4x4x64xbf16> to vector<4x4x64xbf16>
    %10 = vector.shape_cast %9 : vector<4x4x64xbf16> to vector<16x64xbf16>
    %c1 = arith.constant 1 : index
    %c0_10 = arith.constant 0 : index
    %c0_11 = arith.constant 0 : index
    %11 = vector.load %arg2[%c1, %c0_10, %c0_11] : memref<9x64x128xbf16, #tpu.memory_space<vmem>>, vector<1x64x128xbf16>
    %12 = vector.shape_cast %11 : vector<1x64x128xbf16> to vector<64x128xbf16>
    %cst_12 = arith.constant dense<0.000000e+00> : vector<16x128xf32>
    %13 = tpu.matmul %10, %12, %cst_12 {dimension_numbers = #tpu.dot_dimension_numbers<[1], [0], [0], [1], [0, 0, 1, 1], [], []>} : vector<16x64xbf16>, vector<64x128xbf16>, vector<16x128xf32> -> vector<16x128xf32>
    %14 = arith.addf %7, %13 : vector<16x128xf32>
    %c0_13 = arith.constant 0 : index
    %c0_14 = arith.constant 0 : index
    %c1_15 = arith.constant 1 : index
    %c0_16 = arith.constant 0 : index
    %15 = vector.load %arg1[%c0_13, %c0_14, %c1_15, %c0_16] : memref<1x20x5x64xbf16, #tpu.memory_space<vmem>>, vector<1x4x4x64xbf16>
    %16 = vector.shape_cast %15 : vector<1x4x4x64xbf16> to vector<4x4x64xbf16>
    %17 = vector.shape_cast %16 : vector<4x4x64xbf16> to vector<16x64xbf16>
    %c2 = arith.constant 2 : index
    %c0_17 = arith.constant 0 : index
    %c0_18 = arith.constant 0 : index
    %18 = vector.load %arg2[%c2, %c0_17, %c0_18] : memref<9x64x128xbf16, #tpu.memory_space<vmem>>, vector<1x64x128xbf16>
    %19 = vector.shape_cast %18 : vector<1x64x128xbf16> to vector<64x128xbf16>
    %cst_19 = arith.constant dense<0.000000e+00> : vector<16x128xf32>
    %20 = tpu.matmul %17, %19, %cst_19 {dimension_numbers = #tpu.dot_dimension_numbers<[1], [0], [0], [1], [0, 0, 1, 1], [], []>} : vector<16x64xbf16>, vector<64x128xbf16>, vector<16x128xf32> -> vector<16x128xf32>
    %21 = arith.addf %14, %20 : vector<16x128xf32>
    %c0_20 = arith.constant 0 : index
    %c10 = arith.constant 10 : index
    %c0_21 = arith.constant 0 : index
    %c0_22 = arith.constant 0 : index
    %22 = vector.load %arg1[%c0_20, %c10, %c0_21, %c0_22] : memref<1x20x5x64xbf16, #tpu.memory_space<vmem>>, vector<1x4x4x64xbf16>
    %23 = vector.shape_cast %22 : vector<1x4x4x64xbf16> to vector<4x4x64xbf16>
    %24 = vector.shape_cast %23 : vector<4x4x64xbf16> to vector<16x64xbf16>
    %c3 = arith.constant 3 : index
    %c0_23 = arith.constant 0 : index
    %c0_24 = arith.constant 0 : index
    %25 = vector.load %arg2[%c3, %c0_23, %c0_24] : memref<9x64x128xbf16, #tpu.memory_space<vmem>>, vector<1x64x128xbf16>
    %26 = vector.shape_cast %25 : vector<1x64x128xbf16> to vector<64x128xbf16>
    %cst_25 = arith.constant dense<0.000000e+00> : vector<16x128xf32>
    %27 = tpu.matmul %24, %26, %cst_25 {dimension_numbers = #tpu.dot_dimension_numbers<[1], [0], [0], [1], [0, 0, 1, 1], [], []>} : vector<16x64xbf16>, vector<64x128xbf16>, vector<16x128xf32> -> vector<16x128xf32>
    %28 = arith.addf %21, %27 : vector<16x128xf32>
    %c0_26 = arith.constant 0 : index
    %c15 = arith.constant 15 : index
    %c0_27 = arith.constant 0 : index
    %c0_28 = arith.constant 0 : index
    %29 = vector.load %arg1[%c0_26, %c15, %c0_27, %c0_28] : memref<1x20x5x64xbf16, #tpu.memory_space<vmem>>, vector<1x4x4x64xbf16>
    %30 = vector.shape_cast %29 : vector<1x4x4x64xbf16> to vector<4x4x64xbf16>
    %31 = vector.shape_cast %30 : vector<4x4x64xbf16> to vector<16x64xbf16>
    %c4 = arith.constant 4 : index
    %c0_29 = arith.constant 0 : index
    %c0_30 = arith.constant 0 : index
    %32 = vector.load %arg2[%c4, %c0_29, %c0_30] : memref<9x64x128xbf16, #tpu.memory_space<vmem>>, vector<1x64x128xbf16>
    %33 = vector.shape_cast %32 : vector<1x64x128xbf16> to vector<64x128xbf16>
    %cst_31 = arith.constant dense<0.000000e+00> : vector<16x128xf32>
    %34 = tpu.matmul %31, %33, %cst_31 {dimension_numbers = #tpu.dot_dimension_numbers<[1], [0], [0], [1], [0, 0, 1, 1], [], []>} : vector<16x64xbf16>, vector<64x128xbf16>, vector<16x128xf32> -> vector<16x128xf32>
    %35 = arith.addf %28, %34 : vector<16x128xf32>
    %c0_32 = arith.constant 0 : index
    %c10_33 = arith.constant 10 : index
    %c1_34 = arith.constant 1 : index
    %c0_35 = arith.constant 0 : index
    %36 = vector.load %arg1[%c0_32, %c10_33, %c1_34, %c0_35] : memref<1x20x5x64xbf16, #tpu.memory_space<vmem>>, vector<1x4x4x64xbf16>
    %37 = vector.shape_cast %36 : vector<1x4x4x64xbf16> to vector<4x4x64xbf16>
    %38 = vector.shape_cast %37 : vector<4x4x64xbf16> to vector<16x64xbf16>
    %c5_36 = arith.constant 5 : index
    %c0_37 = arith.constant 0 : index
    %c0_38 = arith.constant 0 : index
    %39 = vector.load %arg2[%c5_36, %c0_37, %c0_38] : memref<9x64x128xbf16, #tpu.memory_space<vmem>>, vector<1x64x128xbf16>
    %40 = vector.shape_cast %39 : vector<1x64x128xbf16> to vector<64x128xbf16>
    %cst_39 = arith.constant dense<0.000000e+00> : vector<16x128xf32>
    %41 = tpu.matmul %38, %40, %cst_39 {dimension_numbers = #tpu.dot_dimension_numbers<[1], [0], [0], [1], [0, 0, 1, 1], [], []>} : vector<16x64xbf16>, vector<64x128xbf16>, vector<16x128xf32> -> vector<16x128xf32>
    %42 = arith.addf %35, %41 : vector<16x128xf32>
    %c0_40 = arith.constant 0 : index
    %c1_41 = arith.constant 1 : index
    %c0_42 = arith.constant 0 : index
    %c0_43 = arith.constant 0 : index
    %43 = vector.load %arg1[%c0_40, %c1_41, %c0_42, %c0_43] : memref<1x20x5x64xbf16, #tpu.memory_space<vmem>>, vector<1x4x4x64xbf16>
    %44 = vector.shape_cast %43 : vector<1x4x4x64xbf16> to vector<4x4x64xbf16>
    %45 = vector.shape_cast %44 : vector<4x4x64xbf16> to vector<16x64xbf16>
    %c6 = arith.constant 6 : index
    %c0_44 = arith.constant 0 : index
    %c0_45 = arith.constant 0 : index
    %46 = vector.load %arg2[%c6, %c0_44, %c0_45] : memref<9x64x128xbf16, #tpu.memory_space<vmem>>, vector<1x64x128xbf16>
    %47 = vector.shape_cast %46 : vector<1x64x128xbf16> to vector<64x128xbf16>
    %cst_46 = arith.constant dense<0.000000e+00> : vector<16x128xf32>
    %48 = tpu.matmul %45, %47, %cst_46 {dimension_numbers = #tpu.dot_dimension_numbers<[1], [0], [0], [1], [0, 0, 1, 1], [], []>} : vector<16x64xbf16>, vector<64x128xbf16>, vector<16x128xf32> -> vector<16x128xf32>
    %49 = arith.addf %42, %48 : vector<16x128xf32>
    %c0_47 = arith.constant 0 : index
    %c6_48 = arith.constant 6 : index
    %c0_49 = arith.constant 0 : index
    %c0_50 = arith.constant 0 : index
    %50 = vector.load %arg1[%c0_47, %c6_48, %c0_49, %c0_50] : memref<1x20x5x64xbf16, #tpu.memory_space<vmem>>, vector<1x4x4x64xbf16>
    %51 = vector.shape_cast %50 : vector<1x4x4x64xbf16> to vector<4x4x64xbf16>
    %52 = vector.shape_cast %51 : vector<4x4x64xbf16> to vector<16x64xbf16>
    %c7 = arith.constant 7 : index
    %c0_51 = arith.constant 0 : index
    %c0_52 = arith.constant 0 : index
    %53 = vector.load %arg2[%c7, %c0_51, %c0_52] : memref<9x64x128xbf16, #tpu.memory_space<vmem>>, vector<1x64x128xbf16>
    %54 = vector.shape_cast %53 : vector<1x64x128xbf16> to vector<64x128xbf16>
    %cst_53 = arith.constant dense<0.000000e+00> : vector<16x128xf32>
    %55 = tpu.matmul %52, %54, %cst_53 {dimension_numbers = #tpu.dot_dimension_numbers<[1], [0], [0], [1], [0, 0, 1, 1], [], []>} : vector<16x64xbf16>, vector<64x128xbf16>, vector<16x128xf32> -> vector<16x128xf32>
    %56 = arith.addf %49, %55 : vector<16x128xf32>
    %c0_54 = arith.constant 0 : index
    %c1_55 = arith.constant 1 : index
    %c1_56 = arith.constant 1 : index
    %c0_57 = arith.constant 0 : index
    %57 = vector.load %arg1[%c0_54, %c1_55, %c1_56, %c0_57] : memref<1x20x5x64xbf16, #tpu.memory_space<vmem>>, vector<1x4x4x64xbf16>
    %58 = vector.shape_cast %57 : vector<1x4x4x64xbf16> to vector<4x4x64xbf16>
    %59 = vector.shape_cast %58 : vector<4x4x64xbf16> to vector<16x64xbf16>
    %c8 = arith.constant 8 : index
    %c0_58 = arith.constant 0 : index
    %c0_59 = arith.constant 0 : index
    %60 = vector.load %arg2[%c8, %c0_58, %c0_59] : memref<9x64x128xbf16, #tpu.memory_space<vmem>>, vector<1x64x128xbf16>
    %61 = vector.shape_cast %60 : vector<1x64x128xbf16> to vector<64x128xbf16>
    %cst_60 = arith.constant dense<0.000000e+00> : vector<16x128xf32>
    %62 = tpu.matmul %59, %61, %cst_60 {dimension_numbers = #tpu.dot_dimension_numbers<[1], [0], [0], [1], [0, 0, 1, 1], [], []>} : vector<16x64xbf16>, vector<64x128xbf16>, vector<16x128xf32> -> vector<16x128xf32>
    %63 = arith.addf %56, %62 : vector<16x128xf32>
    %c0_61 = arith.constant 0 : index
    %c0_62 = arith.constant 0 : index
    %64 = vector.load %arg3[%c0_61, %c0_62] : memref<1x128xf32, #tpu.memory_space<vmem>>, vector<1x128xf32>
    %65 = vector.broadcast %64 : vector<1x128xf32> to vector<16x128xf32>
    %66 = arith.addf %63, %65 : vector<16x128xf32>
    %cst_63 = arith.constant 0.000000e+00 : f32
    %67 = vector.broadcast %cst_63 : f32 to vector<16x128xf32>
    %68 = arith.maximumf %66, %67 : vector<16x128xf32>
    %69 = arith.truncf %68 : vector<16x128xf32> to vector<16x128xbf16>
    %c0_64 = arith.constant 0 : index
    %c0_65 = arith.constant 0 : index
    %c0_66 = arith.constant 0 : index
    %70 = vector.load %arg4[%c0_64, %c0_65, %c0_66] : memref<1x16x128xbf16, #tpu.memory_space<vmem>>, vector<1x16x128xbf16>
    %71 = vector.shape_cast %70 : vector<1x16x128xbf16> to vector<16x128xbf16>
    %72 = vector.shape_cast %69 : vector<16x128xbf16> to vector<1x16x128xbf16>
    tpu.vector_store %arg4[%c0_64, %c0_65, %c0_66], %72 {strides = array<i32>} : memref<1x16x128xbf16, #tpu.memory_space<vmem>>, vector<1x16x128xbf16>,
    return
  }
  func.func @transform_0(%arg0: i32) -> (i32, i32, i32, i32) {
    %c0_i32 = arith.constant 0 : i32
    %c0_i32_0 = arith.constant 0 : i32
    %c0_i32_1 = arith.constant 0 : i32
    %c0_i32_2 = arith.constant 0 : i32
    return %arg0, %c0_i32, %c0_i32_0, %c0_i32_1 : i32, i32, i32, i32
  }
  func.func @transform_1(%arg0: i32) -> (i32, i32, i32) {
    %c0_i32 = arith.constant 0 : i32
    %c0_i32_0 = arith.constant 0 : i32
    %c0_i32_1 = arith.constant 0 : i32
    %c0_i32_2 = arith.constant 0 : i32
    return %c0_i32, %c0_i32_0, %c0_i32_1 : i32, i32, i32
  }
  func.func @transform_2(%arg0: i32) -> (i32, i32) {
    %c0_i32 = arith.constant 0 : i32
    %c0_i32_0 = arith.constant 0 : i32
    %c0_i32_1 = arith.constant 0 : i32
    return %c0_i32, %c0_i32_0 : i32, i32
  }
  func.func @transform_3(%arg0: i32) -> (i32, i32, i32) {
    %c0_i32 = arith.constant 0 : i32
    %c0_i32_0 = arith.constant 0 : i32
    %c0_i32_1 = arith.constant 0 : i32
    return %arg0, %c0_i32, %c0_i32_0 : i32, i32, i32
  }
}

module attributes {stable_mosaic.version = 11 : i64} {
  func.func @_conv3x3s2_kernel(%arg0: i32, %arg1: memref<1x12x3x128xbf16, #tpu.memory_space<vmem>>, %arg2: memref<9x128x256xbf16, #tpu.memory_space<vmem>>, %arg3: memref<1x256xf32, #tpu.memory_space<vmem>>, %arg4: memref<1x4x256xbf16, #tpu.memory_space<vmem>>) attributes {dimension_semantics = [#tpu.dimension_semantics<parallel>], iteration_bounds = array<i64: 2>, scalar_prefetch = 0 : i64, scratch_operands = 0 : i64, tpu.core_type = #tpu.core_type<tc>, window_params = [{transform_indices = @transform_0, window_bounds = array<i64: 1, 12, 3, 128>}, {pipeline_mode = #tpu.pipeline_mode<synchronous>, transform_indices = @transform_1, window_bounds = array<i64: 9, 128, 256>}, {pipeline_mode = #tpu.pipeline_mode<synchronous>, transform_indices = @transform_2, window_bounds = array<i64: 1, 256>}, {transform_indices = @transform_3, window_bounds = array<i64: 1, 4, 256>}]} {
    %cst = arith.constant 0.000000e+00 : f32
    %0 = vector.broadcast %cst : f32 to vector<4x256xf32>
    %c0 = arith.constant 0 : index
    %c0_0 = arith.constant 0 : index
    %c0_1 = arith.constant 0 : index
    %c0_2 = arith.constant 0 : index
    %1 = vector.load %arg1[%c0, %c0_0, %c0_1, %c0_2] : memref<1x12x3x128xbf16, #tpu.memory_space<vmem>>, vector<1x2x2x128xbf16>
    %2 = vector.shape_cast %1 : vector<1x2x2x128xbf16> to vector<2x2x128xbf16>
    %3 = vector.shape_cast %2 : vector<2x2x128xbf16> to vector<4x128xbf16>
    %c0_3 = arith.constant 0 : index
    %c0_4 = arith.constant 0 : index
    %c0_5 = arith.constant 0 : index
    %4 = vector.load %arg2[%c0_3, %c0_4, %c0_5] : memref<9x128x256xbf16, #tpu.memory_space<vmem>>, vector<1x128x256xbf16>
    %5 = vector.shape_cast %4 : vector<1x128x256xbf16> to vector<128x256xbf16>
    %cst_6 = arith.constant dense<0.000000e+00> : vector<4x256xf32>
    %6 = tpu.matmul %3, %5, %cst_6 {dimension_numbers = #tpu.dot_dimension_numbers<[1], [0], [0], [1], [0, 0, 1, 1], [], []>} : vector<4x128xbf16>, vector<128x256xbf16>, vector<4x256xf32> -> vector<4x256xf32>
    %7 = arith.addf %0, %6 : vector<4x256xf32>
    %c0_7 = arith.constant 0 : index
    %c3 = arith.constant 3 : index
    %c0_8 = arith.constant 0 : index
    %c0_9 = arith.constant 0 : index
    %8 = vector.load %arg1[%c0_7, %c3, %c0_8, %c0_9] : memref<1x12x3x128xbf16, #tpu.memory_space<vmem>>, vector<1x2x2x128xbf16>
    %9 = vector.shape_cast %8 : vector<1x2x2x128xbf16> to vector<2x2x128xbf16>
    %10 = vector.shape_cast %9 : vector<2x2x128xbf16> to vector<4x128xbf16>
    %c1 = arith.constant 1 : index
    %c0_10 = arith.constant 0 : index
    %c0_11 = arith.constant 0 : index
    %11 = vector.load %arg2[%c1, %c0_10, %c0_11] : memref<9x128x256xbf16, #tpu.memory_space<vmem>>, vector<1x128x256xbf16>
    %12 = vector.shape_cast %11 : vector<1x128x256xbf16> to vector<128x256xbf16>
    %cst_12 = arith.constant dense<0.000000e+00> : vector<4x256xf32>
    %13 = tpu.matmul %10, %12, %cst_12 {dimension_numbers = #tpu.dot_dimension_numbers<[1], [0], [0], [1], [0, 0, 1, 1], [], []>} : vector<4x128xbf16>, vector<128x256xbf16>, vector<4x256xf32> -> vector<4x256xf32>
    %14 = arith.addf %7, %13 : vector<4x256xf32>
    %c0_13 = arith.constant 0 : index
    %c0_14 = arith.constant 0 : index
    %c1_15 = arith.constant 1 : index
    %c0_16 = arith.constant 0 : index
    %15 = vector.load %arg1[%c0_13, %c0_14, %c1_15, %c0_16] : memref<1x12x3x128xbf16, #tpu.memory_space<vmem>>, vector<1x2x2x128xbf16>
    %16 = vector.shape_cast %15 : vector<1x2x2x128xbf16> to vector<2x2x128xbf16>
    %17 = vector.shape_cast %16 : vector<2x2x128xbf16> to vector<4x128xbf16>
    %c2 = arith.constant 2 : index
    %c0_17 = arith.constant 0 : index
    %c0_18 = arith.constant 0 : index
    %18 = vector.load %arg2[%c2, %c0_17, %c0_18] : memref<9x128x256xbf16, #tpu.memory_space<vmem>>, vector<1x128x256xbf16>
    %19 = vector.shape_cast %18 : vector<1x128x256xbf16> to vector<128x256xbf16>
    %cst_19 = arith.constant dense<0.000000e+00> : vector<4x256xf32>
    %20 = tpu.matmul %17, %19, %cst_19 {dimension_numbers = #tpu.dot_dimension_numbers<[1], [0], [0], [1], [0, 0, 1, 1], [], []>} : vector<4x128xbf16>, vector<128x256xbf16>, vector<4x256xf32> -> vector<4x256xf32>
    %21 = arith.addf %14, %20 : vector<4x256xf32>
    %c0_20 = arith.constant 0 : index
    %c6 = arith.constant 6 : index
    %c0_21 = arith.constant 0 : index
    %c0_22 = arith.constant 0 : index
    %22 = vector.load %arg1[%c0_20, %c6, %c0_21, %c0_22] : memref<1x12x3x128xbf16, #tpu.memory_space<vmem>>, vector<1x2x2x128xbf16>
    %23 = vector.shape_cast %22 : vector<1x2x2x128xbf16> to vector<2x2x128xbf16>
    %24 = vector.shape_cast %23 : vector<2x2x128xbf16> to vector<4x128xbf16>
    %c3_23 = arith.constant 3 : index
    %c0_24 = arith.constant 0 : index
    %c0_25 = arith.constant 0 : index
    %25 = vector.load %arg2[%c3_23, %c0_24, %c0_25] : memref<9x128x256xbf16, #tpu.memory_space<vmem>>, vector<1x128x256xbf16>
    %26 = vector.shape_cast %25 : vector<1x128x256xbf16> to vector<128x256xbf16>
    %cst_26 = arith.constant dense<0.000000e+00> : vector<4x256xf32>
    %27 = tpu.matmul %24, %26, %cst_26 {dimension_numbers = #tpu.dot_dimension_numbers<[1], [0], [0], [1], [0, 0, 1, 1], [], []>} : vector<4x128xbf16>, vector<128x256xbf16>, vector<4x256xf32> -> vector<4x256xf32>
    %28 = arith.addf %21, %27 : vector<4x256xf32>
    %c0_27 = arith.constant 0 : index
    %c9 = arith.constant 9 : index
    %c0_28 = arith.constant 0 : index
    %c0_29 = arith.constant 0 : index
    %29 = vector.load %arg1[%c0_27, %c9, %c0_28, %c0_29] : memref<1x12x3x128xbf16, #tpu.memory_space<vmem>>, vector<1x2x2x128xbf16>
    %30 = vector.shape_cast %29 : vector<1x2x2x128xbf16> to vector<2x2x128xbf16>
    %31 = vector.shape_cast %30 : vector<2x2x128xbf16> to vector<4x128xbf16>
    %c4 = arith.constant 4 : index
    %c0_30 = arith.constant 0 : index
    %c0_31 = arith.constant 0 : index
    %32 = vector.load %arg2[%c4, %c0_30, %c0_31] : memref<9x128x256xbf16, #tpu.memory_space<vmem>>, vector<1x128x256xbf16>
    %33 = vector.shape_cast %32 : vector<1x128x256xbf16> to vector<128x256xbf16>
    %cst_32 = arith.constant dense<0.000000e+00> : vector<4x256xf32>
    %34 = tpu.matmul %31, %33, %cst_32 {dimension_numbers = #tpu.dot_dimension_numbers<[1], [0], [0], [1], [0, 0, 1, 1], [], []>} : vector<4x128xbf16>, vector<128x256xbf16>, vector<4x256xf32> -> vector<4x256xf32>
    %35 = arith.addf %28, %34 : vector<4x256xf32>
    %c0_33 = arith.constant 0 : index
    %c6_34 = arith.constant 6 : index
    %c1_35 = arith.constant 1 : index
    %c0_36 = arith.constant 0 : index
    %36 = vector.load %arg1[%c0_33, %c6_34, %c1_35, %c0_36] : memref<1x12x3x128xbf16, #tpu.memory_space<vmem>>, vector<1x2x2x128xbf16>
    %37 = vector.shape_cast %36 : vector<1x2x2x128xbf16> to vector<2x2x128xbf16>
    %38 = vector.shape_cast %37 : vector<2x2x128xbf16> to vector<4x128xbf16>
    %c5 = arith.constant 5 : index
    %c0_37 = arith.constant 0 : index
    %c0_38 = arith.constant 0 : index
    %39 = vector.load %arg2[%c5, %c0_37, %c0_38] : memref<9x128x256xbf16, #tpu.memory_space<vmem>>, vector<1x128x256xbf16>
    %40 = vector.shape_cast %39 : vector<1x128x256xbf16> to vector<128x256xbf16>
    %cst_39 = arith.constant dense<0.000000e+00> : vector<4x256xf32>
    %41 = tpu.matmul %38, %40, %cst_39 {dimension_numbers = #tpu.dot_dimension_numbers<[1], [0], [0], [1], [0, 0, 1, 1], [], []>} : vector<4x128xbf16>, vector<128x256xbf16>, vector<4x256xf32> -> vector<4x256xf32>
    %42 = arith.addf %35, %41 : vector<4x256xf32>
    %c0_40 = arith.constant 0 : index
    %c1_41 = arith.constant 1 : index
    %c0_42 = arith.constant 0 : index
    %c0_43 = arith.constant 0 : index
    %43 = vector.load %arg1[%c0_40, %c1_41, %c0_42, %c0_43] : memref<1x12x3x128xbf16, #tpu.memory_space<vmem>>, vector<1x2x2x128xbf16>
    %44 = vector.shape_cast %43 : vector<1x2x2x128xbf16> to vector<2x2x128xbf16>
    %45 = vector.shape_cast %44 : vector<2x2x128xbf16> to vector<4x128xbf16>
    %c6_44 = arith.constant 6 : index
    %c0_45 = arith.constant 0 : index
    %c0_46 = arith.constant 0 : index
    %46 = vector.load %arg2[%c6_44, %c0_45, %c0_46] : memref<9x128x256xbf16, #tpu.memory_space<vmem>>, vector<1x128x256xbf16>
    %47 = vector.shape_cast %46 : vector<1x128x256xbf16> to vector<128x256xbf16>
    %cst_47 = arith.constant dense<0.000000e+00> : vector<4x256xf32>
    %48 = tpu.matmul %45, %47, %cst_47 {dimension_numbers = #tpu.dot_dimension_numbers<[1], [0], [0], [1], [0, 0, 1, 1], [], []>} : vector<4x128xbf16>, vector<128x256xbf16>, vector<4x256xf32> -> vector<4x256xf32>
    %49 = arith.addf %42, %48 : vector<4x256xf32>
    %c0_48 = arith.constant 0 : index
    %c4_49 = arith.constant 4 : index
    %c0_50 = arith.constant 0 : index
    %c0_51 = arith.constant 0 : index
    %50 = vector.load %arg1[%c0_48, %c4_49, %c0_50, %c0_51] : memref<1x12x3x128xbf16, #tpu.memory_space<vmem>>, vector<1x2x2x128xbf16>
    %51 = vector.shape_cast %50 : vector<1x2x2x128xbf16> to vector<2x2x128xbf16>
    %52 = vector.shape_cast %51 : vector<2x2x128xbf16> to vector<4x128xbf16>
    %c7 = arith.constant 7 : index
    %c0_52 = arith.constant 0 : index
    %c0_53 = arith.constant 0 : index
    %53 = vector.load %arg2[%c7, %c0_52, %c0_53] : memref<9x128x256xbf16, #tpu.memory_space<vmem>>, vector<1x128x256xbf16>
    %54 = vector.shape_cast %53 : vector<1x128x256xbf16> to vector<128x256xbf16>
    %cst_54 = arith.constant dense<0.000000e+00> : vector<4x256xf32>
    %55 = tpu.matmul %52, %54, %cst_54 {dimension_numbers = #tpu.dot_dimension_numbers<[1], [0], [0], [1], [0, 0, 1, 1], [], []>} : vector<4x128xbf16>, vector<128x256xbf16>, vector<4x256xf32> -> vector<4x256xf32>
    %56 = arith.addf %49, %55 : vector<4x256xf32>
    %c0_55 = arith.constant 0 : index
    %c1_56 = arith.constant 1 : index
    %c1_57 = arith.constant 1 : index
    %c0_58 = arith.constant 0 : index
    %57 = vector.load %arg1[%c0_55, %c1_56, %c1_57, %c0_58] : memref<1x12x3x128xbf16, #tpu.memory_space<vmem>>, vector<1x2x2x128xbf16>
    %58 = vector.shape_cast %57 : vector<1x2x2x128xbf16> to vector<2x2x128xbf16>
    %59 = vector.shape_cast %58 : vector<2x2x128xbf16> to vector<4x128xbf16>
    %c8 = arith.constant 8 : index
    %c0_59 = arith.constant 0 : index
    %c0_60 = arith.constant 0 : index
    %60 = vector.load %arg2[%c8, %c0_59, %c0_60] : memref<9x128x256xbf16, #tpu.memory_space<vmem>>, vector<1x128x256xbf16>
    %61 = vector.shape_cast %60 : vector<1x128x256xbf16> to vector<128x256xbf16>
    %cst_61 = arith.constant dense<0.000000e+00> : vector<4x256xf32>
    %62 = tpu.matmul %59, %61, %cst_61 {dimension_numbers = #tpu.dot_dimension_numbers<[1], [0], [0], [1], [0, 0, 1, 1], [], []>} : vector<4x128xbf16>, vector<128x256xbf16>, vector<4x256xf32> -> vector<4x256xf32>
    %63 = arith.addf %56, %62 : vector<4x256xf32>
    %c0_62 = arith.constant 0 : index
    %c0_63 = arith.constant 0 : index
    %64 = vector.load %arg3[%c0_62, %c0_63] : memref<1x256xf32, #tpu.memory_space<vmem>>, vector<1x256xf32>
    %65 = vector.broadcast %64 : vector<1x256xf32> to vector<4x256xf32>
    %66 = arith.addf %63, %65 : vector<4x256xf32>
    %cst_64 = arith.constant 0.000000e+00 : f32
    %67 = vector.broadcast %cst_64 : f32 to vector<4x256xf32>
    %68 = arith.maximumf %66, %67 : vector<4x256xf32>
    %69 = arith.truncf %68 : vector<4x256xf32> to vector<4x256xbf16>
    %c0_65 = arith.constant 0 : index
    %c0_66 = arith.constant 0 : index
    %c0_67 = arith.constant 0 : index
    %70 = vector.load %arg4[%c0_65, %c0_66, %c0_67] : memref<1x4x256xbf16, #tpu.memory_space<vmem>>, vector<1x4x256xbf16>
    %71 = vector.shape_cast %70 : vector<1x4x256xbf16> to vector<4x256xbf16>
    %72 = vector.shape_cast %69 : vector<4x256xbf16> to vector<1x4x256xbf16>
    tpu.vector_store %arg4[%c0_65, %c0_66, %c0_67], %72 {strides = array<i32>} : memref<1x4x256xbf16, #tpu.memory_space<vmem>>, vector<1x4x256xbf16>,
    return
  }
  func.func @transform_0(%arg0: i32) -> (i32, i32, i32, i32) {
    %c0_i32 = arith.constant 0 : i32
    %c0_i32_0 = arith.constant 0 : i32
    %c0_i32_1 = arith.constant 0 : i32
    %c0_i32_2 = arith.constant 0 : i32
    return %arg0, %c0_i32, %c0_i32_0, %c0_i32_1 : i32, i32, i32, i32
  }
  func.func @transform_1(%arg0: i32) -> (i32, i32, i32) {
    %c0_i32 = arith.constant 0 : i32
    %c0_i32_0 = arith.constant 0 : i32
    %c0_i32_1 = arith.constant 0 : i32
    %c0_i32_2 = arith.constant 0 : i32
    return %c0_i32, %c0_i32_0, %c0_i32_1 : i32, i32, i32
  }
  func.func @transform_2(%arg0: i32) -> (i32, i32) {
    %c0_i32 = arith.constant 0 : i32
    %c0_i32_0 = arith.constant 0 : i32
    %c0_i32_1 = arith.constant 0 : i32
    return %c0_i32, %c0_i32_0 : i32, i32
  }
  func.func @transform_3(%arg0: i32) -> (i32, i32, i32) {
    %c0_i32 = arith.constant 0 : i32
    %c0_i32_0 = arith.constant 0 : i32
    %c0_i32_1 = arith.constant 0 : i32
    return %arg0, %c0_i32, %c0_i32_0 : i32, i32, i32
  }
}

module attributes {stable_mosaic.version = 11 : i64} {
  func.func @_fc_head_kernel(%arg0: i32, %arg1: memref<2x256xbf16, #tpu.memory_space<vmem>>, %arg2: memref<256x128xbf16, #tpu.memory_space<vmem>>, %arg3: memref<1x128xf32, #tpu.memory_space<vmem>>, %arg4: memref<128x1xf32, #tpu.memory_space<vmem>>, %arg5: memref<1x1xf32, #tpu.memory_space<vmem>>, %arg6: memref<2x1xf32, #tpu.memory_space<vmem>>, %arg7: memref<2x128xf32, #tpu.memory_space<vmem>>) attributes {dimension_semantics = [#tpu.dimension_semantics<arbitrary>], iteration_bounds = array<i64: 4>, scalar_prefetch = 0 : i64, scratch_operands = 1 : i64, tpu.core_type = #tpu.core_type<tc>, window_params = [{transform_indices = @transform_0, window_bounds = array<i64: 2, 256>}, {transform_indices = @transform_1, window_bounds = array<i64: 256, 128>}, {pipeline_mode = #tpu.pipeline_mode<synchronous>, transform_indices = @transform_2, window_bounds = array<i64: 1, 128>}, {pipeline_mode = #tpu.pipeline_mode<synchronous>, transform_indices = @transform_3, window_bounds = array<i64: 128, 1>}, {pipeline_mode = #tpu.pipeline_mode<synchronous>, transform_indices = @transform_4, window_bounds = array<i64: 1, 1>}, {pipeline_mode = #tpu.pipeline_mode<synchronous>, transform_indices = @transform_5, window_bounds = array<i64: 2, 1>}]} {
    %c0_i32 = arith.constant 0 : i32
    %0 = arith.cmpi eq, %arg0, %c0_i32 : i32
    %1 = arith.extui %0 : i1 to i32
    %c0_i32_0 = arith.constant 0 : i32
    %2 = arith.cmpi ne, %1, %c0_i32_0 : i32
    scf.if %2 {
      %cst_9 = arith.constant 0.000000e+00 : f32
      %12 = vector.broadcast %cst_9 : f32 to vector<2x128xf32>
      %c0_10 = arith.constant 0 : index
      %c0_11 = arith.constant 0 : index
      %13 = vector.load %arg7[%c0_10, %c0_11] : memref<2x128xf32, #tpu.memory_space<vmem>>, vector<2x128xf32>
      tpu.vector_store %arg7[%c0_10, %c0_11], %12 {strides = array<i32>} : memref<2x128xf32, #tpu.memory_space<vmem>>, vector<2x128xf32>,
    } else {
    }
    %c0 = arith.constant 0 : index
    %c0_1 = arith.constant 0 : index
    %3 = vector.load %arg7[%c0, %c0_1] : memref<2x128xf32, #tpu.memory_space<vmem>>, vector<2x128xf32>
    %c0_2 = arith.constant 0 : index
    %c0_3 = arith.constant 0 : index
    %4 = vector.load %arg1[%c0_2, %c0_3] : memref<2x256xbf16, #tpu.memory_space<vmem>>, vector<2x256xbf16>
    %c0_4 = arith.constant 0 : index
    %c0_5 = arith.constant 0 : index
    %5 = vector.load %arg2[%c0_4, %c0_5] : memref<256x128xbf16, #tpu.memory_space<vmem>>, vector<256x128xbf16>
    %cst = arith.constant dense<0.000000e+00> : vector<2x128xf32>
    %6 = tpu.matmul %4, %5, %cst {dimension_numbers = #tpu.dot_dimension_numbers<[1], [0], [0], [1], [0, 0, 1, 1], [], []>} : vector<2x256xbf16>, vector<256x128xbf16>, vector<2x128xf32> -> vector<2x128xf32>
    %7 = arith.addf %3, %6 : vector<2x128xf32>
    %c0_6 = arith.constant 0 : index
    %c0_7 = arith.constant 0 : index
    %8 = vector.load %arg7[%c0_6, %c0_7] : memref<2x128xf32, #tpu.memory_space<vmem>>, vector<2x128xf32>
    tpu.vector_store %arg7[%c0_6, %c0_7], %7 {strides = array<i32>} : memref<2x128xf32, #tpu.memory_space<vmem>>, vector<2x128xf32>,
    %c3_i32 = arith.constant 3 : i32
    %9 = arith.cmpi eq, %arg0, %c3_i32 : i32
    %10 = arith.extui %9 : i1 to i32
    %c0_i32_8 = arith.constant 0 : i32
    %11 = arith.cmpi ne, %10, %c0_i32_8 : i32
    scf.if %11 {
      %c0_9 = arith.constant 0 : index
      %c0_10 = arith.constant 0 : index
      %12 = vector.load %arg7[%c0_9, %c0_10] : memref<2x128xf32, #tpu.memory_space<vmem>>, vector<2x128xf32>
      %c0_11 = arith.constant 0 : index
      %c0_12 = arith.constant 0 : index
      %13 = vector.load %arg3[%c0_11, %c0_12] : memref<1x128xf32, #tpu.memory_space<vmem>>, vector<1x128xf32>
      %14 = vector.broadcast %13 : vector<1x128xf32> to vector<2x128xf32>
      %15 = arith.addf %12, %14 : vector<2x128xf32>
      %cst_13 = arith.constant 0.000000e+00 : f32
      %16 = vector.broadcast %cst_13 : f32 to vector<2x128xf32>
      %17 = arith.maximumf %15, %16 : vector<2x128xf32>
      %c0_14 = arith.constant 0 : index
      %c0_15 = arith.constant 0 : index
      %18 = vector.load %arg4[%c0_14, %c0_15] : memref<128x1xf32, #tpu.memory_space<vmem>>, vector<128x1xf32>
      %cst_16 = arith.constant dense<0.000000e+00> : vector<2x1xf32>
      %19 = tpu.matmul %17, %18, %cst_16 {dimension_numbers = #tpu.dot_dimension_numbers<[1], [0], [0], [1], [0, 0, 1, 1], [], []>} : vector<2x128xf32>, vector<128x1xf32>, vector<2x1xf32> -> vector<2x1xf32>
      %c0_17 = arith.constant 0 : index
      %c0_18 = arith.constant 0 : index
      %20 = vector.load %arg5[%c0_17, %c0_18] : memref<1x1xf32, #tpu.memory_space<vmem>>, vector<1x1xf32>
      %21 = vector.broadcast %20 : vector<1x1xf32> to vector<2x1xf32>
      %22 = arith.addf %19, %21 : vector<2x1xf32>
      %c0_19 = arith.constant 0 : index
      %c0_20 = arith.constant 0 : index
      %23 = vector.load %arg6[%c0_19, %c0_20] : memref<2x1xf32, #tpu.memory_space<vmem>>, vector<2x1xf32>
      tpu.vector_store %arg6[%c0_19, %c0_20], %22 {strides = array<i32>} : memref<2x1xf32, #tpu.memory_space<vmem>>, vector<2x1xf32>,
    } else {
    }
    return
  }
  func.func @transform_0(%arg0: i32) -> (i32, i32) {
    %c0_i32 = arith.constant 0 : i32
    %c0_i32_0 = arith.constant 0 : i32
    return %c0_i32, %arg0 : i32, i32
  }
  func.func @transform_1(%arg0: i32) -> (i32, i32) {
    %c0_i32 = arith.constant 0 : i32
    %c0_i32_0 = arith.constant 0 : i32
    return %arg0, %c0_i32 : i32, i32
  }
  func.func @transform_2(%arg0: i32) -> (i32, i32) {
    %c0_i32 = arith.constant 0 : i32
    %c0_i32_0 = arith.constant 0 : i32
    %c0_i32_1 = arith.constant 0 : i32
    return %c0_i32, %c0_i32_0 : i32, i32
  }
  func.func @transform_3(%arg0: i32) -> (i32, i32) {
    %c0_i32 = arith.constant 0 : i32
    %c0_i32_0 = arith.constant 0 : i32
    %c0_i32_1 = arith.constant 0 : i32
    return %c0_i32, %c0_i32_0 : i32, i32
  }
  func.func @transform_4(%arg0: i32) -> (i32, i32) {
    %c0_i32 = arith.constant 0 : i32
    %c0_i32_0 = arith.constant 0 : i32
    %c0_i32_1 = arith.constant 0 : i32
    return %c0_i32, %c0_i32_0 : i32, i32
  }
  func.func @transform_5(%arg0: i32) -> (i32, i32) {
    %c0_i32 = arith.constant 0 : i32
    %c0_i32_0 = arith.constant 0 : i32
    %c0_i32_1 = arith.constant 0 : i32
    return %c0_i32, %c0_i32_0 : i32, i32
  }
}

</mosaic_0001>

<llo_original>
// kernel: critic_forward.5
$region0: #{critic_forward.5}
  #allocation0 [shape = 'u32[]', space=smem, size = 0x4, offset = 0x4, fixed_abs, tag = 'smem constant byte address 0x4 - core index']
  #allocation1 [shape = 'u32[144,128]{1,0:T(1,128)}', space=vmem, size = 0x12000, scoped, tag = 'internal scratch']
  %s0 = inlined_call_operand.vmem [shape: bf16[2,68,17,4], index: 0, kind: input, shape index: {}]
  %s1 = inlined_call_operand.vmem [shape: bf16[9,4,32], index: 1, kind: input, shape index: {}]
  %s2 = inlined_call_operand.vmem [shape: f32[1,32], index: 2, kind: input, shape index: {}]
  %s3 = inlined_call_operand.vmem [shape: bf16[2,256,32], index: 3, kind: output, shape index: {}]
  %s4 = sld [smem:[#allocation0]]
  $region45: #{critic_forward.5} parent=0
    _
  %s6 = ssub.s32 1, %s4
  %s7 = scalar_select 0, %s6, %s4
  loop: start=0, step=1, limit=4
  $region2: #{critic_forward.5} parent=0 // loop_pre_header
    _
  $region3: #{critic_forward.5} parent=0 // loop_header
    %s9 = sphi 0, %s13
    %p10 = scmp.ge.s32.totalorder %s9, 4
    %s19 = sphi 0, %s21
    %s22 = sphi 0, %s19
    %s23 = sphi 0, %s22
    %s39 = sphi 0, %s23
    %s43 = sphi 0, %s43
    %s45 = sphi 0, %s43
    %s46 = sphi 0, %s45
    %s60 = sphi 0, %s46
    %s64 = sphi 0, %s64
    %s66 = sphi 0, %s64
    %s67 = sphi 0, %s66
    %s81 = sphi 0, %s67
    %s87 = sphi 0, %s89
    %s90 = sphi 0, %s87
    %s91 = sphi 0, %s90
    %s107 = sphi 0, %s91
  $region4: #{critic_forward.5} parent=0 // loop_header_branch
    %12 = sbr.rel (%p10) target = $region8
  $region5: #{critic_forward.5} parent=0 // loop_body
    %s14 = ssub.s32 %s9, 1
    %s15 = ssub.s32 %s9, 2
    %s16 = sadd.s32 %s9, 1
    %s17 = ssub.s32 %s9, %s16
    %p18 = scmp.eq.s32.totalorder %s17, 0
    %s20 = sadd.s32 %s19, 1
    %s21 = scalar_select %p18, %s19, %s20
    %p24 = pneg %p18
    %p25 = scmp.eq.s32.totalorder %s9, 1
    %p26 = por %p24, %p25
    %p27 = scmp.ne.s32.totalorder %s19, %s22
    %p28 = scmp.eq.s32.totalorder %s9, 0
    %p29 = por %p27, %p28
    %p30 = scmp.ne.s32.totalorder %s19, %s22
    %p31 = scmp.eq.s32.totalorder %s14, 1
    %p32 = por %p30, %p31
    %p33 = scmp.ne.s32.totalorder %s22, %s23
    %p34 = scmp.eq.s32.totalorder %s14, 0
    %p35 = por %p33, %p34
    %p36 = scmp.ne.s32.totalorder %s22, %s23
    %p37 = scmp.eq.s32.totalorder %s15, 1
    %p38 = por %p36, %p37
    %p40 = scmp.ne.s32.totalorder %s23, %s39
    %p41 = scmp.eq.s32.totalorder %s15, 0
    %p42 = por %p40, %p41
    %s44 = sadd.s32 %s43, 1
    %p47 = scmp.eq.s32.totalorder %s9, 1
    %p48 = scmp.ne.s32.totalorder %s43, %s45
    %p49 = scmp.eq.s32.totalorder %s9, 0
    %p50 = por %p48, %p49
    %p51 = scmp.ne.s32.totalorder %s43, %s45
    %p52 = scmp.eq.s32.totalorder %s14, 1
    %p53 = por %p51, %p52
    %p54 = scmp.ne.s32.totalorder %s45, %s46
    %p55 = scmp.eq.s32.totalorder %s14, 0
    %p56 = por %p54, %p55
    %p57 = scmp.ne.s32.totalorder %s45, %s46
    %p58 = scmp.eq.s32.totalorder %s15, 1
    %p59 = por %p57, %p58
    %p61 = scmp.ne.s32.totalorder %s46, %s60
    %p62 = scmp.eq.s32.totalorder %s15, 0
    %p63 = por %p61, %p62
    %s65 = sadd.s32 %s64, 1
    %p68 = scmp.eq.s32.totalorder %s9, 1
    %p69 = scmp.ne.s32.totalorder %s64, %s66
    %p70 = scmp.eq.s32.totalorder %s9, 0
    %p71 = por %p69, %p70
    %p72 = scmp.ne.s32.totalorder %s64, %s66
    %p73 = scmp.eq.s32.totalorder %s14, 1
    %p74 = por %p72, %p73
    %p75 = scmp.ne.s32.totalorder %s66, %s67
    %p76 = scmp.eq.s32.totalorder %s14, 0
    %p77 = por %p75, %p76
    %p78 = scmp.ne.s32.totalorder %s66, %s67
    %p79 = scmp.eq.s32.totalorder %s15, 1
    %p80 = por %p78, %p79
    %p82 = scmp.ne.s32.totalorder %s67, %s81
    %p83 = scmp.eq.s32.totalorder %s15, 0
    %p84 = por %p82, %p83
    %s85 = ssub.s32 %s9, %s16
    %p86 = scmp.eq.s32.totalorder %s85, 0
    %s88 = sadd.s32 %s87, 1
    %s89 = scalar_select %p86, %s87, %s88
    %p92 = pneg %p86
    %p93 = scmp.eq.s32.totalorder %s9, 1
    %p94 = por %p92, %p93
    %p95 = scmp.ne.s32.totalorder %s87, %s90
    %p96 = scmp.eq.s32.totalorder %s9, 0
    %p97 = por %p95, %p96
    %p98 = scmp.ne.s32.totalorder %s87, %s90
    %p99 = scmp.eq.s32.totalorder %s14, 1
    %p100 = por %p98, %p99
    %p101 = scmp.ne.s32.totalorder %s90, %s91
    %p102 = scmp.eq.s32.totalorder %s14, 0
    %p103 = por %p101, %p102
    %p104 = scmp.ne.s32.totalorder %s90, %s91
    %p105 = scmp.eq.s32.totalorder %s15, 1
    %p106 = por %p104, %p105
    %p108 = scmp.ne.s32.totalorder %s91, %s107
    %p109 = scmp.eq.s32.totalorder %s15, 0
    %p110 = por %p108, %p109
    %p111 = scmp.le.s32.totalorder 1, %s9
    %p112 = scmp.lt.s32.totalorder %s9, 3
    %p113 = pnand %p111, %p112
    %p114 = pneg %p113
    // Predicated region
    $region9: #{critic_forward.5} parent=5 // pred_check
      _
    $region10: #{critic_forward.5} parent=5 // pred_check_branch
      %116 = sbr.rel (%p113) target = $region12
    $region11: #{critic_forward.5} parent=5 // pred_region
      %s117 = ssub.s32 %s9, 1
      // Predicated region
      $region13: #{critic_forward.5} parent=11 // pred_check
        %p118 = pneg %p56
      $region14: #{critic_forward.5} parent=11 // pred_check_branch
        %120 = sbr.rel (%p118) target = $region16
      $region15: #{critic_forward.5} parent=11 // pred_region
        _
      $region16: #{critic_forward.5} parent=11 // pred_fallthru
        _
      // Predicated region
      $region17: #{critic_forward.5} parent=11 // pred_check
        %p121 = pneg %p77
      $region18: #{critic_forward.5} parent=11 // pred_check_branch
        %123 = sbr.rel (%p121) target = $region20
      $region19: #{critic_forward.5} parent=11 // pred_region
        _
      $region20: #{critic_forward.5} parent=11 // pred_fallthru
        _
    $region12: #{critic_forward.5} parent=5 // pred_fallthru
      _
    %p124 = scmp.lt.s32.totalorder %s9, 2
    // Predicated region
    $region21: #{critic_forward.5} parent=5 // pred_check
      %p125 = pneg %p124
    $region22: #{critic_forward.5} parent=5 // pred_check_branch
      %127 = sbr.rel (%p125) target = $region24
    $region23: #{critic_forward.5} parent=5 // pred_region
      // Predicated region
      $region25: #{critic_forward.5} parent=23 // pred_check
        %p128 = pneg %p29
      $region26: #{critic_forward.5} parent=23 // pred_check_branch
        %130 = sbr.rel (%p128) target = $region28
      $region27: #{critic_forward.5} parent=23 // pred_region
        %p131 = scmp.lt.s32.totalorder %s9, 1
        %s132 = scalar_select %p131, %s9, 1
        %s133 = smul.addr %s132, 204
        %s134 = smul.addr %s133, 4
        %s135 = scalar_lea.vmem %s0, %s134
      $region28: #{critic_forward.5} parent=23 // pred_fallthru
        _
    $region24: #{critic_forward.5} parent=5 // pred_fallthru
      _
    %p136 = scmp.le.s32.totalorder 1, %s9
    %p137 = scmp.lt.s32.totalorder %s9, 3
    %p138 = pnand %p136, %p137
    %p139 = pneg %p138
    // Predicated region
    $region29: #{critic_forward.5} parent=5 // pred_check
      _
    $region30: #{critic_forward.5} parent=5 // pred_check_branch
      %141 = sbr.rel (%p138) target = $region32
    $region31: #{critic_forward.5} parent=5 // pred_region
      %s142 = ssub.s32 %s9, 1
      %p143 = scmp.lt.s32.totalorder %s14, 1
      %s144 = scalar_select %p143, %s14, 1
      %s145 = smul.addr %s144, 204
      %s146 = smul.addr %s145, 4
      %s147 = scalar_lea.vmem %s0, %s146
      %p148 = pneg %p35
      %p149 = pneg %p32
      %p150 = pneg %p56
      %p151 = pneg %p53
      %p152 = pneg %p77
      %p153 = pneg %p74
      %p154 = pneg %p103
      %p155 = pneg %p100
      %p156 = scmp.lt.s32.totalorder %s14, 1
      %s157 = scalar_select %p156, %s14, 1
      %s158 = smul.addr %s157, 32
      %s159 = smul.addr %s158, 4
      %s160 = scalar_lea.vmem %s3, %s159
      %p161 = scmp.lt.s32.totalorder %s14, 1
      %s162 = scalar_select %p161, %s14, 1
      %s163 = smul.addr %s162, 204
      %s164 = smul.addr %s163, 4
      %s165 = scalar_lea.vmem %s0, %s164
      %p166 = scmp.lt.s32.totalorder %s14, 1
      %s167 = scalar_select %p166, %s14, 1
      %s168 = smul.addr %s167, 32
      %s169 = smul.addr %s168, 4
      %s170 = scalar_lea.vmem %s3, %s169
      %v172 = vld [vmem:[%s165] sm:$0xf]
      %v173 = vld [vmem:[%s165 + $0x4] sm:$0xf]
      %v174 = vld [vmem:[%s165 + $0xc] sm:$0xf]
      %v175 = vld [vmem:[%s165 + $0x10] sm:$0xf]
      %v176 = vld [vmem:[%s165 + $0x18] sm:$0xf]
      %v177 = vld [vmem:[%s165 + $0x1c] sm:$0xf]
      %v178 = vld [vmem:[%s165 + $0x24] sm:$0xf]
      %v179 = vld [vmem:[%s165 + $0x28] sm:$0xf]
      %v180 = vld [vmem:[%s165 + $0x30] sm:$0xf]
      %v181 = vld [vmem:[%s165 + $0x34] sm:$0xf]
      %v182 = vld [vmem:[%s165 + $0x3c] sm:$0xf]
      %v183 = vld [vmem:[%s165 + $0x40] sm:$0xf]
      %v184 = vld [vmem:[%s165 + $0x48] sm:$0xf]
      %v185 = vld [vmem:[%s165 + $0x4c] sm:$0xf]
      %v186 = vld [vmem:[%s165 + $0x54] sm:$0xf]
      %v187 = vld [vmem:[%s165 + $0x58] sm:$0xf]
      %v188 = vld [vmem:[%s165 + $0x60] sm:$0xf]
      %v189 = vld [vmem:[%s165 + $0x64] sm:$0xf]
      %v190 = vld [vmem:[%s165 + $0x6c] sm:$0xf]
      %v191 = vld [vmem:[%s165 + $0x70] sm:$0xf]
      %v192 = vld [vmem:[%s165 + $0x78] sm:$0xf]
      %v193 = vld [vmem:[%s165 + $0x7c] sm:$0xf]
      %v194 = vld [vmem:[%s165 + $0x84] sm:$0xf]
      %v195 = vld [vmem:[%s165 + $0x88] sm:$0xf]
      %v196 = vld [vmem:[%s165 + $0x90] sm:$0xf]
      %v197 = vld [vmem:[%s165 + $0x94] sm:$0xf]
      %v198 = vld [vmem:[%s165 + $0x9c] sm:$0xf]
      %v199 = vld [vmem:[%s165 + $0xa0] sm:$0xf]
      %v200 = vld [vmem:[%s165 + $0xa8] sm:$0xf]
      %v201 = vld [vmem:[%s165 + $0xac] sm:$0xf]
      %v202 = vld [vmem:[%s165 + $0xb4] sm:$0xf]
      %v203 = vld [vmem:[%s165 + $0xb8] sm:$0xf]
      %v204 = vld [vmem:[%s1] sm:$0x3]
      %s205 = scalar_lea.vmem %s165, 204
      %v206 = vld [vmem:[%s205] sm:$0xf]
      %v207 = vld [vmem:[%s205 + $0x4] sm:$0xf]
      %v208 = vld [vmem:[%s205 + $0xc] sm:$0xf]
      %v209 = vld [vmem:[%s205 + $0x10] sm:$0xf]
      %v210 = vld [vmem:[%s205 + $0x18] sm:$0xf]
      %v211 = vld [vmem:[%s205 + $0x1c] sm:$0xf]
      %v212 = vld [vmem:[%s205 + $0x24] sm:$0xf]
      %v213 = vld [vmem:[%s205 + $0x28] sm:$0xf]
      %v214 = vld [vmem:[%s205 + $0x30] sm:$0xf]
      %v215 = vld [vmem:[%s205 + $0x34] sm:$0xf]
      %v216 = vld [vmem:[%s205 + $0x3c] sm:$0xf]
      %v217 = vld [vmem:[%s205 + $0x40] sm:$0xf]
      %v218 = vld [vmem:[%s205 + $0x48] sm:$0xf]
      %v219 = vld [vmem:[%s205 + $0x4c] sm:$0xf]
      %v220 = vld [vmem:[%s205 + $0x54] sm:$0xf]
      %v221 = vld [vmem:[%s205 + $0x58] sm:$0xf]
      %v222 = vld [vmem:[%s205 + $0x60] sm:$0xf]
      %v223 = vld [vmem:[%s205 + $0x64] sm:$0xf]
      %v224 = vld [vmem:[%s205 + $0x6c] sm:$0xf]
      %v225 = vld [vmem:[%s205 + $0x70] sm:$0xf]
      %v226 = vld [vmem:[%s205 + $0x78] sm:$0xf]
      %v227 = vld [vmem:[%s205 + $0x7c] sm:$0xf]
      %v228 = vld [vmem:[%s205 + $0x84] sm:$0xf]
      %v229 = vld [vmem:[%s205 + $0x88] sm:$0xf]
      %v230 = vld [vmem:[%s205 + $0x90] sm:$0xf]
      %v231 = vld [vmem:[%s205 + $0x94] sm:$0xf]
      %v232 = vld [vmem:[%s205 + $0x9c] sm:$0xf]
      %v233 = vld [vmem:[%s205 + $0xa0] sm:$0xf]
      %v234 = vld [vmem:[%s205 + $0xa8] sm:$0xf]
      %v235 = vld [vmem:[%s205 + $0xac] sm:$0xf]
      %v236 = vld [vmem:[%s205 + $0xb4] sm:$0xf]
      %v237 = vld [vmem:[%s205 + $0xb8] sm:$0xf]
      %s238 = scalar_lea.vmem %s1, 2
      %v239 = vld [vmem:[%s238] sm:$0x3]
      %v272 = vunpack.c.l.b16 %v206
      %v273 = vunpack.c.l.b16 %v207
      %v274 = vunpack.c.l.b16 %v208
      %v275 = vunpack.c.l.b16 %v209
      %v276 = vunpack.c.l.b16 %v210
      %v277 = vunpack.c.l.b16 %v211
      %v278 = vunpack.c.l.b16 %v212
      %v279 = vunpack.c.l.b16 %v213
      %v280 = vunpack.c.l.b16 %v214
      %v281 = vunpack.c.l.b16 %v215
      %v282 = vunpack.c.l.b16 %v216
      %v283 = vunpack.c.l.b16 %v217
      %v284 = vunpack.c.l.b16 %v218
      %v285 = vunpack.c.l.b16 %v219
      %v286 = vunpack.c.l.b16 %v220
      %v287 = vunpack.c.l.b16 %v221
      %v288 = vunpack.c.l.b16 %v222
      %v289 = vunpack.c.l.b16 %v223
      %v290 = vunpack.c.l.b16 %v224
      %v291 = vunpack.c.l.b16 %v225
      %v292 = vunpack.c.l.b16 %v226
      %v293 = vunpack.c.l.b16 %v227
      %v294 = vunpack.c.l.b16 %v228
      %v295 = vunpack.c.l.b16 %v229
      %v296 = vunpack.c.l.b16 %v230
      %v297 = vunpack.c.l.b16 %v231
      %v298 = vunpack.c.l.b16 %v232
      %v299 = vunpack.c.l.b16 %v233
      %v300 = vunpack.c.l.b16 %v234
      %v301 = vunpack.c.l.b16 %v235
      %v302 = vunpack.c.l.b16 %v236
      %v303 = vunpack.c.l.b16 %v237
      %v304 = vpack.c.b16 %v273, %v272
      %v305 = vpack.c.b16 %v275, %v274
      %v306 = vpack.c.b16 %v277, %v276
      %v307 = vpack.c.b16 %v279, %v278
      %v308 = vpack.c.b16 %v281, %v280
      %v309 = vpack.c.b16 %v283, %v282
      %v310 = vpack.c.b16 %v285, %v284
      %v311 = vpack.c.b16 %v287, %v286
      %v312 = vpack.c.b16 %v289, %v288
      %v313 = vpack.c.b16 %v291, %v290
      %v314 = vpack.c.b16 %v293, %v292
      %v315 = vpack.c.b16 %v295, %v294
      %v316 = vpack.c.b16 %v297, %v296
      %v317 = vpack.c.b16 %v299, %v298
      %v318 = vpack.c.b16 %v301, %v300
      %v319 = vpack.c.b16 %v303, %v302
      %vm320 = vcmask 31744
      %v322 = vsel %vm320, %v304, 0
      %v325 = vsel %vm320, %v305, 0
      %v328 = vsel %vm320, %v306, 0
      %v331 = vsel %vm320, %v307, 0
      %v334 = vsel %vm320, %v308, 0
      %v337 = vsel %vm320, %v309, 0
      %v340 = vsel %vm320, %v310, 0
      %v343 = vsel %vm320, %v311, 0
      %v346 = vsel %vm320, %v312, 0
      %v349 = vsel %vm320, %v313, 0
      %v352 = vsel %vm320, %v314, 0
      %v355 = vsel %vm320, %v315, 0
      %v358 = vsel %vm320, %v316, 0
      %v361 = vsel %vm320, %v317, 0
      %v364 = vsel %vm320, %v318, 0
      %v367 = vsel %vm320, %v319, 0
      %vm369 = vcmask 1041408
      %v371 = vsel %vm369, %v239, 0
      %373 = vmatprep.subr.bf16.mxu0 0
      %374 = vmatpush1.bf16.msra.mxu0 %v371
      %375 = vmatprep.subr.bf16.mxu0 0
      %376 = vmatpush1.bf16.msra.mxu0 0
      %377 = vmatprep.subr.bf16.mxu0 0
      %378 = vmatpush1.bf16.msra.mxu0 0
      %379 = vmatprep.subr.bf16.mxu0 0
      %380 = vmatpush1.bf16.msra.mxu0 0
      %381 = vmatprep.subr.bf16.mxu0 0
      %382 = vmatpush1.bf16.msra.mxu0 0
      %383 = vmatprep.subr.bf16.mxu0 0
      %384 = vmatpush1.bf16.msra.mxu0 0
      %385 = vmatprep.subr.bf16.mxu0 0
      %386 = vmatpush1.bf16.msra.mxu0 0
      %387 = vmatprep.subr.bf16.mxu0 0
      %388 = vmatpush1.bf16.msra.mxu0 0
      %389 = vmatprep.subr.bf16.mxu0 0
      %390 = vmatpush1.bf16.msra.mxu0 0
      %391 = vmatprep.subr.bf16.mxu0 0
      %392 = vmatpush1.bf16.msra.mxu0 0
      %393 = vmatprep.subr.bf16.mxu0 0
      %394 = vmatpush1.bf16.msra.mxu0 0
      %395 = vmatprep.subr.bf16.mxu0 0
      %396 = vmatpush1.bf16.msra.mxu0 0
      %397 = vmatprep.subr.bf16.mxu0 0
      %398 = vmatpush1.bf16.msra.mxu0 0
      %399 = vmatprep.subr.bf16.mxu0 0
      %400 = vmatpush1.bf16.msra.mxu0 0
      %401 = vmatprep.subr.bf16.mxu0 0
      %402 = vmatpush1.bf16.msra.mxu0 0
      %403 = vmatprep.subr.bf16.mxu0 0
      %404 = vmatpush1.bf16.msra.mxu0 0
      %405 = vmatprep.mubr.bf16.mxu0 0
      %406 = vmatmul.mubr.bf16.gmra.mrb[0].mxu0 %v322
      %v407 = vpop.f32.mrb[0].mxu0
      %v408 = vadd.f32 0.0, %v407
      %v409 = vpop.f32.mrb[0].mxu0
      %v410 = vpop.f32.mrb[0].mxu0
      %v411 = vadd.f32 0.0, %v410
      %v412 = vpop.f32.mrb[0].mxu0
      %413 = vmatprep.mubr.bf16.mxu0 0
      %414 = vmatmul.mubr.bf16.gmra.mrb[0].mxu0 %v325
      %v415 = vpop.f32.mrb[0].mxu0
      %v416 = vadd.f32 0.0, %v415
      %v417 = vpop.f32.mrb[0].mxu0
      %v418 = vpop.f32.mrb[0].mxu0
      %v419 = vadd.f32 0.0, %v418
      %v420 = vpop.f32.mrb[0].mxu0
      %421 = vmatprep.mubr.bf16.mxu0 0
      %422 = vmatmul.mubr.bf16.gmra.mrb[0].mxu0 %v328
      %v423 = vpop.f32.mrb[0].mxu0
      %v424 = vadd.f32 0.0, %v423
      %v425 = vpop.f32.mrb[0].mxu0
      %v426 = vpop.f32.mrb[0].mxu0
      %v427 = vadd.f32 0.0, %v426
      %v428 = vpop.f32.mrb[0].mxu0
      %429 = vmatprep.mubr.bf16.mxu0 0
      %430 = vmatmul.mubr.bf16.gmra.mrb[0].mxu0 %v331
      %v431 = vpop.f32.mrb[0].mxu0
      %v432 = vadd.f32 0.0, %v431
      %v433 = vpop.f32.mrb[0].mxu0
      %v434 = vpop.f32.mrb[0].mxu0
      %v435 = vadd.f32 0.0, %v434
      %v436 = vpop.f32.mrb[0].mxu0
      %437 = vmatprep.mubr.bf16.mxu0 0
      %438 = vmatmul.mubr.bf16.gmra.mrb[0].mxu0 %v334
      %v439 = vpop.f32.mrb[0].mxu0
      %v440 = vadd.f32 0.0, %v439
      %v441 = vpop.f32.mrb[0].mxu0
      %v442 = vpop.f32.mrb[0].mxu0
      %v443 = vadd.f32 0.0, %v442
      %v444 = vpop.f32.mrb[0].mxu0
      %445 = vmatprep.mubr.bf16.mxu0 0
      %446 = vmatmul.mubr.bf16.gmra.mrb[0].mxu0 %v337
      %v447 = vpop.f32.mrb[0].mxu0
      %v448 = vadd.f32 0.0, %v447
      %v449 = vpop.f32.mrb[0].mxu0
      %v450 = vpop.f32.mrb[0].mxu0
      %v451 = vadd.f32 0.0, %v450
      %v452 = vpop.f32.mrb[0].mxu0
      %453 = vmatprep.mubr.bf16.mxu0 0
      %454 = vmatmul.mubr.bf16.gmra.mrb[0].mxu0 %v340
      %v455 = vpop.f32.mrb[0].mxu0
      %v456 = vadd.f32 0.0, %v455
      %v457 = vpop.f32.mrb[0].mxu0
      %v458 = vpop.f32.mrb[0].mxu0
      %v459 = vadd.f32 0.0, %v458
      %v460 = vpop.f32.mrb[0].mxu0
      %461 = vmatprep.mubr.bf16.mxu0 0
      %462 = vmatmul.mubr.bf16.gmra.mrb[0].mxu0 %v343
      %v463 = vpop.f32.mrb[0].mxu0
      %v464 = vadd.f32 0.0, %v463
      %v465 = vpop.f32.mrb[0].mxu0
      %v466 = vpop.f32.mrb[0].mxu0
      %v467 = vadd.f32 0.0, %v466
      %v468 = vpop.f32.mrb[0].mxu0
      %469 = vmatprep.mubr.bf16.mxu0 0
      %470 = vmatmul.mubr.bf16.gmra.mrb[0].mxu0 %v346
      %v471 = vpop.f32.mrb[0].mxu0
      %v472 = vadd.f32 0.0, %v471
      %v473 = vpop.f32.mrb[0].mxu0
      %v474 = vpop.f32.mrb[0].mxu0
      %v475 = vadd.f32 0.0, %v474
      %v476 = vpop.f32.mrb[0].mxu0
      %477 = vmatprep.mubr.bf16.mxu0 0
      %478 = vmatmul.mubr.bf16.gmra.mrb[0].mxu0 %v349
      %v479 = vpop.f32.mrb[0].mxu0
      %v480 = vadd.f32 0.0, %v479
      %v481 = vpop.f32.mrb[0].mxu0
      %v482 = vpop.f32.mrb[0].mxu0
      %v483 = vadd.f32 0.0, %v482
      %v484 = vpop.f32.mrb[0].mxu0
      %485 = vmatprep.mubr.bf16.mxu0 0
      %486 = vmatmul.mubr.bf16.gmra.mrb[0].mxu0 %v352
      %v487 = vpop.f32.mrb[0].mxu0
      %v488 = vadd.f32 0.0, %v487
      %v489 = vpop.f32.mrb[0].mxu0
      %v490 = vpop.f32.mrb[0].mxu0
      %v491 = vadd.f32 0.0, %v490
      %v492 = vpop.f32.mrb[0].mxu0
      %493 = vmatprep.mubr.bf16.mxu0 0
      %494 = vmatmul.mubr.bf16.gmra.mrb[0].mxu0 %v355
      %v495 = vpop.f32.mrb[0].mxu0
      %v496 = vadd.f32 0.0, %v495
      %v497 = vpop.f32.mrb[0].mxu0
      %v498 = vpop.f32.mrb[0].mxu0
      %v499 = vadd.f32 0.0, %v498
      %v500 = vpop.f32.mrb[0].mxu0
      %501 = vmatprep.mubr.bf16.mxu0 0
      %502 = vmatmul.mubr.bf16.gmra.mrb[0].mxu0 %v358
      %v503 = vpop.f32.mrb[0].mxu0
      %v504 = vadd.f32 0.0, %v503
      %v505 = vpop.f32.mrb[0].mxu0
      %v506 = vpop.f32.mrb[0].mxu0
      %v507 = vadd.f32 0.0, %v506
      %v508 = vpop.f32.mrb[0].mxu0
      %509 = vmatprep.mubr.bf16.mxu0 0
      %510 = vmatmul.mubr.bf16.gmra.mrb[0].mxu0 %v361
      %v511 = vpop.f32.mrb[0].mxu0
      %v512 = vadd.f32 0.0, %v511
      %v513 = vpop.f32.mrb[0].mxu0
      %v514 = vpop.f32.mrb[0].mxu0
      %v515 = vadd.f32 0.0, %v514
      %v516 = vpop.f32.mrb[0].mxu0
      %517 = vmatprep.mubr.bf16.mxu0 0
      %518 = vmatmul.mubr.bf16.gmra.mrb[0].mxu0 %v364
      %v519 = vpop.f32.mrb[0].mxu0
      %v520 = vadd.f32 0.0, %v519
      %v521 = vpop.f32.mrb[0].mxu0
      %v522 = vpop.f32.mrb[0].mxu0
      %v523 = vadd.f32 0.0, %v522
      %v524 = vpop.f32.mrb[0].mxu0
      %525 = vmatprep.mubr.bf16.mxu0 0
      %526 = vmatmul.mubr.bf16.gmra.mrb[0].mxu0 %v367
      %v527 = vpop.f32.mrb[0].mxu0
      %v528 = vadd.f32 0.0, %v527
      %v529 = vpop.f32.mrb[0].mxu0
      %v530 = vpop.f32.mrb[0].mxu0
      %v531 = vadd.f32 0.0, %v530
      %v532 = vpop.f32.mrb[0].mxu0
      %533 = vdwg.mxu0
      %v566 = vunpack.c.l.b16 %v172
      %v567 = vunpack.c.l.b16 %v173
      %v568 = vunpack.c.l.b16 %v174
      %v569 = vunpack.c.l.b16 %v175
      %v570 = vunpack.c.l.b16 %v176
      %v571 = vunpack.c.l.b16 %v177
      %v572 = vunpack.c.l.b16 %v178
      %v573 = vunpack.c.l.b16 %v179
      %v574 = vunpack.c.l.b16 %v180
      %v575 = vunpack.c.l.b16 %v181
      %v576 = vunpack.c.l.b16 %v182
      %v577 = vunpack.c.l.b16 %v183
      %v578 = vunpack.c.l.b16 %v184
      %v579 = vunpack.c.l.b16 %v185
      %v580 = vunpack.c.l.b16 %v186
      %v581 = vunpack.c.l.b16 %v187
      %v582 = vunpack.c.l.b16 %v188
      %v583 = vunpack.c.l.b16 %v189
      %v584 = vunpack.c.l.b16 %v190
      %v585 = vunpack.c.l.b16 %v191
      %v586 = vunpack.c.l.b16 %v192
      %v587 = vunpack.c.l.b16 %v193
      %v588 = vunpack.c.l.b16 %v194
      %v589 = vunpack.c.l.b16 %v195
      %v590 = vunpack.c.l.b16 %v196
      %v591 = vunpack.c.l.b16 %v197
      %v592 = vunpack.c.l.b16 %v198
      %v593 = vunpack.c.l.b16 %v199
      %v594 = vunpack.c.l.b16 %v200
      %v595 = vunpack.c.l.b16 %v201
      %v596 = vunpack.c.l.b16 %v202
      %v597 = vunpack.c.l.b16 %v203
      %v598 = vpack.c.b16 %v567, %v566
      %v599 = vpack.c.b16 %v569, %v568
      %v600 = vpack.c.b16 %v571, %v570
      %v601 = vpack.c.b16 %v573, %v572
      %v602 = vpack.c.b16 %v575, %v574
      %v603 = vpack.c.b16 %v577, %v576
      %v604 = vpack.c.b16 %v579, %v578
      %v605 = vpack.c.b16 %v581, %v580
      %v606 = vpack.c.b16 %v583, %v582
      %v607 = vpack.c.b16 %v585, %v584
      %v608 = vpack.c.b16 %v587, %v586
      %v609 = vpack.c.b16 %v589, %v588
      %v610 = vpack.c.b16 %v591, %v590
      %v611 = vpack.c.b16 %v593, %v592
      %v612 = vpack.c.b16 %v595, %v594
      %v613 = vpack.c.b16 %v597, %v596
      %v615 = vsel %vm320, %v598, 0
      %v618 = vsel %vm320, %v599, 0
      %v621 = vsel %vm320, %v600, 0
      %v624 = vsel %vm320, %v601, 0
      %v627 = vsel %vm320, %v602, 0
      %v630 = vsel %vm320, %v603, 0
      %v633 = vsel %vm320, %v604, 0
      %v636 = vsel %vm320, %v605, 0
      %v639 = vsel %vm320, %v606, 0
      %v642 = vsel %vm320, %v607, 0
      %v645 = vsel %vm320, %v608, 0
      %v648 = vsel %vm320, %v609, 0
      %v651 = vsel %vm320, %v610, 0
      %v654 = vsel %vm320, %v611, 0
      %v657 = vsel %vm320, %v612, 0
      %v660 = vsel %vm320, %v613, 0
      %v663 = vsel %vm369, %v204, 0
      %665 = vmatprep.subr.bf16.mxu0 0
      %666 = vmatpush1.bf16.msra.mxu0 %v663
      %667 = vmatprep.subr.bf16.mxu0 0
      %668 = vmatpush1.bf16.msra.mxu0 0
      %669 = vmatprep.subr.bf16.mxu0 0
      %670 = vmatpush1.bf16.msra.mxu0 0
      %671 = vmatprep.subr.bf16.mxu0 0
      %672 = vmatpush1.bf16.msra.mxu0 0
      %673 = vmatprep.subr.bf16.mxu0 0
      %674 = vmatpush1.bf16.msra.mxu0 0
      %675 = vmatprep.subr.bf16.mxu0 0
      %676 = vmatpush1.bf16.msra.mxu0 0
      %677 = vmatprep.subr.bf16.mxu0 0
      %678 = vmatpush1.bf16.msra.mxu0 0
      %679 = vmatprep.subr.bf16.mxu0 0
      %680 = vmatpush1.bf16.msra.mxu0 0
      %681 = vmatprep.subr.bf16.mxu0 0
      %682 = vmatpush1.bf16.msra.mxu0 0
      %683 = vmatprep.subr.bf16.mxu0 0
      %684 = vmatpush1.bf16.msra.mxu0 0
      %685 = vmatprep.subr.bf16.mxu0 0
      %686 = vmatpush1.bf16.msra.mxu0 0
      %687 = vmatprep.subr.bf16.mxu0 0
      %688 = vmatpush1.bf16.msra.mxu0 0
      %689 = vmatprep.subr.bf16.mxu0 0
      %690 = vmatpush1.bf16.msra.mxu0 0
      %691 = vmatprep.subr.bf16.mxu0 0
      %692 = vmatpush1.bf16.msra.mxu0 0
      %693 = vmatprep.subr.bf16.mxu0 0
      %694 = vmatpush1.bf16.msra.mxu0 0
      %695 = vmatprep.subr.bf16.mxu0 0
      %696 = vmatpush1.bf16.msra.mxu0 0
      %697 = vmatprep.mubr.bf16.mxu0 0
      %698 = vmatmul.mubr.bf16.gmra.mrb[0].mxu0 %v615
      %v699 = vpop.f32.mrb[0].mxu0
      %v700 = vadd.f32 %v408, %v699
      %v701 = vpop.f32.mrb[0].mxu0
      %v702 = vpop.f32.mrb[0].mxu0
      %v703 = vadd.f32 %v411, %v702
      %v704 = vpop.f32.mrb[0].mxu0
      %705 = vmatprep.mubr.bf16.mxu0 0
      %706 = vmatmul.mubr.bf16.gmra.mrb[0].mxu0 %v618
      %v707 = vpop.f32.mrb[0].mxu0
      %v708 = vadd.f32 %v416, %v707
      %v709 = vpop.f32.mrb[0].mxu0
      %v710 = vpop.f32.mrb[0].mxu0
      %v711 = vadd.f32 %v419, %v710
      %v712 = vpop.f32.mrb[0].mxu0
      %713 = vmatprep.mubr.bf16.mxu0 0
      %714 = vmatmul.mubr.bf16.gmra.mrb[0].mxu0 %v621
      %v715 = vpop.f32.mrb[0].mxu0
      %v716 = vadd.f32 %v424, %v715
      %v717 = vpop.f32.mrb[0].mxu0
      %v718 = vpop.f32.mrb[0].mxu0
      %v719 = vadd.f32 %v427, %v718
      %v720 = vpop.f32.mrb[0].mxu0
      %721 = vmatprep.mubr.bf16.mxu0 0
      %722 = vmatmul.mubr.bf16.gmra.mrb[0].mxu0 %v624
      %v723 = vpop.f32.mrb[0].mxu0
      %v724 = vadd.f32 %v432, %v723
      %v725 = vpop.f32.mrb[0].mxu0
      %v726 = vpop.f32.mrb[0].mxu0
      %v727 = vadd.f32 %v435, %v726
      %v728 = vpop.f32.mrb[0].mxu0
      %729 = vmatprep.mubr.bf16.mxu0 0
      %730 = vmatmul.mubr.bf16.gmra.mrb[0].mxu0 %v627
      %v731 = vpop.f32.mrb[0].mxu0
      %v732 = vadd.f32 %v440, %v731
      %v733 = vpop.f32.mrb[0].mxu0
      %v734 = vpop.f32.mrb[0].mxu0
      %v735 = vadd.f32 %v443, %v734
      %v736 = vpop.f32.mrb[0].mxu0
      %737 = vmatprep.mubr.bf16.mxu0 0
      %738 = vmatmul.mubr.bf16.gmra.mrb[0].mxu0 %v630
      %v739 = vpop.f32.mrb[0].mxu0
      %v740 = vadd.f32 %v448, %v739
      %v741 = vpop.f32.mrb[0].mxu0
      %v742 = vpop.f32.mrb[0].mxu0
      %v743 = vadd.f32 %v451, %v742
      %v744 = vpop.f32.mrb[0].mxu0
      %745 = vmatprep.mubr.bf16.mxu0 0
      %746 = vmatmul.mubr.bf16.gmra.mrb[0].mxu0 %v633
      %v747 = vpop.f32.mrb[0].mxu0
      %v748 = vadd.f32 %v456, %v747
      %v749 = vpop.f32.mrb[0].mxu0
      %v750 = vpop.f32.mrb[0].mxu0
      %v751 = vadd.f32 %v459, %v750
      %v752 = vpop.f32.mrb[0].mxu0
      %753 = vmatprep.mubr.bf16.mxu0 0
      %754 = vmatmul.mubr.bf16.gmra.mrb[0].mxu0 %v636
      %v755 = vpop.f32.mrb[0].mxu0
      %v756 = vadd.f32 %v464, %v755
      %v757 = vpop.f32.mrb[0].mxu0
      %v758 = vpop.f32.mrb[0].mxu0
      %v759 = vadd.f32 %v467, %v758
      %v760 = vpop.f32.mrb[0].mxu0
      %761 = vmatprep.mubr.bf16.mxu0 0
      %762 = vmatmul.mubr.bf16.gmra.mrb[0].mxu0 %v639
      %v763 = vpop.f32.mrb[0].mxu0
      %v764 = vadd.f32 %v472, %v763
      %v765 = vpop.f32.mrb[0].mxu0
      %v766 = vpop.f32.mrb[0].mxu0
      %v767 = vadd.f32 %v475, %v766
      %v768 = vpop.f32.mrb[0].mxu0
      %769 = vmatprep.mubr.bf16.mxu0 0
      %770 = vmatmul.mubr.bf16.gmra.mrb[0].mxu0 %v642
      %v771 = vpop.f32.mrb[0].mxu0
      %v772 = vadd.f32 %v480, %v771
      %v773 = vpop.f32.mrb[0].mxu0
      %v774 = vpop.f32.mrb[0].mxu0
      %v775 = vadd.f32 %v483, %v774
      %v776 = vpop.f32.mrb[0].mxu0
      %777 = vmatprep.mubr.bf16.mxu0 0
      %778 = vmatmul.mubr.bf16.gmra.mrb[0].mxu0 %v645
      %v779 = vpop.f32.mrb[0].mxu0
      %v780 = vadd.f32 %v488, %v779
      %v781 = vpop.f32.mrb[0].mxu0
      %v782 = vpop.f32.mrb[0].mxu0
      %v783 = vadd.f32 %v491, %v782
      %v784 = vpop.f32.mrb[0].mxu0
      %785 = vmatprep.mubr.bf16.mxu0 0
      %786 = vmatmul.mubr.bf16.gmra.mrb[0].mxu0 %v648
      %v787 = vpop.f32.mrb[0].mxu0
      %v788 = vadd.f32 %v496, %v787
      %v789 = vpop.f32.mrb[0].mxu0
      %v790 = vpop.f32.mrb[0].mxu0
      %v791 = vadd.f32 %v499, %v790
      %v792 = vpop.f32.mrb[0].mxu0
      %793 = vmatprep.mubr.bf16.mxu0 0
      %794 = vmatmul.mubr.bf16.gmra.mrb[0].mxu0 %v651
      %v795 = vpop.f32.mrb[0].mxu0
      %v796 = vadd.f32 %v504, %v795
      %v797 = vpop.f32.mrb[0].mxu0
      %v798 = vpop.f32.mrb[0].mxu0
      %v799 = vadd.f32 %v507, %v798
      %v800 = vpop.f32.mrb[0].mxu0
      %801 = vmatprep.mubr.bf16.mxu0 0
      %802 = vmatmul.mubr.bf16.gmra.mrb[0].mxu0 %v654
      %v803 = vpop.f32.mrb[0].mxu0
      %v804 = vadd.f32 %v512, %v803
      %v805 = vpop.f32.mrb[0].mxu0
      %v806 = vpop.f32.mrb[0].mxu0
      %v807 = vadd.f32 %v515, %v806
      %v808 = vpop.f32.mrb[0].mxu0
      %809 = vmatprep.mubr.bf16.mxu0 0
      %810 = vmatmul.mubr.bf16.gmra.mrb[0].mxu0 %v657
      %v811 = vpop.f32.mrb[0].mxu0
      %v812 = vadd.f32 %v520, %v811
      %v813 = vpop.f32.mrb[0].mxu0
      %v814 = vpop.f32.mrb[0].mxu0
      %v815 = vadd.f32 %v523, %v814
      %v816 = vpop.f32.mrb[0].mxu0
      %817 = vmatprep.mubr.bf16.mxu0 0
      %818 = vmatmul.mubr.bf16.gmra.mrb[0].mxu0 %v660
      %v819 = vpop.f32.mrb[0].mxu0
      %v820 = vadd.f32 %v528, %v819
      %v821 = vpop.f32.mrb[0].mxu0
      %v822 = vpop.f32.mrb[0].mxu0
      %v823 = vadd.f32 %v531, %v822
      %v824 = vpop.f32.mrb[0].mxu0
      %825 = vdwg.mxu0
      %v826 = vld [vmem:[%s165] sm:$0xf]
      %v827 = vld [vmem:[%s165 + $0x4] sm:$0xf]
      %v828 = vld [vmem:[%s165 + $0x8] sm:$0x1]
      %v829 = vld [vmem:[%s165 + $0xc] sm:$0xf]
      %v830 = vld [vmem:[%s165 + $0x10] sm:$0xf]
      %v831 = vld [vmem:[%s165 + $0x14] sm:$0x1]
      %v832 = vld [vmem:[%s165 + $0x18] sm:$0xf]
      %v833 = vld [vmem:[%s165 + $0x1c] sm:$0xf]
      %v834 = vld [vmem:[%s165 + $0x20] sm:$0x1]
      %v835 = vld [vmem:[%s165 + $0x24] sm:$0xf]
      %v836 = vld [vmem:[%s165 + $0x28] sm:$0xf]
      %v837 = vld [vmem:[%s165 + $0x2c] sm:$0x1]
      %v838 = vld [vmem:[%s165 + $0x30] sm:$0xf]
      %v839 = vld [vmem:[%s165 + $0x34] sm:$0xf]
      %v840 = vld [vmem:[%s165 + $0x38] sm:$0x1]
      %v841 = vld [vmem:[%s165 + $0x3c] sm:$0xf]
      %v842 = vld [vmem:[%s165 + $0x40] sm:$0xf]
      %v843 = vld [vmem:[%s165 + $0x44] sm:$0x1]
      %v844 = vld [vmem:[%s165 + $0x48] sm:$0xf]
      %v845 = vld [vmem:[%s165 + $0x4c] sm:$0xf]
      %v846 = vld [vmem:[%s165 + $0x50] sm:$0x1]
      %v847 = vld [vmem:[%s165 + $0x54] sm:$0xf]
      %v848 = vld [vmem:[%s165 + $0x58] sm:$0xf]
      %v849 = vld [vmem:[%s165 + $0x5c] sm:$0x1]
      %v850 = vld [vmem:[%s165 + $0x60] sm:$0xf]
      %v851 = vld [vmem:[%s165 + $0x64] sm:$0xf]
      %v852 = vld [vmem:[%s165 + $0x68] sm:$0x1]
      %v853 = vld [vmem:[%s165 + $0x6c] sm:$0xf]
      %v854 = vld [vmem:[%s165 + $0x70] sm:$0xf]
      %v855 = vld [vmem:[%s165 + $0x74] sm:$0x1]
      %v856 = vld [vmem:[%s165 + $0x78] sm:$0xf]
      %v857 = vld [vmem:[%s165 + $0x7c] sm:$0xf]
      %v858 = vld [vmem:[%s165 + $0x80] sm:$0x1]
      %v859 = vld [vmem:[%s165 + $0x84] sm:$0xf]
      %v860 = vld [vmem:[%s165 + $0x88] sm:$0xf]
      %v861 = vld [vmem:[%s165 + $0x8c] sm:$0x1]
      %v862 = vld [vmem:[%s165 + $0x90] sm:$0xf]
      %v863 = vld [vmem:[%s165 + $0x94] sm:$0xf]
      %v864 = vld [vmem:[%s165 + $0x98] sm:$0x1]
      %v865 = vld [vmem:[%s165 + $0x9c] sm:$0xf]
      %v866 = vld [vmem:[%s165 + $0xa0] sm:$0xf]
      %v867 = vld [vmem:[%s165 + $0xa4] sm:$0x1]
      %v868 = vld [vmem:[%s165 + $0xa8] sm:$0xf]
      %v869 = vld [vmem:[%s165 + $0xac] sm:$0xf]
      %v870 = vld [vmem:[%s165 + $0xb0] sm:$0x1]
      %v871 = vld [vmem:[%s165 + $0xb4] sm:$0xf]
      %v872 = vld [vmem:[%s165 + $0xb8] sm:$0xf]
      %v873 = vld [vmem:[%s165 + $0xbc] sm:$0x1]
      %vm874 = vsmask.f32 3328
      %vm875 = vsmask.f32 7440
      %vm876 = vmor %vm874, %vm875
      %v878 = vshrl.u32 %v826, 16
      %v880 = vrot.slane %v878, 4
      %v881 = vshll.u32 %v826, 16
      %v883 = vrot.slane %v881, 5
      %v884 = vor.u32 %v880, %v883
      %v885 = vrot.slane %v884, 4
      %v887 = vshll.u32 %v827, 16
      %v889 = vrot.slane %v887, 5
      %v890 = vsel %vm876, %v885, %v889
      %v891 = vshrl.u32 %v827, 16
      %v893 = vrot.slane %v891, 4
      %v894 = vor.u32 %v893, %v889
      %v895 = vrot.slane %v894, 4
      %v897 = vshll.u32 %v828, 16
      %v899 = vrot.slane %v897, 5
      %v900 = vsel %vm876, %v895, %v899
      %v902 = vshrl.u32 %v829, 16
      %v904 = vrot.slane %v902, 4
      %v905 = vshll.u32 %v829, 16
      %v907 = vrot.slane %v905, 5
      %v908 = vor.u32 %v904, %v907
      %v909 = vrot.slane %v908, 4
      %v911 = vshll.u32 %v830, 16
      %v913 = vrot.slane %v911, 5
      %v914 = vsel %vm876, %v909, %v913
      %v915 = vshrl.u32 %v830, 16
      %v917 = vrot.slane %v915, 4
      %v918 = vor.u32 %v917, %v913
      %v919 = vrot.slane %v918, 4
      %v921 = vshll.u32 %v831, 16
      %v923 = vrot.slane %v921, 5
      %v924 = vsel %vm876, %v919, %v923
      %v926 = vshrl.u32 %v832, 16
      %v928 = vrot.slane %v926, 4
      %v929 = vshll.u32 %v832, 16
      %v931 = vrot.slane %v929, 5
      %v932 = vor.u32 %v928, %v931
      %v933 = vrot.slane %v932, 4
      %v935 = vshll.u32 %v833, 16
      %v937 = vrot.slane %v935, 5
      %v938 = vsel %vm876, %v933, %v937
      %v939 = vshrl.u32 %v833, 16
      %v941 = vrot.slane %v939, 4
      %v942 = vor.u32 %v941, %v937
      %v943 = vrot.slane %v942, 4
      %v945 = vshll.u32 %v834, 16
      %v947 = vrot.slane %v945, 5
      %v948 = vsel %vm876, %v943, %v947
      %v950 = vshrl.u32 %v835, 16
      %v952 = vrot.slane %v950, 4
      %v953 = vshll.u32 %v835, 16
      %v955 = vrot.slane %v953, 5
      %v956 = vor.u32 %v952, %v955
      %v957 = vrot.slane %v956, 4
      %v959 = vshll.u32 %v836, 16
      %v961 = vrot.slane %v959, 5
      %v962 = vsel %vm876, %v957, %v961
      %v963 = vshrl.u32 %v836, 16
      %v965 = vrot.slane %v963, 4
      %v966 = vor.u32 %v965, %v961
      %v967 = vrot.slane %v966, 4
      %v969 = vshll.u32 %v837, 16
      %v971 = vrot.slane %v969, 5
      %v972 = vsel %vm876, %v967, %v971
      %v974 = vshrl.u32 %v838, 16
      %v976 = vrot.slane %v974, 4
      %v977 = vshll.u32 %v838, 16
      %v979 = vrot.slane %v977, 5
      %v980 = vor.u32 %v976, %v979
      %v981 = vrot.slane %v980, 4
      %v983 = vshll.u32 %v839, 16
      %v985 = vrot.slane %v983, 5
      %v986 = vsel %vm876, %v981, %v985
      %v987 = vshrl.u32 %v839, 16
      %v989 = vrot.slane %v987, 4
      %v990 = vor.u32 %v989, %v985
      %v991 = vrot.slane %v990, 4
      %v993 = vshll.u32 %v840, 16
      %v995 = vrot.slane %v993, 5
      %v996 = vsel %vm876, %v991, %v995
      %v998 = vshrl.u32 %v841, 16
      %v1000 = vrot.slane %v998, 4
      %v1001 = vshll.u32 %v841, 16
      %v1003 = vrot.slane %v1001, 5
      %v1004 = vor.u32 %v1000, %v1003
      %v1005 = vrot.slane %v1004, 4
      %v1007 = vshll.u32 %v842, 16
      %v1009 = vrot.slane %v1007, 5
      %v1010 = vsel %vm876, %v1005, %v1009
      %v1011 = vshrl.u32 %v842, 16
      %v1013 = vrot.slane %v1011, 4
      %v1014 = vor.u32 %v1013, %v1009
      %v1015 = vrot.slane %v1014, 4
      %v1017 = vshll.u32 %v843, 16
      %v1019 = vrot.slane %v1017, 5
      %v1020 = vsel %vm876, %v1015, %v1019
      %v1022 = vshrl.u32 %v844, 16
      %v1024 = vrot.slane %v1022, 4
      %v1025 = vshll.u32 %v844, 16
      %v1027 = vrot.slane %v1025, 5
      %v1028 = vor.u32 %v1024, %v1027
      %v1029 = vrot.slane %v1028, 4
      %v1031 = vshll.u32 %v845, 16
      %v1033 = vrot.slane %v1031, 5
      %v1034 = vsel %vm876, %v1029, %v1033
      %v1035 = vshrl.u32 %v845, 16
      %v1037 = vrot.slane %v1035, 4
      %v1038 = vor.u32 %v1037, %v1033
      %v1039 = vrot.slane %v1038, 4
      %v1041 = vshll.u32 %v846, 16
      %v1043 = vrot.slane %v1041, 5
      %v1044 = vsel %vm876, %v1039, %v1043
      %v1046 = vshrl.u32 %v847, 16
      %v1048 = vrot.slane %v1046, 4
      %v1049 = vshll.u32 %v847, 16
      %v1051 = vrot.slane %v1049, 5
      %v1052 = vor.u32 %v1048, %v1051
      %v1053 = vrot.slane %v1052, 4
      %v1055 = vshll.u32 %v848, 16
      %v1057 = vrot.slane %v1055, 5
      %v1058 = vsel %vm876, %v1053, %v1057
      %v1059 = vshrl.u32 %v848, 16
      %v1061 = vrot.slane %v1059, 4
      %v1062 = vor.u32 %v1061, %v1057
      %v1063 = vrot.slane %v1062, 4
      %v1065 = vshll.u32 %v849, 16
      %v1067 = vrot.slane %v1065, 5
      %v1068 = vsel %vm876, %v1063, %v1067
      %v1070 = vshrl.u32 %v850, 16
      %v1072 = vrot.slane %v1070, 4
      %v1073 = vshll.u32 %v850, 16
      %v1075 = vrot.slane %v1073, 5
      %v1076 = vor.u32 %v1072, %v1075
      %v1077 = vrot.slane %v1076, 4
      %v1079 = vshll.u32 %v851, 16
      %v1081 = vrot.slane %v1079, 5
      %v1082 = vsel %vm876, %v1077, %v1081
      %v1083 = vshrl.u32 %v851, 16
      %v1085 = vrot.slane %v1083, 4
      %v1086 = vor.u32 %v1085, %v1081
      %v1087 = vrot.slane %v1086, 4
      %v1089 = vshll.u32 %v852, 16
      %v1091 = vrot.slane %v1089, 5
      %v1092 = vsel %vm876, %v1087, %v1091
      %v1094 = vshrl.u32 %v853, 16
      %v1096 = vrot.slane %v1094, 4
      %v1097 = vshll.u32 %v853, 16
      %v1099 = vrot.slane %v1097, 5
      %v1100 = vor.u32 %v1096, %v1099
      %v1101 = vrot.slane %v1100, 4
      %v1103 = vshll.u32 %v854, 16
      %v1105 = vrot.slane %v1103, 5
      %v1106 = vsel %vm876, %v1101, %v1105
      %v1107 = vshrl.u32 %v854, 16
      %v1109 = vrot.slane %v1107, 4
      %v1110 = vor.u32 %v1109, %v1105
      %v1111 = vrot.slane %v1110, 4
      %v1113 = vshll.u32 %v855, 16
      %v1115 = vrot.slane %v1113, 5
      %v1116 = vsel %vm876, %v1111, %v1115
      %v1118 = vshrl.u32 %v856, 16
      %v1120 = vrot.slane %v1118, 4
      %v1121 = vshll.u32 %v856, 16
      %v1123 = vrot.slane %v1121, 5
      %v1124 = vor.u32 %v1120, %v1123
      %v1125 = vrot.slane %v1124, 4
      %v1127 = vshll.u32 %v857, 16
      %v1129 = vrot.slane %v1127, 5
      %v1130 = vsel %vm876, %v1125, %v1129
      %v1131 = vshrl.u32 %v857, 16
      %v1133 = vrot.slane %v1131, 4
      %v1134 = vor.u32 %v1133, %v1129
      %v1135 = vrot.slane %v1134, 4
      %v1137 = vshll.u32 %v858, 16
      %v1139 = vrot.slane %v1137, 5
      %v1140 = vsel %vm876, %v1135, %v1139
      %v1142 = vshrl.u32 %v859, 16
      %v1144 = vrot.slane %v1142, 4
      %v1145 = vshll.u32 %v859, 16
      %v1147 = vrot.slane %v1145, 5
      %v1148 = vor.u32 %v1144, %v1147
      %v1149 = vrot.slane %v1148, 4
      %v1151 = vshll.u32 %v860, 16
      %v1153 = vrot.slane %v1151, 5
      %v1154 = vsel %vm876, %v1149, %v1153
      %v1155 = vshrl.u32 %v860, 16
      %v1157 = vrot.slane %v1155, 4
      %v1158 = vor.u32 %v1157, %v1153
      %v1159 = vrot.slane %v1158, 4
      %v1161 = vshll.u32 %v861, 16
      %v1163 = vrot.slane %v1161, 5
      %v1164 = vsel %vm876, %v1159, %v1163
      %v1166 = vshrl.u32 %v862, 16
      %v1168 = vrot.slane %v1166, 4
      %v1169 = vshll.u32 %v862, 16
      %v1171 = vrot.slane %v1169, 5
      %v1172 = vor.u32 %v1168, %v1171
      %v1173 = vrot.slane %v1172, 4
      %v1175 = vshll.u32 %v863, 16
      %v1177 = vrot.slane %v1175, 5
      %v1178 = vsel %vm876, %v1173, %v1177
      %v1179 = vshrl.u32 %v863, 16
      %v1181 = vrot.slane %v1179, 4
      %v1182 = vor.u32 %v1181, %v1177
      %v1183 = vrot.slane %v1182, 4
      %v1185 = vshll.u32 %v864, 16
      %v1187 = vrot.slane %v1185, 5
      %v1188 = vsel %vm876, %v1183, %v1187
      %v1190 = vshrl.u32 %v865, 16
      %v1192 = vrot.slane %v1190, 4
      %v1193 = vshll.u32 %v865, 16
      %v1195 = vrot.slane %v1193, 5
      %v1196 = vor.u32 %v1192, %v1195
      %v1197 = vrot.slane %v1196, 4
      %v1199 = vshll.u32 %v866, 16
      %v1201 = vrot.slane %v1199, 5
      %v1202 = vsel %vm876, %v1197, %v1201
      %v1203 = vshrl.u32 %v866, 16
      %v1205 = vrot.slane %v1203, 4
      %v1206 = vor.u32 %v1205, %v1201
      %v1207 = vrot.slane %v1206, 4
      %v1209 = vshll.u32 %v867, 16
      %v1211 = vrot.slane %v1209, 5
      %v1212 = vsel %vm876, %v1207, %v1211
      %v1214 = vshrl.u32 %v868, 16
      %v1216 = vrot.slane %v1214, 4
      %v1217 = vshll.u32 %v868, 16
      %v1219 = vrot.slane %v1217, 5
      %v1220 = vor.u32 %v1216, %v1219
      %v1221 = vrot.slane %v1220, 4
      %v1223 = vshll.u32 %v869, 16
      %v1225 = vrot.slane %v1223, 5
      %v1226 = vsel %vm876, %v1221, %v1225
      %v1227 = vshrl.u32 %v869, 16
      %v1229 = vrot.slane %v1227, 4
      %v1230 = vor.u32 %v1229, %v1225
      %v1231 = vrot.slane %v1230, 4
      %v1233 = vshll.u32 %v870, 16
      %v1235 = vrot.slane %v1233, 5
      %v1236 = vsel %vm876, %v1231, %v1235
      %v1238 = vshrl.u32 %v871, 16
      %v1240 = vrot.slane %v1238, 4
      %v1241 = vshll.u32 %v871, 16
      %v1243 = vrot.slane %v1241, 5
      %v1244 = vor.u32 %v1240, %v1243
      %v1245 = vrot.slane %v1244, 4
      %v1247 = vshll.u32 %v872, 16
      %v1249 = vrot.slane %v1247, 5
      %v1250 = vsel %vm876, %v1245, %v1249
      %v1251 = vshrl.u32 %v872, 16
      %v1253 = vrot.slane %v1251, 4
      %v1254 = vor.u32 %v1253, %v1249
      %v1255 = vrot.slane %v1254, 4
      %v1257 = vshll.u32 %v873, 16
      %v1259 = vrot.slane %v1257, 5
      %v1260 = vsel %vm876, %v1255, %v1259
      %s1261 = scalar_lea.vmem %s1, 4
      %v1262 = vld [vmem:[%s1261] sm:$0x3]
      %v1263 = vunpack.c.l.b16 %v890
      %v1264 = vunpack.c.l.b16 %v900
      %v1265 = vunpack.c.l.b16 %v914
      %v1266 = vunpack.c.l.b16 %v924
      %v1267 = vunpack.c.l.b16 %v938
      %v1268 = vunpack.c.l.b16 %v948
      %v1269 = vunpack.c.l.b16 %v962
      %v1270 = vunpack.c.l.b16 %v972
      %v1271 = vunpack.c.l.b16 %v986
      %v1272 = vunpack.c.l.b16 %v996
      %v1273 = vunpack.c.l.b16 %v1010
      %v1274 = vunpack.c.l.b16 %v1020
      %v1275 = vunpack.c.l.b16 %v1034
      %v1276 = vunpack.c.l.b16 %v1044
      %v1277 = vunpack.c.l.b16 %v1058
      %v1278 = vunpack.c.l.b16 %v1068
      %v1279 = vunpack.c.l.b16 %v1082
      %v1280 = vunpack.c.l.b16 %v1092
      %v1281 = vunpack.c.l.b16 %v1106
      %v1282 = vunpack.c.l.b16 %v1116
      %v1283 = vunpack.c.l.b16 %v1130
      %v1284 = vunpack.c.l.b16 %v1140
      %v1285 = vunpack.c.l.b16 %v1154
      %v1286 = vunpack.c.l.b16 %v1164
      %v1287 = vunpack.c.l.b16 %v1178
      %v1288 = vunpack.c.l.b16 %v1188
      %v1289 = vunpack.c.l.b16 %v1202
      %v1290 = vunpack.c.l.b16 %v1212
      %v1291 = vunpack.c.l.b16 %v1226
      %v1292 = vunpack.c.l.b16 %v1236
      %v1293 = vunpack.c.l.b16 %v1250
      %v1294 = vunpack.c.l.b16 %v1260
      %v1295 = vpack.c.b16 %v1264, %v1263
      %v1296 = vpack.c.b16 %v1266, %v1265
      %v1297 = vpack.c.b16 %v1268, %v1267
      %v1298 = vpack.c.b16 %v1270, %v1269
      %v1299 = vpack.c.b16 %v1272, %v1271
      %v1300 = vpack.c.b16 %v1274, %v1273
      %v1301 = vpack.c.b16 %v1276, %v1275
      %v1302 = vpack.c.b16 %v1278, %v1277
      %v1303 = vpack.c.b16 %v1280, %v1279
      %v1304 = vpack.c.b16 %v1282, %v1281
      %v1305 = vpack.c.b16 %v1284, %v1283
      %v1306 = vpack.c.b16 %v1286, %v1285
      %v1307 = vpack.c.b16 %v1288, %v1287
      %v1308 = vpack.c.b16 %v1290, %v1289
      %v1309 = vpack.c.b16 %v1292, %v1291
      %v1310 = vpack.c.b16 %v1294, %v1293
      %v1312 = vsel %vm320, %v1295, 0
      %v1315 = vsel %vm320, %v1296, 0
      %v1318 = vsel %vm320, %v1297, 0
      %v1321 = vsel %vm320, %v1298, 0
      %v1324 = vsel %vm320, %v1299, 0
      %v1327 = vsel %vm320, %v1300, 0
      %v1330 = vsel %vm320, %v1301, 0
      %v1333 = vsel %vm320, %v1302, 0
      %v1336 = vsel %vm320, %v1303, 0
      %v1339 = vsel %vm320, %v1304, 0
      %v1342 = vsel %vm320, %v1305, 0
      %v1345 = vsel %vm320, %v1306, 0
      %v1348 = vsel %vm320, %v1307, 0
      %v1351 = vsel %vm320, %v1308, 0
      %v1354 = vsel %vm320, %v1309, 0
      %v1357 = vsel %vm320, %v1310, 0
      %v1360 = vsel %vm369, %v1262, 0
      %1362 = vmatprep.subr.bf16.mxu0 0
      %1363 = vmatpush1.bf16.msra.mxu0 %v1360
      %1364 = vmatprep.subr.bf16.mxu0 0
      %1365 = vmatpush1.bf16.msra.mxu0 0
      %1366 = vmatprep.subr.bf16.mxu0 0
      %1367 = vmatpush1.bf16.msra.mxu0 0
      %1368 = vmatprep.subr.bf16.mxu0 0
      %1369 = vmatpush1.bf16.msra.mxu0 0
      %1370 = vmatprep.subr.bf16.mxu0 0
      %1371 = vmatpush1.bf16.msra.mxu0 0
      %1372 = vmatprep.subr.bf16.mxu0 0
      %1373 = vmatpush1.bf16.msra.mxu0 0
      %1374 = vmatprep.subr.bf16.mxu0 0
      %1375 = vmatpush1.bf16.msra.mxu0 0
      %1376 = vmatprep.subr.bf16.mxu0 0
      %1377 = vmatpush1.bf16.msra.mxu0 0
      %1378 = vmatprep.subr.bf16.mxu0 0
      %1379 = vmatpush1.bf16.msra.mxu0 0
      %1380 = vmatprep.subr.bf16.mxu0 0
      %1381 = vmatpush1.bf16.msra.mxu0 0
      %1382 = vmatprep.subr.bf16.mxu0 0
      %1383 = vmatpush1.bf16.msra.mxu0 0
      %1384 = vmatprep.subr.bf16.mxu0 0
      %1385 = vmatpush1.bf16.msra.mxu0 0
      %1386 = vmatprep.subr.bf16.mxu0 0
      %1387 = vmatpush1.bf16.msra.mxu0 0
      %1388 = vmatprep.subr.bf16.mxu0 0
      %1389 = vmatpush1.bf16.msra.mxu0 0
      %1390 = vmatprep.subr.bf16.mxu0 0
      %1391 = vmatpush1.bf16.msra.mxu0 0
      %1392 = vmatprep.subr.bf16.mxu0 0
      %1393 = vmatpush1.bf16.msra.mxu0 0
      %1394 = vmatprep.mubr.bf16.mxu0 0
      %1395 = vmatmul.mubr.bf16.gmra.mrb[0].mxu0 %v1312
      %v1396 = vpop.f32.mrb[0].mxu0
      %v1397 = vadd.f32 0.0, %v1396
      %v1398 = vpop.f32.mrb[0].mxu0
      %v1399 = vpop.f32.mrb[0].mxu0
      %v1400 = vadd.f32 0.0, %v1399
      %v1401 = vpop.f32.mrb[0].mxu0
      %1402 = vmatprep.mubr.bf16.mxu0 0
      %1403 = vmatmul.mubr.bf16.gmra.mrb[0].mxu0 %v1315
      %v1404 = vpop.f32.mrb[0].mxu0
      %v1405 = vadd.f32 0.0, %v1404
      %v1406 = vpop.f32.mrb[0].mxu0
      %v1407 = vpop.f32.mrb[0].mxu0
      %v1408 = vadd.f32 0.0, %v1407
      %v1409 = vpop.f32.mrb[0].mxu0
      %1410 = vmatprep.mubr.bf16.mxu0 0
      %1411 = vmatmul.mubr.bf16.gmra.mrb[0].mxu0 %v1318
      %v1412 = vpop.f32.mrb[0].mxu0
      %v1413 = vadd.f32 0.0, %v1412
      %v1414 = vpop.f32.mrb[0].mxu0
      %v1415 = vpop.f32.mrb[0].mxu0
      %v1416 = vadd.f32 0.0, %v1415
      %v1417 = vpop.f32.mrb[0].mxu0
      %1418 = vmatprep.mubr.bf16.mxu0 0
      %1419 = vmatmul.mubr.bf16.gmra.mrb[0].mxu0 %v1321
      %v1420 = vpop.f32.mrb[0].mxu0
      %v1421 = vadd.f32 0.0, %v1420
      %v1422 = vpop.f32.mrb[0].mxu0
      %v1423 = vpop.f32.mrb[0].mxu0
      %v1424 = vadd.f32 0.0, %v1423
      %v1425 = vpop.f32.mrb[0].mxu0
      %1426 = vmatprep.mubr.bf16.mxu0 0
      %1427 = vmatmul.mubr.bf16.gmra.mrb[0].mxu0 %v1324
      %v1428 = vpop.f32.mrb[0].mxu0
      %v1429 = vadd.f32 0.0, %v1428
      %v1430 = vpop.f32.mrb[0].mxu0
      %v1431 = vpop.f32.mrb[0].mxu0
      %v1432 = vadd.f32 0.0, %v1431
      %v1433 = vpop.f32.mrb[0].mxu0
      %1434 = vmatprep.mubr.bf16.mxu0 0
      %1435 = vmatmul.mubr.bf16.gmra.mrb[0].mxu0 %v1327
      %v1436 = vpop.f32.mrb[0].mxu0
      %v1437 = vadd.f32 0.0, %v1436
      %v1438 = vpop.f32.mrb[0].mxu0
      %v1439 = vpop.f32.mrb[0].mxu0
      %v1440 = vadd.f32 0.0, %v1439
      %v1441 = vpop.f32.mrb[0].mxu0
      %1442 = vmatprep.mubr.bf16.mxu0 0
      %1443 = vmatmul.mubr.bf16.gmra.mrb[0].mxu0 %v1330
      %v1444 = vpop.f32.mrb[0].mxu0
      %v1445 = vadd.f32 0.0, %v1444
      %v1446 = vpop.f32.mrb[0].mxu0
      %v1447 = vpop.f32.mrb[0].mxu0
      %v1448 = vadd.f32 0.0, %v1447
      %v1449 = vpop.f32.mrb[0].mxu0
      %1450 = vmatprep.mubr.bf16.mxu0 0
      %1451 = vmatmul.mubr.bf16.gmra.mrb[0].mxu0 %v1333
      %v1452 = vpop.f32.mrb[0].mxu0
      %v1453 = vadd.f32 0.0, %v1452
      %v1454 = vpop.f32.mrb[0].mxu0
      %v1455 = vpop.f32.mrb[0].mxu0
      %v1456 = vadd.f32 0.0, %v1455
      %v1457 = vpop.f32.mrb[0].mxu0
      %1458 = vmatprep.mubr.bf16.mxu0 0
      %1459 = vmatmul.mubr.bf16.gmra.mrb[0].mxu0 %v1336
      %v1460 = vpop.f32.mrb[0].mxu0
      %v1461 = vadd.f32 0.0, %v1460
      %v1462 = vpop.f32.mrb[0].mxu0
      %v1463 = vpop.f32.mrb[0].mxu0
      %v1464 = vadd.f32 0.0, %v1463
      %v1465 = vpop.f32.mrb[0].mxu0
      %1466 = vmatprep.mubr.bf16.mxu0 0
      %1467 = vmatmul.mubr.bf16.gmra.mrb[0].mxu0 %v1339
      %v1468 = vpop.f32.mrb[0].mxu0
      %v1469 = vadd.f32 0.0, %v1468
      %v1470 = vpop.f32.mrb[0].mxu0
      %v1471 = vpop.f32.mrb[0].mxu0
      %v1472 = vadd.f32 0.0, %v1471
      %v1473 = vpop.f32.mrb[0].mxu0
      %1474 = vmatprep.mubr.bf16.mxu0 0
      %1475 = vmatmul.mubr.bf16.gmra.mrb[0].mxu0 %v1342
      %v1476 = vpop.f32.mrb[0].mxu0
      %v1477 = vadd.f32 0.0, %v1476
      %v1478 = vpop.f32.mrb[0].mxu0
      %v1479 = vpop.f32.mrb[0].mxu0
      %v1480 = vadd.f32 0.0, %v1479
      %v1481 = vpop.f32.mrb[0].mxu0
      %1482 = vmatprep.mubr.bf16.mxu0 0
      %1483 = vmatmul.mubr.bf16.gmra.mrb[0].mxu0 %v1345
      %v1484 = vpop.f32.mrb[0].mxu0
      %v1485 = vadd.f32 0.0, %v1484
      %v1486 = vpop.f32.mrb[0].mxu0
      %v1487 = vpop.f32.mrb[0].mxu0
      %v1488 = vadd.f32 0.0, %v1487
      %v1489 = vpop.f32.mrb[0].mxu0
      %1490 = vmatprep.mubr.bf16.mxu0 0
      %1491 = vmatmul.mubr.bf16.gmra.mrb[0].mxu0 %v1348
      %v1492 = vpop.f32.mrb[0].mxu0
      %v1493 = vadd.f32 0.0, %v1492
      %v1494 = vpop.f32.mrb[0].mxu0
      %v1495 = vpop.f32.mrb[0].mxu0
      %v1496 = vadd.f32 0.0, %v1495
      %v1497 = vpop.f32.mrb[0].mxu0
      %1498 = vmatprep.mubr.bf16.mxu0 0
      %1499 = vmatmul.mubr.bf16.gmra.mrb[0].mxu0 %v1351
      %v1500 = vpop.f32.mrb[0].mxu0
      %v1501 = vadd.f32 0.0, %v1500
      %v1502 = vpop.f32.mrb[0].mxu0
      %v1503 = vpop.f32.mrb[0].mxu0
      %v1504 = vadd.f32 0.0, %v1503
      %v1505 = vpop.f32.mrb[0].mxu0
      %1506 = vmatprep.mubr.bf16.mxu0 0
      %1507 = vmatmul.mubr.bf16.gmra.mrb[0].mxu0 %v1354
      %v1508 = vpop.f32.mrb[0].mxu0
      %v1509 = vadd.f32 0.0, %v1508
      %v1510 = vpop.f32.mrb[0].mxu0
      %v1511 = vpop.f32.mrb[0].mxu0
      %v1512 = vadd.f32 0.0, %v1511
      %v1513 = vpop.f32.mrb[0].mxu0
      %1514 = vmatprep.mubr.bf16.mxu0 0
      %1515 = vmatmul.mubr.bf16.gmra.mrb[0].mxu0 %v1357
      %v1516 = vpop.f32.mrb[0].mxu0
      %v1517 = vadd.f32 0.0, %v1516
      %v1518 = vpop.f32.mrb[0].mxu0
      %v1519 = vpop.f32.mrb[0].mxu0
      %v1520 = vadd.f32 0.0, %v1519
      %v1521 = vpop.f32.mrb[0].mxu0
      %1522 = vdwg.mxu0
      %v1523 = vadd.f32 %v700, %v1397
      %v1524 = vadd.f32 %v703, %v1400
      %v1525 = vadd.f32 %v708, %v1405
      %v1526 = vadd.f32 %v711, %v1408
      %v1527 = vadd.f32 %v716, %v1413
      %v1528 = vadd.f32 %v719, %v1416
      %v1529 = vadd.f32 %v724, %v1421
      %v1530 = vadd.f32 %v727, %v1424
      %v1531 = vadd.f32 %v732, %v1429
      %v1532 = vadd.f32 %v735, %v1432
      %v1533 = vadd.f32 %v740, %v1437
      %v1534 = vadd.f32 %v743, %v1440
      %v1535 = vadd.f32 %v748, %v1445
      %v1536 = vadd.f32 %v751, %v1448
      %v1537 = vadd.f32 %v756, %v1453
      %v1538 = vadd.f32 %v759, %v1456
      %v1539 = vadd.f32 %v764, %v1461
      %v1540 = vadd.f32 %v767, %v1464
      %v1541 = vadd.f32 %v772, %v1469
      %v1542 = vadd.f32 %v775, %v1472
      %v1543 = vadd.f32 %v780, %v1477
      %v1544 = vadd.f32 %v783, %v1480
      %v1545 = vadd.f32 %v788, %v1485
      %v1546 = vadd.f32 %v791, %v1488
      %v1547 = vadd.f32 %v796, %v1493
      %v1548 = vadd.f32 %v799, %v1496
      %v1549 = vadd.f32 %v804, %v1501
      %v1550 = vadd.f32 %v807, %v1504
      %v1551 = vadd.f32 %v812, %v1509
      %v1552 = vadd.f32 %v815, %v1512
      %v1553 = vadd.f32 %v820, %v1517
      %v1554 = vadd.f32 %v823, %v1520
      %s1555 = scalar_lea.vmem %s165, 408
      %v1556 = vld [vmem:[%s1555] sm:$0xf]
      %v1557 = vld [vmem:[%s1555 + $0x4] sm:$0xf]
      %v1558 = vld [vmem:[%s1555 + $0xc] sm:$0xf]
      %v1559 = vld [vmem:[%s1555 + $0x10] sm:$0xf]
      %v1560 = vld [vmem:[%s1555 + $0x18] sm:$0xf]
      %v1561 = vld [vmem:[%s1555 + $0x1c] sm:$0xf]
      %v1562 = vld [vmem:[%s1555 + $0x24] sm:$0xf]
      %v1563 = vld [vmem:[%s1555 + $0x28] sm:$0xf]
      %v1564 = vld [vmem:[%s1555 + $0x30] sm:$0xf]
      %v1565 = vld [vmem:[%s1555 + $0x34] sm:$0xf]
      %v1566 = vld [vmem:[%s1555 + $0x3c] sm:$0xf]
      %v1567 = vld [vmem:[%s1555 + $0x40] sm:$0xf]
      %v1568 = vld [vmem:[%s1555 + $0x48] sm:$0xf]
      %v1569 = vld [vmem:[%s1555 + $0x4c] sm:$0xf]
      %v1570 = vld [vmem:[%s1555 + $0x54] sm:$0xf]
      %v1571 = vld [vmem:[%s1555 + $0x58] sm:$0xf]
      %v1572 = vld [vmem:[%s1555 + $0x60] sm:$0xf]
      %v1573 = vld [vmem:[%s1555 + $0x64] sm:$0xf]
      %v1574 = vld [vmem:[%s1555 + $0x6c] sm:$0xf]
      %v1575 = vld [vmem:[%s1555 + $0x70] sm:$0xf]
      %v1576 = vld [vmem:[%s1555 + $0x78] sm:$0xf]
      %v1577 = vld [vmem:[%s1555 + $0x7c] sm:$0xf]
      %v1578 = vld [vmem:[%s1555 + $0x84] sm:$0xf]
      %v1579 = vld [vmem:[%s1555 + $0x88] sm:$0xf]
      %v1580 = vld [vmem:[%s1555 + $0x90] sm:$0xf]
      %v1581 = vld [vmem:[%s1555 + $0x94] sm:$0xf]
      %v1582 = vld [vmem:[%s1555 + $0x9c] sm:$0xf]
      %v1583 = vld [vmem:[%s1555 + $0xa0] sm:$0xf]
      %v1584 = vld [vmem:[%s1555 + $0xa8] sm:$0xf]
      %v1585 = vld [vmem:[%s1555 + $0xac] sm:$0xf]
      %v1586 = vld [vmem:[%s1555 + $0xb4] sm:$0xf]
      %v1587 = vld [vmem:[%s1555 + $0xb8] sm:$0xf]
      %s1588 = scalar_lea.vmem %s1, 6
      %v1589 = vld [vmem:[%s1588] sm:$0x3]
      %v1622 = vunpack.c.l.b16 %v1556
      %v1623 = vunpack.c.l.b16 %v1557
      %v1624 = vunpack.c.l.b16 %v1558
      %v1625 = vunpack.c.l.b16 %v1559
      %v1626 = vunpack.c.l.b16 %v1560
      %v1627 = vunpack.c.l.b16 %v1561
      %v1628 = vunpack.c.l.b16 %v1562
      %v1629 = vunpack.c.l.b16 %v1563
      %v1630 = vunpack.c.l.b16 %v1564
      %v1631 = vunpack.c.l.b16 %v1565
      %v1632 = vunpack.c.l.b16 %v1566
      %v1633 = vunpack.c.l.b16 %v1567
      %v1634 = vunpack.c.l.b16 %v1568
      %v1635 = vunpack.c.l.b16 %v1569
      %v1636 = vunpack.c.l.b16 %v1570
      %v1637 = vunpack.c.l.b16 %v1571
      %v1638 = vunpack.c.l.b16 %v1572
      %v1639 = vunpack.c.l.b16 %v1573
      %v1640 = vunpack.c.l.b16 %v1574
      %v1641 = vunpack.c.l.b16 %v1575
      %v1642 = vunpack.c.l.b16 %v1576
      %v1643 = vunpack.c.l.b16 %v1577
      %v1644 = vunpack.c.l.b16 %v1578
      %v1645 = vunpack.c.l.b16 %v1579
      %v1646 = vunpack.c.l.b16 %v1580
      %v1647 = vunpack.c.l.b16 %v1581
      %v1648 = vunpack.c.l.b16 %v1582
      %v1649 = vunpack.c.l.b16 %v1583
      %v1650 = vunpack.c.l.b16 %v1584
      %v1651 = vunpack.c.l.b16 %v1585
      %v1652 = vunpack.c.l.b16 %v1586
      %v1653 = vunpack.c.l.b16 %v1587
      %v1654 = vpack.c.b16 %v1623, %v1622
      %v1655 = vpack.c.b16 %v1625, %v1624
      %v1656 = vpack.c.b16 %v1627, %v1626
      %v1657 = vpack.c.b16 %v1629, %v1628
      %v1658 = vpack.c.b16 %v1631, %v1630
      %v1659 = vpack.c.b16 %v1633, %v1632
      %v1660 = vpack.c.b16 %v1635, %v1634
      %v1661 = vpack.c.b16 %v1637, %v1636
      %v1662 = vpack.c.b16 %v1639, %v1638
      %v1663 = vpack.c.b16 %v1641, %v1640
      %v1664 = vpack.c.b16 %v1643, %v1642
      %v1665 = vpack.c.b16 %v1645, %v1644
      %v1666 = vpack.c.b16 %v1647, %v1646
      %v1667 = vpack.c.b16 %v1649, %v1648
      %v1668 = vpack.c.b16 %v1651, %v1650
      %v1669 = vpack.c.b16 %v1653, %v1652
      %v1671 = vsel %vm320, %v1654, 0
      %v1674 = vsel %vm320, %v1655, 0
      %v1677 = vsel %vm320, %v1656, 0
      %v1680 = vsel %vm320, %v1657, 0
      %v1683 = vsel %vm320, %v1658, 0
      %v1686 = vsel %vm320, %v1659, 0
      %v1689 = vsel %vm320, %v1660, 0
      %v1692 = vsel %vm320, %v1661, 0
      %v1695 = vsel %vm320, %v1662, 0
      %v1698 = vsel %vm320, %v1663, 0
      %v1701 = vsel %vm320, %v1664, 0
      %v1704 = vsel %vm320, %v1665, 0
      %v1707 = vsel %vm320, %v1666, 0
      %v1710 = vsel %vm320, %v1667, 0
      %v1713 = vsel %vm320, %v1668, 0
      %v1716 = vsel %vm320, %v1669, 0
      %v1719 = vsel %vm369, %v1589, 0
      %1721 = vmatprep.subr.bf16.mxu0 0
      %1722 = vmatpush1.bf16.msra.mxu0 %v1719
      %1723 = vmatprep.subr.bf16.mxu0 0
      %1724 = vmatpush1.bf16.msra.mxu0 0
      %1725 = vmatprep.subr.bf16.mxu0 0
      %1726 = vmatpush1.bf16.msra.mxu0 0
      %1727 = vmatprep.subr.bf16.mxu0 0
      %1728 = vmatpush1.bf16.msra.mxu0 0
      %1729 = vmatprep.subr.bf16.mxu0 0
      %1730 = vmatpush1.bf16.msra.mxu0 0
      %1731 = vmatprep.subr.bf16.mxu0 0
      %1732 = vmatpush1.bf16.msra.mxu0 0
      %1733 = vmatprep.subr.bf16.mxu0 0
      %1734 = vmatpush1.bf16.msra.mxu0 0
      %1735 = vmatprep.subr.bf16.mxu0 0
      %1736 = vmatpush1.bf16.msra.mxu0 0
      %1737 = vmatprep.subr.bf16.mxu0 0
      %1738 = vmatpush1.bf16.msra.mxu0 0
      %1739 = vmatprep.subr.bf16.mxu0 0
      %1740 = vmatpush1.bf16.msra.mxu0 0
      %1741 = vmatprep.subr.bf16.mxu0 0
      %1742 = vmatpush1.bf16.msra.mxu0 0
      %1743 = vmatprep.subr.bf16.mxu0 0
      %1744 = vmatpush1.bf16.msra.mxu0 0
      %1745 = vmatprep.subr.bf16.mxu0 0
      %1746 = vmatpush1.bf16.msra.mxu0 0
      %1747 = vmatprep.subr.bf16.mxu0 0
      %1748 = vmatpush1.bf16.msra.mxu0 0
      %1749 = vmatprep.subr.bf16.mxu0 0
      %1750 = vmatpush1.bf16.msra.mxu0 0
      %1751 = vmatprep.subr.bf16.mxu0 0
      %1752 = vmatpush1.bf16.msra.mxu0 0
      %1753 = vmatprep.mubr.bf16.mxu0 0
      %1754 = vmatmul.mubr.bf16.gmra.mrb[0].mxu0 %v1671
      %v1755 = vpop.f32.mrb[0].mxu0
      %v1756 = vadd.f32 0.0, %v1755
      %v1757 = vpop.f32.mrb[0].mxu0
      %v1758 = vpop.f32.mrb[0].mxu0
      %v1759 = vadd.f32 0.0, %v1758
      %v1760 = vpop.f32.mrb[0].mxu0
      %1761 = vmatprep.mubr.bf16.mxu0 0
      %1762 = vmatmul.mubr.bf16.gmra.mrb[0].mxu0 %v1674
      %v1763 = vpop.f32.mrb[0].mxu0
      %v1764 = vadd.f32 0.0, %v1763
      %v1765 = vpop.f32.mrb[0].mxu0
      %v1766 = vpop.f32.mrb[0].mxu0
      %v1767 = vadd.f32 0.0, %v1766
      %v1768 = vpop.f32.mrb[0].mxu0
      %1769 = vmatprep.mubr.bf16.mxu0 0
      %1770 = vmatmul.mubr.bf16.gmra.mrb[0].mxu0 %v1677
      %v1771 = vpop.f32.mrb[0].mxu0
      %v1772 = vadd.f32 0.0, %v1771
      %v1773 = vpop.f32.mrb[0].mxu0
      %v1774 = vpop.f32.mrb[0].mxu0
      %v1775 = vadd.f32 0.0, %v1774
      %v1776 = vpop.f32.mrb[0].mxu0
      %1777 = vmatprep.mubr.bf16.mxu0 0
      %1778 = vmatmul.mubr.bf16.gmra.mrb[0].mxu0 %v1680
      %v1779 = vpop.f32.mrb[0].mxu0
      %v1780 = vadd.f32 0.0, %v1779
      %v1781 = vpop.f32.mrb[0].mxu0
      %v1782 = vpop.f32.mrb[0].mxu0
      %v1783 = vadd.f32 0.0, %v1782
      %v1784 = vpop.f32.mrb[0].mxu0
      %1785 = vmatprep.mubr.bf16.mxu0 0
      %1786 = vmatmul.mubr.bf16.gmra.mrb[0].mxu0 %v1683
      %v1787 = vpop.f32.mrb[0].mxu0
      %v1788 = vadd.f32 0.0, %v1787
      %v1789 = vpop.f32.mrb[0].mxu0
      %v1790 = vpop.f32.mrb[0].mxu0
      %v1791 = vadd.f32 0.0, %v1790
      %v1792 = vpop.f32.mrb[0].mxu0
      %1793 = vmatprep.mubr.bf16.mxu0 0
      %1794 = vmatmul.mubr.bf16.gmra.mrb[0].mxu0 %v1686
      %v1795 = vpop.f32.mrb[0].mxu0
      %v1796 = vadd.f32 0.0, %v1795
      %v1797 = vpop.f32.mrb[0].mxu0
      %v1798 = vpop.f32.mrb[0].mxu0
      %v1799 = vadd.f32 0.0, %v1798
      %v1800 = vpop.f32.mrb[0].mxu0
      %1801 = vmatprep.mubr.bf16.mxu0 0
      %1802 = vmatmul.mubr.bf16.gmra.mrb[0].mxu0 %v1689
      %v1803 = vpop.f32.mrb[0].mxu0
      %v1804 = vadd.f32 0.0, %v1803
      %v1805 = vpop.f32.mrb[0].mxu0
      %v1806 = vpop.f32.mrb[0].mxu0
      %v1807 = vadd.f32 0.0, %v1806
      %v1808 = vpop.f32.mrb[0].mxu0
      %1809 = vmatprep.mubr.bf16.mxu0 0
      %1810 = vmatmul.mubr.bf16.gmra.mrb[0].mxu0 %v1692
      %v1811 = vpop.f32.mrb[0].mxu0
      %v1812 = vadd.f32 0.0, %v1811
      %v1813 = vpop.f32.mrb[0].mxu0
      %v1814 = vpop.f32.mrb[0].mxu0
      %v1815 = vadd.f32 0.0, %v1814
      %v1816 = vpop.f32.mrb[0].mxu0
      %1817 = vmatprep.mubr.bf16.mxu0 0
      %1818 = vmatmul.mubr.bf16.gmra.mrb[0].mxu0 %v1695
      %v1819 = vpop.f32.mrb[0].mxu0
      %v1820 = vadd.f32 0.0, %v1819
      %v1821 = vpop.f32.mrb[0].mxu0
      %v1822 = vpop.f32.mrb[0].mxu0
      %v1823 = vadd.f32 0.0, %v1822
      %v1824 = vpop.f32.mrb[0].mxu0
      %1825 = vmatprep.mubr.bf16.mxu0 0
      %1826 = vmatmul.mubr.bf16.gmra.mrb[0].mxu0 %v1698
      %v1827 = vpop.f32.mrb[0].mxu0
      %v1828 = vadd.f32 0.0, %v1827
      %v1829 = vpop.f32.mrb[0].mxu0
      %v1830 = vpop.f32.mrb[0].mxu0
      %v1831 = vadd.f32 0.0, %v1830
      %v1832 = vpop.f32.mrb[0].mxu0
      %1833 = vmatprep.mubr.bf16.mxu0 0
      %1834 = vmatmul.mubr.bf16.gmra.mrb[0].mxu0 %v1701
      %v1835 = vpop.f32.mrb[0].mxu0
      %v1836 = vadd.f32 0.0, %v1835
      %v1837 = vpop.f32.mrb[0].mxu0
      %v1838 = vpop.f32.mrb[0].mxu0
      %v1839 = vadd.f32 0.0, %v1838
      %v1840 = vpop.f32.mrb[0].mxu0
      %1841 = vmatprep.mubr.bf16.mxu0 0
      %1842 = vmatmul.mubr.bf16.gmra.mrb[0].mxu0 %v1704
      %v1843 = vpop.f32.mrb[0].mxu0
      %v1844 = vadd.f32 0.0, %v1843
      %v1845 = vpop.f32.mrb[0].mxu0
      %v1846 = vpop.f32.mrb[0].mxu0
      %v1847 = vadd.f32 0.0, %v1846
      %v1848 = vpop.f32.mrb[0].mxu0
      %1849 = vmatprep.mubr.bf16.mxu0 0
      %1850 = vmatmul.mubr.bf16.gmra.mrb[0].mxu0 %v1707
      %v1851 = vpop.f32.mrb[0].mxu0
      %v1852 = vadd.f32 0.0, %v1851
      %v1853 = vpop.f32.mrb[0].mxu0
      %v1854 = vpop.f32.mrb[0].mxu0
      %v1855 = vadd.f32 0.0, %v1854
      %v1856 = vpop.f32.mrb[0].mxu0
      %1857 = vmatprep.mubr.bf16.mxu0 0
      %1858 = vmatmul.mubr.bf16.gmra.mrb[0].mxu0 %v1710
      %v1859 = vpop.f32.mrb[0].mxu0
      %v1860 = vadd.f32 0.0, %v1859
      %v1861 = vpop.f32.mrb[0].mxu0
      %v1862 = vpop.f32.mrb[0].mxu0
      %v1863 = vadd.f32 0.0, %v1862
      %v1864 = vpop.f32.mrb[0].mxu0
      %1865 = vmatprep.mubr.bf16.mxu0 0
      %1866 = vmatmul.mubr.bf16.gmra.mrb[0].mxu0 %v1713
      %v1867 = vpop.f32.mrb[0].mxu0
      %v1868 = vadd.f32 0.0, %v1867
      %v1869 = vpop.f32.mrb[0].mxu0
      %v1870 = vpop.f32.mrb[0].mxu0
      %v1871 = vadd.f32 0.0, %v1870
      %v1872 = vpop.f32.mrb[0].mxu0
      %1873 = vmatprep.mubr.bf16.mxu0 0
      %1874 = vmatmul.mubr.bf16.gmra.mrb[0].mxu0 %v1716
      %v1875 = vpop.f32.mrb[0].mxu0
      %v1876 = vadd.f32 0.0, %v1875
      %v1877 = vpop.f32.mrb[0].mxu0
      %v1878 = vpop.f32.mrb[0].mxu0
      %v1879 = vadd.f32 0.0, %v1878
      %v1880 = vpop.f32.mrb[0].mxu0
      %1881 = vdwg.mxu0
      %v1882 = vadd.f32 %v1523, %v1756
      %v1883 = vadd.f32 %v1524, %v1759
      %v1884 = vadd.f32 %v1525, %v1764
      %v1885 = vadd.f32 %v1526, %v1767
      %v1886 = vadd.f32 %v1527, %v1772
      %v1887 = vadd.f32 %v1528, %v1775
      %v1888 = vadd.f32 %v1529, %v1780
      %v1889 = vadd.f32 %v1530, %v1783
      %v1890 = vadd.f32 %v1531, %v1788
      %v1891 = vadd.f32 %v1532, %v1791
      %v1892 = vadd.f32 %v1533, %v1796
      %v1893 = vadd.f32 %v1534, %v1799
      %v1894 = vadd.f32 %v1535, %v1804
      %v1895 = vadd.f32 %v1536, %v1807
      %v1896 = vadd.f32 %v1537, %v1812
      %v1897 = vadd.f32 %v1538, %v1815
      %v1898 = vadd.f32 %v1539, %v1820
      %v1899 = vadd.f32 %v1540, %v1823
      %v1900 = vadd.f32 %v1541, %v1828
      %v1901 = vadd.f32 %v1542, %v1831
      %v1902 = vadd.f32 %v1543, %v1836
      %v1903 = vadd.f32 %v1544, %v1839
      %v1904 = vadd.f32 %v1545, %v1844
      %v1905 = vadd.f32 %v1546, %v1847
      %v1906 = vadd.f32 %v1547, %v1852
      %v1907 = vadd.f32 %v1548, %v1855
      %v1908 = vadd.f32 %v1549, %v1860
      %v1909 = vadd.f32 %v1550, %v1863
      %v1910 = vadd.f32 %v1551, %v1868
      %v1911 = vadd.f32 %v1552, %v1871
      %v1912 = vadd.f32 %v1553, %v1876
      %v1913 = vadd.f32 %v1554, %v1879
      %s1914 = scalar_lea.vmem %s165, 612
      %v1915 = vld [vmem:[%s1914] sm:$0xf]
      %v1916 = vld [vmem:[%s1914 + $0x4] sm:$0xf]
      %v1917 = vld [vmem:[%s1914 + $0xc] sm:$0xf]
      %v1918 = vld [vmem:[%s1914 + $0x10] sm:$0xf]
      %v1919 = vld [vmem:[%s1914 + $0x18] sm:$0xf]
      %v1920 = vld [vmem:[%s1914 + $0x1c] sm:$0xf]
      %v1921 = vld [vmem:[%s1914 + $0x24] sm:$0xf]
      %v1922 = vld [vmem:[%s1914 + $0x28] sm:$0xf]
      %v1923 = vld [vmem:[%s1914 + $0x30] sm:$0xf]
      %v1924 = vld [vmem:[%s1914 + $0x34] sm:$0xf]
      %v1925 = vld [vmem:[%s1914 + $0x3c] sm:$0xf]
      %v1926 = vld [vmem:[%s1914 + $0x40] sm:$0xf]
      %v1927 = vld [vmem:[%s1914 + $0x48] sm:$0xf]
      %v1928 = vld [vmem:[%s1914 + $0x4c] sm:$0xf]
      %v1929 = vld [vmem:[%s1914 + $0x54] sm:$0xf]
      %v1930 = vld [vmem:[%s1914 + $0x58] sm:$0xf]
      %v1931 = vld [vmem:[%s1914 + $0x60] sm:$0xf]
      %v1932 = vld [vmem:[%s1914 + $0x64] sm:$0xf]
      %v1933 = vld [vmem:[%s1914 + $0x6c] sm:$0xf]
      %v1934 = vld [vmem:[%s1914 + $0x70] sm:$0xf]
      %v1935 = vld [vmem:[%s1914 + $0x78] sm:$0xf]
      %v1936 = vld [vmem:[%s1914 + $0x7c] sm:$0xf]
      %v1937 = vld [vmem:[%s1914 + $0x84] sm:$0xf]
      %v1938 = vld [vmem:[%s1914 + $0x88] sm:$0xf]
      %v1939 = vld [vmem:[%s1914 + $0x90] sm:$0xf]
      %v1940 = vld [vmem:[%s1914 + $0x94] sm:$0xf]
      %v1941 = vld [vmem:[%s1914 + $0x9c] sm:$0xf]
      %v1942 = vld [vmem:[%s1914 + $0xa0] sm:$0xf]
      %v1943 = vld [vmem:[%s1914 + $0xa8] sm:$0xf]
      %v1944 = vld [vmem:[%s1914 + $0xac] sm:$0xf]
      %v1945 = vld [vmem:[%s1914 + $0xb4] sm:$0xf]
      %v1946 = vld [vmem:[%s1914 + $0xb8] sm:$0xf]
      %s1947 = scalar_lea.vmem %s1, 8
      %v1948 = vld [vmem:[%s1947] sm:$0x3]
      %v1981 = vunpack.c.l.b16 %v1915
      %v1982 = vunpack.c.l.b16 %v1916
      %v1983 = vunpack.c.l.b16 %v1917
      %v1984 = vunpack.c.l.b16 %v1918
      %v1985 = vunpack.c.l.b16 %v1919
      %v1986 = vunpack.c.l.b16 %v1920
      %v1987 = vunpack.c.l.b16 %v1921
      %v1988 = vunpack.c.l.b16 %v1922
      %v1989 = vunpack.c.l.b16 %v1923
      %v1990 = vunpack.c.l.b16 %v1924
      %v1991 = vunpack.c.l.b16 %v1925
      %v1992 = vunpack.c.l.b16 %v1926
      %v1993 = vunpack.c.l.b16 %v1927
      %v1994 = vunpack.c.l.b16 %v1928
      %v1995 = vunpack.c.l.b16 %v1929
      %v1996 = vunpack.c.l.b16 %v1930
      %v1997 = vunpack.c.l.b16 %v1931
      %v1998 = vunpack.c.l.b16 %v1932
      %v1999 = vunpack.c.l.b16 %v1933
      %v2000 = vunpack.c.l.b16 %v1934
      %v2001 = vunpack.c.l.b16 %v1935
      %v2002 = vunpack.c.l.b16 %v1936
      %v2003 = vunpack.c.l.b16 %v1937
      %v2004 = vunpack.c.l.b16 %v1938
      %v2005 = vunpack.c.l.b16 %v1939
      %v2006 = vunpack.c.l.b16 %v1940
      %v2007 = vunpack.c.l.b16 %v1941
      %v2008 = vunpack.c.l.b16 %v1942
      %v2009 = vunpack.c.l.b16 %v1943
      %v2010 = vunpack.c.l.b16 %v1944
      %v2011 = vunpack.c.l.b16 %v1945
      %v2012 = vunpack.c.l.b16 %v1946
      %v2013 = vpack.c.b16 %v1982, %v1981
      %v2014 = vpack.c.b16 %v1984, %v1983
      %v2015 = vpack.c.b16 %v1986, %v1985
      %v2016 = vpack.c.b16 %v1988, %v1987
      %v2017 = vpack.c.b16 %v1990, %v1989
      %v2018 = vpack.c.b16 %v1992, %v1991
      %v2019 = vpack.c.b16 %v1994, %v1993
      %v2020 = vpack.c.b16 %v1996, %v1995
      %v2021 = vpack.c.b16 %v1998, %v1997
      %v2022 = vpack.c.b16 %v2000, %v1999
      %v2023 = vpack.c.b16 %v2002, %v2001
      %v2024 = vpack.c.b16 %v2004, %v2003
      %v2025 = vpack.c.b16 %v2006, %v2005
      %v2026 = vpack.c.b16 %v2008, %v2007
      %v2027 = vpack.c.b16 %v2010, %v2009
      %v2028 = vpack.c.b16 %v2012, %v2011
      %v2030 = vsel %vm320, %v2013, 0
      %v2033 = vsel %vm320, %v2014, 0
      %v2036 = vsel %vm320, %v2015, 0
      %v2039 = vsel %vm320, %v2016, 0
      %v2042 = vsel %vm320, %v2017, 0
      %v2045 = vsel %vm320, %v2018, 0
      %v2048 = vsel %vm320, %v2019, 0
      %v2051 = vsel %vm320, %v2020, 0
      %v2054 = vsel %vm320, %v2021, 0
      %v2057 = vsel %vm320, %v2022, 0
      %v2060 = vsel %vm320, %v2023, 0
      %v2063 = vsel %vm320, %v2024, 0
      %v2066 = vsel %vm320, %v2025, 0
      %v2069 = vsel %vm320, %v2026, 0
      %v2072 = vsel %vm320, %v2027, 0
      %v2075 = vsel %vm320, %v2028, 0
      %v2078 = vsel %vm369, %v1948, 0
      %2080 = vmatprep.subr.bf16.mxu0 0
      %2081 = vmatpush1.bf16.msra.mxu0 %v2078
      %2082 = vmatprep.subr.bf16.mxu0 0
      %2083 = vmatpush1.bf16.msra.mxu0 0
      %2084 = vmatprep.subr.bf16.mxu0 0
      %2085 = vmatpush1.bf16.msra.mxu0 0
      %2086 = vmatprep.subr.bf16.mxu0 0
      %2087 = vmatpush1.bf16.msra.mxu0 0
      %2088 = vmatprep.subr.bf16.mxu0 0
      %2089 = vmatpush1.bf16.msra.mxu0 0
      %2090 = vmatprep.subr.bf16.mxu0 0
      %2091 = vmatpush1.bf16.msra.mxu0 0
      %2092 = vmatprep.subr.bf16.mxu0 0
      %2093 = vmatpush1.bf16.msra.mxu0 0
      %2094 = vmatprep.subr.bf16.mxu0 0
      %2095 = vmatpush1.bf16.msra.mxu0 0
      %2096 = vmatprep.subr.bf16.mxu0 0
      %2097 = vmatpush1.bf16.msra.mxu0 0
      %2098 = vmatprep.subr.bf16.mxu0 0
      %2099 = vmatpush1.bf16.msra.mxu0 0
      %2100 = vmatprep.subr.bf16.mxu0 0
      %2101 = vmatpush1.bf16.msra.mxu0 0
      %2102 = vmatprep.subr.bf16.mxu0 0
      %2103 = vmatpush1.bf16.msra.mxu0 0
      %2104 = vmatprep.subr.bf16.mxu0 0
      %2105 = vmatpush1.bf16.msra.mxu0 0
      %2106 = vmatprep.subr.bf16.mxu0 0
      %2107 = vmatpush1.bf16.msra.mxu0 0
      %2108 = vmatprep.subr.bf16.mxu0 0
      %2109 = vmatpush1.bf16.msra.mxu0 0
      %2110 = vmatprep.subr.bf16.mxu0 0
      %2111 = vmatpush1.bf16.msra.mxu0 0
      %2112 = vmatprep.mubr.bf16.mxu0 0
      %2113 = vmatmul.mubr.bf16.gmra.mrb[0].mxu0 %v2030
      %v2114 = vpop.f32.mrb[0].mxu0
      %v2115 = vadd.f32 0.0, %v2114
      %v2116 = vpop.f32.mrb[0].mxu0
      %v2117 = vpop.f32.mrb[0].mxu0
      %v2118 = vadd.f32 0.0, %v2117
      %v2119 = vpop.f32.mrb[0].mxu0
      %2120 = vmatprep.mubr.bf16.mxu0 0
      %2121 = vmatmul.mubr.bf16.gmra.mrb[0].mxu0 %v2033
      %v2122 = vpop.f32.mrb[0].mxu0
      %v2123 = vadd.f32 0.0, %v2122
      %v2124 = vpop.f32.mrb[0].mxu0
      %v2125 = vpop.f32.mrb[0].mxu0
      %v2126 = vadd.f32 0.0, %v2125
      %v2127 = vpop.f32.mrb[0].mxu0
      %2128 = vmatprep.mubr.bf16.mxu0 0
      %2129 = vmatmul.mubr.bf16.gmra.mrb[0].mxu0 %v2036
      %v2130 = vpop.f32.mrb[0].mxu0
      %v2131 = vadd.f32 0.0, %v2130
      %v2132 = vpop.f32.mrb[0].mxu0
      %v2133 = vpop.f32.mrb[0].mxu0
      %v2134 = vadd.f32 0.0, %v2133
      %v2135 = vpop.f32.mrb[0].mxu0
      %2136 = vmatprep.mubr.bf16.mxu0 0
      %2137 = vmatmul.mubr.bf16.gmra.mrb[0].mxu0 %v2039
      %v2138 = vpop.f32.mrb[0].mxu0
      %v2139 = vadd.f32 0.0, %v2138
      %v2140 = vpop.f32.mrb[0].mxu0
      %v2141 = vpop.f32.mrb[0].mxu0
      %v2142 = vadd.f32 0.0, %v2141
      %v2143 = vpop.f32.mrb[0].mxu0
      %2144 = vmatprep.mubr.bf16.mxu0 0
      %2145 = vmatmul.mubr.bf16.gmra.mrb[0].mxu0 %v2042
      %v2146 = vpop.f32.mrb[0].mxu0
      %v2147 = vadd.f32 0.0, %v2146
      %v2148 = vpop.f32.mrb[0].mxu0
      %v2149 = vpop.f32.mrb[0].mxu0
      %v2150 = vadd.f32 0.0, %v2149
      %v2151 = vpop.f32.mrb[0].mxu0
      %2152 = vmatprep.mubr.bf16.mxu0 0
      %2153 = vmatmul.mubr.bf16.gmra.mrb[0].mxu0 %v2045
      %v2154 = vpop.f32.mrb[0].mxu0
      %v2155 = vadd.f32 0.0, %v2154
      %v2156 = vpop.f32.mrb[0].mxu0
      %v2157 = vpop.f32.mrb[0].mxu0
      %v2158 = vadd.f32 0.0, %v2157
      %v2159 = vpop.f32.mrb[0].mxu0
      %2160 = vmatprep.mubr.bf16.mxu0 0
      %2161 = vmatmul.mubr.bf16.gmra.mrb[0].mxu0 %v2048
      %v2162 = vpop.f32.mrb[0].mxu0
      %v2163 = vadd.f32 0.0, %v2162
      %v2164 = vpop.f32.mrb[0].mxu0
      %v2165 = vpop.f32.mrb[0].mxu0
      %v2166 = vadd.f32 0.0, %v2165
      %v2167 = vpop.f32.mrb[0].mxu0
      %2168 = vmatprep.mubr.bf16.mxu0 0
      %2169 = vmatmul.mubr.bf16.gmra.mrb[0].mxu0 %v2051
      %v2170 = vpop.f32.mrb[0].mxu0
      %v2171 = vadd.f32 0.0, %v2170
      %v2172 = vpop.f32.mrb[0].mxu0
      %v2173 = vpop.f32.mrb[0].mxu0
      %v2174 = vadd.f32 0.0, %v2173
      %v2175 = vpop.f32.mrb[0].mxu0
      %2176 = vmatprep.mubr.bf16.mxu0 0
      %2177 = vmatmul.mubr.bf16.gmra.mrb[0].mxu0 %v2054
      %v2178 = vpop.f32.mrb[0].mxu0
      %v2179 = vadd.f32 0.0, %v2178
      %v2180 = vpop.f32.mrb[0].mxu0
      %v2181 = vpop.f32.mrb[0].mxu0
      %v2182 = vadd.f32 0.0, %v2181
      %v2183 = vpop.f32.mrb[0].mxu0
      %2184 = vmatprep.mubr.bf16.mxu0 0
      %2185 = vmatmul.mubr.bf16.gmra.mrb[0].mxu0 %v2057
      %v2186 = vpop.f32.mrb[0].mxu0
      %v2187 = vadd.f32 0.0, %v2186
      %v2188 = vpop.f32.mrb[0].mxu0
      %v2189 = vpop.f32.mrb[0].mxu0
      %v2190 = vadd.f32 0.0, %v2189
      %v2191 = vpop.f32.mrb[0].mxu0
      %2192 = vmatprep.mubr.bf16.mxu0 0
      %2193 = vmatmul.mubr.bf16.gmra.mrb[0].mxu0 %v2060
      %v2194 = vpop.f32.mrb[0].mxu0
      %v2195 = vadd.f32 0.0, %v2194
      %v2196 = vpop.f32.mrb[0].mxu0
      %v2197 = vpop.f32.mrb[0].mxu0
      %v2198 = vadd.f32 0.0, %v2197
      %v2199 = vpop.f32.mrb[0].mxu0
      %2200 = vmatprep.mubr.bf16.mxu0 0
      %2201 = vmatmul.mubr.bf16.gmra.mrb[0].mxu0 %v2063
      %v2202 = vpop.f32.mrb[0].mxu0
      %v2203 = vadd.f32 0.0, %v2202
      %v2204 = vpop.f32.mrb[0].mxu0
      %v2205 = vpop.f32.mrb[0].mxu0
      %v2206 = vadd.f32 0.0, %v2205
      %v2207 = vpop.f32.mrb[0].mxu0
      %2208 = vmatprep.mubr.bf16.mxu0 0
      %2209 = vmatmul.mubr.bf16.gmra.mrb[0].mxu0 %v2066
      %v2210 = vpop.f32.mrb[0].mxu0
      %v2211 = vadd.f32 0.0, %v2210
      %v2212 = vpop.f32.mrb[0].mxu0
      %v2213 = vpop.f32.mrb[0].mxu0
      %v2214 = vadd.f32 0.0, %v2213
      %v2215 = vpop.f32.mrb[0].mxu0
      %2216 = vmatprep.mubr.bf16.mxu0 0
      %2217 = vmatmul.mubr.bf16.gmra.mrb[0].mxu0 %v2069
      %v2218 = vpop.f32.mrb[0].mxu0
      %v2219 = vadd.f32 0.0, %v2218
      %v2220 = vpop.f32.mrb[0].mxu0
      %v2221 = vpop.f32.mrb[0].mxu0
      %v2222 = vadd.f32 0.0, %v2221
      %v2223 = vpop.f32.mrb[0].mxu0
      %2224 = vmatprep.mubr.bf16.mxu0 0
      %2225 = vmatmul.mubr.bf16.gmra.mrb[0].mxu0 %v2072
      %v2226 = vpop.f32.mrb[0].mxu0
      %v2227 = vadd.f32 0.0, %v2226
      %v2228 = vpop.f32.mrb[0].mxu0
      %v2229 = vpop.f32.mrb[0].mxu0
      %v2230 = vadd.f32 0.0, %v2229
      %v2231 = vpop.f32.mrb[0].mxu0
      %2232 = vmatprep.mubr.bf16.mxu0 0
      %2233 = vmatmul.mubr.bf16.gmra.mrb[0].mxu0 %v2075
      %v2234 = vpop.f32.mrb[0].mxu0
      %v2235 = vadd.f32 0.0, %v2234
      %v2236 = vpop.f32.mrb[0].mxu0
      %v2237 = vpop.f32.mrb[0].mxu0
      %v2238 = vadd.f32 0.0, %v2237
      %v2239 = vpop.f32.mrb[0].mxu0
      %2240 = vdwg.mxu0
      %v2241 = vadd.f32 %v1882, %v2115
      %v2242 = vadd.f32 %v1883, %v2118
      %v2243 = vadd.f32 %v1884, %v2123
      %v2244 = vadd.f32 %v1885, %v2126
      %v2245 = vadd.f32 %v1886, %v2131
      %v2246 = vadd.f32 %v1887, %v2134
      %v2247 = vadd.f32 %v1888, %v2139
      %v2248 = vadd.f32 %v1889, %v2142
      %v2249 = vadd.f32 %v1890, %v2147
      %v2250 = vadd.f32 %v1891, %v2150
      %v2251 = vadd.f32 %v1892, %v2155
      %v2252 = vadd.f32 %v1893, %v2158
      %v2253 = vadd.f32 %v1894, %v2163
      %v2254 = vadd.f32 %v1895, %v2166
      %v2255 = vadd.f32 %v1896, %v2171
      %v2256 = vadd.f32 %v1897, %v2174
      %v2257 = vadd.f32 %v1898, %v2179
      %v2258 = vadd.f32 %v1899, %v2182
      %v2259 = vadd.f32 %v1900, %v2187
      %v2260 = vadd.f32 %v1901, %v2190
      %v2261 = vadd.f32 %v1902, %v2195
      %v2262 = vadd.f32 %v1903, %v2198
      %v2263 = vadd.f32 %v1904, %v2203
      %v2264 = vadd.f32 %v1905, %v2206
      %v2265 = vadd.f32 %v1906, %v2211
      %v2266 = vadd.f32 %v1907, %v2214
      %v2267 = vadd.f32 %v1908, %v2219
      %v2268 = vadd.f32 %v1909, %v2222
      %v2269 = vadd.f32 %v1910, %v2227
      %v2270 = vadd.f32 %v1911, %v2230
      %v2271 = vadd.f32 %v1912, %v2235
      %v2272 = vadd.f32 %v1913, %v2238
      %v2273 = vld [vmem:[%s1555] sm:$0xf]
      %v2274 = vld [vmem:[%s1555 + $0x4] sm:$0xf]
      %v2275 = vld [vmem:[%s1555 + $0x8] sm:$0x1]
      %v2276 = vld [vmem:[%s1555 + $0xc] sm:$0xf]
      %v2277 = vld [vmem:[%s1555 + $0x10] sm:$0xf]
      %v2278 = vld [vmem:[%s1555 + $0x14] sm:$0x1]
      %v2279 = vld [vmem:[%s1555 + $0x18] sm:$0xf]
      %v2280 = vld [vmem:[%s1555 + $0x1c] sm:$0xf]
      %v2281 = vld [vmem:[%s1555 + $0x20] sm:$0x1]
      %v2282 = vld [vmem:[%s1555 + $0x24] sm:$0xf]
      %v2283 = vld [vmem:[%s1555 + $0x28] sm:$0xf]
      %v2284 = vld [vmem:[%s1555 + $0x2c] sm:$0x1]
      %v2285 = vld [vmem:[%s1555 + $0x30] sm:$0xf]
      %v2286 = vld [vmem:[%s1555 + $0x34] sm:$0xf]
      %v2287 = vld [vmem:[%s1555 + $0x38] sm:$0x1]
      %v2288 = vld [vmem:[%s1555 + $0x3c] sm:$0xf]
      %v2289 = vld [vmem:[%s1555 + $0x40] sm:$0xf]
      %v2290 = vld [vmem:[%s1555 + $0x44] sm:$0x1]
      %v2291 = vld [vmem:[%s1555 + $0x48] sm:$0xf]
      %v2292 = vld [vmem:[%s1555 + $0x4c] sm:$0xf]
      %v2293 = vld [vmem:[%s1555 + $0x50] sm:$0x1]
      %v2294 = vld [vmem:[%s1555 + $0x54] sm:$0xf]
      %v2295 = vld [vmem:[%s1555 + $0x58] sm:$0xf]
      %v2296 = vld [vmem:[%s1555 + $0x5c] sm:$0x1]
      %v2297 = vld [vmem:[%s1555 + $0x60] sm:$0xf]
      %v2298 = vld [vmem:[%s1555 + $0x64] sm:$0xf]
      %v2299 = vld [vmem:[%s1555 + $0x68] sm:$0x1]
      %v2300 = vld [vmem:[%s1555 + $0x6c] sm:$0xf]
      %v2301 = vld [vmem:[%s1555 + $0x70] sm:$0xf]
      %v2302 = vld [vmem:[%s1555 + $0x74] sm:$0x1]
      %v2303 = vld [vmem:[%s1555 + $0x78] sm:$0xf]
      %v2304 = vld [vmem:[%s1555 + $0x7c] sm:$0xf]
      %v2305 = vld [vmem:[%s1555 + $0x80] sm:$0x1]
      %v2306 = vld [vmem:[%s1555 + $0x84] sm:$0xf]
      %v2307 = vld [vmem:[%s1555 + $0x88] sm:$0xf]
      %v2308 = vld [vmem:[%s1555 + $0x8c] sm:$0x1]
      %v2309 = vld [vmem:[%s1555 + $0x90] sm:$0xf]
      %v2310 = vld [vmem:[%s1555 + $0x94] sm:$0xf]
      %v2311 = vld [vmem:[%s1555 + $0x98] sm:$0x1]
      %v2312 = vld [vmem:[%s1555 + $0x9c] sm:$0xf]
      %v2313 = vld [vmem:[%s1555 + $0xa0] sm:$0xf]
      %v2314 = vld [vmem:[%s1555 + $0xa4] sm:$0x1]
      %v2315 = vld [vmem:[%s1555 + $0xa8] sm:$0xf]
      %v2316 = vld [vmem:[%s1555 + $0xac] sm:$0xf]
      %v2317 = vld [vmem:[%s1555 + $0xb0] sm:$0x1]
      %v2318 = vld [vmem:[%s1555 + $0xb4] sm:$0xf]
      %v2319 = vld [vmem:[%s1555 + $0xb8] sm:$0xf]
      %v2320 = vld [vmem:[%s1555 + $0xbc] sm:$0x1]
      %v2322 = vshrl.u32 %v2273, 16
      %v2324 = vrot.slane %v2322, 4
      %v2325 = vshll.u32 %v2273, 16
      %v2327 = vrot.slane %v2325, 5
      %v2328 = vor.u32 %v2324, %v2327
      %v2329 = vrot.slane %v2328, 4
      %v2331 = vshll.u32 %v2274, 16
      %v2333 = vrot.slane %v2331, 5
      %v2334 = vsel %vm876, %v2329, %v2333
      %v2335 = vshrl.u32 %v2274, 16
      %v2337 = vrot.slane %v2335, 4
      %v2338 = vor.u32 %v2337, %v2333
      %v2339 = vrot.slane %v2338, 4
      %v2341 = vshll.u32 %v2275, 16
      %v2343 = vrot.slane %v2341, 5
      %v2344 = vsel %vm876, %v2339, %v2343
      %v2346 = vshrl.u32 %v2276, 16
      %v2348 = vrot.slane %v2346, 4
      %v2349 = vshll.u32 %v2276, 16
      %v2351 = vrot.slane %v2349, 5
      %v2352 = vor.u32 %v2348, %v2351
      %v2353 = vrot.slane %v2352, 4
      %v2355 = vshll.u32 %v2277, 16
      %v2357 = vrot.slane %v2355, 5
      %v2358 = vsel %vm876, %v2353, %v2357
      %v2359 = vshrl.u32 %v2277, 16
      %v2361 = vrot.slane %v2359, 4
      %v2362 = vor.u32 %v2361, %v2357
      %v2363 = vrot.slane %v2362, 4
      %v2365 = vshll.u32 %v2278, 16
      %v2367 = vrot.slane %v2365, 5
      %v2368 = vsel %vm876, %v2363, %v2367
      %v2370 = vshrl.u32 %v2279, 16
      %v2372 = vrot.slane %v2370, 4
      %v2373 = vshll.u32 %v2279, 16
      %v2375 = vrot.slane %v2373, 5
      %v2376 = vor.u32 %v2372, %v2375
      %v2377 = vrot.slane %v2376, 4
      %v2379 = vshll.u32 %v2280, 16
      %v2381 = vrot.slane %v2379, 5
      %v2382 = vsel %vm876, %v2377, %v2381
      %v2383 = vshrl.u32 %v2280, 16
      %v2385 = vrot.slane %v2383, 4
      %v2386 = vor.u32 %v2385, %v2381
      %v2387 = vrot.slane %v2386, 4
      %v2389 = vshll.u32 %v2281, 16
      %v2391 = vrot.slane %v2389, 5
      %v2392 = vsel %vm876, %v2387, %v2391
      %v2394 = vshrl.u32 %v2282, 16
      %v2396 = vrot.slane %v2394, 4
      %v2397 = vshll.u32 %v2282, 16
      %v2399 = vrot.slane %v2397, 5
      %v2400 = vor.u32 %v2396, %v2399
      %v2401 = vrot.slane %v2400, 4
      %v2403 = vshll.u32 %v2283, 16
      %v2405 = vrot.slane %v2403, 5
      %v2406 = vsel %vm876, %v2401, %v2405
      %v2407 = vshrl.u32 %v2283, 16
      %v2409 = vrot.slane %v2407, 4
      %v2410 = vor.u32 %v2409, %v2405
      %v2411 = vrot.slane %v2410, 4
      %v2413 = vshll.u32 %v2284, 16
      %v2415 = vrot.slane %v2413, 5
      %v2416 = vsel %vm876, %v2411, %v2415
      %v2418 = vshrl.u32 %v2285, 16
      %v2420 = vrot.slane %v2418, 4
      %v2421 = vshll.u32 %v2285, 16
      %v2423 = vrot.slane %v2421, 5
      %v2424 = vor.u32 %v2420, %v2423
      %v2425 = vrot.slane %v2424, 4
      %v2427 = vshll.u32 %v2286, 16
      %v2429 = vrot.slane %v2427, 5
      %v2430 = vsel %vm876, %v2425, %v2429
      %v2431 = vshrl.u32 %v2286, 16
      %v2433 = vrot.slane %v2431, 4
      %v2434 = vor.u32 %v2433, %v2429
      %v2435 = vrot.slane %v2434, 4
      %v2437 = vshll.u32 %v2287, 16
      %v2439 = vrot.slane %v2437, 5
      %v2440 = vsel %vm876, %v2435, %v2439
      %v2442 = vshrl.u32 %v2288, 16
      %v2444 = vrot.slane %v2442, 4
      %v2445 = vshll.u32 %v2288, 16
      %v2447 = vrot.slane %v2445, 5
      %v2448 = vor.u32 %v2444, %v2447
      %v2449 = vrot.slane %v2448, 4
      %v2451 = vshll.u32 %v2289, 16
      %v2453 = vrot.slane %v2451, 5
      %v2454 = vsel %vm876, %v2449, %v2453
      %v2455 = vshrl.u32 %v2289, 16
      %v2457 = vrot.slane %v2455, 4
      %v2458 = vor.u32 %v2457, %v2453
      %v2459 = vrot.slane %v2458, 4
      %v2461 = vshll.u32 %v2290, 16
      %v2463 = vrot.slane %v2461, 5
      %v2464 = vsel %vm876, %v2459, %v2463
      %v2466 = vshrl.u32 %v2291, 16
      %v2468 = vrot.slane %v2466, 4
      %v2469 = vshll.u32 %v2291, 16
      %v2471 = vrot.slane %v2469, 5
      %v2472 = vor.u32 %v2468, %v2471
      %v2473 = vrot.slane %v2472, 4
      %v2475 = vshll.u32 %v2292, 16
      %v2477 = vrot.slane %v2475, 5
      %v2478 = vsel %vm876, %v2473, %v2477
      %v2479 = vshrl.u32 %v2292, 16
      %v2481 = vrot.slane %v2479, 4
      %v2482 = vor.u32 %v2481, %v2477
      %v2483 = vrot.slane %v2482, 4
      %v2485 = vshll.u32 %v2293, 16
      %v2487 = vrot.slane %v2485, 5
      %v2488 = vsel %vm876, %v2483, %v2487
      %v2490 = vshrl.u32 %v2294, 16
      %v2492 = vrot.slane %v2490, 4
      %v2493 = vshll.u32 %v2294, 16
      %v2495 = vrot.slane %v2493, 5
      %v2496 = vor.u32 %v2492, %v2495
      %v2497 = vrot.slane %v2496, 4
      %v2499 = vshll.u32 %v2295, 16
      %v2501 = vrot.slane %v2499, 5
      %v2502 = vsel %vm876, %v2497, %v2501
      %v2503 = vshrl.u32 %v2295, 16
      %v2505 = vrot.slane %v2503, 4
      %v2506 = vor.u32 %v2505, %v2501
      %v2507 = vrot.slane %v2506, 4
      %v2509 = vshll.u32 %v2296, 16
      %v2511 = vrot.slane %v2509, 5
      %v2512 = vsel %vm876, %v2507, %v2511
      %v2514 = vshrl.u32 %v2297, 16
      %v2516 = vrot.slane %v2514, 4
      %v2517 = vshll.u32 %v2297, 16
      %v2519 = vrot.slane %v2517, 5
      %v2520 = vor.u32 %v2516, %v2519
      %v2521 = vrot.slane %v2520, 4
      %v2523 = vshll.u32 %v2298, 16
      %v2525 = vrot.slane %v2523, 5
      %v2526 = vsel %vm876, %v2521, %v2525
      %v2527 = vshrl.u32 %v2298, 16
      %v2529 = vrot.slane %v2527, 4
      %v2530 = vor.u32 %v2529, %v2525
      %v2531 = vrot.slane %v2530, 4
      %v2533 = vshll.u32 %v2299, 16
      %v2535 = vrot.slane %v2533, 5
      %v2536 = vsel %vm876, %v2531, %v2535
      %v2538 = vshrl.u32 %v2300, 16
      %v2540 = vrot.slane %v2538, 4
      %v2541 = vshll.u32 %v2300, 16
      %v2543 = vrot.slane %v2541, 5
      %v2544 = vor.u32 %v2540, %v2543
      %v2545 = vrot.slane %v2544, 4
      %v2547 = vshll.u32 %v2301, 16
      %v2549 = vrot.slane %v2547, 5
      %v2550 = vsel %vm876, %v2545, %v2549
      %v2551 = vshrl.u32 %v2301, 16
      %v2553 = vrot.slane %v2551, 4
      %v2554 = vor.u32 %v2553, %v2549
      %v2555 = vrot.slane %v2554, 4
      %v2557 = vshll.u32 %v2302, 16
      %v2559 = vrot.slane %v2557, 5
      %v2560 = vsel %vm876, %v2555, %v2559
      %v2562 = vshrl.u32 %v2303, 16
      %v2564 = vrot.slane %v2562, 4
      %v2565 = vshll.u32 %v2303, 16
      %v2567 = vrot.slane %v2565, 5
      %v2568 = vor.u32 %v2564, %v2567
      %v2569 = vrot.slane %v2568, 4
      %v2571 = vshll.u32 %v2304, 16
      %v2573 = vrot.slane %v2571, 5
      %v2574 = vsel %vm876, %v2569, %v2573
      %v2575 = vshrl.u32 %v2304, 16
      %v2577 = vrot.slane %v2575, 4
      %v2578 = vor.u32 %v2577, %v2573
      %v2579 = vrot.slane %v2578, 4
      %v2581 = vshll.u32 %v2305, 16
      %v2583 = vrot.slane %v2581, 5
      %v2584 = vsel %vm876, %v2579, %v2583
      %v2586 = vshrl.u32 %v2306, 16
      %v2588 = vrot.slane %v2586, 4
      %v2589 = vshll.u32 %v2306, 16
      %v2591 = vrot.slane %v2589, 5
      %v2592 = vor.u32 %v2588, %v2591
      %v2593 = vrot.slane %v2592, 4
      %v2595 = vshll.u32 %v2307, 16
      %v2597 = vrot.slane %v2595, 5
      %v2598 = vsel %vm876, %v2593, %v2597
      %v2599 = vshrl.u32 %v2307, 16
      %v2601 = vrot.slane %v2599, 4
      %v2602 = vor.u32 %v2601, %v2597
      %v2603 = vrot.slane %v2602, 4
      %v2605 = vshll.u32 %v2308, 16
      %v2607 = vrot.slane %v2605, 5
      %v2608 = vsel %vm876, %v2603, %v2607
      %v2610 = vshrl.u32 %v2309, 16
      %v2612 = vrot.slane %v2610, 4
      %v2613 = vshll.u32 %v2309, 16
      %v2615 = vrot.slane %v2613, 5
      %v2616 = vor.u32 %v2612, %v2615
      %v2617 = vrot.slane %v2616, 4
      %v2619 = vshll.u32 %v2310, 16
      %v2621 = vrot.slane %v2619, 5
      %v2622 = vsel %vm876, %v2617, %v2621
      %v2623 = vshrl.u32 %v2310, 16
      %v2625 = vrot.slane %v2623, 4
      %v2626 = vor.u32 %v2625, %v2621
      %v2627 = vrot.slane %v2626, 4
      %v2629 = vshll.u32 %v2311, 16
      %v2631 = vrot.slane %v2629, 5
      %v2632 = vsel %vm876, %v2627, %v2631
      %v2634 = vshrl.u32 %v2312, 16
      %v2636 = vrot.slane %v2634, 4
      %v2637 = vshll.u32 %v2312, 16
      %v2639 = vrot.slane %v2637, 5
      %v2640 = vor.u32 %v2636, %v2639
      %v2641 = vrot.slane %v2640, 4
      %v2643 = vshll.u32 %v2313, 16
      %v2645 = vrot.slane %v2643, 5
      %v2646 = vsel %vm876, %v2641, %v2645
      %v2647 = vshrl.u32 %v2313, 16
      %v2649 = vrot.slane %v2647, 4
      %v2650 = vor.u32 %v2649, %v2645
      %v2651 = vrot.slane %v2650, 4
      %v2653 = vshll.u32 %v2314, 16
      %v2655 = vrot.slane %v2653, 5
      %v2656 = vsel %vm876, %v2651, %v2655
      %v2658 = vshrl.u32 %v2315, 16
      %v2660 = vrot.slane %v2658, 4
      %v2661 = vshll.u32 %v2315, 16
      %v2663 = vrot.slane %v2661, 5
      %v2664 = vor.u32 %v2660, %v2663
      %v2665 = vrot.slane %v2664, 4
      %v2667 = vshll.u32 %v2316, 16
      %v2669 = vrot.slane %v2667, 5
      %v2670 = vsel %vm876, %v2665, %v2669
      %v2671 = vshrl.u32 %v2316, 16
      %v2673 = vrot.slane %v2671, 4
      %v2674 = vor.u32 %v2673, %v2669
      %v2675 = vrot.slane %v2674, 4
      %v2677 = vshll.u32 %v2317, 16
      %v2679 = vrot.slane %v2677, 5
      %v2680 = vsel %vm876, %v2675, %v2679
      %v2682 = vshrl.u32 %v2318, 16
      %v2684 = vrot.slane %v2682, 4
      %v2685 = vshll.u32 %v2318, 16
      %v2687 = vrot.slane %v2685, 5
      %v2688 = vor.u32 %v2684, %v2687
      %v2689 = vrot.slane %v2688, 4
      %v2691 = vshll.u32 %v2319, 16
      %v2693 = vrot.slane %v2691, 5
      %v2694 = vsel %vm876, %v2689, %v2693
      %v2695 = vshrl.u32 %v2319, 16
      %v2697 = vrot.slane %v2695, 4
      %v2698 = vor.u32 %v2697, %v2693
      %v2699 = vrot.slane %v2698, 4
      %v2701 = vshll.u32 %v2320, 16
      %v2703 = vrot.slane %v2701, 5
      %v2704 = vsel %vm876, %v2699, %v2703
      %s2705 = scalar_lea.vmem %s1, 10
      %v2706 = vld [vmem:[%s2705] sm:$0x3]
      %v2707 = vunpack.c.l.b16 %v2334
      %v2708 = vunpack.c.l.b16 %v2344
      %v2709 = vunpack.c.l.b16 %v2358
      %v2710 = vunpack.c.l.b16 %v2368
      %v2711 = vunpack.c.l.b16 %v2382
      %v2712 = vunpack.c.l.b16 %v2392
      %v2713 = vunpack.c.l.b16 %v2406
      %v2714 = vunpack.c.l.b16 %v2416
      %v2715 = vunpack.c.l.b16 %v2430
      %v2716 = vunpack.c.l.b16 %v2440
      %v2717 = vunpack.c.l.b16 %v2454
      %v2718 = vunpack.c.l.b16 %v2464
      %v2719 = vunpack.c.l.b16 %v2478
      %v2720 = vunpack.c.l.b16 %v2488
      %v2721 = vunpack.c.l.b16 %v2502
      %v2722 = vunpack.c.l.b16 %v2512
      %v2723 = vunpack.c.l.b16 %v2526
      %v2724 = vunpack.c.l.b16 %v2536
      %v2725 = vunpack.c.l.b16 %v2550
      %v2726 = vunpack.c.l.b16 %v2560
      %v2727 = vunpack.c.l.b16 %v2574
      %v2728 = vunpack.c.l.b16 %v2584
      %v2729 = vunpack.c.l.b16 %v2598
      %v2730 = vunpack.c.l.b16 %v2608
      %v2731 = vunpack.c.l.b16 %v2622
      %v2732 = vunpack.c.l.b16 %v2632
      %v2733 = vunpack.c.l.b16 %v2646
      %v2734 = vunpack.c.l.b16 %v2656
      %v2735 = vunpack.c.l.b16 %v2670
      %v2736 = vunpack.c.l.b16 %v2680
      %v2737 = vunpack.c.l.b16 %v2694
      %v2738 = vunpack.c.l.b16 %v2704
      %v2739 = vpack.c.b16 %v2708, %v2707
      %v2740 = vpack.c.b16 %v2710, %v2709
      %v2741 = vpack.c.b16 %v2712, %v2711
      %v2742 = vpack.c.b16 %v2714, %v2713
      %v2743 = vpack.c.b16 %v2716, %v2715
      %v2744 = vpack.c.b16 %v2718, %v2717
      %v2745 = vpack.c.b16 %v2720, %v2719
      %v2746 = vpack.c.b16 %v2722, %v2721
      %v2747 = vpack.c.b16 %v2724, %v2723
      %v2748 = vpack.c.b16 %v2726, %v2725
      %v2749 = vpack.c.b16 %v2728, %v2727
      %v2750 = vpack.c.b16 %v2730, %v2729
      %v2751 = vpack.c.b16 %v2732, %v2731
      %v2752 = vpack.c.b16 %v2734, %v2733
      %v2753 = vpack.c.b16 %v2736, %v2735
      %v2754 = vpack.c.b16 %v2738, %v2737
      %v2756 = vsel %vm320, %v2739, 0
      %v2759 = vsel %vm320, %v2740, 0
      %v2762 = vsel %vm320, %v2741, 0
      %v2765 = vsel %vm320, %v2742, 0
      %v2768 = vsel %vm320, %v2743, 0
      %v2771 = vsel %vm320, %v2744, 0
      %v2774 = vsel %vm320, %v2745, 0
      %v2777 = vsel %vm320, %v2746, 0
      %v2780 = vsel %vm320, %v2747, 0
      %v2783 = vsel %vm320, %v2748, 0
      %v2786 = vsel %vm320, %v2749, 0
      %v2789 = vsel %vm320, %v2750, 0
      %v2792 = vsel %vm320, %v2751, 0
      %v2795 = vsel %vm320, %v2752, 0
      %v2798 = vsel %vm320, %v2753, 0
      %v2801 = vsel %vm320, %v2754, 0
      %v2804 = vsel %vm369, %v2706, 0
      %2806 = vmatprep.subr.bf16.mxu0 0
      %2807 = vmatpush1.bf16.msra.mxu0 %v2804
      %2808 = vmatprep.subr.bf16.mxu0 0
      %2809 = vmatpush1.bf16.msra.mxu0 0
      %2810 = vmatprep.subr.bf16.mxu0 0
      %2811 = vmatpush1.bf16.msra.mxu0 0
      %2812 = vmatprep.subr.bf16.mxu0 0
      %2813 = vmatpush1.bf16.msra.mxu0 0
      %2814 = vmatprep.subr.bf16.mxu0 0
      %2815 = vmatpush1.bf16.msra.mxu0 0
      %2816 = vmatprep.subr.bf16.mxu0 0
      %2817 = vmatpush1.bf16.msra.mxu0 0
      %2818 = vmatprep.subr.bf16.mxu0 0
      %2819 = vmatpush1.bf16.msra.mxu0 0
      %2820 = vmatprep.subr.bf16.mxu0 0
      %2821 = vmatpush1.bf16.msra.mxu0 0
      %2822 = vmatprep.subr.bf16.mxu0 0
      %2823 = vmatpush1.bf16.msra.mxu0 0
      %2824 = vmatprep.subr.bf16.mxu0 0
      %2825 = vmatpush1.bf16.msra.mxu0 0
      %2826 = vmatprep.subr.bf16.mxu0 0
      %2827 = vmatpush1.bf16.msra.mxu0 0
      %2828 = vmatprep.subr.bf16.mxu0 0
      %2829 = vmatpush1.bf16.msra.mxu0 0
      %2830 = vmatprep.subr.bf16.mxu0 0
      %2831 = vmatpush1.bf16.msra.mxu0 0
      %2832 = vmatprep.subr.bf16.mxu0 0
      %2833 = vmatpush1.bf16.msra.mxu0 0
      %2834 = vmatprep.subr.bf16.mxu0 0
      %2835 = vmatpush1.bf16.msra.mxu0 0
      %2836 = vmatprep.subr.bf16.mxu0 0
      %2837 = vmatpush1.bf16.msra.mxu0 0
      %2838 = vmatprep.mubr.bf16.mxu0 0
      %2839 = vmatmul.mubr.bf16.gmra.mrb[0].mxu0 %v2756
      %v2840 = vpop.f32.mrb[0].mxu0
      %v2841 = vadd.f32 0.0, %v2840
      %v2842 = vpop.f32.mrb[0].mxu0
      %v2843 = vpop.f32.mrb[0].mxu0
      %v2844 = vadd.f32 0.0, %v2843
      %v2845 = vpop.f32.mrb[0].mxu0
      %2846 = vmatprep.mubr.bf16.mxu0 0
      %2847 = vmatmul.mubr.bf16.gmra.mrb[0].mxu0 %v2759
      %v2848 = vpop.f32.mrb[0].mxu0
      %v2849 = vadd.f32 0.0, %v2848
      %v2850 = vpop.f32.mrb[0].mxu0
      %v2851 = vpop.f32.mrb[0].mxu0
      %v2852 = vadd.f32 0.0, %v2851
      %v2853 = vpop.f32.mrb[0].mxu0
      %2854 = vmatprep.mubr.bf16.mxu0 0
      %2855 = vmatmul.mubr.bf16.gmra.mrb[0].mxu0 %v2762
      %v2856 = vpop.f32.mrb[0].mxu0
      %v2857 = vadd.f32 0.0, %v2856
      %v2858 = vpop.f32.mrb[0].mxu0
      %v2859 = vpop.f32.mrb[0].mxu0
      %v2860 = vadd.f32 0.0, %v2859
      %v2861 = vpop.f32.mrb[0].mxu0
      %2862 = vmatprep.mubr.bf16.mxu0 0
      %2863 = vmatmul.mubr.bf16.gmra.mrb[0].mxu0 %v2765
      %v2864 = vpop.f32.mrb[0].mxu0
      %v2865 = vadd.f32 0.0, %v2864
      %v2866 = vpop.f32.mrb[0].mxu0
      %v2867 = vpop.f32.mrb[0].mxu0
      %v2868 = vadd.f32 0.0, %v2867
      %v2869 = vpop.f32.mrb[0].mxu0
      %2870 = vmatprep.mubr.bf16.mxu0 0
      %2871 = vmatmul.mubr.bf16.gmra.mrb[0].mxu0 %v2768
      %v2872 = vpop.f32.mrb[0].mxu0
      %v2873 = vadd.f32 0.0, %v2872
      %v2874 = vpop.f32.mrb[0].mxu0
      %v2875 = vpop.f32.mrb[0].mxu0
      %v2876 = vadd.f32 0.0, %v2875
      %v2877 = vpop.f32.mrb[0].mxu0
      %2878 = vmatprep.mubr.bf16.mxu0 0
      %2879 = vmatmul.mubr.bf16.gmra.mrb[0].mxu0 %v2771
      %v2880 = vpop.f32.mrb[0].mxu0
      %v2881 = vadd.f32 0.0, %v2880
      %v2882 = vpop.f32.mrb[0].mxu0
      %v2883 = vpop.f32.mrb[0].mxu0
      %v2884 = vadd.f32 0.0, %v2883
      %v2885 = vpop.f32.mrb[0].mxu0
      %2886 = vmatprep.mubr.bf16.mxu0 0
      %2887 = vmatmul.mubr.bf16.gmra.mrb[0].mxu0 %v2774
      %v2888 = vpop.f32.mrb[0].mxu0
      %v2889 = vadd.f32 0.0, %v2888
      %v2890 = vpop.f32.mrb[0].mxu0
      %v2891 = vpop.f32.mrb[0].mxu0
      %v2892 = vadd.f32 0.0, %v2891
      %v2893 = vpop.f32.mrb[0].mxu0
      %2894 = vmatprep.mubr.bf16.mxu0 0
      %2895 = vmatmul.mubr.bf16.gmra.mrb[0].mxu0 %v2777
      %v2896 = vpop.f32.mrb[0].mxu0
      %v2897 = vadd.f32 0.0, %v2896
      %v2898 = vpop.f32.mrb[0].mxu0
      %v2899 = vpop.f32.mrb[0].mxu0
      %v2900 = vadd.f32 0.0, %v2899
      %v2901 = vpop.f32.mrb[0].mxu0
      %2902 = vmatprep.mubr.bf16.mxu0 0
      %2903 = vmatmul.mubr.bf16.gmra.mrb[0].mxu0 %v2780
      %v2904 = vpop.f32.mrb[0].mxu0
      %v2905 = vadd.f32 0.0, %v2904
      %v2906 = vpop.f32.mrb[0].mxu0
      %v2907 = vpop.f32.mrb[0].mxu0
      %v2908 = vadd.f32 0.0, %v2907
      %v2909 = vpop.f32.mrb[0].mxu0
      %2910 = vmatprep.mubr.bf16.mxu0 0
      %2911 = vmatmul.mubr.bf16.gmra.mrb[0].mxu0 %v2783
      %v2912 = vpop.f32.mrb[0].mxu0
      %v2913 = vadd.f32 0.0, %v2912
      %v2914 = vpop.f32.mrb[0].mxu0
      %v2915 = vpop.f32.mrb[0].mxu0
      %v2916 = vadd.f32 0.0, %v2915
      %v2917 = vpop.f32.mrb[0].mxu0
      %2918 = vmatprep.mubr.bf16.mxu0 0
      %2919 = vmatmul.mubr.bf16.gmra.mrb[0].mxu0 %v2786
      %v2920 = vpop.f32.mrb[0].mxu0
      %v2921 = vadd.f32 0.0, %v2920
      %v2922 = vpop.f32.mrb[0].mxu0
      %v2923 = vpop.f32.mrb[0].mxu0
      %v2924 = vadd.f32 0.0, %v2923
      %v2925 = vpop.f32.mrb[0].mxu0
      %2926 = vmatprep.mubr.bf16.mxu0 0
      %2927 = vmatmul.mubr.bf16.gmra.mrb[0].mxu0 %v2789
      %v2928 = vpop.f32.mrb[0].mxu0
      %v2929 = vadd.f32 0.0, %v2928
      %v2930 = vpop.f32.mrb[0].mxu0
      %v2931 = vpop.f32.mrb[0].mxu0
      %v2932 = vadd.f32 0.0, %v2931
      %v2933 = vpop.f32.mrb[0].mxu0
      %2934 = vmatprep.mubr.bf16.mxu0 0
      %2935 = vmatmul.mubr.bf16.gmra.mrb[0].mxu0 %v2792
      %v2936 = vpop.f32.mrb[0].mxu0
      %v2937 = vadd.f32 0.0, %v2936
      %v2938 = vpop.f32.mrb[0].mxu0
      %v2939 = vpop.f32.mrb[0].mxu0
      %v2940 = vadd.f32 0.0, %v2939
      %v2941 = vpop.f32.mrb[0].mxu0
      %2942 = vmatprep.mubr.bf16.mxu0 0
      %2943 = vmatmul.mubr.bf16.gmra.mrb[0].mxu0 %v2795
      %v2944 = vpop.f32.mrb[0].mxu0
      %v2945 = vadd.f32 0.0, %v2944
      %v2946 = vpop.f32.mrb[0].mxu0
      %v2947 = vpop.f32.mrb[0].mxu0
      %v2948 = vadd.f32 0.0, %v2947
      %v2949 = vpop.f32.mrb[0].mxu0
      %2950 = vmatprep.mubr.bf16.mxu0 0
      %2951 = vmatmul.mubr.bf16.gmra.mrb[0].mxu0 %v2798
      %v2952 = vpop.f32.mrb[0].mxu0
      %v2953 = vadd.f32 0.0, %v2952
      %v2954 = vpop.f32.mrb[0].mxu0
      %v2955 = vpop.f32.mrb[0].mxu0
      %v2956 = vadd.f32 0.0, %v2955
      %v2957 = vpop.f32.mrb[0].mxu0
      %2958 = vmatprep.mubr.bf16.mxu0 0
      %2959 = vmatmul.mubr.bf16.gmra.mrb[0].mxu0 %v2801
      %v2960 = vpop.f32.mrb[0].mxu0
      %v2961 = vadd.f32 0.0, %v2960
      %v2962 = vpop.f32.mrb[0].mxu0
      %v2963 = vpop.f32.mrb[0].mxu0
      %v2964 = vadd.f32 0.0, %v2963
      %v2965 = vpop.f32.mrb[0].mxu0
      %2966 = vdwg.mxu0
      %v2967 = vadd.f32 %v2241, %v2841
      %v2968 = vadd.f32 %v2242, %v2844
      %v2969 = vadd.f32 %v2243, %v2849
      %v2970 = vadd.f32 %v2244, %v2852
      %v2971 = vadd.f32 %v2245, %v2857
      %v2972 = vadd.f32 %v2246, %v2860
      %v2973 = vadd.f32 %v2247, %v2865
      %v2974 = vadd.f32 %v2248, %v2868
      %v2975 = vadd.f32 %v2249, %v2873
      %v2976 = vadd.f32 %v2250, %v2876
      %v2977 = vadd.f32 %v2251, %v2881
      %v2978 = vadd.f32 %v2252, %v2884
      %v2979 = vadd.f32 %v2253, %v2889
      %v2980 = vadd.f32 %v2254, %v2892
      %v2981 = vadd.f32 %v2255, %v2897
      %v2982 = vadd.f32 %v2256, %v2900
      %v2983 = vadd.f32 %v2257, %v2905
      %v2984 = vadd.f32 %v2258, %v2908
      %v2985 = vadd.f32 %v2259, %v2913
      %v2986 = vadd.f32 %v2260, %v2916
      %v2987 = vadd.f32 %v2261, %v2921
      %v2988 = vadd.f32 %v2262, %v2924
      %v2989 = vadd.f32 %v2263, %v2929
      %v2990 = vadd.f32 %v2264, %v2932
      %v2991 = vadd.f32 %v2265, %v2937
      %v2992 = vadd.f32 %v2266, %v2940
      %v2993 = vadd.f32 %v2267, %v2945
      %v2994 = vadd.f32 %v2268, %v2948
      %v2995 = vadd.f32 %v2269, %v2953
      %v2996 = vadd.f32 %v2270, %v2956
      %v2997 = vadd.f32 %v2271, %v2961
      %v2998 = vadd.f32 %v2272, %v2964
      %s2999 = scalar_lea.vmem %s165, 12
      %v3000 = vld [vmem:[%s2999] sm:$0xf]
      %v3001 = vld [vmem:[%s2999 + $0x4] sm:$0xf]
      %v3002 = vld [vmem:[%s2999 + $0xc] sm:$0xf]
      %v3003 = vld [vmem:[%s2999 + $0x10] sm:$0xf]
      %v3004 = vld [vmem:[%s2999 + $0x18] sm:$0xf]
      %v3005 = vld [vmem:[%s2999 + $0x1c] sm:$0xf]
      %v3006 = vld [vmem:[%s2999 + $0x24] sm:$0xf]
      %v3007 = vld [vmem:[%s2999 + $0x28] sm:$0xf]
      %v3008 = vld [vmem:[%s2999 + $0x30] sm:$0xf]
      %v3009 = vld [vmem:[%s2999 + $0x34] sm:$0xf]
      %v3010 = vld [vmem:[%s2999 + $0x3c] sm:$0xf]
      %v3011 = vld [vmem:[%s2999 + $0x40] sm:$0xf]
      %v3012 = vld [vmem:[%s2999 + $0x48] sm:$0xf]
      %v3013 = vld [vmem:[%s2999 + $0x4c] sm:$0xf]
      %v3014 = vld [vmem:[%s2999 + $0x54] sm:$0xf]
      %v3015 = vld [vmem:[%s2999 + $0x58] sm:$0xf]
      %v3016 = vld [vmem:[%s2999 + $0x60] sm:$0xf]
      %v3017 = vld [vmem:[%s2999 + $0x64] sm:$0xf]
      %v3018 = vld [vmem:[%s2999 + $0x6c] sm:$0xf]
      %v3019 = vld [vmem:[%s2999 + $0x70] sm:$0xf]
      %v3020 = vld [vmem:[%s2999 + $0x78] sm:$0xf]
      %v3021 = vld [vmem:[%s2999 + $0x7c] sm:$0xf]
      %v3022 = vld [vmem:[%s2999 + $0x84] sm:$0xf]
      %v3023 = vld [vmem:[%s2999 + $0x88] sm:$0xf]
      %v3024 = vld [vmem:[%s2999 + $0x90] sm:$0xf]
      %v3025 = vld [vmem:[%s2999 + $0x94] sm:$0xf]
      %v3026 = vld [vmem:[%s2999 + $0x9c] sm:$0xf]
      %v3027 = vld [vmem:[%s2999 + $0xa0] sm:$0xf]
      %v3028 = vld [vmem:[%s2999 + $0xa8] sm:$0xf]
      %v3029 = vld [vmem:[%s2999 + $0xac] sm:$0xf]
      %v3030 = vld [vmem:[%s2999 + $0xb4] sm:$0xf]
      %v3031 = vld [vmem:[%s2999 + $0xb8] sm:$0xf]
      %s3032 = scalar_lea.vmem %s1, 12
      %v3033 = vld [vmem:[%s3032] sm:$0x3]
      %v3066 = vunpack.c.l.b16 %v3000
      %v3067 = vunpack.c.l.b16 %v3001
      %v3068 = vunpack.c.l.b16 %v3002
      %v3069 = vunpack.c.l.b16 %v3003
      %v3070 = vunpack.c.l.b16 %v3004
      %v3071 = vunpack.c.l.b16 %v3005
      %v3072 = vunpack.c.l.b16 %v3006
      %v3073 = vunpack.c.l.b16 %v3007
      %v3074 = vunpack.c.l.b16 %v3008
      %v3075 = vunpack.c.l.b16 %v3009
      %v3076 = vunpack.c.l.b16 %v3010
      %v3077 = vunpack.c.l.b16 %v3011
      %v3078 = vunpack.c.l.b16 %v3012
      %v3079 = vunpack.c.l.b16 %v3013
      %v3080 = vunpack.c.l.b16 %v3014
      %v3081 = vunpack.c.l.b16 %v3015
      %v3082 = vunpack.c.l.b16 %v3016
      %v3083 = vunpack.c.l.b16 %v3017
      %v3084 = vunpack.c.l.b16 %v3018
      %v3085 = vunpack.c.l.b16 %v3019
      %v3086 = vunpack.c.l.b16 %v3020
      %v3087 = vunpack.c.l.b16 %v3021
      %v3088 = vunpack.c.l.b16 %v3022
      %v3089 = vunpack.c.l.b16 %v3023
      %v3090 = vunpack.c.l.b16 %v3024
      %v3091 = vunpack.c.l.b16 %v3025
      %v3092 = vunpack.c.l.b16 %v3026
      %v3093 = vunpack.c.l.b16 %v3027
      %v3094 = vunpack.c.l.b16 %v3028
      %v3095 = vunpack.c.l.b16 %v3029
      %v3096 = vunpack.c.l.b16 %v3030
      %v3097 = vunpack.c.l.b16 %v3031
      %v3098 = vpack.c.b16 %v3067, %v3066
      %v3099 = vpack.c.b16 %v3069, %v3068
      %v3100 = vpack.c.b16 %v3071, %v3070
      %v3101 = vpack.c.b16 %v3073, %v3072
      %v3102 = vpack.c.b16 %v3075, %v3074
      %v3103 = vpack.c.b16 %v3077, %v3076
      %v3104 = vpack.c.b16 %v3079, %v3078
      %v3105 = vpack.c.b16 %v3081, %v3080
      %v3106 = vpack.c.b16 %v3083, %v3082
      %v3107 = vpack.c.b16 %v3085, %v3084
      %v3108 = vpack.c.b16 %v3087, %v3086
      %v3109 = vpack.c.b16 %v3089, %v3088
      %v3110 = vpack.c.b16 %v3091, %v3090
      %v3111 = vpack.c.b16 %v3093, %v3092
      %v3112 = vpack.c.b16 %v3095, %v3094
      %v3113 = vpack.c.b16 %v3097, %v3096
      %v3115 = vsel %vm320, %v3098, 0
      %v3118 = vsel %vm320, %v3099, 0
      %v3121 = vsel %vm320, %v3100, 0
      %v3124 = vsel %vm320, %v3101, 0
      %v3127 = vsel %vm320, %v3102, 0
      %v3130 = vsel %vm320, %v3103, 0
      %v3133 = vsel %vm320, %v3104, 0
      %v3136 = vsel %vm320, %v3105, 0
      %v3139 = vsel %vm320, %v3106, 0
      %v3142 = vsel %vm320, %v3107, 0
      %v3145 = vsel %vm320, %v3108, 0
      %v3148 = vsel %vm320, %v3109, 0
      %v3151 = vsel %vm320, %v3110, 0
      %v3154 = vsel %vm320, %v3111, 0
      %v3157 = vsel %vm320, %v3112, 0
      %v3160 = vsel %vm320, %v3113, 0
      %v3163 = vsel %vm369, %v3033, 0
      %3165 = vmatprep.subr.bf16.mxu0 0
      %3166 = vmatpush1.bf16.msra.mxu0 %v3163
      %3167 = vmatprep.subr.bf16.mxu0 0
      %3168 = vmatpush1.bf16.msra.mxu0 0
      %3169 = vmatprep.subr.bf16.mxu0 0
      %3170 = vmatpush1.bf16.msra.mxu0 0
      %3171 = vmatprep.subr.bf16.mxu0 0
      %3172 = vmatpush1.bf16.msra.mxu0 0
      %3173 = vmatprep.subr.bf16.mxu0 0
      %3174 = vmatpush1.bf16.msra.mxu0 0
      %3175 = vmatprep.subr.bf16.mxu0 0
      %3176 = vmatpush1.bf16.msra.mxu0 0
      %3177 = vmatprep.subr.bf16.mxu0 0
      %3178 = vmatpush1.bf16.msra.mxu0 0
      %3179 = vmatprep.subr.bf16.mxu0 0
      %3180 = vmatpush1.bf16.msra.mxu0 0
      %3181 = vmatprep.subr.bf16.mxu0 0
      %3182 = vmatpush1.bf16.msra.mxu0 0
      %3183 = vmatprep.subr.bf16.mxu0 0
      %3184 = vmatpush1.bf16.msra.mxu0 0
      %3185 = vmatprep.subr.bf16.mxu0 0
      %3186 = vmatpush1.bf16.msra.mxu0 0
      %3187 = vmatprep.subr.bf16.mxu0 0
      %3188 = vmatpush1.bf16.msra.mxu0 0
      %3189 = vmatprep.subr.bf16.mxu0 0
      %3190 = vmatpush1.bf16.msra.mxu0 0
      %3191 = vmatprep.subr.bf16.mxu0 0
      %3192 = vmatpush1.bf16.msra.mxu0 0
      %3193 = vmatprep.subr.bf16.mxu0 0
      %3194 = vmatpush1.bf16.msra.mxu0 0
      %3195 = vmatprep.subr.bf16.mxu0 0
      %3196 = vmatpush1.bf16.msra.mxu0 0
      %3197 = vmatprep.mubr.bf16.mxu0 0
      %3198 = vmatmul.mubr.bf16.gmra.mrb[0].mxu0 %v3115
      %v3199 = vpop.f32.mrb[0].mxu0
      %v3200 = vadd.f32 0.0, %v3199
      %v3201 = vpop.f32.mrb[0].mxu0
      %v3202 = vpop.f32.mrb[0].mxu0
      %v3203 = vadd.f32 0.0, %v3202
      %v3204 = vpop.f32.mrb[0].mxu0
      %3205 = vmatprep.mubr.bf16.mxu0 0
      %3206 = vmatmul.mubr.bf16.gmra.mrb[0].mxu0 %v3118
      %v3207 = vpop.f32.mrb[0].mxu0
      %v3208 = vadd.f32 0.0, %v3207
      %v3209 = vpop.f32.mrb[0].mxu0
      %v3210 = vpop.f32.mrb[0].mxu0
      %v3211 = vadd.f32 0.0, %v3210
      %v3212 = vpop.f32.mrb[0].mxu0
      %3213 = vmatprep.mubr.bf16.mxu0 0
      %3214 = vmatmul.mubr.bf16.gmra.mrb[0].mxu0 %v3121
      %v3215 = vpop.f32.mrb[0].mxu0
      %v3216 = vadd.f32 0.0, %v3215
      %v3217 = vpop.f32.mrb[0].mxu0
      %v3218 = vpop.f32.mrb[0].mxu0
      %v3219 = vadd.f32 0.0, %v3218
      %v3220 = vpop.f32.mrb[0].mxu0
      %3221 = vmatprep.mubr.bf16.mxu0 0
      %3222 = vmatmul.mubr.bf16.gmra.mrb[0].mxu0 %v3124
      %v3223 = vpop.f32.mrb[0].mxu0
      %v3224 = vadd.f32 0.0, %v3223
      %v3225 = vpop.f32.mrb[0].mxu0
      %v3226 = vpop.f32.mrb[0].mxu0
      %v3227 = vadd.f32 0.0, %v3226
      %v3228 = vpop.f32.mrb[0].mxu0
      %3229 = vmatprep.mubr.bf16.mxu0 0
      %3230 = vmatmul.mubr.bf16.gmra.mrb[0].mxu0 %v3127
      %v3231 = vpop.f32.mrb[0].mxu0
      %v3232 = vadd.f32 0.0, %v3231
      %v3233 = vpop.f32.mrb[0].mxu0
      %v3234 = vpop.f32.mrb[0].mxu0
      %v3235 = vadd.f32 0.0, %v3234
      %v3236 = vpop.f32.mrb[0].mxu0
      %3237 = vmatprep.mubr.bf16.mxu0 0
      %3238 = vmatmul.mubr.bf16.gmra.mrb[0].mxu0 %v3130
      %v3239 = vpop.f32.mrb[0].mxu0
      %v3240 = vadd.f32 0.0, %v3239
      %v3241 = vpop.f32.mrb[0].mxu0
      %v3242 = vpop.f32.mrb[0].mxu0
      %v3243 = vadd.f32 0.0, %v3242
      %v3244 = vpop.f32.mrb[0].mxu0
      %3245 = vmatprep.mubr.bf16.mxu0 0
      %3246 = vmatmul.mubr.bf16.gmra.mrb[0].mxu0 %v3133
      %v3247 = vpop.f32.mrb[0].mxu0
      %v3248 = vadd.f32 0.0, %v3247
      %v3249 = vpop.f32.mrb[0].mxu0
      %v3250 = vpop.f32.mrb[0].mxu0
      %v3251 = vadd.f32 0.0, %v3250
      %v3252 = vpop.f32.mrb[0].mxu0
      %3253 = vmatprep.mubr.bf16.mxu0 0
      %3254 = vmatmul.mubr.bf16.gmra.mrb[0].mxu0 %v3136
      %v3255 = vpop.f32.mrb[0].mxu0
      %v3256 = vadd.f32 0.0, %v3255
      %v3257 = vpop.f32.mrb[0].mxu0
      %v3258 = vpop.f32.mrb[0].mxu0
      %v3259 = vadd.f32 0.0, %v3258
      %v3260 = vpop.f32.mrb[0].mxu0
      %3261 = vmatprep.mubr.bf16.mxu0 0
      %3262 = vmatmul.mubr.bf16.gmra.mrb[0].mxu0 %v3139
      %v3263 = vpop.f32.mrb[0].mxu0
      %v3264 = vadd.f32 0.0, %v3263
      %v3265 = vpop.f32.mrb[0].mxu0
      %v3266 = vpop.f32.mrb[0].mxu0
      %v3267 = vadd.f32 0.0, %v3266
      %v3268 = vpop.f32.mrb[0].mxu0
      %3269 = vmatprep.mubr.bf16.mxu0 0
      %3270 = vmatmul.mubr.bf16.gmra.mrb[0].mxu0 %v3142
      %v3271 = vpop.f32.mrb[0].mxu0
      %v3272 = vadd.f32 0.0, %v3271
      %v3273 = vpop.f32.mrb[0].mxu0
      %v3274 = vpop.f32.mrb[0].mxu0
      %v3275 = vadd.f32 0.0, %v3274
      %v3276 = vpop.f32.mrb[0].mxu0
      %3277 = vmatprep.mubr.bf16.mxu0 0
      %3278 = vmatmul.mubr.bf16.gmra.mrb[0].mxu0 %v3145
      %v3279 = vpop.f32.mrb[0].mxu0
      %v3280 = vadd.f32 0.0, %v3279
      %v3281 = vpop.f32.mrb[0].mxu0
      %v3282 = vpop.f32.mrb[0].mxu0
      %v3283 = vadd.f32 0.0, %v3282
      %v3284 = vpop.f32.mrb[0].mxu0
      %3285 = vmatprep.mubr.bf16.mxu0 0
      %3286 = vmatmul.mubr.bf16.gmra.mrb[0].mxu0 %v3148
      %v3287 = vpop.f32.mrb[0].mxu0
      %v3288 = vadd.f32 0.0, %v3287
      %v3289 = vpop.f32.mrb[0].mxu0
      %v3290 = vpop.f32.mrb[0].mxu0
      %v3291 = vadd.f32 0.0, %v3290
      %v3292 = vpop.f32.mrb[0].mxu0
      %3293 = vmatprep.mubr.bf16.mxu0 0
      %3294 = vmatmul.mubr.bf16.gmra.mrb[0].mxu0 %v3151
      %v3295 = vpop.f32.mrb[0].mxu0
      %v3296 = vadd.f32 0.0, %v3295
      %v3297 = vpop.f32.mrb[0].mxu0
      %v3298 = vpop.f32.mrb[0].mxu0
      %v3299 = vadd.f32 0.0, %v3298
      %v3300 = vpop.f32.mrb[0].mxu0
      %3301 = vmatprep.mubr.bf16.mxu0 0
      %3302 = vmatmul.mubr.bf16.gmra.mrb[0].mxu0 %v3154
      %v3303 = vpop.f32.mrb[0].mxu0
      %v3304 = vadd.f32 0.0, %v3303
      %v3305 = vpop.f32.mrb[0].mxu0
      %v3306 = vpop.f32.mrb[0].mxu0
      %v3307 = vadd.f32 0.0, %v3306
      %v3308 = vpop.f32.mrb[0].mxu0
      %3309 = vmatprep.mubr.bf16.mxu0 0
      %3310 = vmatmul.mubr.bf16.gmra.mrb[0].mxu0 %v3157
      %v3311 = vpop.f32.mrb[0].mxu0
      %v3312 = vadd.f32 0.0, %v3311
      %v3313 = vpop.f32.mrb[0].mxu0
      %v3314 = vpop.f32.mrb[0].mxu0
      %v3315 = vadd.f32 0.0, %v3314
      %v3316 = vpop.f32.mrb[0].mxu0
      %3317 = vmatprep.mubr.bf16.mxu0 0
      %3318 = vmatmul.mubr.bf16.gmra.mrb[0].mxu0 %v3160
      %v3319 = vpop.f32.mrb[0].mxu0
      %v3320 = vadd.f32 0.0, %v3319
      %v3321 = vpop.f32.mrb[0].mxu0
      %v3322 = vpop.f32.mrb[0].mxu0
      %v3323 = vadd.f32 0.0, %v3322
      %v3324 = vpop.f32.mrb[0].mxu0
      %3325 = vdwg.mxu0
      %v3326 = vadd.f32 %v2967, %v3200
      %v3327 = vadd.f32 %v2968, %v3203
      %v3328 = vadd.f32 %v2969, %v3208
      %v3329 = vadd.f32 %v2970, %v3211
      %v3330 = vadd.f32 %v2971, %v3216
      %v3331 = vadd.f32 %v2972, %v3219
      %v3332 = vadd.f32 %v2973, %v3224
      %v3333 = vadd.f32 %v2974, %v3227
      %v3334 = vadd.f32 %v2975, %v3232
      %v3335 = vadd.f32 %v2976, %v3235
      %v3336 = vadd.f32 %v2977, %v3240
      %v3337 = vadd.f32 %v2978, %v3243
      %v3338 = vadd.f32 %v2979, %v3248
      %v3339 = vadd.f32 %v2980, %v3251
      %v3340 = vadd.f32 %v2981, %v3256
      %v3341 = vadd.f32 %v2982, %v3259
      %v3342 = vadd.f32 %v2983, %v3264
      %v3343 = vadd.f32 %v2984, %v3267
      %v3344 = vadd.f32 %v2985, %v3272
      %v3345 = vadd.f32 %v2986, %v3275
      %v3346 = vadd.f32 %v2987, %v3280
      %v3347 = vadd.f32 %v2988, %v3283
      %v3348 = vadd.f32 %v2989, %v3288
      %v3349 = vadd.f32 %v2990, %v3291
      %v3350 = vadd.f32 %v2991, %v3296
      %v3351 = vadd.f32 %v2992, %v3299
      %v3352 = vadd.f32 %v2993, %v3304
      %v3353 = vadd.f32 %v2994, %v3307
      %v3354 = vadd.f32 %v2995, %v3312
      %v3355 = vadd.f32 %v2996, %v3315
      %v3356 = vadd.f32 %v2997, %v3320
      %v3357 = vadd.f32 %v2998, %v3323
      %s3358 = scalar_lea.vmem %s165, 216
      %v3359 = vld [vmem:[%s3358] sm:$0xf]
      %v3360 = vld [vmem:[%s3358 + $0x4] sm:$0xf]
      %v3361 = vld [vmem:[%s3358 + $0xc] sm:$0xf]
      %v3362 = vld [vmem:[%s3358 + $0x10] sm:$0xf]
      %v3363 = vld [vmem:[%s3358 + $0x18] sm:$0xf]
      %v3364 = vld [vmem:[%s3358 + $0x1c] sm:$0xf]
      %v3365 = vld [vmem:[%s3358 + $0x24] sm:$0xf]
      %v3366 = vld [vmem:[%s3358 + $0x28] sm:$0xf]
      %v3367 = vld [vmem:[%s3358 + $0x30] sm:$0xf]
      %v3368 = vld [vmem:[%s3358 + $0x34] sm:$0xf]
      %v3369 = vld [vmem:[%s3358 + $0x3c] sm:$0xf]
      %v3370 = vld [vmem:[%s3358 + $0x40] sm:$0xf]
      %v3371 = vld [vmem:[%s3358 + $0x48] sm:$0xf]
      %v3372 = vld [vmem:[%s3358 + $0x4c] sm:$0xf]
      %v3373 = vld [vmem:[%s3358 + $0x54] sm:$0xf]
      %v3374 = vld [vmem:[%s3358 + $0x58] sm:$0xf]
      %v3375 = vld [vmem:[%s3358 + $0x60] sm:$0xf]
      %v3376 = vld [vmem:[%s3358 + $0x64] sm:$0xf]
      %v3377 = vld [vmem:[%s3358 + $0x6c] sm:$0xf]
      %v3378 = vld [vmem:[%s3358 + $0x70] sm:$0xf]
      %v3379 = vld [vmem:[%s3358 + $0x78] sm:$0xf]
      %v3380 = vld [vmem:[%s3358 + $0x7c] sm:$0xf]
      %v3381 = vld [vmem:[%s3358 + $0x84] sm:$0xf]
      %v3382 = vld [vmem:[%s3358 + $0x88] sm:$0xf]
      %v3383 = vld [vmem:[%s3358 + $0x90] sm:$0xf]
      %v3384 = vld [vmem:[%s3358 + $0x94] sm:$0xf]
      %v3385 = vld [vmem:[%s3358 + $0x9c] sm:$0xf]
      %v3386 = vld [vmem:[%s3358 + $0xa0] sm:$0xf]
      %v3387 = vld [vmem:[%s3358 + $0xa8] sm:$0xf]
      %v3388 = vld [vmem:[%s3358 + $0xac] sm:$0xf]
      %v3389 = vld [vmem:[%s3358 + $0xb4] sm:$0xf]
      %v3390 = vld [vmem:[%s3358 + $0xb8] sm:$0xf]
      %s3391 = scalar_lea.vmem %s1, 14
      %v3392 = vld [vmem:[%s3391] sm:$0x3]
      %v3425 = vunpack.c.l.b16 %v3359
      %v3426 = vunpack.c.l.b16 %v3360
      %v3427 = vunpack.c.l.b16 %v3361
      %v3428 = vunpack.c.l.b16 %v3362
      %v3429 = vunpack.c.l.b16 %v3363
      %v3430 = vunpack.c.l.b16 %v3364
      %v3431 = vunpack.c.l.b16 %v3365
      %v3432 = vunpack.c.l.b16 %v3366
      %v3433 = vunpack.c.l.b16 %v3367
      %v3434 = vunpack.c.l.b16 %v3368
      %v3435 = vunpack.c.l.b16 %v3369
      %v3436 = vunpack.c.l.b16 %v3370
      %v3437 = vunpack.c.l.b16 %v3371
      %v3438 = vunpack.c.l.b16 %v3372
      %v3439 = vunpack.c.l.b16 %v3373
      %v3440 = vunpack.c.l.b16 %v3374
      %v3441 = vunpack.c.l.b16 %v3375
      %v3442 = vunpack.c.l.b16 %v3376
      %v3443 = vunpack.c.l.b16 %v3377
      %v3444 = vunpack.c.l.b16 %v3378
      %v3445 = vunpack.c.l.b16 %v3379
      %v3446 = vunpack.c.l.b16 %v3380
      %v3447 = vunpack.c.l.b16 %v3381
      %v3448 = vunpack.c.l.b16 %v3382
      %v3449 = vunpack.c.l.b16 %v3383
      %v3450 = vunpack.c.l.b16 %v3384
      %v3451 = vunpack.c.l.b16 %v3385
      %v3452 = vunpack.c.l.b16 %v3386
      %v3453 = vunpack.c.l.b16 %v3387
      %v3454 = vunpack.c.l.b16 %v3388
      %v3455 = vunpack.c.l.b16 %v3389
      %v3456 = vunpack.c.l.b16 %v3390
      %v3457 = vpack.c.b16 %v3426, %v3425
      %v3458 = vpack.c.b16 %v3428, %v3427
      %v3459 = vpack.c.b16 %v3430, %v3429
      %v3460 = vpack.c.b16 %v3432, %v3431
      %v3461 = vpack.c.b16 %v3434, %v3433
      %v3462 = vpack.c.b16 %v3436, %v3435
      %v3463 = vpack.c.b16 %v3438, %v3437
      %v3464 = vpack.c.b16 %v3440, %v3439
      %v3465 = vpack.c.b16 %v3442, %v3441
      %v3466 = vpack.c.b16 %v3444, %v3443
      %v3467 = vpack.c.b16 %v3446, %v3445
      %v3468 = vpack.c.b16 %v3448, %v3447
      %v3469 = vpack.c.b16 %v3450, %v3449
      %v3470 = vpack.c.b16 %v3452, %v3451
      %v3471 = vpack.c.b16 %v3454, %v3453
      %v3472 = vpack.c.b16 %v3456, %v3455
      %v3474 = vsel %vm320, %v3457, 0
      %v3477 = vsel %vm320, %v3458, 0
      %v3480 = vsel %vm320, %v3459, 0
      %v3483 = vsel %vm320, %v3460, 0
      %v3486 = vsel %vm320, %v3461, 0
      %v3489 = vsel %vm320, %v3462, 0
      %v3492 = vsel %vm320, %v3463, 0
      %v3495 = vsel %vm320, %v3464, 0
      %v3498 = vsel %vm320, %v3465, 0
      %v3501 = vsel %vm320, %v3466, 0
      %v3504 = vsel %vm320, %v3467, 0
      %v3507 = vsel %vm320, %v3468, 0
      %v3510 = vsel %vm320, %v3469, 0
      %v3513 = vsel %vm320, %v3470, 0
      %v3516 = vsel %vm320, %v3471, 0
      %v3519 = vsel %vm320, %v3472, 0
      %v3522 = vsel %vm369, %v3392, 0
      %3524 = vmatprep.subr.bf16.mxu0 0
      %3525 = vmatpush1.bf16.msra.mxu0 %v3522
      %3526 = vmatprep.subr.bf16.mxu0 0
      %3527 = vmatpush1.bf16.msra.mxu0 0
      %3528 = vmatprep.subr.bf16.mxu0 0
      %3529 = vmatpush1.bf16.msra.mxu0 0
      %3530 = vmatprep.subr.bf16.mxu0 0
      %3531 = vmatpush1.bf16.msra.mxu0 0
      %3532 = vmatprep.subr.bf16.mxu0 0
      %3533 = vmatpush1.bf16.msra.mxu0 0
      %3534 = vmatprep.subr.bf16.mxu0 0
      %3535 = vmatpush1.bf16.msra.mxu0 0
      %3536 = vmatprep.subr.bf16.mxu0 0
      %3537 = vmatpush1.bf16.msra.mxu0 0
      %3538 = vmatprep.subr.bf16.mxu0 0
      %3539 = vmatpush1.bf16.msra.mxu0 0
      %3540 = vmatprep.subr.bf16.mxu0 0
      %3541 = vmatpush1.bf16.msra.mxu0 0
      %3542 = vmatprep.subr.bf16.mxu0 0
      %3543 = vmatpush1.bf16.msra.mxu0 0
      %3544 = vmatprep.subr.bf16.mxu0 0
      %3545 = vmatpush1.bf16.msra.mxu0 0
      %3546 = vmatprep.subr.bf16.mxu0 0
      %3547 = vmatpush1.bf16.msra.mxu0 0
      %3548 = vmatprep.subr.bf16.mxu0 0
      %3549 = vmatpush1.bf16.msra.mxu0 0
      %3550 = vmatprep.subr.bf16.mxu0 0
      %3551 = vmatpush1.bf16.msra.mxu0 0
      %3552 = vmatprep.subr.bf16.mxu0 0
      %3553 = vmatpush1.bf16.msra.mxu0 0
      %3554 = vmatprep.subr.bf16.mxu0 0
      %3555 = vmatpush1.bf16.msra.mxu0 0
      %3556 = vmatprep.mubr.bf16.mxu0 0
      %3557 = vmatmul.mubr.bf16.gmra.mrb[0].mxu0 %v3474
      %v3558 = vpop.f32.mrb[0].mxu0
      %v3559 = vadd.f32 0.0, %v3558
      %v3560 = vpop.f32.mrb[0].mxu0
      %v3561 = vpop.f32.mrb[0].mxu0
      %v3562 = vadd.f32 0.0, %v3561
      %v3563 = vpop.f32.mrb[0].mxu0
      %3564 = vmatprep.mubr.bf16.mxu0 0
      %3565 = vmatmul.mubr.bf16.gmra.mrb[0].mxu0 %v3477
      %v3566 = vpop.f32.mrb[0].mxu0
      %v3567 = vadd.f32 0.0, %v3566
      %v3568 = vpop.f32.mrb[0].mxu0
      %v3569 = vpop.f32.mrb[0].mxu0
      %v3570 = vadd.f32 0.0, %v3569
      %v3571 = vpop.f32.mrb[0].mxu0
      %3572 = vmatprep.mubr.bf16.mxu0 0
      %3573 = vmatmul.mubr.bf16.gmra.mrb[0].mxu0 %v3480
      %v3574 = vpop.f32.mrb[0].mxu0
      %v3575 = vadd.f32 0.0, %v3574
      %v3576 = vpop.f32.mrb[0].mxu0
      %v3577 = vpop.f32.mrb[0].mxu0
      %v3578 = vadd.f32 0.0, %v3577
      %v3579 = vpop.f32.mrb[0].mxu0
      %3580 = vmatprep.mubr.bf16.mxu0 0
      %3581 = vmatmul.mubr.bf16.gmra.mrb[0].mxu0 %v3483
      %v3582 = vpop.f32.mrb[0].mxu0
      %v3583 = vadd.f32 0.0, %v3582
      %v3584 = vpop.f32.mrb[0].mxu0
      %v3585 = vpop.f32.mrb[0].mxu0
      %v3586 = vadd.f32 0.0, %v3585
      %v3587 = vpop.f32.mrb[0].mxu0
      %3588 = vmatprep.mubr.bf16.mxu0 0
      %3589 = vmatmul.mubr.bf16.gmra.mrb[0].mxu0 %v3486
      %v3590 = vpop.f32.mrb[0].mxu0
      %v3591 = vadd.f32 0.0, %v3590
      %v3592 = vpop.f32.mrb[0].mxu0
      %v3593 = vpop.f32.mrb[0].mxu0
      %v3594 = vadd.f32 0.0, %v3593
      %v3595 = vpop.f32.mrb[0].mxu0
      %3596 = vmatprep.mubr.bf16.mxu0 0
      %3597 = vmatmul.mubr.bf16.gmra.mrb[0].mxu0 %v3489
      %v3598 = vpop.f32.mrb[0].mxu0
      %v3599 = vadd.f32 0.0, %v3598
      %v3600 = vpop.f32.mrb[0].mxu0
      %v3601 = vpop.f32.mrb[0].mxu0
      %v3602 = vadd.f32 0.0, %v3601
      %v3603 = vpop.f32.mrb[0].mxu0
      %3604 = vmatprep.mubr.bf16.mxu0 0
      %3605 = vmatmul.mubr.bf16.gmra.mrb[0].mxu0 %v3492
      %v3606 = vpop.f32.mrb[0].mxu0
      %v3607 = vadd.f32 0.0, %v3606
      %v3608 = vpop.f32.mrb[0].mxu0
      %v3609 = vpop.f32.mrb[0].mxu0
      %v3610 = vadd.f32 0.0, %v3609
      %v3611 = vpop.f32.mrb[0].mxu0
      %3612 = vmatprep.mubr.bf16.mxu0 0
      %3613 = vmatmul.mubr.bf16.gmra.mrb[0].mxu0 %v3495
      %v3614 = vpop.f32.mrb[0].mxu0
      %v3615 = vadd.f32 0.0, %v3614
      %v3616 = vpop.f32.mrb[0].mxu0
      %v3617 = vpop.f32.mrb[0].mxu0
      %v3618 = vadd.f32 0.0, %v3617
      %v3619 = vpop.f32.mrb[0].mxu0
      %3620 = vmatprep.mubr.bf16.mxu0 0
      %3621 = vmatmul.mubr.bf16.gmra.mrb[0].mxu0 %v3498
      %v3622 = vpop.f32.mrb[0].mxu0
      %v3623 = vadd.f32 0.0, %v3622
      %v3624 = vpop.f32.mrb[0].mxu0
      %v3625 = vpop.f32.mrb[0].mxu0
      %v3626 = vadd.f32 0.0, %v3625
      %v3627 = vpop.f32.mrb[0].mxu0
      %3628 = vmatprep.mubr.bf16.mxu0 0
      %3629 = vmatmul.mubr.bf16.gmra.mrb[0].mxu0 %v3501
      %v3630 = vpop.f32.mrb[0].mxu0
      %v3631 = vadd.f32 0.0, %v3630
      %v3632 = vpop.f32.mrb[0].mxu0
      %v3633 = vpop.f32.mrb[0].mxu0
      %v3634 = vadd.f32 0.0, %v3633
      %v3635 = vpop.f32.mrb[0].mxu0
      %3636 = vmatprep.mubr.bf16.mxu0 0
      %3637 = vmatmul.mubr.bf16.gmra.mrb[0].mxu0 %v3504
      %v3638 = vpop.f32.mrb[0].mxu0
      %v3639 = vadd.f32 0.0, %v3638
      %v3640 = vpop.f32.mrb[0].mxu0
      %v3641 = vpop.f32.mrb[0].mxu0
      %v3642 = vadd.f32 0.0, %v3641
      %v3643 = vpop.f32.mrb[0].mxu0
      %3644 = vmatprep.mubr.bf16.mxu0 0
      %3645 = vmatmul.mubr.bf16.gmra.mrb[0].mxu0 %v3507
      %v3646 = vpop.f32.mrb[0].mxu0
      %v3647 = vadd.f32 0.0, %v3646
      %v3648 = vpop.f32.mrb[0].mxu0
      %v3649 = vpop.f32.mrb[0].mxu0
      %v3650 = vadd.f32 0.0, %v3649
      %v3651 = vpop.f32.mrb[0].mxu0
      %3652 = vmatprep.mubr.bf16.mxu0 0
      %3653 = vmatmul.mubr.bf16.gmra.mrb[0].mxu0 %v3510
      %v3654 = vpop.f32.mrb[0].mxu0
      %v3655 = vadd.f32 0.0, %v3654
      %v3656 = vpop.f32.mrb[0].mxu0
      %v3657 = vpop.f32.mrb[0].mxu0
      %v3658 = vadd.f32 0.0, %v3657
      %v3659 = vpop.f32.mrb[0].mxu0
      %3660 = vmatprep.mubr.bf16.mxu0 0
      %3661 = vmatmul.mubr.bf16.gmra.mrb[0].mxu0 %v3513
      %v3662 = vpop.f32.mrb[0].mxu0
      %v3663 = vadd.f32 0.0, %v3662
      %v3664 = vpop.f32.mrb[0].mxu0
      %v3665 = vpop.f32.mrb[0].mxu0
      %v3666 = vadd.f32 0.0, %v3665
      %v3667 = vpop.f32.mrb[0].mxu0
      %3668 = vmatprep.mubr.bf16.mxu0 0
      %3669 = vmatmul.mubr.bf16.gmra.mrb[0].mxu0 %v3516
      %v3670 = vpop.f32.mrb[0].mxu0
      %v3671 = vadd.f32 0.0, %v3670
      %v3672 = vpop.f32.mrb[0].mxu0
      %v3673 = vpop.f32.mrb[0].mxu0
      %v3674 = vadd.f32 0.0, %v3673
      %v3675 = vpop.f32.mrb[0].mxu0
      %3676 = vmatprep.mubr.bf16.mxu0 0
      %3677 = vmatmul.mubr.bf16.gmra.mrb[0].mxu0 %v3519
      %v3678 = vpop.f32.mrb[0].mxu0
      %v3679 = vadd.f32 0.0, %v3678
      %v3680 = vpop.f32.mrb[0].mxu0
      %v3681 = vpop.f32.mrb[0].mxu0
      %v3682 = vadd.f32 0.0, %v3681
      %v3683 = vpop.f32.mrb[0].mxu0
      %3684 = vdwg.mxu0
      %v3685 = vadd.f32 %v3326, %v3559
      %v3686 = vadd.f32 %v3327, %v3562
      %v3687 = vadd.f32 %v3328, %v3567
      %v3688 = vadd.f32 %v3329, %v3570
      %v3689 = vadd.f32 %v3330, %v3575
      %v3690 = vadd.f32 %v3331, %v3578
      %v3691 = vadd.f32 %v3332, %v3583
      %v3692 = vadd.f32 %v3333, %v3586
      %v3693 = vadd.f32 %v3334, %v3591
      %v3694 = vadd.f32 %v3335, %v3594
      %v3695 = vadd.f32 %v3336, %v3599
      %v3696 = vadd.f32 %v3337, %v3602
      %v3697 = vadd.f32 %v3338, %v3607
      %v3698 = vadd.f32 %v3339, %v3610
      %v3699 = vadd.f32 %v3340, %v3615
      %v3700 = vadd.f32 %v3341, %v3618
      %v3701 = vadd.f32 %v3342, %v3623
      %v3702 = vadd.f32 %v3343, %v3626
      %v3703 = vadd.f32 %v3344, %v3631
      %v3704 = vadd.f32 %v3345, %v3634
      %v3705 = vadd.f32 %v3346, %v3639
      %v3706 = vadd.f32 %v3347, %v3642
      %v3707 = vadd.f32 %v3348, %v3647
      %v3708 = vadd.f32 %v3349, %v3650
      %v3709 = vadd.f32 %v3350, %v3655
      %v3710 = vadd.f32 %v3351, %v3658
      %v3711 = vadd.f32 %v3352, %v3663
      %v3712 = vadd.f32 %v3353, %v3666
      %v3713 = vadd.f32 %v3354, %v3671
      %v3714 = vadd.f32 %v3355, %v3674
      %v3715 = vadd.f32 %v3356, %v3679
      %v3716 = vadd.f32 %v3357, %v3682
      %v3717 = vld [vmem:[%s2999] sm:$0xf]
      %v3718 = vld [vmem:[%s2999 + $0x4] sm:$0xf]
      %v3719 = vld [vmem:[%s2999 + $0x8] sm:$0x1]
      %v3720 = vld [vmem:[%s2999 + $0xc] sm:$0xf]
      %v3721 = vld [vmem:[%s2999 + $0x10] sm:$0xf]
      %v3722 = vld [vmem:[%s2999 + $0x14] sm:$0x1]
      %v3723 = vld [vmem:[%s2999 + $0x18] sm:$0xf]
      %v3724 = vld [vmem:[%s2999 + $0x1c] sm:$0xf]
      %v3725 = vld [vmem:[%s2999 + $0x20] sm:$0x1]
      %v3726 = vld [vmem:[%s2999 + $0x24] sm:$0xf]
      %v3727 = vld [vmem:[%s2999 + $0x28] sm:$0xf]
      %v3728 = vld [vmem:[%s2999 + $0x2c] sm:$0x1]
      %v3729 = vld [vmem:[%s2999 + $0x30] sm:$0xf]
      %v3730 = vld [vmem:[%s2999 + $0x34] sm:$0xf]
      %v3731 = vld [vmem:[%s2999 + $0x38] sm:$0x1]
      %v3732 = vld [vmem:[%s2999 + $0x3c] sm:$0xf]
      %v3733 = vld [vmem:[%s2999 + $0x40] sm:$0xf]
      %v3734 = vld [vmem:[%s2999 + $0x44] sm:$0x1]
      %v3735 = vld [vmem:[%s2999 + $0x48] sm:$0xf]
      %v3736 = vld [vmem:[%s2999 + $0x4c] sm:$0xf]
      %v3737 = vld [vmem:[%s2999 + $0x50] sm:$0x1]
      %v3738 = vld [vmem:[%s2999 + $0x54] sm:$0xf]
      %v3739 = vld [vmem:[%s2999 + $0x58] sm:$0xf]
      %v3740 = vld [vmem:[%s2999 + $0x5c] sm:$0x1]
      %v3741 = vld [vmem:[%s2999 + $0x60] sm:$0xf]
      %v3742 = vld [vmem:[%s2999 + $0x64] sm:$0xf]
      %v3743 = vld [vmem:[%s2999 + $0x68] sm:$0x1]
      %v3744 = vld [vmem:[%s2999 + $0x6c] sm:$0xf]
      %v3745 = vld [vmem:[%s2999 + $0x70] sm:$0xf]
      %v3746 = vld [vmem:[%s2999 + $0x74] sm:$0x1]
      %v3747 = vld [vmem:[%s2999 + $0x78] sm:$0xf]
      %v3748 = vld [vmem:[%s2999 + $0x7c] sm:$0xf]
      %v3749 = vld [vmem:[%s2999 + $0x80] sm:$0x1]
      %v3750 = vld [vmem:[%s2999 + $0x84] sm:$0xf]
      %v3751 = vld [vmem:[%s2999 + $0x88] sm:$0xf]
      %v3752 = vld [vmem:[%s2999 + $0x8c] sm:$0x1]
      %v3753 = vld [vmem:[%s2999 + $0x90] sm:$0xf]
      %v3754 = vld [vmem:[%s2999 + $0x94] sm:$0xf]
      %v3755 = vld [vmem:[%s2999 + $0x98] sm:$0x1]
      %v3756 = vld [vmem:[%s2999 + $0x9c] sm:$0xf]
      %v3757 = vld [vmem:[%s2999 + $0xa0] sm:$0xf]
      %v3758 = vld [vmem:[%s2999 + $0xa4] sm:$0x1]
      %v3759 = vld [vmem:[%s2999 + $0xa8] sm:$0xf]
      %v3760 = vld [vmem:[%s2999 + $0xac] sm:$0xf]
      %v3761 = vld [vmem:[%s2999 + $0xb0] sm:$0x1]
      %v3762 = vld [vmem:[%s2999 + $0xb4] sm:$0xf]
      %v3763 = vld [vmem:[%s2999 + $0xb8] sm:$0xf]
      %v3764 = vld [vmem:[%s2999 + $0xbc] sm:$0x1]
      %v3766 = vshrl.u32 %v3717, 16
      %v3768 = vrot.slane %v3766, 4
      %v3769 = vshll.u32 %v3717, 16
      %v3771 = vrot.slane %v3769, 5
      %v3772 = vor.u32 %v3768, %v3771
      %v3773 = vrot.slane %v3772, 4
      %v3775 = vshll.u32 %v3718, 16
      %v3777 = vrot.slane %v3775, 5
      %v3778 = vsel %vm876, %v3773, %v3777
      %v3779 = vshrl.u32 %v3718, 16
      %v3781 = vrot.slane %v3779, 4
      %v3782 = vor.u32 %v3781, %v3777
      %v3783 = vrot.slane %v3782, 4
      %v3785 = vshll.u32 %v3719, 16
      %v3787 = vrot.slane %v3785, 5
      %v3788 = vsel %vm876, %v3783, %v3787
      %v3790 = vshrl.u32 %v3720, 16
      %v3792 = vrot.slane %v3790, 4
      %v3793 = vshll.u32 %v3720, 16
      %v3795 = vrot.slane %v3793, 5
      %v3796 = vor.u32 %v3792, %v3795
      %v3797 = vrot.slane %v3796, 4
      %v3799 = vshll.u32 %v3721, 16
      %v3801 = vrot.slane %v3799, 5
      %v3802 = vsel %vm876, %v3797, %v3801
      %v3803 = vshrl.u32 %v3721, 16
      %v3805 = vrot.slane %v3803, 4
      %v3806 = vor.u32 %v3805, %v3801
      %v3807 = vrot.slane %v3806, 4
      %v3809 = vshll.u32 %v3722, 16
      %v3811 = vrot.slane %v3809, 5
      %v3812 = vsel %vm876, %v3807, %v3811
      %v3814 = vshrl.u32 %v3723, 16
      %v3816 = vrot.slane %v3814, 4
      %v3817 = vshll.u32 %v3723, 16
      %v3819 = vrot.slane %v3817, 5
      %v3820 = vor.u32 %v3816, %v3819
      %v3821 = vrot.slane %v3820, 4
      %v3823 = vshll.u32 %v3724, 16
      %v3825 = vrot.slane %v3823, 5
      %v3826 = vsel %vm876, %v3821, %v3825
      %v3827 = vshrl.u32 %v3724, 16
      %v3829 = vrot.slane %v3827, 4
      %v3830 = vor.u32 %v3829, %v3825
      %v3831 = vrot.slane %v3830, 4
      %v3833 = vshll.u32 %v3725, 16
      %v3835 = vrot.slane %v3833, 5
      %v3836 = vsel %vm876, %v3831, %v3835
      %v3838 = vshrl.u32 %v3726, 16
      %v3840 = vrot.slane %v3838, 4
      %v3841 = vshll.u32 %v3726, 16
      %v3843 = vrot.slane %v3841, 5
      %v3844 = vor.u32 %v3840, %v3843
      %v3845 = vrot.slane %v3844, 4
      %v3847 = vshll.u32 %v3727, 16
      %v3849 = vrot.slane %v3847, 5
      %v3850 = vsel %vm876, %v3845, %v3849
      %v3851 = vshrl.u32 %v3727, 16
      %v3853 = vrot.slane %v3851, 4
      %v3854 = vor.u32 %v3853, %v3849
      %v3855 = vrot.slane %v3854, 4
      %v3857 = vshll.u32 %v3728, 16
      %v3859 = vrot.slane %v3857, 5
      %v3860 = vsel %vm876, %v3855, %v3859
      %v3862 = vshrl.u32 %v3729, 16
      %v3864 = vrot.slane %v3862, 4
      %v3865 = vshll.u32 %v3729, 16
      %v3867 = vrot.slane %v3865, 5
      %v3868 = vor.u32 %v3864, %v3867
      %v3869 = vrot.slane %v3868, 4
      %v3871 = vshll.u32 %v3730, 16
      %v3873 = vrot.slane %v3871, 5
      %v3874 = vsel %vm876, %v3869, %v3873
      %v3875 = vshrl.u32 %v3730, 16
      %v3877 = vrot.slane %v3875, 4
      %v3878 = vor.u32 %v3877, %v3873
      %v3879 = vrot.slane %v3878, 4
      %v3881 = vshll.u32 %v3731, 16
      %v3883 = vrot.slane %v3881, 5
      %v3884 = vsel %vm876, %v3879, %v3883
      %v3886 = vshrl.u32 %v3732, 16
      %v3888 = vrot.slane %v3886, 4
      %v3889 = vshll.u32 %v3732, 16
      %v3891 = vrot.slane %v3889, 5
      %v3892 = vor.u32 %v3888, %v3891
      %v3893 = vrot.slane %v3892, 4
      %v3895 = vshll.u32 %v3733, 16
      %v3897 = vrot.slane %v3895, 5
      %v3898 = vsel %vm876, %v3893, %v3897
      %v3899 = vshrl.u32 %v3733, 16
      %v3901 = vrot.slane %v3899, 4
      %v3902 = vor.u32 %v3901, %v3897
      %v3903 = vrot.slane %v3902, 4
      %v3905 = vshll.u32 %v3734, 16
      %v3907 = vrot.slane %v3905, 5
      %v3908 = vsel %vm876, %v3903, %v3907
      %v3910 = vshrl.u32 %v3735, 16
      %v3912 = vrot.slane %v3910, 4
      %v3913 = vshll.u32 %v3735, 16
      %v3915 = vrot.slane %v3913, 5
      %v3916 = vor.u32 %v3912, %v3915
      %v3917 = vrot.slane %v3916, 4
      %v3919 = vshll.u32 %v3736, 16
      %v3921 = vrot.slane %v3919, 5
      %v3922 = vsel %vm876, %v3917, %v3921
      %v3923 = vshrl.u32 %v3736, 16
      %v3925 = vrot.slane %v3923, 4
      %v3926 = vor.u32 %v3925, %v3921
      %v3927 = vrot.slane %v3926, 4
      %v3929 = vshll.u32 %v3737, 16
      %v3931 = vrot.slane %v3929, 5
      %v3932 = vsel %vm876, %v3927, %v3931
      %v3934 = vshrl.u32 %v3738, 16
      %v3936 = vrot.slane %v3934, 4
      %v3937 = vshll.u32 %v3738, 16
      %v3939 = vrot.slane %v3937, 5
      %v3940 = vor.u32 %v3936, %v3939
      %v3941 = vrot.slane %v3940, 4
      %v3943 = vshll.u32 %v3739, 16
      %v3945 = vrot.slane %v3943, 5
      %v3946 = vsel %vm876, %v3941, %v3945
      %v3947 = vshrl.u32 %v3739, 16
      %v3949 = vrot.slane %v3947, 4
      %v3950 = vor.u32 %v3949, %v3945
      %v3951 = vrot.slane %v3950, 4
      %v3953 = vshll.u32 %v3740, 16
      %v3955 = vrot.slane %v3953, 5
      %v3956 = vsel %vm876, %v3951, %v3955
      %v3958 = vshrl.u32 %v3741, 16
      %v3960 = vrot.slane %v3958, 4
      %v3961 = vshll.u32 %v3741, 16
      %v3963 = vrot.slane %v3961, 5
      %v3964 = vor.u32 %v3960, %v3963
      %v3965 = vrot.slane %v3964, 4
      %v3967 = vshll.u32 %v3742, 16
      %v3969 = vrot.slane %v3967, 5
      %v3970 = vsel %vm876, %v3965, %v3969
      %v3971 = vshrl.u32 %v3742, 16
      %v3973 = vrot.slane %v3971, 4
      %v3974 = vor.u32 %v3973, %v3969
      %v3975 = vrot.slane %v3974, 4
      %v3977 = vshll.u32 %v3743, 16
      %v3979 = vrot.slane %v3977, 5
      %v3980 = vsel %vm876, %v3975, %v3979
      %v3982 = vshrl.u32 %v3744, 16
      %v3984 = vrot.slane %v3982, 4
      %v3985 = vshll.u32 %v3744, 16
      %v3987 = vrot.slane %v3985, 5
      %v3988 = vor.u32 %v3984, %v3987
      %v3989 = vrot.slane %v3988, 4
      %v3991 = vshll.u32 %v3745, 16
      %v3993 = vrot.slane %v3991, 5
      %v3994 = vsel %vm876, %v3989, %v3993
      %v3995 = vshrl.u32 %v3745, 16
      %v3997 = vrot.slane %v3995, 4
      %v3998 = vor.u32 %v3997, %v3993
      %v3999 = vrot.slane %v3998, 4
      %v4001 = vshll.u32 %v3746, 16
      %v4003 = vrot.slane %v4001, 5
      %v4004 = vsel %vm876, %v3999, %v4003
      %v4006 = vshrl.u32 %v3747, 16
      %v4008 = vrot.slane %v4006, 4
      %v4009 = vshll.u32 %v3747, 16
      %v4011 = vrot.slane %v4009, 5
      %v4012 = vor.u32 %v4008, %v4011
      %v4013 = vrot.slane %v4012, 4
      %v4015 = vshll.u32 %v3748, 16
      %v4017 = vrot.slane %v4015, 5
      %v4018 = vsel %vm876, %v4013, %v4017
      %v4019 = vshrl.u32 %v3748, 16
      %v4021 = vrot.slane %v4019, 4
      %v4022 = vor.u32 %v4021, %v4017
      %v4023 = vrot.slane %v4022, 4
      %v4025 = vshll.u32 %v3749, 16
      %v4027 = vrot.slane %v4025, 5
      %v4028 = vsel %vm876, %v4023, %v4027
      %v4030 = vshrl.u32 %v3750, 16
      %v4032 = vrot.slane %v4030, 4
      %v4033 = vshll.u32 %v3750, 16
      %v4035 = vrot.slane %v4033, 5
      %v4036 = vor.u32 %v4032, %v4035
      %v4037 = vrot.slane %v4036, 4
      %v4039 = vshll.u32 %v3751, 16
      %v4041 = vrot.slane %v4039, 5
      %v4042 = vsel %vm876, %v4037, %v4041
      %v4043 = vshrl.u32 %v3751, 16
      %v4045 = vrot.slane %v4043, 4
      %v4046 = vor.u32 %v4045, %v4041
      %v4047 = vrot.slane %v4046, 4
      %v4049 = vshll.u32 %v3752, 16
      %v4051 = vrot.slane %v4049, 5
      %v4052 = vsel %vm876, %v4047, %v4051
      %v4054 = vshrl.u32 %v3753, 16
      %v4056 = vrot.slane %v4054, 4
      %v4057 = vshll.u32 %v3753, 16
      %v4059 = vrot.slane %v4057, 5
      %v4060 = vor.u32 %v4056, %v4059
      %v4061 = vrot.slane %v4060, 4
      %v4063 = vshll.u32 %v3754, 16
      %v4065 = vrot.slane %v4063, 5
      %v4066 = vsel %vm876, %v4061, %v4065
      %v4067 = vshrl.u32 %v3754, 16
      %v4069 = vrot.slane %v4067, 4
      %v4070 = vor.u32 %v4069, %v4065
      %v4071 = vrot.slane %v4070, 4
      %v4073 = vshll.u32 %v3755, 16
      %v4075 = vrot.slane %v4073, 5
      %v4076 = vsel %vm876, %v4071, %v4075
      %v4078 = vshrl.u32 %v3756, 16
      %v4080 = vrot.slane %v4078, 4
      %v4081 = vshll.u32 %v3756, 16
      %v4083 = vrot.slane %v4081, 5
      %v4084 = vor.u32 %v4080, %v4083
      %v4085 = vrot.slane %v4084, 4
      %v4087 = vshll.u32 %v3757, 16
      %v4089 = vrot.slane %v4087, 5
      %v4090 = vsel %vm876, %v4085, %v4089
      %v4091 = vshrl.u32 %v3757, 16
      %v4093 = vrot.slane %v4091, 4
      %v4094 = vor.u32 %v4093, %v4089
      %v4095 = vrot.slane %v4094, 4
      %v4097 = vshll.u32 %v3758, 16
      %v4099 = vrot.slane %v4097, 5
      %v4100 = vsel %vm876, %v4095, %v4099
      %v4102 = vshrl.u32 %v3759, 16
      %v4104 = vrot.slane %v4102, 4
      %v4105 = vshll.u32 %v3759, 16
      %v4107 = vrot.slane %v4105, 5
      %v4108 = vor.u32 %v4104, %v4107
      %v4109 = vrot.slane %v4108, 4
      %v4111 = vshll.u32 %v3760, 16
      %v4113 = vrot.slane %v4111, 5
      %v4114 = vsel %vm876, %v4109, %v4113
      %v4115 = vshrl.u32 %v3760, 16
      %v4117 = vrot.slane %v4115, 4
      %v4118 = vor.u32 %v4117, %v4113
      %v4119 = vrot.slane %v4118, 4
      %v4121 = vshll.u32 %v3761, 16
      %v4123 = vrot.slane %v4121, 5
      %v4124 = vsel %vm876, %v4119, %v4123
      %v4126 = vshrl.u32 %v3762, 16
      %v4128 = vrot.slane %v4126, 4
      %v4129 = vshll.u32 %v3762, 16
      %v4131 = vrot.slane %v4129, 5
      %v4132 = vor.u32 %v4128, %v4131
      %v4133 = vrot.slane %v4132, 4
      %v4135 = vshll.u32 %v3763, 16
      %v4137 = vrot.slane %v4135, 5
      %v4138 = vsel %vm876, %v4133, %v4137
      %v4139 = vshrl.u32 %v3763, 16
      %v4141 = vrot.slane %v4139, 4
      %v4142 = vor.u32 %v4141, %v4137
      %v4143 = vrot.slane %v4142, 4
      %v4145 = vshll.u32 %v3764, 16
      %v4147 = vrot.slane %v4145, 5
      %v4148 = vsel %vm876, %v4143, %v4147
      %s4149 = scalar_lea.vmem %s1, 16
      %v4150 = vld [vmem:[%s4149] sm:$0x3]
      %v4151 = vunpack.c.l.b16 %v3778
      %v4152 = vunpack.c.l.b16 %v3788
      %v4153 = vunpack.c.l.b16 %v3802
      %v4154 = vunpack.c.l.b16 %v3812
      %v4155 = vunpack.c.l.b16 %v3826
      %v4156 = vunpack.c.l.b16 %v3836
      %v4157 = vunpack.c.l.b16 %v3850
      %v4158 = vunpack.c.l.b16 %v3860
      %v4159 = vunpack.c.l.b16 %v3874
      %v4160 = vunpack.c.l.b16 %v3884
      %v4161 = vunpack.c.l.b16 %v3898
      %v4162 = vunpack.c.l.b16 %v3908
      %v4163 = vunpack.c.l.b16 %v3922
      %v4164 = vunpack.c.l.b16 %v3932
      %v4165 = vunpack.c.l.b16 %v3946
      %v4166 = vunpack.c.l.b16 %v3956
      %v4167 = vunpack.c.l.b16 %v3970
      %v4168 = vunpack.c.l.b16 %v3980
      %v4169 = vunpack.c.l.b16 %v3994
      %v4170 = vunpack.c.l.b16 %v4004
      %v4171 = vunpack.c.l.b16 %v4018
      %v4172 = vunpack.c.l.b16 %v4028
      %v4173 = vunpack.c.l.b16 %v4042
      %v4174 = vunpack.c.l.b16 %v4052
      %v4175 = vunpack.c.l.b16 %v4066
      %v4176 = vunpack.c.l.b16 %v4076
      %v4177 = vunpack.c.l.b16 %v4090
      %v4178 = vunpack.c.l.b16 %v4100
      %v4179 = vunpack.c.l.b16 %v4114
      %v4180 = vunpack.c.l.b16 %v4124
      %v4181 = vunpack.c.l.b16 %v4138
      %v4182 = vunpack.c.l.b16 %v4148
      %v4183 = vpack.c.b16 %v4152, %v4151
      %v4184 = vpack.c.b16 %v4154, %v4153
      %v4185 = vpack.c.b16 %v4156, %v4155
      %v4186 = vpack.c.b16 %v4158, %v4157
      %v4187 = vpack.c.b16 %v4160, %v4159
      %v4188 = vpack.c.b16 %v4162, %v4161
      %v4189 = vpack.c.b16 %v4164, %v4163
      %v4190 = vpack.c.b16 %v4166, %v4165
      %v4191 = vpack.c.b16 %v4168, %v4167
      %v4192 = vpack.c.b16 %v4170, %v4169
      %v4193 = vpack.c.b16 %v4172, %v4171
      %v4194 = vpack.c.b16 %v4174, %v4173
      %v4195 = vpack.c.b16 %v4176, %v4175
      %v4196 = vpack.c.b16 %v4178, %v4177
      %v4197 = vpack.c.b16 %v4180, %v4179
      %v4198 = vpack.c.b16 %v4182, %v4181
      %v4200 = vsel %vm320, %v4183, 0
      %v4203 = vsel %vm320, %v4184, 0
      %v4206 = vsel %vm320, %v4185, 0
      %v4209 = vsel %vm320, %v4186, 0
      %v4212 = vsel %vm320, %v4187, 0
      %v4215 = vsel %vm320, %v4188, 0
      %v4218 = vsel %vm320, %v4189, 0
      %v4221 = vsel %vm320, %v4190, 0
      %v4224 = vsel %vm320, %v4191, 0
      %v4227 = vsel %vm320, %v4192, 0
      %v4230 = vsel %vm320, %v4193, 0
      %v4233 = vsel %vm320, %v4194, 0
      %v4236 = vsel %vm320, %v4195, 0
      %v4239 = vsel %vm320, %v4196, 0
      %v4242 = vsel %vm320, %v4197, 0
      %v4245 = vsel %vm320, %v4198, 0
      %v4248 = vsel %vm369, %v4150, 0
      %4250 = vmatprep.subr.bf16.mxu0 0
      %4251 = vmatpush1.bf16.msra.mxu0 %v4248
      %4252 = vmatprep.subr.bf16.mxu0 0
      %4253 = vmatpush1.bf16.msra.mxu0 0
      %4254 = vmatprep.subr.bf16.mxu0 0
      %4255 = vmatpush1.bf16.msra.mxu0 0
      %4256 = vmatprep.subr.bf16.mxu0 0
      %4257 = vmatpush1.bf16.msra.mxu0 0
      %4258 = vmatprep.subr.bf16.mxu0 0
      %4259 = vmatpush1.bf16.msra.mxu0 0
      %4260 = vmatprep.subr.bf16.mxu0 0
      %4261 = vmatpush1.bf16.msra.mxu0 0
      %4262 = vmatprep.subr.bf16.mxu0 0
      %4263 = vmatpush1.bf16.msra.mxu0 0
      %4264 = vmatprep.subr.bf16.mxu0 0
      %4265 = vmatpush1.bf16.msra.mxu0 0
      %4266 = vmatprep.subr.bf16.mxu0 0
      %4267 = vmatpush1.bf16.msra.mxu0 0
      %4268 = vmatprep.subr.bf16.mxu0 0
      %4269 = vmatpush1.bf16.msra.mxu0 0
      %4270 = vmatprep.subr.bf16.mxu0 0
      %4271 = vmatpush1.bf16.msra.mxu0 0
      %4272 = vmatprep.subr.bf16.mxu0 0
      %4273 = vmatpush1.bf16.msra.mxu0 0
      %4274 = vmatprep.subr.bf16.mxu0 0
      %4275 = vmatpush1.bf16.msra.mxu0 0
      %4276 = vmatprep.subr.bf16.mxu0 0
      %4277 = vmatpush1.bf16.msra.mxu0 0
      %4278 = vmatprep.subr.bf16.mxu0 0
      %4279 = vmatpush1.bf16.msra.mxu0 0
      %4280 = vmatprep.subr.bf16.mxu0 0
      %4281 = vmatpush1.bf16.msra.mxu0 0
      %4282 = vmatprep.mubr.bf16.mxu0 0
      %4283 = vmatmul.mubr.bf16.gmra.mrb[0].mxu0 %v4200
      %v4284 = vpop.f32.mrb[0].mxu0
      %v4285 = vadd.f32 0.0, %v4284
      %v4286 = vpop.f32.mrb[0].mxu0
      %v4287 = vpop.f32.mrb[0].mxu0
      %v4288 = vadd.f32 0.0, %v4287
      %v4289 = vpop.f32.mrb[0].mxu0
      %4290 = vmatprep.mubr.bf16.mxu0 0
      %4291 = vmatmul.mubr.bf16.gmra.mrb[0].mxu0 %v4203
      %v4292 = vpop.f32.mrb[0].mxu0
      %v4293 = vadd.f32 0.0, %v4292
      %v4294 = vpop.f32.mrb[0].mxu0
      %v4295 = vpop.f32.mrb[0].mxu0
      %v4296 = vadd.f32 0.0, %v4295
      %v4297 = vpop.f32.mrb[0].mxu0
      %4298 = vmatprep.mubr.bf16.mxu0 0
      %4299 = vmatmul.mubr.bf16.gmra.mrb[0].mxu0 %v4206
      %v4300 = vpop.f32.mrb[0].mxu0
      %v4301 = vadd.f32 0.0, %v4300
      %v4302 = vpop.f32.mrb[0].mxu0
      %v4303 = vpop.f32.mrb[0].mxu0
      %v4304 = vadd.f32 0.0, %v4303
      %v4305 = vpop.f32.mrb[0].mxu0
      %4306 = vmatprep.mubr.bf16.mxu0 0
      %4307 = vmatmul.mubr.bf16.gmra.mrb[0].mxu0 %v4209
      %v4308 = vpop.f32.mrb[0].mxu0
      %v4309 = vadd.f32 0.0, %v4308
      %v4310 = vpop.f32.mrb[0].mxu0
      %v4311 = vpop.f32.mrb[0].mxu0
      %v4312 = vadd.f32 0.0, %v4311
      %v4313 = vpop.f32.mrb[0].mxu0
      %4314 = vmatprep.mubr.bf16.mxu0 0
      %4315 = vmatmul.mubr.bf16.gmra.mrb[0].mxu0 %v4212
      %v4316 = vpop.f32.mrb[0].mxu0
      %v4317 = vadd.f32 0.0, %v4316
      %v4318 = vpop.f32.mrb[0].mxu0
      %v4319 = vpop.f32.mrb[0].mxu0
      %v4320 = vadd.f32 0.0, %v4319
      %v4321 = vpop.f32.mrb[0].mxu0
      %4322 = vmatprep.mubr.bf16.mxu0 0
      %4323 = vmatmul.mubr.bf16.gmra.mrb[0].mxu0 %v4215
      %v4324 = vpop.f32.mrb[0].mxu0
      %v4325 = vadd.f32 0.0, %v4324
      %v4326 = vpop.f32.mrb[0].mxu0
      %v4327 = vpop.f32.mrb[0].mxu0
      %v4328 = vadd.f32 0.0, %v4327
      %v4329 = vpop.f32.mrb[0].mxu0
      %4330 = vmatprep.mubr.bf16.mxu0 0
      %4331 = vmatmul.mubr.bf16.gmra.mrb[0].mxu0 %v4218
      %v4332 = vpop.f32.mrb[0].mxu0
      %v4333 = vadd.f32 0.0, %v4332
      %v4334 = vpop.f32.mrb[0].mxu0
      %v4335 = vpop.f32.mrb[0].mxu0
      %v4336 = vadd.f32 0.0, %v4335
      %v4337 = vpop.f32.mrb[0].mxu0
      %4338 = vmatprep.mubr.bf16.mxu0 0
      %4339 = vmatmul.mubr.bf16.gmra.mrb[0].mxu0 %v4221
      %v4340 = vpop.f32.mrb[0].mxu0
      %v4341 = vadd.f32 0.0, %v4340
      %v4342 = vpop.f32.mrb[0].mxu0
      %v4343 = vpop.f32.mrb[0].mxu0
      %v4344 = vadd.f32 0.0, %v4343
      %v4345 = vpop.f32.mrb[0].mxu0
      %4346 = vmatprep.mubr.bf16.mxu0 0
      %4347 = vmatmul.mubr.bf16.gmra.mrb[0].mxu0 %v4224
      %v4348 = vpop.f32.mrb[0].mxu0
      %v4349 = vadd.f32 0.0, %v4348
      %v4350 = vpop.f32.mrb[0].mxu0
      %v4351 = vpop.f32.mrb[0].mxu0
      %v4352 = vadd.f32 0.0, %v4351
      %v4353 = vpop.f32.mrb[0].mxu0
      %4354 = vmatprep.mubr.bf16.mxu0 0
      %4355 = vmatmul.mubr.bf16.gmra.mrb[0].mxu0 %v4227
      %v4356 = vpop.f32.mrb[0].mxu0
      %v4357 = vadd.f32 0.0, %v4356
      %v4358 = vpop.f32.mrb[0].mxu0
      %v4359 = vpop.f32.mrb[0].mxu0
      %v4360 = vadd.f32 0.0, %v4359
      %v4361 = vpop.f32.mrb[0].mxu0
      %4362 = vmatprep.mubr.bf16.mxu0 0
      %4363 = vmatmul.mubr.bf16.gmra.mrb[0].mxu0 %v4230
      %v4364 = vpop.f32.mrb[0].mxu0
      %v4365 = vadd.f32 0.0, %v4364
      %v4366 = vpop.f32.mrb[0].mxu0
      %v4367 = vpop.f32.mrb[0].mxu0
      %v4368 = vadd.f32 0.0, %v4367
      %v4369 = vpop.f32.mrb[0].mxu0
      %4370 = vmatprep.mubr.bf16.mxu0 0
      %4371 = vmatmul.mubr.bf16.gmra.mrb[0].mxu0 %v4233
      %v4372 = vpop.f32.mrb[0].mxu0
      %v4373 = vadd.f32 0.0, %v4372
      %v4374 = vpop.f32.mrb[0].mxu0
      %v4375 = vpop.f32.mrb[0].mxu0
      %v4376 = vadd.f32 0.0, %v4375
      %v4377 = vpop.f32.mrb[0].mxu0
      %4378 = vmatprep.mubr.bf16.mxu0 0
      %4379 = vmatmul.mubr.bf16.gmra.mrb[0].mxu0 %v4236
      %v4380 = vpop.f32.mrb[0].mxu0
      %v4381 = vadd.f32 0.0, %v4380
      %v4382 = vpop.f32.mrb[0].mxu0
      %v4383 = vpop.f32.mrb[0].mxu0
      %v4384 = vadd.f32 0.0, %v4383
      %v4385 = vpop.f32.mrb[0].mxu0
      %4386 = vmatprep.mubr.bf16.mxu0 0
      %4387 = vmatmul.mubr.bf16.gmra.mrb[0].mxu0 %v4239
      %v4388 = vpop.f32.mrb[0].mxu0
      %v4389 = vadd.f32 0.0, %v4388
      %v4390 = vpop.f32.mrb[0].mxu0
      %v4391 = vpop.f32.mrb[0].mxu0
      %v4392 = vadd.f32 0.0, %v4391
      %v4393 = vpop.f32.mrb[0].mxu0
      %4394 = vmatprep.mubr.bf16.mxu0 0
      %4395 = vmatmul.mubr.bf16.gmra.mrb[0].mxu0 %v4242
      %v4396 = vpop.f32.mrb[0].mxu0
      %v4397 = vadd.f32 0.0, %v4396
      %v4398 = vpop.f32.mrb[0].mxu0
      %v4399 = vpop.f32.mrb[0].mxu0
      %v4400 = vadd.f32 0.0, %v4399
      %v4401 = vpop.f32.mrb[0].mxu0
      %4402 = vmatprep.mubr.bf16.mxu0 0
      %4403 = vmatmul.mubr.bf16.gmra.mrb[0].mxu0 %v4245
      %v4404 = vpop.f32.mrb[0].mxu0
      %v4405 = vadd.f32 0.0, %v4404
      %v4406 = vpop.f32.mrb[0].mxu0
      %v4407 = vpop.f32.mrb[0].mxu0
      %v4408 = vadd.f32 0.0, %v4407
      %v4409 = vpop.f32.mrb[0].mxu0
      %4410 = vdwg.mxu0
      %v4411 = vadd.f32 %v3685, %v4285
      %v4412 = vadd.f32 %v3686, %v4288
      %v4413 = vadd.f32 %v3687, %v4293
      %v4414 = vadd.f32 %v3688, %v4296
      %v4415 = vadd.f32 %v3689, %v4301
      %v4416 = vadd.f32 %v3690, %v4304
      %v4417 = vadd.f32 %v3691, %v4309
      %v4418 = vadd.f32 %v3692, %v4312
      %v4419 = vadd.f32 %v3693, %v4317
      %v4420 = vadd.f32 %v3694, %v4320
      %v4421 = vadd.f32 %v3695, %v4325
      %v4422 = vadd.f32 %v3696, %v4328
      %v4423 = vadd.f32 %v3697, %v4333
      %v4424 = vadd.f32 %v3698, %v4336
      %v4425 = vadd.f32 %v3699, %v4341
      %v4426 = vadd.f32 %v3700, %v4344
      %v4427 = vadd.f32 %v3701, %v4349
      %v4428 = vadd.f32 %v3702, %v4352
      %v4429 = vadd.f32 %v3703, %v4357
      %v4430 = vadd.f32 %v3704, %v4360
      %v4431 = vadd.f32 %v3705, %v4365
      %v4432 = vadd.f32 %v3706, %v4368
      %v4433 = vadd.f32 %v3707, %v4373
      %v4434 = vadd.f32 %v3708, %v4376
      %v4435 = vadd.f32 %v3709, %v4381
      %v4436 = vadd.f32 %v3710, %v4384
      %v4437 = vadd.f32 %v3711, %v4389
      %v4438 = vadd.f32 %v3712, %v4392
      %v4439 = vadd.f32 %v3713, %v4397
      %v4440 = vadd.f32 %v3714, %v4400
      %v4441 = vadd.f32 %v3715, %v4405
      %v4442 = vadd.f32 %v3716, %v4408
      %v4443 = vld [vmem:[%s2] sm:$0x1]
      %v4445 = vlaneseq
      %v4446 = vshrl.u32 %v4445, 7
      %v4447 = vsub.s32 0, %v4446
      %v4448 = vrot.slane %v4443, %v4447
      %v4450 = vadd.f32 %v4411, %v4448
      %v4451 = vadd.f32 %v4412, %v4448
      %v4452 = vadd.f32 %v4413, %v4448
      %v4453 = vadd.f32 %v4414, %v4448
      %v4454 = vadd.f32 %v4415, %v4448
      %v4455 = vadd.f32 %v4416, %v4448
      %v4456 = vadd.f32 %v4417, %v4448
      %v4457 = vadd.f32 %v4418, %v4448
      %v4458 = vadd.f32 %v4419, %v4448
      %v4459 = vadd.f32 %v4420, %v4448
      %v4460 = vadd.f32 %v4421, %v4448
      %v4461 = vadd.f32 %v4422, %v4448
      %v4462 = vadd.f32 %v4423, %v4448
      %v4463 = vadd.f32 %v4424, %v4448
      %v4464 = vadd.f32 %v4425, %v4448
      %v4465 = vadd.f32 %v4426, %v4448
      %v4466 = vadd.f32 %v4427, %v4448
      %v4467 = vadd.f32 %v4428, %v4448
      %v4468 = vadd.f32 %v4429, %v4448
      %v4469 = vadd.f32 %v4430, %v4448
      %v4470 = vadd.f32 %v4431, %v4448
      %v4471 = vadd.f32 %v4432, %v4448
      %v4472 = vadd.f32 %v4433, %v4448
      %v4473 = vadd.f32 %v4434, %v4448
      %v4474 = vadd.f32 %v4435, %v4448
      %v4475 = vadd.f32 %v4436, %v4448
      %v4476 = vadd.f32 %v4437, %v4448
      %v4477 = vadd.f32 %v4438, %v4448
      %v4478 = vadd.f32 %v4439, %v4448
      %v4479 = vadd.f32 %v4440, %v4448
      %v4480 = vadd.f32 %v4441, %v4448
      %v4481 = vadd.f32 %v4442, %v4448
      %v4482 = vmax.f32 %v4450, 0.0
      %v4483 = vmax.f32 %v4451, 0.0
      %v4484 = vmax.f32 %v4452, 0.0
      %v4485 = vmax.f32 %v4453, 0.0
      %v4486 = vmax.f32 %v4454, 0.0
      %v4487 = vmax.f32 %v4455, 0.0
      %v4488 = vmax.f32 %v4456, 0.0
      %v4489 = vmax.f32 %v4457, 0.0
      %v4490 = vmax.f32 %v4458, 0.0
      %v4491 = vmax.f32 %v4459, 0.0
      %v4492 = vmax.f32 %v4460, 0.0
      %v4493 = vmax.f32 %v4461, 0.0
      %v4494 = vmax.f32 %v4462, 0.0
      %v4495 = vmax.f32 %v4463, 0.0
      %v4496 = vmax.f32 %v4464, 0.0
      %v4497 = vmax.f32 %v4465, 0.0
      %v4498 = vmax.f32 %v4466, 0.0
      %v4499 = vmax.f32 %v4467, 0.0
      %v4500 = vmax.f32 %v4468, 0.0
      %v4501 = vmax.f32 %v4469, 0.0
      %v4502 = vmax.f32 %v4470, 0.0
      %v4503 = vmax.f32 %v4471, 0.0
      %v4504 = vmax.f32 %v4472, 0.0
      %v4505 = vmax.f32 %v4473, 0.0
      %v4506 = vmax.f32 %v4474, 0.0
      %v4507 = vmax.f32 %v4475, 0.0
      %v4508 = vmax.f32 %v4476, 0.0
      %v4509 = vmax.f32 %v4477, 0.0
      %v4510 = vmax.f32 %v4478, 0.0
      %v4511 = vmax.f32 %v4479, 0.0
      %v4512 = vmax.f32 %v4480, 0.0
      %v4513 = vmax.f32 %v4481, 0.0
      %v4514 = vpack.c.bf16 %v4483, %v4482
      %v4515 = vpack.c.bf16 %v4485, %v4484
      %v4516 = vpack.c.bf16 %v4487, %v4486
      %v4517 = vpack.c.bf16 %v4489, %v4488
      %v4518 = vpack.c.bf16 %v4491, %v4490
      %v4519 = vpack.c.bf16 %v4493, %v4492
      %v4520 = vpack.c.bf16 %v4495, %v4494
      %v4521 = vpack.c.bf16 %v4497, %v4496
      %v4522 = vpack.c.bf16 %v4499, %v4498
      %v4523 = vpack.c.bf16 %v4501, %v4500
      %v4524 = vpack.c.bf16 %v4503, %v4502
      %v4525 = vpack.c.bf16 %v4505, %v4504
      %v4526 = vpack.c.bf16 %v4507, %v4506
      %v4527 = vpack.c.bf16 %v4509, %v4508
      %v4528 = vpack.c.bf16 %v4511, %v4510
      %v4529 = vpack.c.bf16 %v4513, %v4512
      %v4546 = vunpack.c.l.b16 %v4514
      %v4547 = vunpack.c.h.b16 %v4514
      %v4548 = vunpack.c.l.b16 %v4515
      %v4549 = vunpack.c.h.b16 %v4515
      %v4550 = vunpack.c.l.b16 %v4516
      %v4551 = vunpack.c.h.b16 %v4516
      %v4552 = vunpack.c.l.b16 %v4517
      %v4553 = vunpack.c.h.b16 %v4517
      %v4554 = vunpack.c.l.b16 %v4518
      %v4555 = vunpack.c.h.b16 %v4518
      %v4556 = vunpack.c.l.b16 %v4519
      %v4557 = vunpack.c.h.b16 %v4519
      %v4558 = vunpack.c.l.b16 %v4520
      %v4559 = vunpack.c.h.b16 %v4520
      %v4560 = vunpack.c.l.b16 %v4521
      %v4561 = vunpack.c.h.b16 %v4521
      %v4562 = vunpack.c.l.b16 %v4522
      %v4563 = vunpack.c.h.b16 %v4522
      %v4564 = vunpack.c.l.b16 %v4523
      %v4565 = vunpack.c.h.b16 %v4523
      %v4566 = vunpack.c.l.b16 %v4524
      %v4567 = vunpack.c.h.b16 %v4524
      %v4568 = vunpack.c.l.b16 %v4525
      %v4569 = vunpack.c.h.b16 %v4525
      %v4570 = vunpack.c.l.b16 %v4526
      %v4571 = vunpack.c.h.b16 %v4526
      %v4572 = vunpack.c.l.b16 %v4527
      %v4573 = vunpack.c.h.b16 %v4527
      %v4574 = vunpack.c.l.b16 %v4528
      %v4575 = vunpack.c.h.b16 %v4528
      %v4576 = vunpack.c.l.b16 %v4529
      %v4577 = vunpack.c.h.b16 %v4529
      %v4578 = vpack.c.b16 %v4546, %v4546
      %v4579 = vpack.c.b16 %v4547, %v4547
      %v4580 = vpack.c.b16 %v4548, %v4548
      %v4581 = vpack.c.b16 %v4549, %v4549
      %v4582 = vpack.c.b16 %v4550, %v4550
      %v4583 = vpack.c.b16 %v4551, %v4551
      %v4584 = vpack.c.b16 %v4552, %v4552
      %v4585 = vpack.c.b16 %v4553, %v4553
      %v4586 = vpack.c.b16 %v4554, %v4554
      %v4587 = vpack.c.b16 %v4555, %v4555
      %v4588 = vpack.c.b16 %v4556, %v4556
      %v4589 = vpack.c.b16 %v4557, %v4557
      %v4590 = vpack.c.b16 %v4558, %v4558
      %v4591 = vpack.c.b16 %v4559, %v4559
      %v4592 = vpack.c.b16 %v4560, %v4560
      %v4593 = vpack.c.b16 %v4561, %v4561
      %v4594 = vpack.c.b16 %v4562, %v4562
      %v4595 = vpack.c.b16 %v4563, %v4563
      %v4596 = vpack.c.b16 %v4564, %v4564
      %v4597 = vpack.c.b16 %v4565, %v4565
      %v4598 = vpack.c.b16 %v4566, %v4566
      %v4599 = vpack.c.b16 %v4567, %v4567
      %v4600 = vpack.c.b16 %v4568, %v4568
      %v4601 = vpack.c.b16 %v4569, %v4569
      %v4602 = vpack.c.b16 %v4570, %v4570
      %v4603 = vpack.c.b16 %v4571, %v4571
      %v4604 = vpack.c.b16 %v4572, %v4572
      %v4605 = vpack.c.b16 %v4573, %v4573
      %v4606 = vpack.c.b16 %v4574, %v4574
      %v4607 = vpack.c.b16 %v4575, %v4575
      %v4608 = vpack.c.b16 %v4576, %v4576
      %v4609 = vpack.c.b16 %v4577, %v4577
      %vm4642 = vcmask 257024
      %4643 = vst.msk [vmem:[%s170] sm:$0xf] %vm4642, %v4578
      %4644 = vst.msk [vmem:[%s170 + $0x4] sm:$0xf] %vm4642, %v4579
      %4645 = vst.msk [vmem:[%s170 + $0x8] sm:$0xf] %vm4642, %v4580
      %4646 = vst.msk [vmem:[%s170 + $0xc] sm:$0xf] %vm4642, %v4581
      %4647 = vst.msk [vmem:[%s170 + $0x10] sm:$0xf] %vm4642, %v4582
      %4648 = vst.msk [vmem:[%s170 + $0x14] sm:$0xf] %vm4642, %v4583
      %4649 = vst.msk [vmem:[%s170 + $0x18] sm:$0xf] %vm4642, %v4584
      %4650 = vst.msk [vmem:[%s170 + $0x1c] sm:$0xf] %vm4642, %v4585
      %4651 = vst.msk [vmem:[%s170 + $0x20] sm:$0xf] %vm4642, %v4586
      %4652 = vst.msk [vmem:[%s170 + $0x24] sm:$0xf] %vm4642, %v4587
      %4653 = vst.msk [vmem:[%s170 + $0x28] sm:$0xf] %vm4642, %v4588
      %4654 = vst.msk [vmem:[%s170 + $0x2c] sm:$0xf] %vm4642, %v4589
      %4655 = vst.msk [vmem:[%s170 + $0x30] sm:$0xf] %vm4642, %v4590
      %4656 = vst.msk [vmem:[%s170 + $0x34] sm:$0xf] %vm4642, %v4591
      %4657 = vst.msk [vmem:[%s170 + $0x38] sm:$0xf] %vm4642, %v4592
      %4658 = vst.msk [vmem:[%s170 + $0x3c] sm:$0xf] %vm4642, %v4593
      %4659 = vst.msk [vmem:[%s170 + $0x40] sm:$0xf] %vm4642, %v4594
      %4660 = vst.msk [vmem:[%s170 + $0x44] sm:$0xf] %vm4642, %v4595
      %4661 = vst.msk [vmem:[%s170 + $0x48] sm:$0xf] %vm4642, %v4596
      %4662 = vst.msk [vmem:[%s170 + $0x4c] sm:$0xf] %vm4642, %v4597
      %4663 = vst.msk [vmem:[%s170 + $0x50] sm:$0xf] %vm4642, %v4598
      %4664 = vst.msk [vmem:[%s170 + $0x54] sm:$0xf] %vm4642, %v4599
      %4665 = vst.msk [vmem:[%s170 + $0x58] sm:$0xf] %vm4642, %v4600
      %4666 = vst.msk [vmem:[%s170 + $0x5c] sm:$0xf] %vm4642, %v4601
      %4667 = vst.msk [vmem:[%s170 + $0x60] sm:$0xf] %vm4642, %v4602
      %4668 = vst.msk [vmem:[%s170 + $0x64] sm:$0xf] %vm4642, %v4603
      %4669 = vst.msk [vmem:[%s170 + $0x68] sm:$0xf] %vm4642, %v4604
      %4670 = vst.msk [vmem:[%s170 + $0x6c] sm:$0xf] %vm4642, %v4605
      %4671 = vst.msk [vmem:[%s170 + $0x70] sm:$0xf] %vm4642, %v4606
      %4672 = vst.msk [vmem:[%s170 + $0x74] sm:$0xf] %vm4642, %v4607
      %4673 = vst.msk [vmem:[%s170 + $0x78] sm:$0xf] %vm4642, %v4608
      %4674 = vst.msk [vmem:[%s170 + $0x7c] sm:$0xf] %vm4642, %v4609
      %p4675 = scmp.lt.s32.totalorder %s14, 1
      %s4676 = scalar_select %p4675, %s14, 1
      %s4677 = smul.addr %s4676, 32
      %s4678 = smul.addr %s4677, 4
      %s4679 = scalar_lea.vmem %s3, %s4678
      // Predicated region
      $region33: #{critic_forward.5} parent=31 // pred_check
        %p4680 = pneg %p100
      $region34: #{critic_forward.5} parent=31 // pred_check_branch
        %4682 = sbr.rel (%p4680) target = $region36
      $region35: #{critic_forward.5} parent=31 // pred_region
        _
      $region36: #{critic_forward.5} parent=31 // pred_fallthru
        _
    $region32: #{critic_forward.5} parent=5 // pred_fallthru
      _
    %p4683 = scmp.le.s32.totalorder 2, %s9
    // Predicated region
    $region37: #{critic_forward.5} parent=5 // pred_check
      %p4684 = pneg %p4683
    $region38: #{critic_forward.5} parent=5 // pred_check_branch
      %4686 = sbr.rel (%p4684) target = $region40
    $region39: #{critic_forward.5} parent=5 // pred_region
      %s4687 = ssub.s32 %s9, 2
      // Predicated region
      $region41: #{critic_forward.5} parent=39 // pred_check
        %p4688 = pneg %p106
      $region42: #{critic_forward.5} parent=39 // pred_check_branch
        %4690 = sbr.rel (%p4688) target = $region44
      $region43: #{critic_forward.5} parent=39 // pred_region
        %p4691 = scmp.lt.s32.totalorder %s15, 1
        %s4692 = scalar_select %p4691, %s15, 1
        %s4693 = smul.addr %s4692, 32
        %s4694 = smul.addr %s4693, 4
        %s4695 = scalar_lea.vmem %s3, %s4694
      $region44: #{critic_forward.5} parent=39 // pred_fallthru
        _
    $region40: #{critic_forward.5} parent=5 // pred_fallthru
      _
  $region6: #{critic_forward.5} parent=0 // loop_footer
    %s13 = sadd.s32 1, %s9
  $region7: #{critic_forward.5} parent=0 // loop_footer_branch
    %8 = sbr.rel target = $region3
  $region8: #{critic_forward.5} parent=0 // loop_exit
    _

// kernel: critic_forward.6
$region0: #{critic_forward.6}
  #allocation0 [shape = 'u32[]', space=smem, size = 0x4, offset = 0x4, fixed_abs, tag = 'smem constant byte address 0x4 - core index']
  #allocation1 [shape = 'u32[144,128]{1,0:T(1,128)}', space=vmem, size = 0x12000, scoped, tag = 'internal scratch']
  %s0 = inlined_call_operand.vmem [shape: bf16[2,36,9,32], index: 0, kind: input, shape index: {}]
  %s1 = inlined_call_operand.vmem [shape: bf16[9,32,64], index: 1, kind: input, shape index: {}]
  %s2 = inlined_call_operand.vmem [shape: f32[1,64], index: 2, kind: input, shape index: {}]
  %s3 = inlined_call_operand.vmem [shape: bf16[2,64,64], index: 3, kind: output, shape index: {}]
  %s4 = sld [smem:[#allocation0]]
  $region45: #{critic_forward.6} parent=0
    _
  %s6 = ssub.s32 1, %s4
  %s7 = scalar_select 0, %s6, %s4
  loop: start=0, step=1, limit=4
  $region2: #{critic_forward.6} parent=0 // loop_pre_header
    _
  $region3: #{critic_forward.6} parent=0 // loop_header
    %s9 = sphi 0, %s13
    %p10 = scmp.ge.s32.totalorder %s9, 4
    %s19 = sphi 0, %s21
    %s22 = sphi 0, %s19
    %s23 = sphi 0, %s22
    %s39 = sphi 0, %s23
    %s43 = sphi 0, %s43
    %s45 = sphi 0, %s43
    %s46 = sphi 0, %s45
    %s60 = sphi 0, %s46
    %s64 = sphi 0, %s64
    %s66 = sphi 0, %s64
    %s67 = sphi 0, %s66
    %s81 = sphi 0, %s67
    %s87 = sphi 0, %s89
    %s90 = sphi 0, %s87
    %s91 = sphi 0, %s90
    %s107 = sphi 0, %s91
  $region4: #{critic_forward.6} parent=0 // loop_header_branch
    %12 = sbr.rel (%p10) target = $region8
  $region5: #{critic_forward.6} parent=0 // loop_body
    %s14 = ssub.s32 %s9, 1
    %s15 = ssub.s32 %s9, 2
    %s16 = sadd.s32 %s9, 1
    %s17 = ssub.s32 %s9, %s16
    %p18 = scmp.eq.s32.totalorder %s17, 0
    %s20 = sadd.s32 %s19, 1
    %s21 = scalar_select %p18, %s19, %s20
    %p24 = pneg %p18
    %p25 = scmp.eq.s32.totalorder %s9, 1
    %p26 = por %p24, %p25
    %p27 = scmp.ne.s32.totalorder %s19, %s22
    %p28 = scmp.eq.s32.totalorder %s9, 0
    %p29 = por %p27, %p28
    %p30 = scmp.ne.s32.totalorder %s19, %s22
    %p31 = scmp.eq.s32.totalorder %s14, 1
    %p32 = por %p30, %p31
    %p33 = scmp.ne.s32.totalorder %s22, %s23
    %p34 = scmp.eq.s32.totalorder %s14, 0
    %p35 = por %p33, %p34
    %p36 = scmp.ne.s32.totalorder %s22, %s23
    %p37 = scmp.eq.s32.totalorder %s15, 1
    %p38 = por %p36, %p37
    %p40 = scmp.ne.s32.totalorder %s23, %s39
    %p41 = scmp.eq.s32.totalorder %s15, 0
    %p42 = por %p40, %p41
    %s44 = sadd.s32 %s43, 1
    %p47 = scmp.eq.s32.totalorder %s9, 1
    %p48 = scmp.ne.s32.totalorder %s43, %s45
    %p49 = scmp.eq.s32.totalorder %s9, 0
    %p50 = por %p48, %p49
    %p51 = scmp.ne.s32.totalorder %s43, %s45
    %p52 = scmp.eq.s32.totalorder %s14, 1
    %p53 = por %p51, %p52
    %p54 = scmp.ne.s32.totalorder %s45, %s46
    %p55 = scmp.eq.s32.totalorder %s14, 0
    %p56 = por %p54, %p55
    %p57 = scmp.ne.s32.totalorder %s45, %s46
    %p58 = scmp.eq.s32.totalorder %s15, 1
    %p59 = por %p57, %p58
    %p61 = scmp.ne.s32.totalorder %s46, %s60
    %p62 = scmp.eq.s32.totalorder %s15, 0
    %p63 = por %p61, %p62
    %s65 = sadd.s32 %s64, 1
    %p68 = scmp.eq.s32.totalorder %s9, 1
    %p69 = scmp.ne.s32.totalorder %s64, %s66
    %p70 = scmp.eq.s32.totalorder %s9, 0
    %p71 = por %p69, %p70
    %p72 = scmp.ne.s32.totalorder %s64, %s66
    %p73 = scmp.eq.s32.totalorder %s14, 1
    %p74 = por %p72, %p73
    %p75 = scmp.ne.s32.totalorder %s66, %s67
    %p76 = scmp.eq.s32.totalorder %s14, 0
    %p77 = por %p75, %p76
    %p78 = scmp.ne.s32.totalorder %s66, %s67
    %p79 = scmp.eq.s32.totalorder %s15, 1
    %p80 = por %p78, %p79
    %p82 = scmp.ne.s32.totalorder %s67, %s81
    %p83 = scmp.eq.s32.totalorder %s15, 0
    %p84 = por %p82, %p83
    %s85 = ssub.s32 %s9, %s16
    %p86 = scmp.eq.s32.totalorder %s85, 0
    %s88 = sadd.s32 %s87, 1
    %s89 = scalar_select %p86, %s87, %s88
    %p92 = pneg %p86
    %p93 = scmp.eq.s32.totalorder %s9, 1
    %p94 = por %p92, %p93
    %p95 = scmp.ne.s32.totalorder %s87, %s90
    %p96 = scmp.eq.s32.totalorder %s9, 0
    %p97 = por %p95, %p96
    %p98 = scmp.ne.s32.totalorder %s87, %s90
    %p99 = scmp.eq.s32.totalorder %s14, 1
    %p100 = por %p98, %p99
    %p101 = scmp.ne.s32.totalorder %s90, %s91
    %p102 = scmp.eq.s32.totalorder %s14, 0
    %p103 = por %p101, %p102
    %p104 = scmp.ne.s32.totalorder %s90, %s91
    %p105 = scmp.eq.s32.totalorder %s15, 1
    %p106 = por %p104, %p105
    %p108 = scmp.ne.s32.totalorder %s91, %s107
    %p109 = scmp.eq.s32.totalorder %s15, 0
    %p110 = por %p108, %p109
    %p111 = scmp.le.s32.totalorder 1, %s9
    %p112 = scmp.lt.s32.totalorder %s9, 3
    %p113 = pnand %p111, %p112
    %p114 = pneg %p113
    // Predicated region
    $region9: #{critic_forward.6} parent=5 // pred_check
      _
    $region10: #{critic_forward.6} parent=5 // pred_check_branch
      %116 = sbr.rel (%p113) target = $region12
    $region11: #{critic_forward.6} parent=5 // pred_region
      %s117 = ssub.s32 %s9, 1
      // Predicated region
      $region13: #{critic_forward.6} parent=11 // pred_check
        %p118 = pneg %p56
      $region14: #{critic_forward.6} parent=11 // pred_check_branch
        %120 = sbr.rel (%p118) target = $region16
      $region15: #{critic_forward.6} parent=11 // pred_region
        _
      $region16: #{critic_forward.6} parent=11 // pred_fallthru
        _
      // Predicated region
      $region17: #{critic_forward.6} parent=11 // pred_check
        %p121 = pneg %p77
      $region18: #{critic_forward.6} parent=11 // pred_check_branch
        %123 = sbr.rel (%p121) target = $region20
      $region19: #{critic_forward.6} parent=11 // pred_region
        _
      $region20: #{critic_forward.6} parent=11 // pred_fallthru
        _
    $region12: #{critic_forward.6} parent=5 // pred_fallthru
      _
    %p124 = scmp.lt.s32.totalorder %s9, 2
    // Predicated region
    $region21: #{critic_forward.6} parent=5 // pred_check
      %p125 = pneg %p124
    $region22: #{critic_forward.6} parent=5 // pred_check_branch
      %127 = sbr.rel (%p125) target = $region24
    $region23: #{critic_forward.6} parent=5 // pred_region
      // Predicated region
      $region25: #{critic_forward.6} parent=23 // pred_check
        %p128 = pneg %p29
      $region26: #{critic_forward.6} parent=23 // pred_check_branch
        %130 = sbr.rel (%p128) target = $region28
      $region27: #{critic_forward.6} parent=23 // pred_region
        %p131 = scmp.lt.s32.totalorder %s9, 1
        %s132 = scalar_select %p131, %s9, 1
        %s133 = smul.addr %s132, 72
        %s134 = smul.addr %s133, 4
        %s135 = scalar_lea.vmem %s0, %s134
      $region28: #{critic_forward.6} parent=23 // pred_fallthru
        _
    $region24: #{critic_forward.6} parent=5 // pred_fallthru
      _
    %p136 = scmp.le.s32.totalorder 1, %s9
    %p137 = scmp.lt.s32.totalorder %s9, 3
    %p138 = pnand %p136, %p137
    %p139 = pneg %p138
    // Predicated region
    $region29: #{critic_forward.6} parent=5 // pred_check
      _
    $region30: #{critic_forward.6} parent=5 // pred_check_branch
      %141 = sbr.rel (%p138) target = $region32
    $region31: #{critic_forward.6} parent=5 // pred_region
      %s142 = ssub.s32 %s9, 1
      %p143 = scmp.lt.s32.totalorder %s14, 1
      %s144 = scalar_select %p143, %s14, 1
      %s145 = smul.addr %s144, 72
      %s146 = smul.addr %s145, 4
      %s147 = scalar_lea.vmem %s0, %s146
      %p148 = pneg %p35
      %p149 = pneg %p32
      %p150 = pneg %p56
      %p151 = pneg %p53
      %p152 = pneg %p77
      %p153 = pneg %p74
      %p154 = pneg %p103
      %p155 = pneg %p100
      %p156 = scmp.lt.s32.totalorder %s14, 1
      %s157 = scalar_select %p156, %s14, 1
      %s158 = smul.addr %s157, 8
      %s159 = smul.addr %s158, 4
      %s160 = scalar_lea.vmem %s3, %s159
      %p161 = scmp.lt.s32.totalorder %s14, 1
      %s162 = scalar_select %p161, %s14, 1
      %s163 = smul.addr %s162, 72
      %s164 = smul.addr %s163, 4
      %s165 = scalar_lea.vmem %s0, %s164
      %p166 = scmp.lt.s32.totalorder %s14, 1
      %s167 = scalar_select %p166, %s14, 1
      %s168 = smul.addr %s167, 8
      %s169 = smul.addr %s168, 4
      %s170 = scalar_lea.vmem %s3, %s169
      %v172 = vld [vmem:[%s165] sm:$0xf]
      %v173 = vld [vmem:[%s165 + $0x8] sm:$0xf]
      %v174 = vld [vmem:[%s165 + $0x10] sm:$0xf]
      %v175 = vld [vmem:[%s165 + $0x18] sm:$0xf]
      %v176 = vld [vmem:[%s165 + $0x20] sm:$0xf]
      %v177 = vld [vmem:[%s165 + $0x28] sm:$0xf]
      %v178 = vld [vmem:[%s165 + $0x30] sm:$0xf]
      %v179 = vld [vmem:[%s165 + $0x38] sm:$0xf]
      %v180 = vld [vmem:[%s1] sm:$0xf]
      %v181 = vld [vmem:[%s1 + $0x4] sm:$0xf]
      %v182 = vld [vmem:[%s1 + $0x8] sm:$0xf]
      %v183 = vld [vmem:[%s1 + $0xc] sm:$0xf]
      %s184 = scalar_lea.vmem %s165, 72
      %v185 = vld [vmem:[%s184] sm:$0xf]
      %v186 = vld [vmem:[%s184 + $0x8] sm:$0xf]
      %v187 = vld [vmem:[%s184 + $0x10] sm:$0xf]
      %v188 = vld [vmem:[%s184 + $0x18] sm:$0xf]
      %v189 = vld [vmem:[%s184 + $0x20] sm:$0xf]
      %v190 = vld [vmem:[%s184 + $0x28] sm:$0xf]
      %v191 = vld [vmem:[%s184 + $0x30] sm:$0xf]
      %v192 = vld [vmem:[%s184 + $0x38] sm:$0xf]
      %s193 = scalar_lea.vmem %s1, 16
      %v194 = vld [vmem:[%s193] sm:$0xf]
      %v195 = vld [vmem:[%s193 + $0x4] sm:$0xf]
      %v196 = vld [vmem:[%s193 + $0x8] sm:$0xf]
      %v197 = vld [vmem:[%s193 + $0xc] sm:$0xf]
      %v206 = vunpack.c.l.b16 %v185
      %v207 = vunpack.c.l.b16 %v186
      %v208 = vunpack.c.l.b16 %v187
      %v209 = vunpack.c.l.b16 %v188
      %v210 = vunpack.c.l.b16 %v189
      %v211 = vunpack.c.l.b16 %v190
      %v212 = vunpack.c.l.b16 %v191
      %v213 = vunpack.c.l.b16 %v192
      %v214 = vpack.c.b16 %v207, %v206
      %v215 = vpack.c.b16 %v209, %v208
      %v216 = vpack.c.b16 %v211, %v210
      %v217 = vpack.c.b16 %v213, %v212
      %v222 = vunpack.c.l.b16 %v194
      %v223 = vunpack.c.l.b16 %v195
      %v224 = vunpack.c.l.b16 %v196
      %v225 = vunpack.c.l.b16 %v197
      %v226 = vpack.c.b16 %v223, %v222
      %v227 = vpack.c.b16 %v225, %v224
      %vm230 = vcmask 261120
      %v232 = vsel %vm230, %v214, 0
      %v235 = vsel %vm230, %v215, 0
      %v238 = vsel %vm230, %v216, 0
      %v241 = vsel %vm230, %v217, 0
      %243 = vmatprep.subr.bf16.mxu0 0
      %244 = vmatpush1.bf16.msra.mxu0 %v226
      %245 = vmatprep.subr.bf16.mxu0 0
      %246 = vmatpush1.bf16.msra.mxu0 %v227
      %247 = vmatprep.subr.bf16.mxu0 0
      %248 = vmatpush1.bf16.msra.mxu0 0
      %249 = vmatprep.subr.bf16.mxu0 0
      %250 = vmatpush1.bf16.msra.mxu0 0
      %251 = vmatprep.subr.bf16.mxu0 0
      %252 = vmatpush1.bf16.msra.mxu0 0
      %253 = vmatprep.subr.bf16.mxu0 0
      %254 = vmatpush1.bf16.msra.mxu0 0
      %255 = vmatprep.subr.bf16.mxu0 0
      %256 = vmatpush1.bf16.msra.mxu0 0
      %257 = vmatprep.subr.bf16.mxu0 0
      %258 = vmatpush1.bf16.msra.mxu0 0
      %259 = vmatprep.subr.bf16.mxu0 0
      %260 = vmatpush1.bf16.msra.mxu0 0
      %261 = vmatprep.subr.bf16.mxu0 0
      %262 = vmatpush1.bf16.msra.mxu0 0
      %263 = vmatprep.subr.bf16.mxu0 0
      %264 = vmatpush1.bf16.msra.mxu0 0
      %265 = vmatprep.subr.bf16.mxu0 0
      %266 = vmatpush1.bf16.msra.mxu0 0
      %267 = vmatprep.subr.bf16.mxu0 0
      %268 = vmatpush1.bf16.msra.mxu0 0
      %269 = vmatprep.subr.bf16.mxu0 0
      %270 = vmatpush1.bf16.msra.mxu0 0
      %271 = vmatprep.subr.bf16.mxu0 0
      %272 = vmatpush1.bf16.msra.mxu0 0
      %273 = vmatprep.subr.bf16.mxu0 0
      %274 = vmatpush1.bf16.msra.mxu0 0
      %275 = vmatprep.mubr.bf16.mxu0 0
      %276 = vmatmul.mubr.bf16.gmra.mrb[0].mxu0 %v232
      %v277 = vpop.f32.mrb[0].mxu0
      %v278 = vadd.f32 0.0, %v277
      %v279 = vpop.f32.mrb[0].mxu0
      %v280 = vpop.f32.mrb[0].mxu0
      %v281 = vadd.f32 0.0, %v280
      %v282 = vpop.f32.mrb[0].mxu0
      %283 = vmatprep.mubr.bf16.mxu0 0
      %284 = vmatmul.mubr.bf16.gmra.mrb[0].mxu0 %v235
      %v285 = vpop.f32.mrb[0].mxu0
      %v286 = vadd.f32 0.0, %v285
      %v287 = vpop.f32.mrb[0].mxu0
      %v288 = vpop.f32.mrb[0].mxu0
      %v289 = vadd.f32 0.0, %v288
      %v290 = vpop.f32.mrb[0].mxu0
      %291 = vmatprep.mubr.bf16.mxu0 0
      %292 = vmatmul.mubr.bf16.gmra.mrb[0].mxu0 %v238
      %v293 = vpop.f32.mrb[0].mxu0
      %v294 = vadd.f32 0.0, %v293
      %v295 = vpop.f32.mrb[0].mxu0
      %v296 = vpop.f32.mrb[0].mxu0
      %v297 = vadd.f32 0.0, %v296
      %v298 = vpop.f32.mrb[0].mxu0
      %299 = vmatprep.mubr.bf16.mxu0 0
      %300 = vmatmul.mubr.bf16.gmra.mrb[0].mxu0 %v241
      %v301 = vpop.f32.mrb[0].mxu0
      %v302 = vadd.f32 0.0, %v301
      %v303 = vpop.f32.mrb[0].mxu0
      %v304 = vpop.f32.mrb[0].mxu0
      %v305 = vadd.f32 0.0, %v304
      %v306 = vpop.f32.mrb[0].mxu0
      %307 = vdwg.mxu0
      %v316 = vunpack.c.l.b16 %v172
      %v317 = vunpack.c.l.b16 %v173
      %v318 = vunpack.c.l.b16 %v174
      %v319 = vunpack.c.l.b16 %v175
      %v320 = vunpack.c.l.b16 %v176
      %v321 = vunpack.c.l.b16 %v177
      %v322 = vunpack.c.l.b16 %v178
      %v323 = vunpack.c.l.b16 %v179
      %v324 = vpack.c.b16 %v317, %v316
      %v325 = vpack.c.b16 %v319, %v318
      %v326 = vpack.c.b16 %v321, %v320
      %v327 = vpack.c.b16 %v323, %v322
      %v332 = vunpack.c.l.b16 %v180
      %v333 = vunpack.c.l.b16 %v181
      %v334 = vunpack.c.l.b16 %v182
      %v335 = vunpack.c.l.b16 %v183
      %v336 = vpack.c.b16 %v333, %v332
      %v337 = vpack.c.b16 %v335, %v334
      %v341 = vsel %vm230, %v324, 0
      %v344 = vsel %vm230, %v325, 0
      %v347 = vsel %vm230, %v326, 0
      %v350 = vsel %vm230, %v327, 0
      %352 = vmatprep.subr.bf16.mxu0 0
      %353 = vmatpush1.bf16.msra.mxu0 %v336
      %354 = vmatprep.subr.bf16.mxu0 0
      %355 = vmatpush1.bf16.msra.mxu0 %v337
      %356 = vmatprep.subr.bf16.mxu0 0
      %357 = vmatpush1.bf16.msra.mxu0 0
      %358 = vmatprep.subr.bf16.mxu0 0
      %359 = vmatpush1.bf16.msra.mxu0 0
      %360 = vmatprep.subr.bf16.mxu0 0
      %361 = vmatpush1.bf16.msra.mxu0 0
      %362 = vmatprep.subr.bf16.mxu0 0
      %363 = vmatpush1.bf16.msra.mxu0 0
      %364 = vmatprep.subr.bf16.mxu0 0
      %365 = vmatpush1.bf16.msra.mxu0 0
      %366 = vmatprep.subr.bf16.mxu0 0
      %367 = vmatpush1.bf16.msra.mxu0 0
      %368 = vmatprep.subr.bf16.mxu0 0
      %369 = vmatpush1.bf16.msra.mxu0 0
      %370 = vmatprep.subr.bf16.mxu0 0
      %371 = vmatpush1.bf16.msra.mxu0 0
      %372 = vmatprep.subr.bf16.mxu0 0
      %373 = vmatpush1.bf16.msra.mxu0 0
      %374 = vmatprep.subr.bf16.mxu0 0
      %375 = vmatpush1.bf16.msra.mxu0 0
      %376 = vmatprep.subr.bf16.mxu0 0
      %377 = vmatpush1.bf16.msra.mxu0 0
      %378 = vmatprep.subr.bf16.mxu0 0
      %379 = vmatpush1.bf16.msra.mxu0 0
      %380 = vmatprep.subr.bf16.mxu0 0
      %381 = vmatpush1.bf16.msra.mxu0 0
      %382 = vmatprep.subr.bf16.mxu0 0
      %383 = vmatpush1.bf16.msra.mxu0 0
      %384 = vmatprep.mubr.bf16.mxu0 0
      %385 = vmatmul.mubr.bf16.gmra.mrb[0].mxu0 %v341
      %v386 = vpop.f32.mrb[0].mxu0
      %v387 = vadd.f32 %v278, %v386
      %v388 = vpop.f32.mrb[0].mxu0
      %v389 = vpop.f32.mrb[0].mxu0
      %v390 = vadd.f32 %v281, %v389
      %v391 = vpop.f32.mrb[0].mxu0
      %392 = vmatprep.mubr.bf16.mxu0 0
      %393 = vmatmul.mubr.bf16.gmra.mrb[0].mxu0 %v344
      %v394 = vpop.f32.mrb[0].mxu0
      %v395 = vadd.f32 %v286, %v394
      %v396 = vpop.f32.mrb[0].mxu0
      %v397 = vpop.f32.mrb[0].mxu0
      %v398 = vadd.f32 %v289, %v397
      %v399 = vpop.f32.mrb[0].mxu0
      %400 = vmatprep.mubr.bf16.mxu0 0
      %401 = vmatmul.mubr.bf16.gmra.mrb[0].mxu0 %v347
      %v402 = vpop.f32.mrb[0].mxu0
      %v403 = vadd.f32 %v294, %v402
      %v404 = vpop.f32.mrb[0].mxu0
      %v405 = vpop.f32.mrb[0].mxu0
      %v406 = vadd.f32 %v297, %v405
      %v407 = vpop.f32.mrb[0].mxu0
      %408 = vmatprep.mubr.bf16.mxu0 0
      %409 = vmatmul.mubr.bf16.gmra.mrb[0].mxu0 %v350
      %v410 = vpop.f32.mrb[0].mxu0
      %v411 = vadd.f32 %v302, %v410
      %v412 = vpop.f32.mrb[0].mxu0
      %v413 = vpop.f32.mrb[0].mxu0
      %v414 = vadd.f32 %v305, %v413
      %v415 = vpop.f32.mrb[0].mxu0
      %416 = vdwg.mxu0
      %v417 = vld [vmem:[%s165] sm:$0xf]
      %v418 = vld [vmem:[%s165 + $0x4] sm:$0x1]
      %v419 = vld [vmem:[%s165 + $0x8] sm:$0xf]
      %v420 = vld [vmem:[%s165 + $0xc] sm:$0x1]
      %v421 = vld [vmem:[%s165 + $0x10] sm:$0xf]
      %v422 = vld [vmem:[%s165 + $0x14] sm:$0x1]
      %v423 = vld [vmem:[%s165 + $0x18] sm:$0xf]
      %v424 = vld [vmem:[%s165 + $0x1c] sm:$0x1]
      %v425 = vld [vmem:[%s165 + $0x20] sm:$0xf]
      %v426 = vld [vmem:[%s165 + $0x24] sm:$0x1]
      %v427 = vld [vmem:[%s165 + $0x28] sm:$0xf]
      %v428 = vld [vmem:[%s165 + $0x2c] sm:$0x1]
      %v429 = vld [vmem:[%s165 + $0x30] sm:$0xf]
      %v430 = vld [vmem:[%s165 + $0x34] sm:$0x1]
      %v431 = vld [vmem:[%s165 + $0x38] sm:$0xf]
      %v432 = vld [vmem:[%s165 + $0x3c] sm:$0x1]
      %vm433 = vsmask.f32 3328
      %vm434 = vsmask.f32 7440
      %vm435 = vmor %vm433, %vm434
      %v437 = vshrl.u32 %v417, 16
      %v439 = vrot.slane %v437, 4
      %v440 = vshll.u32 %v417, 16
      %v442 = vrot.slane %v440, 5
      %v443 = vor.u32 %v439, %v442
      %v444 = vrot.slane %v443, 4
      %v446 = vshll.u32 %v418, 16
      %v448 = vrot.slane %v446, 5
      %v449 = vsel %vm435, %v444, %v448
      %v451 = vshrl.u32 %v419, 16
      %v453 = vrot.slane %v451, 4
      %v454 = vshll.u32 %v419, 16
      %v456 = vrot.slane %v454, 5
      %v457 = vor.u32 %v453, %v456
      %v458 = vrot.slane %v457, 4
      %v460 = vshll.u32 %v420, 16
      %v462 = vrot.slane %v460, 5
      %v463 = vsel %vm435, %v458, %v462
      %v465 = vshrl.u32 %v421, 16
      %v467 = vrot.slane %v465, 4
      %v468 = vshll.u32 %v421, 16
      %v470 = vrot.slane %v468, 5
      %v471 = vor.u32 %v467, %v470
      %v472 = vrot.slane %v471, 4
      %v474 = vshll.u32 %v422, 16
      %v476 = vrot.slane %v474, 5
      %v477 = vsel %vm435, %v472, %v476
      %v479 = vshrl.u32 %v423, 16
      %v481 = vrot.slane %v479, 4
      %v482 = vshll.u32 %v423, 16
      %v484 = vrot.slane %v482, 5
      %v485 = vor.u32 %v481, %v484
      %v486 = vrot.slane %v485, 4
      %v488 = vshll.u32 %v424, 16
      %v490 = vrot.slane %v488, 5
      %v491 = vsel %vm435, %v486, %v490
      %v493 = vshrl.u32 %v425, 16
      %v495 = vrot.slane %v493, 4
      %v496 = vshll.u32 %v425, 16
      %v498 = vrot.slane %v496, 5
      %v499 = vor.u32 %v495, %v498
      %v500 = vrot.slane %v499, 4
      %v502 = vshll.u32 %v426, 16
      %v504 = vrot.slane %v502, 5
      %v505 = vsel %vm435, %v500, %v504
      %v507 = vshrl.u32 %v427, 16
      %v509 = vrot.slane %v507, 4
      %v510 = vshll.u32 %v427, 16
      %v512 = vrot.slane %v510, 5
      %v513 = vor.u32 %v509, %v512
      %v514 = vrot.slane %v513, 4
      %v516 = vshll.u32 %v428, 16
      %v518 = vrot.slane %v516, 5
      %v519 = vsel %vm435, %v514, %v518
      %v521 = vshrl.u32 %v429, 16
      %v523 = vrot.slane %v521, 4
      %v524 = vshll.u32 %v429, 16
      %v526 = vrot.slane %v524, 5
      %v527 = vor.u32 %v523, %v526
      %v528 = vrot.slane %v527, 4
      %v530 = vshll.u32 %v430, 16
      %v532 = vrot.slane %v530, 5
      %v533 = vsel %vm435, %v528, %v532
      %v535 = vshrl.u32 %v431, 16
      %v537 = vrot.slane %v535, 4
      %v538 = vshll.u32 %v431, 16
      %v540 = vrot.slane %v538, 5
      %v541 = vor.u32 %v537, %v540
      %v542 = vrot.slane %v541, 4
      %v544 = vshll.u32 %v432, 16
      %v546 = vrot.slane %v544, 5
      %v547 = vsel %vm435, %v542, %v546
      %s548 = scalar_lea.vmem %s1, 32
      %v549 = vld [vmem:[%s548] sm:$0xf]
      %v550 = vld [vmem:[%s548 + $0x4] sm:$0xf]
      %v551 = vld [vmem:[%s548 + $0x8] sm:$0xf]
      %v552 = vld [vmem:[%s548 + $0xc] sm:$0xf]
      %v553 = vunpack.c.l.b16 %v449
      %v554 = vunpack.c.l.b16 %v463
      %v555 = vunpack.c.l.b16 %v477
      %v556 = vunpack.c.l.b16 %v491
      %v557 = vunpack.c.l.b16 %v505
      %v558 = vunpack.c.l.b16 %v519
      %v559 = vunpack.c.l.b16 %v533
      %v560 = vunpack.c.l.b16 %v547
      %v561 = vpack.c.b16 %v554, %v553
      %v562 = vpack.c.b16 %v556, %v555
      %v563 = vpack.c.b16 %v558, %v557
      %v564 = vpack.c.b16 %v560, %v559
      %v569 = vunpack.c.l.b16 %v549
      %v570 = vunpack.c.l.b16 %v550
      %v571 = vunpack.c.l.b16 %v551
      %v572 = vunpack.c.l.b16 %v552
      %v573 = vpack.c.b16 %v570, %v569
      %v574 = vpack.c.b16 %v572, %v571
      %v578 = vsel %vm230, %v561, 0
      %v581 = vsel %vm230, %v562, 0
      %v584 = vsel %vm230, %v563, 0
      %v587 = vsel %vm230, %v564, 0
      %589 = vmatprep.subr.bf16.mxu0 0
      %590 = vmatpush1.bf16.msra.mxu0 %v573
      %591 = vmatprep.subr.bf16.mxu0 0
      %592 = vmatpush1.bf16.msra.mxu0 %v574
      %593 = vmatprep.subr.bf16.mxu0 0
      %594 = vmatpush1.bf16.msra.mxu0 0
      %595 = vmatprep.subr.bf16.mxu0 0
      %596 = vmatpush1.bf16.msra.mxu0 0
      %597 = vmatprep.subr.bf16.mxu0 0
      %598 = vmatpush1.bf16.msra.mxu0 0
      %599 = vmatprep.subr.bf16.mxu0 0
      %600 = vmatpush1.bf16.msra.mxu0 0
      %601 = vmatprep.subr.bf16.mxu0 0
      %602 = vmatpush1.bf16.msra.mxu0 0
      %603 = vmatprep.subr.bf16.mxu0 0
      %604 = vmatpush1.bf16.msra.mxu0 0
      %605 = vmatprep.subr.bf16.mxu0 0
      %606 = vmatpush1.bf16.msra.mxu0 0
      %607 = vmatprep.subr.bf16.mxu0 0
      %608 = vmatpush1.bf16.msra.mxu0 0
      %609 = vmatprep.subr.bf16.mxu0 0
      %610 = vmatpush1.bf16.msra.mxu0 0
      %611 = vmatprep.subr.bf16.mxu0 0
      %612 = vmatpush1.bf16.msra.mxu0 0
      %613 = vmatprep.subr.bf16.mxu0 0
      %614 = vmatpush1.bf16.msra.mxu0 0
      %615 = vmatprep.subr.bf16.mxu0 0
      %616 = vmatpush1.bf16.msra.mxu0 0
      %617 = vmatprep.subr.bf16.mxu0 0
      %618 = vmatpush1.bf16.msra.mxu0 0
      %619 = vmatprep.subr.bf16.mxu0 0
      %620 = vmatpush1.bf16.msra.mxu0 0
      %621 = vmatprep.mubr.bf16.mxu0 0
      %622 = vmatmul.mubr.bf16.gmra.mrb[0].mxu0 %v578
      %v623 = vpop.f32.mrb[0].mxu0
      %v624 = vadd.f32 0.0, %v623
      %v625 = vpop.f32.mrb[0].mxu0
      %v626 = vpop.f32.mrb[0].mxu0
      %v627 = vadd.f32 0.0, %v626
      %v628 = vpop.f32.mrb[0].mxu0
      %629 = vmatprep.mubr.bf16.mxu0 0
      %630 = vmatmul.mubr.bf16.gmra.mrb[0].mxu0 %v581
      %v631 = vpop.f32.mrb[0].mxu0
      %v632 = vadd.f32 0.0, %v631
      %v633 = vpop.f32.mrb[0].mxu0
      %v634 = vpop.f32.mrb[0].mxu0
      %v635 = vadd.f32 0.0, %v634
      %v636 = vpop.f32.mrb[0].mxu0
      %637 = vmatprep.mubr.bf16.mxu0 0
      %638 = vmatmul.mubr.bf16.gmra.mrb[0].mxu0 %v584
      %v639 = vpop.f32.mrb[0].mxu0
      %v640 = vadd.f32 0.0, %v639
      %v641 = vpop.f32.mrb[0].mxu0
      %v642 = vpop.f32.mrb[0].mxu0
      %v643 = vadd.f32 0.0, %v642
      %v644 = vpop.f32.mrb[0].mxu0
      %645 = vmatprep.mubr.bf16.mxu0 0
      %646 = vmatmul.mubr.bf16.gmra.mrb[0].mxu0 %v587
      %v647 = vpop.f32.mrb[0].mxu0
      %v648 = vadd.f32 0.0, %v647
      %v649 = vpop.f32.mrb[0].mxu0
      %v650 = vpop.f32.mrb[0].mxu0
      %v651 = vadd.f32 0.0, %v650
      %v652 = vpop.f32.mrb[0].mxu0
      %653 = vdwg.mxu0
      %v654 = vadd.f32 %v387, %v624
      %v655 = vadd.f32 %v390, %v627
      %v656 = vadd.f32 %v395, %v632
      %v657 = vadd.f32 %v398, %v635
      %v658 = vadd.f32 %v403, %v640
      %v659 = vadd.f32 %v406, %v643
      %v660 = vadd.f32 %v411, %v648
      %v661 = vadd.f32 %v414, %v651
      %s662 = scalar_lea.vmem %s165, 144
      %v663 = vld [vmem:[%s662] sm:$0xf]
      %v664 = vld [vmem:[%s662 + $0x8] sm:$0xf]
      %v665 = vld [vmem:[%s662 + $0x10] sm:$0xf]
      %v666 = vld [vmem:[%s662 + $0x18] sm:$0xf]
      %v667 = vld [vmem:[%s662 + $0x20] sm:$0xf]
      %v668 = vld [vmem:[%s662 + $0x28] sm:$0xf]
      %v669 = vld [vmem:[%s662 + $0x30] sm:$0xf]
      %v670 = vld [vmem:[%s662 + $0x38] sm:$0xf]
      %s671 = scalar_lea.vmem %s1, 48
      %v672 = vld [vmem:[%s671] sm:$0xf]
      %v673 = vld [vmem:[%s671 + $0x4] sm:$0xf]
      %v674 = vld [vmem:[%s671 + $0x8] sm:$0xf]
      %v675 = vld [vmem:[%s671 + $0xc] sm:$0xf]
      %v684 = vunpack.c.l.b16 %v663
      %v685 = vunpack.c.l.b16 %v664
      %v686 = vunpack.c.l.b16 %v665
      %v687 = vunpack.c.l.b16 %v666
      %v688 = vunpack.c.l.b16 %v667
      %v689 = vunpack.c.l.b16 %v668
      %v690 = vunpack.c.l.b16 %v669
      %v691 = vunpack.c.l.b16 %v670
      %v692 = vpack.c.b16 %v685, %v684
      %v693 = vpack.c.b16 %v687, %v686
      %v694 = vpack.c.b16 %v689, %v688
      %v695 = vpack.c.b16 %v691, %v690
      %v700 = vunpack.c.l.b16 %v672
      %v701 = vunpack.c.l.b16 %v673
      %v702 = vunpack.c.l.b16 %v674
      %v703 = vunpack.c.l.b16 %v675
      %v704 = vpack.c.b16 %v701, %v700
      %v705 = vpack.c.b16 %v703, %v702
      %v709 = vsel %vm230, %v692, 0
      %v712 = vsel %vm230, %v693, 0
      %v715 = vsel %vm230, %v694, 0
      %v718 = vsel %vm230, %v695, 0
      %720 = vmatprep.subr.bf16.mxu0 0
      %721 = vmatpush1.bf16.msra.mxu0 %v704
      %722 = vmatprep.subr.bf16.mxu0 0
      %723 = vmatpush1.bf16.msra.mxu0 %v705
      %724 = vmatprep.subr.bf16.mxu0 0
      %725 = vmatpush1.bf16.msra.mxu0 0
      %726 = vmatprep.subr.bf16.mxu0 0
      %727 = vmatpush1.bf16.msra.mxu0 0
      %728 = vmatprep.subr.bf16.mxu0 0
      %729 = vmatpush1.bf16.msra.mxu0 0
      %730 = vmatprep.subr.bf16.mxu0 0
      %731 = vmatpush1.bf16.msra.mxu0 0
      %732 = vmatprep.subr.bf16.mxu0 0
      %733 = vmatpush1.bf16.msra.mxu0 0
      %734 = vmatprep.subr.bf16.mxu0 0
      %735 = vmatpush1.bf16.msra.mxu0 0
      %736 = vmatprep.subr.bf16.mxu0 0
      %737 = vmatpush1.bf16.msra.mxu0 0
      %738 = vmatprep.subr.bf16.mxu0 0
      %739 = vmatpush1.bf16.msra.mxu0 0
      %740 = vmatprep.subr.bf16.mxu0 0
      %741 = vmatpush1.bf16.msra.mxu0 0
      %742 = vmatprep.subr.bf16.mxu0 0
      %743 = vmatpush1.bf16.msra.mxu0 0
      %744 = vmatprep.subr.bf16.mxu0 0
      %745 = vmatpush1.bf16.msra.mxu0 0
      %746 = vmatprep.subr.bf16.mxu0 0
      %747 = vmatpush1.bf16.msra.mxu0 0
      %748 = vmatprep.subr.bf16.mxu0 0
      %749 = vmatpush1.bf16.msra.mxu0 0
      %750 = vmatprep.subr.bf16.mxu0 0
      %751 = vmatpush1.bf16.msra.mxu0 0
      %752 = vmatprep.mubr.bf16.mxu0 0
      %753 = vmatmul.mubr.bf16.gmra.mrb[0].mxu0 %v709
      %v754 = vpop.f32.mrb[0].mxu0
      %v755 = vadd.f32 0.0, %v754
      %v756 = vpop.f32.mrb[0].mxu0
      %v757 = vpop.f32.mrb[0].mxu0
      %v758 = vadd.f32 0.0, %v757
      %v759 = vpop.f32.mrb[0].mxu0
      %760 = vmatprep.mubr.bf16.mxu0 0
      %761 = vmatmul.mubr.bf16.gmra.mrb[0].mxu0 %v712
      %v762 = vpop.f32.mrb[0].mxu0
      %v763 = vadd.f32 0.0, %v762
      %v764 = vpop.f32.mrb[0].mxu0
      %v765 = vpop.f32.mrb[0].mxu0
      %v766 = vadd.f32 0.0, %v765
      %v767 = vpop.f32.mrb[0].mxu0
      %768 = vmatprep.mubr.bf16.mxu0 0
      %769 = vmatmul.mubr.bf16.gmra.mrb[0].mxu0 %v715
      %v770 = vpop.f32.mrb[0].mxu0
      %v771 = vadd.f32 0.0, %v770
      %v772 = vpop.f32.mrb[0].mxu0
      %v773 = vpop.f32.mrb[0].mxu0
      %v774 = vadd.f32 0.0, %v773
      %v775 = vpop.f32.mrb[0].mxu0
      %776 = vmatprep.mubr.bf16.mxu0 0
      %777 = vmatmul.mubr.bf16.gmra.mrb[0].mxu0 %v718
      %v778 = vpop.f32.mrb[0].mxu0
      %v779 = vadd.f32 0.0, %v778
      %v780 = vpop.f32.mrb[0].mxu0
      %v781 = vpop.f32.mrb[0].mxu0
      %v782 = vadd.f32 0.0, %v781
      %v783 = vpop.f32.mrb[0].mxu0
      %784 = vdwg.mxu0
      %v785 = vadd.f32 %v654, %v755
      %v786 = vadd.f32 %v655, %v758
      %v787 = vadd.f32 %v656, %v763
      %v788 = vadd.f32 %v657, %v766
      %v789 = vadd.f32 %v658, %v771
      %v790 = vadd.f32 %v659, %v774
      %v791 = vadd.f32 %v660, %v779
      %v792 = vadd.f32 %v661, %v782
      %s793 = scalar_lea.vmem %s165, 216
      %v794 = vld [vmem:[%s793] sm:$0xf]
      %v795 = vld [vmem:[%s793 + $0x8] sm:$0xf]
      %v796 = vld [vmem:[%s793 + $0x10] sm:$0xf]
      %v797 = vld [vmem:[%s793 + $0x18] sm:$0xf]
      %v798 = vld [vmem:[%s793 + $0x20] sm:$0xf]
      %v799 = vld [vmem:[%s793 + $0x28] sm:$0xf]
      %v800 = vld [vmem:[%s793 + $0x30] sm:$0xf]
      %v801 = vld [vmem:[%s793 + $0x38] sm:$0xf]
      %s802 = scalar_lea.vmem %s1, 64
      %v803 = vld [vmem:[%s802] sm:$0xf]
      %v804 = vld [vmem:[%s802 + $0x4] sm:$0xf]
      %v805 = vld [vmem:[%s802 + $0x8] sm:$0xf]
      %v806 = vld [vmem:[%s802 + $0xc] sm:$0xf]
      %v815 = vunpack.c.l.b16 %v794
      %v816 = vunpack.c.l.b16 %v795
      %v817 = vunpack.c.l.b16 %v796
      %v818 = vunpack.c.l.b16 %v797
      %v819 = vunpack.c.l.b16 %v798
      %v820 = vunpack.c.l.b16 %v799
      %v821 = vunpack.c.l.b16 %v800
      %v822 = vunpack.c.l.b16 %v801
      %v823 = vpack.c.b16 %v816, %v815
      %v824 = vpack.c.b16 %v818, %v817
      %v825 = vpack.c.b16 %v820, %v819
      %v826 = vpack.c.b16 %v822, %v821
      %v831 = vunpack.c.l.b16 %v803
      %v832 = vunpack.c.l.b16 %v804
      %v833 = vunpack.c.l.b16 %v805
      %v834 = vunpack.c.l.b16 %v806
      %v835 = vpack.c.b16 %v832, %v831
      %v836 = vpack.c.b16 %v834, %v833
      %v840 = vsel %vm230, %v823, 0
      %v843 = vsel %vm230, %v824, 0
      %v846 = vsel %vm230, %v825, 0
      %v849 = vsel %vm230, %v826, 0
      %851 = vmatprep.subr.bf16.mxu0 0
      %852 = vmatpush1.bf16.msra.mxu0 %v835
      %853 = vmatprep.subr.bf16.mxu0 0
      %854 = vmatpush1.bf16.msra.mxu0 %v836
      %855 = vmatprep.subr.bf16.mxu0 0
      %856 = vmatpush1.bf16.msra.mxu0 0
      %857 = vmatprep.subr.bf16.mxu0 0
      %858 = vmatpush1.bf16.msra.mxu0 0
      %859 = vmatprep.subr.bf16.mxu0 0
      %860 = vmatpush1.bf16.msra.mxu0 0
      %861 = vmatprep.subr.bf16.mxu0 0
      %862 = vmatpush1.bf16.msra.mxu0 0
      %863 = vmatprep.subr.bf16.mxu0 0
      %864 = vmatpush1.bf16.msra.mxu0 0
      %865 = vmatprep.subr.bf16.mxu0 0
      %866 = vmatpush1.bf16.msra.mxu0 0
      %867 = vmatprep.subr.bf16.mxu0 0
      %868 = vmatpush1.bf16.msra.mxu0 0
      %869 = vmatprep.subr.bf16.mxu0 0
      %870 = vmatpush1.bf16.msra.mxu0 0
      %871 = vmatprep.subr.bf16.mxu0 0
      %872 = vmatpush1.bf16.msra.mxu0 0
      %873 = vmatprep.subr.bf16.mxu0 0
      %874 = vmatpush1.bf16.msra.mxu0 0
      %875 = vmatprep.subr.bf16.mxu0 0
      %876 = vmatpush1.bf16.msra.mxu0 0
      %877 = vmatprep.subr.bf16.mxu0 0
      %878 = vmatpush1.bf16.msra.mxu0 0
      %879 = vmatprep.subr.bf16.mxu0 0
      %880 = vmatpush1.bf16.msra.mxu0 0
      %881 = vmatprep.subr.bf16.mxu0 0
      %882 = vmatpush1.bf16.msra.mxu0 0
      %883 = vmatprep.mubr.bf16.mxu0 0
      %884 = vmatmul.mubr.bf16.gmra.mrb[0].mxu0 %v840
      %v885 = vpop.f32.mrb[0].mxu0
      %v886 = vadd.f32 0.0, %v885
      %v887 = vpop.f32.mrb[0].mxu0
      %v888 = vpop.f32.mrb[0].mxu0
      %v889 = vadd.f32 0.0, %v888
      %v890 = vpop.f32.mrb[0].mxu0
      %891 = vmatprep.mubr.bf16.mxu0 0
      %892 = vmatmul.mubr.bf16.gmra.mrb[0].mxu0 %v843
      %v893 = vpop.f32.mrb[0].mxu0
      %v894 = vadd.f32 0.0, %v893
      %v895 = vpop.f32.mrb[0].mxu0
      %v896 = vpop.f32.mrb[0].mxu0
      %v897 = vadd.f32 0.0, %v896
      %v898 = vpop.f32.mrb[0].mxu0
      %899 = vmatprep.mubr.bf16.mxu0 0
      %900 = vmatmul.mubr.bf16.gmra.mrb[0].mxu0 %v846
      %v901 = vpop.f32.mrb[0].mxu0
      %v902 = vadd.f32 0.0, %v901
      %v903 = vpop.f32.mrb[0].mxu0
      %v904 = vpop.f32.mrb[0].mxu0
      %v905 = vadd.f32 0.0, %v904
      %v906 = vpop.f32.mrb[0].mxu0
      %907 = vmatprep.mubr.bf16.mxu0 0
      %908 = vmatmul.mubr.bf16.gmra.mrb[0].mxu0 %v849
      %v909 = vpop.f32.mrb[0].mxu0
      %v910 = vadd.f32 0.0, %v909
      %v911 = vpop.f32.mrb[0].mxu0
      %v912 = vpop.f32.mrb[0].mxu0
      %v913 = vadd.f32 0.0, %v912
      %v914 = vpop.f32.mrb[0].mxu0
      %915 = vdwg.mxu0
      %v916 = vadd.f32 %v785, %v886
      %v917 = vadd.f32 %v786, %v889
      %v918 = vadd.f32 %v787, %v894
      %v919 = vadd.f32 %v788, %v897
      %v920 = vadd.f32 %v789, %v902
      %v921 = vadd.f32 %v790, %v905
      %v922 = vadd.f32 %v791, %v910
      %v923 = vadd.f32 %v792, %v913
      %v924 = vld [vmem:[%s662] sm:$0xf]
      %v925 = vld [vmem:[%s662 + $0x4] sm:$0x1]
      %v926 = vld [vmem:[%s662 + $0x8] sm:$0xf]
      %v927 = vld [vmem:[%s662 + $0xc] sm:$0x1]
      %v928 = vld [vmem:[%s662 + $0x10] sm:$0xf]
      %v929 = vld [vmem:[%s662 + $0x14] sm:$0x1]
      %v930 = vld [vmem:[%s662 + $0x18] sm:$0xf]
      %v931 = vld [vmem:[%s662 + $0x1c] sm:$0x1]
      %v932 = vld [vmem:[%s662 + $0x20] sm:$0xf]
      %v933 = vld [vmem:[%s662 + $0x24] sm:$0x1]
      %v934 = vld [vmem:[%s662 + $0x28] sm:$0xf]
      %v935 = vld [vmem:[%s662 + $0x2c] sm:$0x1]
      %v936 = vld [vmem:[%s662 + $0x30] sm:$0xf]
      %v937 = vld [vmem:[%s662 + $0x34] sm:$0x1]
      %v938 = vld [vmem:[%s662 + $0x38] sm:$0xf]
      %v939 = vld [vmem:[%s662 + $0x3c] sm:$0x1]
      %v941 = vshrl.u32 %v924, 16
      %v943 = vrot.slane %v941, 4
      %v944 = vshll.u32 %v924, 16
      %v946 = vrot.slane %v944, 5
      %v947 = vor.u32 %v943, %v946
      %v948 = vrot.slane %v947, 4
      %v950 = vshll.u32 %v925, 16
      %v952 = vrot.slane %v950, 5
      %v953 = vsel %vm435, %v948, %v952
      %v955 = vshrl.u32 %v926, 16
      %v957 = vrot.slane %v955, 4
      %v958 = vshll.u32 %v926, 16
      %v960 = vrot.slane %v958, 5
      %v961 = vor.u32 %v957, %v960
      %v962 = vrot.slane %v961, 4
      %v964 = vshll.u32 %v927, 16
      %v966 = vrot.slane %v964, 5
      %v967 = vsel %vm435, %v962, %v966
      %v969 = vshrl.u32 %v928, 16
      %v971 = vrot.slane %v969, 4
      %v972 = vshll.u32 %v928, 16
      %v974 = vrot.slane %v972, 5
      %v975 = vor.u32 %v971, %v974
      %v976 = vrot.slane %v975, 4
      %v978 = vshll.u32 %v929, 16
      %v980 = vrot.slane %v978, 5
      %v981 = vsel %vm435, %v976, %v980
      %v983 = vshrl.u32 %v930, 16
      %v985 = vrot.slane %v983, 4
      %v986 = vshll.u32 %v930, 16
      %v988 = vrot.slane %v986, 5
      %v989 = vor.u32 %v985, %v988
      %v990 = vrot.slane %v989, 4
      %v992 = vshll.u32 %v931, 16
      %v994 = vrot.slane %v992, 5
      %v995 = vsel %vm435, %v990, %v994
      %v997 = vshrl.u32 %v932, 16
      %v999 = vrot.slane %v997, 4
      %v1000 = vshll.u32 %v932, 16
      %v1002 = vrot.slane %v1000, 5
      %v1003 = vor.u32 %v999, %v1002
      %v1004 = vrot.slane %v1003, 4
      %v1006 = vshll.u32 %v933, 16
      %v1008 = vrot.slane %v1006, 5
      %v1009 = vsel %vm435, %v1004, %v1008
      %v1011 = vshrl.u32 %v934, 16
      %v1013 = vrot.slane %v1011, 4
      %v1014 = vshll.u32 %v934, 16
      %v1016 = vrot.slane %v1014, 5
      %v1017 = vor.u32 %v1013, %v1016
      %v1018 = vrot.slane %v1017, 4
      %v1020 = vshll.u32 %v935, 16
      %v1022 = vrot.slane %v1020, 5
      %v1023 = vsel %vm435, %v1018, %v1022
      %v1025 = vshrl.u32 %v936, 16
      %v1027 = vrot.slane %v1025, 4
      %v1028 = vshll.u32 %v936, 16
      %v1030 = vrot.slane %v1028, 5
      %v1031 = vor.u32 %v1027, %v1030
      %v1032 = vrot.slane %v1031, 4
      %v1034 = vshll.u32 %v937, 16
      %v1036 = vrot.slane %v1034, 5
      %v1037 = vsel %vm435, %v1032, %v1036
      %v1039 = vshrl.u32 %v938, 16
      %v1041 = vrot.slane %v1039, 4
      %v1042 = vshll.u32 %v938, 16
      %v1044 = vrot.slane %v1042, 5
      %v1045 = vor.u32 %v1041, %v1044
      %v1046 = vrot.slane %v1045, 4
      %v1048 = vshll.u32 %v939, 16
      %v1050 = vrot.slane %v1048, 5
      %v1051 = vsel %vm435, %v1046, %v1050
      %s1052 = scalar_lea.vmem %s1, 80
      %v1053 = vld [vmem:[%s1052] sm:$0xf]
      %v1054 = vld [vmem:[%s1052 + $0x4] sm:$0xf]
      %v1055 = vld [vmem:[%s1052 + $0x8] sm:$0xf]
      %v1056 = vld [vmem:[%s1052 + $0xc] sm:$0xf]
      %v1057 = vunpack.c.l.b16 %v953
      %v1058 = vunpack.c.l.b16 %v967
      %v1059 = vunpack.c.l.b16 %v981
      %v1060 = vunpack.c.l.b16 %v995
      %v1061 = vunpack.c.l.b16 %v1009
      %v1062 = vunpack.c.l.b16 %v1023
      %v1063 = vunpack.c.l.b16 %v1037
      %v1064 = vunpack.c.l.b16 %v1051
      %v1065 = vpack.c.b16 %v1058, %v1057
      %v1066 = vpack.c.b16 %v1060, %v1059
      %v1067 = vpack.c.b16 %v1062, %v1061
      %v1068 = vpack.c.b16 %v1064, %v1063
      %v1073 = vunpack.c.l.b16 %v1053
      %v1074 = vunpack.c.l.b16 %v1054
      %v1075 = vunpack.c.l.b16 %v1055
      %v1076 = vunpack.c.l.b16 %v1056
      %v1077 = vpack.c.b16 %v1074, %v1073
      %v1078 = vpack.c.b16 %v1076, %v1075
      %v1082 = vsel %vm230, %v1065, 0
      %v1085 = vsel %vm230, %v1066, 0
      %v1088 = vsel %vm230, %v1067, 0
      %v1091 = vsel %vm230, %v1068, 0
      %1093 = vmatprep.subr.bf16.mxu0 0
      %1094 = vmatpush1.bf16.msra.mxu0 %v1077
      %1095 = vmatprep.subr.bf16.mxu0 0
      %1096 = vmatpush1.bf16.msra.mxu0 %v1078
      %1097 = vmatprep.subr.bf16.mxu0 0
      %1098 = vmatpush1.bf16.msra.mxu0 0
      %1099 = vmatprep.subr.bf16.mxu0 0
      %1100 = vmatpush1.bf16.msra.mxu0 0
      %1101 = vmatprep.subr.bf16.mxu0 0
      %1102 = vmatpush1.bf16.msra.mxu0 0
      %1103 = vmatprep.subr.bf16.mxu0 0
      %1104 = vmatpush1.bf16.msra.mxu0 0
      %1105 = vmatprep.subr.bf16.mxu0 0
      %1106 = vmatpush1.bf16.msra.mxu0 0
      %1107 = vmatprep.subr.bf16.mxu0 0
      %1108 = vmatpush1.bf16.msra.mxu0 0
      %1109 = vmatprep.subr.bf16.mxu0 0
      %1110 = vmatpush1.bf16.msra.mxu0 0
      %1111 = vmatprep.subr.bf16.mxu0 0
      %1112 = vmatpush1.bf16.msra.mxu0 0
      %1113 = vmatprep.subr.bf16.mxu0 0
      %1114 = vmatpush1.bf16.msra.mxu0 0
      %1115 = vmatprep.subr.bf16.mxu0 0
      %1116 = vmatpush1.bf16.msra.mxu0 0
      %1117 = vmatprep.subr.bf16.mxu0 0
      %1118 = vmatpush1.bf16.msra.mxu0 0
      %1119 = vmatprep.subr.bf16.mxu0 0
      %1120 = vmatpush1.bf16.msra.mxu0 0
      %1121 = vmatprep.subr.bf16.mxu0 0
      %1122 = vmatpush1.bf16.msra.mxu0 0
      %1123 = vmatprep.subr.bf16.mxu0 0
      %1124 = vmatpush1.bf16.msra.mxu0 0
      %1125 = vmatprep.mubr.bf16.mxu0 0
      %1126 = vmatmul.mubr.bf16.gmra.mrb[0].mxu0 %v1082
      %v1127 = vpop.f32.mrb[0].mxu0
      %v1128 = vadd.f32 0.0, %v1127
      %v1129 = vpop.f32.mrb[0].mxu0
      %v1130 = vpop.f32.mrb[0].mxu0
      %v1131 = vadd.f32 0.0, %v1130
      %v1132 = vpop.f32.mrb[0].mxu0
      %1133 = vmatprep.mubr.bf16.mxu0 0
      %1134 = vmatmul.mubr.bf16.gmra.mrb[0].mxu0 %v1085
      %v1135 = vpop.f32.mrb[0].mxu0
      %v1136 = vadd.f32 0.0, %v1135
      %v1137 = vpop.f32.mrb[0].mxu0
      %v1138 = vpop.f32.mrb[0].mxu0
      %v1139 = vadd.f32 0.0, %v1138
      %v1140 = vpop.f32.mrb[0].mxu0
      %1141 = vmatprep.mubr.bf16.mxu0 0
      %1142 = vmatmul.mubr.bf16.gmra.mrb[0].mxu0 %v1088
      %v1143 = vpop.f32.mrb[0].mxu0
      %v1144 = vadd.f32 0.0, %v1143
      %v1145 = vpop.f32.mrb[0].mxu0
      %v1146 = vpop.f32.mrb[0].mxu0
      %v1147 = vadd.f32 0.0, %v1146
      %v1148 = vpop.f32.mrb[0].mxu0
      %1149 = vmatprep.mubr.bf16.mxu0 0
      %1150 = vmatmul.mubr.bf16.gmra.mrb[0].mxu0 %v1091
      %v1151 = vpop.f32.mrb[0].mxu0
      %v1152 = vadd.f32 0.0, %v1151
      %v1153 = vpop.f32.mrb[0].mxu0
      %v1154 = vpop.f32.mrb[0].mxu0
      %v1155 = vadd.f32 0.0, %v1154
      %v1156 = vpop.f32.mrb[0].mxu0
      %1157 = vdwg.mxu0
      %v1158 = vadd.f32 %v916, %v1128
      %v1159 = vadd.f32 %v917, %v1131
      %v1160 = vadd.f32 %v918, %v1136
      %v1161 = vadd.f32 %v919, %v1139
      %v1162 = vadd.f32 %v920, %v1144
      %v1163 = vadd.f32 %v921, %v1147
      %v1164 = vadd.f32 %v922, %v1152
      %v1165 = vadd.f32 %v923, %v1155
      %s1166 = scalar_lea.vmem %s165, 8
      %v1167 = vld [vmem:[%s1166] sm:$0xf]
      %v1168 = vld [vmem:[%s1166 + $0x8] sm:$0xf]
      %v1169 = vld [vmem:[%s1166 + $0x10] sm:$0xf]
      %v1170 = vld [vmem:[%s1166 + $0x18] sm:$0xf]
      %v1171 = vld [vmem:[%s1166 + $0x20] sm:$0xf]
      %v1172 = vld [vmem:[%s1166 + $0x28] sm:$0xf]
      %v1173 = vld [vmem:[%s1166 + $0x30] sm:$0xf]
      %v1174 = vld [vmem:[%s1166 + $0x38] sm:$0xf]
      %s1175 = scalar_lea.vmem %s1, 96
      %v1176 = vld [vmem:[%s1175] sm:$0xf]
      %v1177 = vld [vmem:[%s1175 + $0x4] sm:$0xf]
      %v1178 = vld [vmem:[%s1175 + $0x8] sm:$0xf]
      %v1179 = vld [vmem:[%s1175 + $0xc] sm:$0xf]
      %v1188 = vunpack.c.l.b16 %v1167
      %v1189 = vunpack.c.l.b16 %v1168
      %v1190 = vunpack.c.l.b16 %v1169
      %v1191 = vunpack.c.l.b16 %v1170
      %v1192 = vunpack.c.l.b16 %v1171
      %v1193 = vunpack.c.l.b16 %v1172
      %v1194 = vunpack.c.l.b16 %v1173
      %v1195 = vunpack.c.l.b16 %v1174
      %v1196 = vpack.c.b16 %v1189, %v1188
      %v1197 = vpack.c.b16 %v1191, %v1190
      %v1198 = vpack.c.b16 %v1193, %v1192
      %v1199 = vpack.c.b16 %v1195, %v1194
      %v1204 = vunpack.c.l.b16 %v1176
      %v1205 = vunpack.c.l.b16 %v1177
      %v1206 = vunpack.c.l.b16 %v1178
      %v1207 = vunpack.c.l.b16 %v1179
      %v1208 = vpack.c.b16 %v1205, %v1204
      %v1209 = vpack.c.b16 %v1207, %v1206
      %v1213 = vsel %vm230, %v1196, 0
      %v1216 = vsel %vm230, %v1197, 0
      %v1219 = vsel %vm230, %v1198, 0
      %v1222 = vsel %vm230, %v1199, 0
      %1224 = vmatprep.subr.bf16.mxu0 0
      %1225 = vmatpush1.bf16.msra.mxu0 %v1208
      %1226 = vmatprep.subr.bf16.mxu0 0
      %1227 = vmatpush1.bf16.msra.mxu0 %v1209
      %1228 = vmatprep.subr.bf16.mxu0 0
      %1229 = vmatpush1.bf16.msra.mxu0 0
      %1230 = vmatprep.subr.bf16.mxu0 0
      %1231 = vmatpush1.bf16.msra.mxu0 0
      %1232 = vmatprep.subr.bf16.mxu0 0
      %1233 = vmatpush1.bf16.msra.mxu0 0
      %1234 = vmatprep.subr.bf16.mxu0 0
      %1235 = vmatpush1.bf16.msra.mxu0 0
      %1236 = vmatprep.subr.bf16.mxu0 0
      %1237 = vmatpush1.bf16.msra.mxu0 0
      %1238 = vmatprep.subr.bf16.mxu0 0
      %1239 = vmatpush1.bf16.msra.mxu0 0
      %1240 = vmatprep.subr.bf16.mxu0 0
      %1241 = vmatpush1.bf16.msra.mxu0 0
      %1242 = vmatprep.subr.bf16.mxu0 0
      %1243 = vmatpush1.bf16.msra.mxu0 0
      %1244 = vmatprep.subr.bf16.mxu0 0
      %1245 = vmatpush1.bf16.msra.mxu0 0
      %1246 = vmatprep.subr.bf16.mxu0 0
      %1247 = vmatpush1.bf16.msra.mxu0 0
      %1248 = vmatprep.subr.bf16.mxu0 0
      %1249 = vmatpush1.bf16.msra.mxu0 0
      %1250 = vmatprep.subr.bf16.mxu0 0
      %1251 = vmatpush1.bf16.msra.mxu0 0
      %1252 = vmatprep.subr.bf16.mxu0 0
      %1253 = vmatpush1.bf16.msra.mxu0 0
      %1254 = vmatprep.subr.bf16.mxu0 0
      %1255 = vmatpush1.bf16.msra.mxu0 0
      %1256 = vmatprep.mubr.bf16.mxu0 0
      %1257 = vmatmul.mubr.bf16.gmra.mrb[0].mxu0 %v1213
      %v1258 = vpop.f32.mrb[0].mxu0
      %v1259 = vadd.f32 0.0, %v1258
      %v1260 = vpop.f32.mrb[0].mxu0
      %v1261 = vpop.f32.mrb[0].mxu0
      %v1262 = vadd.f32 0.0, %v1261
      %v1263 = vpop.f32.mrb[0].mxu0
      %1264 = vmatprep.mubr.bf16.mxu0 0
      %1265 = vmatmul.mubr.bf16.gmra.mrb[0].mxu0 %v1216
      %v1266 = vpop.f32.mrb[0].mxu0
      %v1267 = vadd.f32 0.0, %v1266
      %v1268 = vpop.f32.mrb[0].mxu0
      %v1269 = vpop.f32.mrb[0].mxu0
      %v1270 = vadd.f32 0.0, %v1269
      %v1271 = vpop.f32.mrb[0].mxu0
      %1272 = vmatprep.mubr.bf16.mxu0 0
      %1273 = vmatmul.mubr.bf16.gmra.mrb[0].mxu0 %v1219
      %v1274 = vpop.f32.mrb[0].mxu0
      %v1275 = vadd.f32 0.0, %v1274
      %v1276 = vpop.f32.mrb[0].mxu0
      %v1277 = vpop.f32.mrb[0].mxu0
      %v1278 = vadd.f32 0.0, %v1277
      %v1279 = vpop.f32.mrb[0].mxu0
      %1280 = vmatprep.mubr.bf16.mxu0 0
      %1281 = vmatmul.mubr.bf16.gmra.mrb[0].mxu0 %v1222
      %v1282 = vpop.f32.mrb[0].mxu0
      %v1283 = vadd.f32 0.0, %v1282
      %v1284 = vpop.f32.mrb[0].mxu0
      %v1285 = vpop.f32.mrb[0].mxu0
      %v1286 = vadd.f32 0.0, %v1285
      %v1287 = vpop.f32.mrb[0].mxu0
      %1288 = vdwg.mxu0
      %v1289 = vadd.f32 %v1158, %v1259
      %v1290 = vadd.f32 %v1159, %v1262
      %v1291 = vadd.f32 %v1160, %v1267
      %v1292 = vadd.f32 %v1161, %v1270
      %v1293 = vadd.f32 %v1162, %v1275
      %v1294 = vadd.f32 %v1163, %v1278
      %v1295 = vadd.f32 %v1164, %v1283
      %v1296 = vadd.f32 %v1165, %v1286
      %s1297 = scalar_lea.vmem %s165, 80
      %v1298 = vld [vmem:[%s1297] sm:$0xf]
      %v1299 = vld [vmem:[%s1297 + $0x8] sm:$0xf]
      %v1300 = vld [vmem:[%s1297 + $0x10] sm:$0xf]
      %v1301 = vld [vmem:[%s1297 + $0x18] sm:$0xf]
      %v1302 = vld [vmem:[%s1297 + $0x20] sm:$0xf]
      %v1303 = vld [vmem:[%s1297 + $0x28] sm:$0xf]
      %v1304 = vld [vmem:[%s1297 + $0x30] sm:$0xf]
      %v1305 = vld [vmem:[%s1297 + $0x38] sm:$0xf]
      %s1306 = scalar_lea.vmem %s1, 112
      %v1307 = vld [vmem:[%s1306] sm:$0xf]
      %v1308 = vld [vmem:[%s1306 + $0x4] sm:$0xf]
      %v1309 = vld [vmem:[%s1306 + $0x8] sm:$0xf]
      %v1310 = vld [vmem:[%s1306 + $0xc] sm:$0xf]
      %v1319 = vunpack.c.l.b16 %v1298
      %v1320 = vunpack.c.l.b16 %v1299
      %v1321 = vunpack.c.l.b16 %v1300
      %v1322 = vunpack.c.l.b16 %v1301
      %v1323 = vunpack.c.l.b16 %v1302
      %v1324 = vunpack.c.l.b16 %v1303
      %v1325 = vunpack.c.l.b16 %v1304
      %v1326 = vunpack.c.l.b16 %v1305
      %v1327 = vpack.c.b16 %v1320, %v1319
      %v1328 = vpack.c.b16 %v1322, %v1321
      %v1329 = vpack.c.b16 %v1324, %v1323
      %v1330 = vpack.c.b16 %v1326, %v1325
      %v1335 = vunpack.c.l.b16 %v1307
      %v1336 = vunpack.c.l.b16 %v1308
      %v1337 = vunpack.c.l.b16 %v1309
      %v1338 = vunpack.c.l.b16 %v1310
      %v1339 = vpack.c.b16 %v1336, %v1335
      %v1340 = vpack.c.b16 %v1338, %v1337
      %v1344 = vsel %vm230, %v1327, 0
      %v1347 = vsel %vm230, %v1328, 0
      %v1350 = vsel %vm230, %v1329, 0
      %v1353 = vsel %vm230, %v1330, 0
      %1355 = vmatprep.subr.bf16.mxu0 0
      %1356 = vmatpush1.bf16.msra.mxu0 %v1339
      %1357 = vmatprep.subr.bf16.mxu0 0
      %1358 = vmatpush1.bf16.msra.mxu0 %v1340
      %1359 = vmatprep.subr.bf16.mxu0 0
      %1360 = vmatpush1.bf16.msra.mxu0 0
      %1361 = vmatprep.subr.bf16.mxu0 0
      %1362 = vmatpush1.bf16.msra.mxu0 0
      %1363 = vmatprep.subr.bf16.mxu0 0
      %1364 = vmatpush1.bf16.msra.mxu0 0
      %1365 = vmatprep.subr.bf16.mxu0 0
      %1366 = vmatpush1.bf16.msra.mxu0 0
      %1367 = vmatprep.subr.bf16.mxu0 0
      %1368 = vmatpush1.bf16.msra.mxu0 0
      %1369 = vmatprep.subr.bf16.mxu0 0
      %1370 = vmatpush1.bf16.msra.mxu0 0
      %1371 = vmatprep.subr.bf16.mxu0 0
      %1372 = vmatpush1.bf16.msra.mxu0 0
      %1373 = vmatprep.subr.bf16.mxu0 0
      %1374 = vmatpush1.bf16.msra.mxu0 0
      %1375 = vmatprep.subr.bf16.mxu0 0
      %1376 = vmatpush1.bf16.msra.mxu0 0
      %1377 = vmatprep.subr.bf16.mxu0 0
      %1378 = vmatpush1.bf16.msra.mxu0 0
      %1379 = vmatprep.subr.bf16.mxu0 0
      %1380 = vmatpush1.bf16.msra.mxu0 0
      %1381 = vmatprep.subr.bf16.mxu0 0
      %1382 = vmatpush1.bf16.msra.mxu0 0
      %1383 = vmatprep.subr.bf16.mxu0 0
      %1384 = vmatpush1.bf16.msra.mxu0 0
      %1385 = vmatprep.subr.bf16.mxu0 0
      %1386 = vmatpush1.bf16.msra.mxu0 0
      %1387 = vmatprep.mubr.bf16.mxu0 0
      %1388 = vmatmul.mubr.bf16.gmra.mrb[0].mxu0 %v1344
      %v1389 = vpop.f32.mrb[0].mxu0
      %v1390 = vadd.f32 0.0, %v1389
      %v1391 = vpop.f32.mrb[0].mxu0
      %v1392 = vpop.f32.mrb[0].mxu0
      %v1393 = vadd.f32 0.0, %v1392
      %v1394 = vpop.f32.mrb[0].mxu0
      %1395 = vmatprep.mubr.bf16.mxu0 0
      %1396 = vmatmul.mubr.bf16.gmra.mrb[0].mxu0 %v1347
      %v1397 = vpop.f32.mrb[0].mxu0
      %v1398 = vadd.f32 0.0, %v1397
      %v1399 = vpop.f32.mrb[0].mxu0
      %v1400 = vpop.f32.mrb[0].mxu0
      %v1401 = vadd.f32 0.0, %v1400
      %v1402 = vpop.f32.mrb[0].mxu0
      %1403 = vmatprep.mubr.bf16.mxu0 0
      %1404 = vmatmul.mubr.bf16.gmra.mrb[0].mxu0 %v1350
      %v1405 = vpop.f32.mrb[0].mxu0
      %v1406 = vadd.f32 0.0, %v1405
      %v1407 = vpop.f32.mrb[0].mxu0
      %v1408 = vpop.f32.mrb[0].mxu0
      %v1409 = vadd.f32 0.0, %v1408
      %v1410 = vpop.f32.mrb[0].mxu0
      %1411 = vmatprep.mubr.bf16.mxu0 0
      %1412 = vmatmul.mubr.bf16.gmra.mrb[0].mxu0 %v1353
      %v1413 = vpop.f32.mrb[0].mxu0
      %v1414 = vadd.f32 0.0, %v1413
      %v1415 = vpop.f32.mrb[0].mxu0
      %v1416 = vpop.f32.mrb[0].mxu0
      %v1417 = vadd.f32 0.0, %v1416
      %v1418 = vpop.f32.mrb[0].mxu0
      %1419 = vdwg.mxu0
      %v1420 = vadd.f32 %v1289, %v1390
      %v1421 = vadd.f32 %v1290, %v1393
      %v1422 = vadd.f32 %v1291, %v1398
      %v1423 = vadd.f32 %v1292, %v1401
      %v1424 = vadd.f32 %v1293, %v1406
      %v1425 = vadd.f32 %v1294, %v1409
      %v1426 = vadd.f32 %v1295, %v1414
      %v1427 = vadd.f32 %v1296, %v1417
      %v1428 = vld [vmem:[%s1166] sm:$0xf]
      %v1429 = vld [vmem:[%s1166 + $0x4] sm:$0x1]
      %v1430 = vld [vmem:[%s1166 + $0x8] sm:$0xf]
      %v1431 = vld [vmem:[%s1166 + $0xc] sm:$0x1]
      %v1432 = vld [vmem:[%s1166 + $0x10] sm:$0xf]
      %v1433 = vld [vmem:[%s1166 + $0x14] sm:$0x1]
      %v1434 = vld [vmem:[%s1166 + $0x18] sm:$0xf]
      %v1435 = vld [vmem:[%s1166 + $0x1c] sm:$0x1]
      %v1436 = vld [vmem:[%s1166 + $0x20] sm:$0xf]
      %v1437 = vld [vmem:[%s1166 + $0x24] sm:$0x1]
      %v1438 = vld [vmem:[%s1166 + $0x28] sm:$0xf]
      %v1439 = vld [vmem:[%s1166 + $0x2c] sm:$0x1]
      %v1440 = vld [vmem:[%s1166 + $0x30] sm:$0xf]
      %v1441 = vld [vmem:[%s1166 + $0x34] sm:$0x1]
      %v1442 = vld [vmem:[%s1166 + $0x38] sm:$0xf]
      %v1443 = vld [vmem:[%s1166 + $0x3c] sm:$0x1]
      %v1445 = vshrl.u32 %v1428, 16
      %v1447 = vrot.slane %v1445, 4
      %v1448 = vshll.u32 %v1428, 16
      %v1450 = vrot.slane %v1448, 5
      %v1451 = vor.u32 %v1447, %v1450
      %v1452 = vrot.slane %v1451, 4
      %v1454 = vshll.u32 %v1429, 16
      %v1456 = vrot.slane %v1454, 5
      %v1457 = vsel %vm435, %v1452, %v1456
      %v1459 = vshrl.u32 %v1430, 16
      %v1461 = vrot.slane %v1459, 4
      %v1462 = vshll.u32 %v1430, 16
      %v1464 = vrot.slane %v1462, 5
      %v1465 = vor.u32 %v1461, %v1464
      %v1466 = vrot.slane %v1465, 4
      %v1468 = vshll.u32 %v1431, 16
      %v1470 = vrot.slane %v1468, 5
      %v1471 = vsel %vm435, %v1466, %v1470
      %v1473 = vshrl.u32 %v1432, 16
      %v1475 = vrot.slane %v1473, 4
      %v1476 = vshll.u32 %v1432, 16
      %v1478 = vrot.slane %v1476, 5
      %v1479 = vor.u32 %v1475, %v1478
      %v1480 = vrot.slane %v1479, 4
      %v1482 = vshll.u32 %v1433, 16
      %v1484 = vrot.slane %v1482, 5
      %v1485 = vsel %vm435, %v1480, %v1484
      %v1487 = vshrl.u32 %v1434, 16
      %v1489 = vrot.slane %v1487, 4
      %v1490 = vshll.u32 %v1434, 16
      %v1492 = vrot.slane %v1490, 5
      %v1493 = vor.u32 %v1489, %v1492
      %v1494 = vrot.slane %v1493, 4
      %v1496 = vshll.u32 %v1435, 16
      %v1498 = vrot.slane %v1496, 5
      %v1499 = vsel %vm435, %v1494, %v1498
      %v1501 = vshrl.u32 %v1436, 16
      %v1503 = vrot.slane %v1501, 4
      %v1504 = vshll.u32 %v1436, 16
      %v1506 = vrot.slane %v1504, 5
      %v1507 = vor.u32 %v1503, %v1506
      %v1508 = vrot.slane %v1507, 4
      %v1510 = vshll.u32 %v1437, 16
      %v1512 = vrot.slane %v1510, 5
      %v1513 = vsel %vm435, %v1508, %v1512
      %v1515 = vshrl.u32 %v1438, 16
      %v1517 = vrot.slane %v1515, 4
      %v1518 = vshll.u32 %v1438, 16
      %v1520 = vrot.slane %v1518, 5
      %v1521 = vor.u32 %v1517, %v1520
      %v1522 = vrot.slane %v1521, 4
      %v1524 = vshll.u32 %v1439, 16
      %v1526 = vrot.slane %v1524, 5
      %v1527 = vsel %vm435, %v1522, %v1526
      %v1529 = vshrl.u32 %v1440, 16
      %v1531 = vrot.slane %v1529, 4
      %v1532 = vshll.u32 %v1440, 16
      %v1534 = vrot.slane %v1532, 5
      %v1535 = vor.u32 %v1531, %v1534
      %v1536 = vrot.slane %v1535, 4
      %v1538 = vshll.u32 %v1441, 16
      %v1540 = vrot.slane %v1538, 5
      %v1541 = vsel %vm435, %v1536, %v1540
      %v1543 = vshrl.u32 %v1442, 16
      %v1545 = vrot.slane %v1543, 4
      %v1546 = vshll.u32 %v1442, 16
      %v1548 = vrot.slane %v1546, 5
      %v1549 = vor.u32 %v1545, %v1548
      %v1550 = vrot.slane %v1549, 4
      %v1552 = vshll.u32 %v1443, 16
      %v1554 = vrot.slane %v1552, 5
      %v1555 = vsel %vm435, %v1550, %v1554
      %s1556 = scalar_lea.vmem %s1, 128
      %v1557 = vld [vmem:[%s1556] sm:$0xf]
      %v1558 = vld [vmem:[%s1556 + $0x4] sm:$0xf]
      %v1559 = vld [vmem:[%s1556 + $0x8] sm:$0xf]
      %v1560 = vld [vmem:[%s1556 + $0xc] sm:$0xf]
      %v1561 = vunpack.c.l.b16 %v1457
      %v1562 = vunpack.c.l.b16 %v1471
      %v1563 = vunpack.c.l.b16 %v1485
      %v1564 = vunpack.c.l.b16 %v1499
      %v1565 = vunpack.c.l.b16 %v1513
      %v1566 = vunpack.c.l.b16 %v1527
      %v1567 = vunpack.c.l.b16 %v1541
      %v1568 = vunpack.c.l.b16 %v1555
      %v1569 = vpack.c.b16 %v1562, %v1561
      %v1570 = vpack.c.b16 %v1564, %v1563
      %v1571 = vpack.c.b16 %v1566, %v1565
      %v1572 = vpack.c.b16 %v1568, %v1567
      %v1577 = vunpack.c.l.b16 %v1557
      %v1578 = vunpack.c.l.b16 %v1558
      %v1579 = vunpack.c.l.b16 %v1559
      %v1580 = vunpack.c.l.b16 %v1560
      %v1581 = vpack.c.b16 %v1578, %v1577
      %v1582 = vpack.c.b16 %v1580, %v1579
      %v1586 = vsel %vm230, %v1569, 0
      %v1589 = vsel %vm230, %v1570, 0
      %v1592 = vsel %vm230, %v1571, 0
      %v1595 = vsel %vm230, %v1572, 0
      %1597 = vmatprep.subr.bf16.mxu0 0
      %1598 = vmatpush1.bf16.msra.mxu0 %v1581
      %1599 = vmatprep.subr.bf16.mxu0 0
      %1600 = vmatpush1.bf16.msra.mxu0 %v1582
      %1601 = vmatprep.subr.bf16.mxu0 0
      %1602 = vmatpush1.bf16.msra.mxu0 0
      %1603 = vmatprep.subr.bf16.mxu0 0
      %1604 = vmatpush1.bf16.msra.mxu0 0
      %1605 = vmatprep.subr.bf16.mxu0 0
      %1606 = vmatpush1.bf16.msra.mxu0 0
      %1607 = vmatprep.subr.bf16.mxu0 0
      %1608 = vmatpush1.bf16.msra.mxu0 0
      %1609 = vmatprep.subr.bf16.mxu0 0
      %1610 = vmatpush1.bf16.msra.mxu0 0
      %1611 = vmatprep.subr.bf16.mxu0 0
      %1612 = vmatpush1.bf16.msra.mxu0 0
      %1613 = vmatprep.subr.bf16.mxu0 0
      %1614 = vmatpush1.bf16.msra.mxu0 0
      %1615 = vmatprep.subr.bf16.mxu0 0
      %1616 = vmatpush1.bf16.msra.mxu0 0
      %1617 = vmatprep.subr.bf16.mxu0 0
      %1618 = vmatpush1.bf16.msra.mxu0 0
      %1619 = vmatprep.subr.bf16.mxu0 0
      %1620 = vmatpush1.bf16.msra.mxu0 0
      %1621 = vmatprep.subr.bf16.mxu0 0
      %1622 = vmatpush1.bf16.msra.mxu0 0
      %1623 = vmatprep.subr.bf16.mxu0 0
      %1624 = vmatpush1.bf16.msra.mxu0 0
      %1625 = vmatprep.subr.bf16.mxu0 0
      %1626 = vmatpush1.bf16.msra.mxu0 0
      %1627 = vmatprep.subr.bf16.mxu0 0
      %1628 = vmatpush1.bf16.msra.mxu0 0
      %1629 = vmatprep.mubr.bf16.mxu0 0
      %1630 = vmatmul.mubr.bf16.gmra.mrb[0].mxu0 %v1586
      %v1631 = vpop.f32.mrb[0].mxu0
      %v1632 = vadd.f32 0.0, %v1631
      %v1633 = vpop.f32.mrb[0].mxu0
      %v1634 = vpop.f32.mrb[0].mxu0
      %v1635 = vadd.f32 0.0, %v1634
      %v1636 = vpop.f32.mrb[0].mxu0
      %1637 = vmatprep.mubr.bf16.mxu0 0
      %1638 = vmatmul.mubr.bf16.gmra.mrb[0].mxu0 %v1589
      %v1639 = vpop.f32.mrb[0].mxu0
      %v1640 = vadd.f32 0.0, %v1639
      %v1641 = vpop.f32.mrb[0].mxu0
      %v1642 = vpop.f32.mrb[0].mxu0
      %v1643 = vadd.f32 0.0, %v1642
      %v1644 = vpop.f32.mrb[0].mxu0
      %1645 = vmatprep.mubr.bf16.mxu0 0
      %1646 = vmatmul.mubr.bf16.gmra.mrb[0].mxu0 %v1592
      %v1647 = vpop.f32.mrb[0].mxu0
      %v1648 = vadd.f32 0.0, %v1647
      %v1649 = vpop.f32.mrb[0].mxu0
      %v1650 = vpop.f32.mrb[0].mxu0
      %v1651 = vadd.f32 0.0, %v1650
      %v1652 = vpop.f32.mrb[0].mxu0
      %1653 = vmatprep.mubr.bf16.mxu0 0
      %1654 = vmatmul.mubr.bf16.gmra.mrb[0].mxu0 %v1595
      %v1655 = vpop.f32.mrb[0].mxu0
      %v1656 = vadd.f32 0.0, %v1655
      %v1657 = vpop.f32.mrb[0].mxu0
      %v1658 = vpop.f32.mrb[0].mxu0
      %v1659 = vadd.f32 0.0, %v1658
      %v1660 = vpop.f32.mrb[0].mxu0
      %1661 = vdwg.mxu0
      %v1662 = vadd.f32 %v1420, %v1632
      %v1663 = vadd.f32 %v1421, %v1635
      %v1664 = vadd.f32 %v1422, %v1640
      %v1665 = vadd.f32 %v1423, %v1643
      %v1666 = vadd.f32 %v1424, %v1648
      %v1667 = vadd.f32 %v1425, %v1651
      %v1668 = vadd.f32 %v1426, %v1656
      %v1669 = vadd.f32 %v1427, %v1659
      %v1670 = vld [vmem:[%s2] sm:$0x1]
      %v1672 = vlaneseq
      %v1673 = vshrl.u32 %v1672, 7
      %v1674 = vsub.s32 0, %v1673
      %v1675 = vrot.slane %v1670, %v1674
      %v1677 = vadd.f32 %v1662, %v1675
      %v1678 = vadd.f32 %v1663, %v1675
      %v1679 = vadd.f32 %v1664, %v1675
      %v1680 = vadd.f32 %v1665, %v1675
      %v1681 = vadd.f32 %v1666, %v1675
      %v1682 = vadd.f32 %v1667, %v1675
      %v1683 = vadd.f32 %v1668, %v1675
      %v1684 = vadd.f32 %v1669, %v1675
      %v1685 = vmax.f32 %v1677, 0.0
      %v1686 = vmax.f32 %v1678, 0.0
      %v1687 = vmax.f32 %v1679, 0.0
      %v1688 = vmax.f32 %v1680, 0.0
      %v1689 = vmax.f32 %v1681, 0.0
      %v1690 = vmax.f32 %v1682, 0.0
      %v1691 = vmax.f32 %v1683, 0.0
      %v1692 = vmax.f32 %v1684, 0.0
      %v1693 = vpack.c.bf16 %v1686, %v1685
      %v1694 = vpack.c.bf16 %v1688, %v1687
      %v1695 = vpack.c.bf16 %v1690, %v1689
      %v1696 = vpack.c.bf16 %v1692, %v1691
      %v1701 = vunpack.c.l.b16 %v1693
      %v1702 = vunpack.c.h.b16 %v1693
      %v1703 = vunpack.c.l.b16 %v1694
      %v1704 = vunpack.c.h.b16 %v1694
      %v1705 = vunpack.c.l.b16 %v1695
      %v1706 = vunpack.c.h.b16 %v1695
      %v1707 = vunpack.c.l.b16 %v1696
      %v1708 = vunpack.c.h.b16 %v1696
      %v1709 = vpack.c.b16 %v1701, %v1701
      %v1710 = vpack.c.b16 %v1702, %v1702
      %v1711 = vpack.c.b16 %v1703, %v1703
      %v1712 = vpack.c.b16 %v1704, %v1704
      %v1713 = vpack.c.b16 %v1705, %v1705
      %v1714 = vpack.c.b16 %v1706, %v1706
      %v1715 = vpack.c.b16 %v1707, %v1707
      %v1716 = vpack.c.b16 %v1708, %v1708
      %vm1725 = vcmask 519168
      %1726 = vst.msk [vmem:[%s170] sm:$0xf] %vm1725, %v1709
      %1727 = vst.msk [vmem:[%s170 + $0x4] sm:$0xf] %vm1725, %v1710
      %1728 = vst.msk [vmem:[%s170 + $0x8] sm:$0xf] %vm1725, %v1711
      %1729 = vst.msk [vmem:[%s170 + $0xc] sm:$0xf] %vm1725, %v1712
      %1730 = vst.msk [vmem:[%s170 + $0x10] sm:$0xf] %vm1725, %v1713
      %1731 = vst.msk [vmem:[%s170 + $0x14] sm:$0xf] %vm1725, %v1714
      %1732 = vst.msk [vmem:[%s170 + $0x18] sm:$0xf] %vm1725, %v1715
      %1733 = vst.msk [vmem:[%s170 + $0x1c] sm:$0xf] %vm1725, %v1716
      %p1734 = scmp.lt.s32.totalorder %s14, 1
      %s1735 = scalar_select %p1734, %s14, 1
      %s1736 = smul.addr %s1735, 8
      %s1737 = smul.addr %s1736, 4
      %s1738 = scalar_lea.vmem %s3, %s1737
      // Predicated region
      $region33: #{critic_forward.6} parent=31 // pred_check
        %p1739 = pneg %p100
      $region34: #{critic_forward.6} parent=31 // pred_check_branch
        %1741 = sbr.rel (%p1739) target = $region36
      $region35: #{critic_forward.6} parent=31 // pred_region
        _
      $region36: #{critic_forward.6} parent=31 // pred_fallthru
        _
    $region32: #{critic_forward.6} parent=5 // pred_fallthru
      _
    %p1742 = scmp.le.s32.totalorder 2, %s9
    // Predicated region
    $region37: #{critic_forward.6} parent=5 // pred_check
      %p1743 = pneg %p1742
    $region38: #{critic_forward.6} parent=5 // pred_check_branch
      %1745 = sbr.rel (%p1743) target = $region40
    $region39: #{critic_forward.6} parent=5 // pred_region
      %s1746 = ssub.s32 %s9, 2
      // Predicated region
      $region41: #{critic_forward.6} parent=39 // pred_check
        %p1747 = pneg %p106
      $region42: #{critic_forward.6} parent=39 // pred_check_branch
        %1749 = sbr.rel (%p1747) target = $region44
      $region43: #{critic_forward.6} parent=39 // pred_region
        %p1750 = scmp.lt.s32.totalorder %s15, 1
        %s1751 = scalar_select %p1750, %s15, 1
        %s1752 = smul.addr %s1751, 8
        %s1753 = smul.addr %s1752, 4
        %s1754 = scalar_lea.vmem %s3, %s1753
      $region44: #{critic_forward.6} parent=39 // pred_fallthru
        _
    $region40: #{critic_forward.6} parent=5 // pred_fallthru
      _
  $region6: #{critic_forward.6} parent=0 // loop_footer
    %s13 = sadd.s32 1, %s9
  $region7: #{critic_forward.6} parent=0 // loop_footer_branch
    %8 = sbr.rel target = $region3
  $region8: #{critic_forward.6} parent=0 // loop_exit
    _

// kernel: critic_forward.7
$region0: #{critic_forward.7}
  #allocation0 [shape = 'u32[]', space=smem, size = 0x4, offset = 0x4, fixed_abs, tag = 'smem constant byte address 0x4 - core index']
  #allocation1 [shape = 'u32[144,128]{1,0:T(1,128)}', space=vmem, size = 0x12000, scoped, tag = 'internal scratch']
  %s0 = inlined_call_operand.vmem [shape: bf16[2,20,5,64], index: 0, kind: input, shape index: {}]
  %s1 = inlined_call_operand.vmem [shape: bf16[9,64,128], index: 1, kind: input, shape index: {}]
  %s2 = inlined_call_operand.vmem [shape: f32[1,128], index: 2, kind: input, shape index: {}]
  %s3 = inlined_call_operand.vmem [shape: bf16[2,16,128], index: 3, kind: output, shape index: {}]
  %s4 = sld [smem:[#allocation0]]
  $region45: #{critic_forward.7} parent=0
    _
  %s6 = ssub.s32 1, %s4
  %s7 = scalar_select 0, %s6, %s4
  loop: start=0, step=1, limit=4
  $region2: #{critic_forward.7} parent=0 // loop_pre_header
    _
  $region3: #{critic_forward.7} parent=0 // loop_header
    %s9 = sphi 0, %s13
    %p10 = scmp.ge.s32.totalorder %s9, 4
    %s19 = sphi 0, %s21
    %s22 = sphi 0, %s19
    %s23 = sphi 0, %s22
    %s39 = sphi 0, %s23
    %s43 = sphi 0, %s43
    %s45 = sphi 0, %s43
    %s46 = sphi 0, %s45
    %s60 = sphi 0, %s46
    %s64 = sphi 0, %s64
    %s66 = sphi 0, %s64
    %s67 = sphi 0, %s66
    %s81 = sphi 0, %s67
    %s87 = sphi 0, %s89
    %s90 = sphi 0, %s87
    %s91 = sphi 0, %s90
    %s107 = sphi 0, %s91
  $region4: #{critic_forward.7} parent=0 // loop_header_branch
    %12 = sbr.rel (%p10) target = $region8
  $region5: #{critic_forward.7} parent=0 // loop_body
    %s14 = ssub.s32 %s9, 1
    %s15 = ssub.s32 %s9, 2
    %s16 = sadd.s32 %s9, 1
    %s17 = ssub.s32 %s9, %s16
    %p18 = scmp.eq.s32.totalorder %s17, 0
    %s20 = sadd.s32 %s19, 1
    %s21 = scalar_select %p18, %s19, %s20
    %p24 = pneg %p18
    %p25 = scmp.eq.s32.totalorder %s9, 1
    %p26 = por %p24, %p25
    %p27 = scmp.ne.s32.totalorder %s19, %s22
    %p28 = scmp.eq.s32.totalorder %s9, 0
    %p29 = por %p27, %p28
    %p30 = scmp.ne.s32.totalorder %s19, %s22
    %p31 = scmp.eq.s32.totalorder %s14, 1
    %p32 = por %p30, %p31
    %p33 = scmp.ne.s32.totalorder %s22, %s23
    %p34 = scmp.eq.s32.totalorder %s14, 0
    %p35 = por %p33, %p34
    %p36 = scmp.ne.s32.totalorder %s22, %s23
    %p37 = scmp.eq.s32.totalorder %s15, 1
    %p38 = por %p36, %p37
    %p40 = scmp.ne.s32.totalorder %s23, %s39
    %p41 = scmp.eq.s32.totalorder %s15, 0
    %p42 = por %p40, %p41
    %s44 = sadd.s32 %s43, 1
    %p47 = scmp.eq.s32.totalorder %s9, 1
    %p48 = scmp.ne.s32.totalorder %s43, %s45
    %p49 = scmp.eq.s32.totalorder %s9, 0
    %p50 = por %p48, %p49
    %p51 = scmp.ne.s32.totalorder %s43, %s45
    %p52 = scmp.eq.s32.totalorder %s14, 1
    %p53 = por %p51, %p52
    %p54 = scmp.ne.s32.totalorder %s45, %s46
    %p55 = scmp.eq.s32.totalorder %s14, 0
    %p56 = por %p54, %p55
    %p57 = scmp.ne.s32.totalorder %s45, %s46
    %p58 = scmp.eq.s32.totalorder %s15, 1
    %p59 = por %p57, %p58
    %p61 = scmp.ne.s32.totalorder %s46, %s60
    %p62 = scmp.eq.s32.totalorder %s15, 0
    %p63 = por %p61, %p62
    %s65 = sadd.s32 %s64, 1
    %p68 = scmp.eq.s32.totalorder %s9, 1
    %p69 = scmp.ne.s32.totalorder %s64, %s66
    %p70 = scmp.eq.s32.totalorder %s9, 0
    %p71 = por %p69, %p70
    %p72 = scmp.ne.s32.totalorder %s64, %s66
    %p73 = scmp.eq.s32.totalorder %s14, 1
    %p74 = por %p72, %p73
    %p75 = scmp.ne.s32.totalorder %s66, %s67
    %p76 = scmp.eq.s32.totalorder %s14, 0
    %p77 = por %p75, %p76
    %p78 = scmp.ne.s32.totalorder %s66, %s67
    %p79 = scmp.eq.s32.totalorder %s15, 1
    %p80 = por %p78, %p79
    %p82 = scmp.ne.s32.totalorder %s67, %s81
    %p83 = scmp.eq.s32.totalorder %s15, 0
    %p84 = por %p82, %p83
    %s85 = ssub.s32 %s9, %s16
    %p86 = scmp.eq.s32.totalorder %s85, 0
    %s88 = sadd.s32 %s87, 1
    %s89 = scalar_select %p86, %s87, %s88
    %p92 = pneg %p86
    %p93 = scmp.eq.s32.totalorder %s9, 1
    %p94 = por %p92, %p93
    %p95 = scmp.ne.s32.totalorder %s87, %s90
    %p96 = scmp.eq.s32.totalorder %s9, 0
    %p97 = por %p95, %p96
    %p98 = scmp.ne.s32.totalorder %s87, %s90
    %p99 = scmp.eq.s32.totalorder %s14, 1
    %p100 = por %p98, %p99
    %p101 = scmp.ne.s32.totalorder %s90, %s91
    %p102 = scmp.eq.s32.totalorder %s14, 0
    %p103 = por %p101, %p102
    %p104 = scmp.ne.s32.totalorder %s90, %s91
    %p105 = scmp.eq.s32.totalorder %s15, 1
    %p106 = por %p104, %p105
    %p108 = scmp.ne.s32.totalorder %s91, %s107
    %p109 = scmp.eq.s32.totalorder %s15, 0
    %p110 = por %p108, %p109
    %p111 = scmp.le.s32.totalorder 1, %s9
    %p112 = scmp.lt.s32.totalorder %s9, 3
    %p113 = pnand %p111, %p112
    %p114 = pneg %p113
    // Predicated region
    $region9: #{critic_forward.7} parent=5 // pred_check
      _
    $region10: #{critic_forward.7} parent=5 // pred_check_branch
      %116 = sbr.rel (%p113) target = $region12
    $region11: #{critic_forward.7} parent=5 // pred_region
      %s117 = ssub.s32 %s9, 1
      // Predicated region
      $region13: #{critic_forward.7} parent=11 // pred_check
        %p118 = pneg %p56
      $region14: #{critic_forward.7} parent=11 // pred_check_branch
        %120 = sbr.rel (%p118) target = $region16
      $region15: #{critic_forward.7} parent=11 // pred_region
        _
      $region16: #{critic_forward.7} parent=11 // pred_fallthru
        _
      // Predicated region
      $region17: #{critic_forward.7} parent=11 // pred_check
        %p121 = pneg %p77
      $region18: #{critic_forward.7} parent=11 // pred_check_branch
        %123 = sbr.rel (%p121) target = $region20
      $region19: #{critic_forward.7} parent=11 // pred_region
        _
      $region20: #{critic_forward.7} parent=11 // pred_fallthru
        _
    $region12: #{critic_forward.7} parent=5 // pred_fallthru
      _
    %p124 = scmp.lt.s32.totalorder %s9, 2
    // Predicated region
    $region21: #{critic_forward.7} parent=5 // pred_check
      %p125 = pneg %p124
    $region22: #{critic_forward.7} parent=5 // pred_check_branch
      %127 = sbr.rel (%p125) target = $region24
    $region23: #{critic_forward.7} parent=5 // pred_region
      // Predicated region
      $region25: #{critic_forward.7} parent=23 // pred_check
        %p128 = pneg %p29
      $region26: #{critic_forward.7} parent=23 // pred_check_branch
        %130 = sbr.rel (%p128) target = $region28
      $region27: #{critic_forward.7} parent=23 // pred_region
        %p131 = scmp.lt.s32.totalorder %s9, 1
        %s132 = scalar_select %p131, %s9, 1
        %s133 = smul.addr %s132, 20
        %s134 = smul.addr %s133, 4
        %s135 = scalar_lea.vmem %s0, %s134
      $region28: #{critic_forward.7} parent=23 // pred_fallthru
        _
    $region24: #{critic_forward.7} parent=5 // pred_fallthru
      _
    %p136 = scmp.le.s32.totalorder 1, %s9
    %p137 = scmp.lt.s32.totalorder %s9, 3
    %p138 = pnand %p136, %p137
    %p139 = pneg %p138
    // Predicated region
    $region29: #{critic_forward.7} parent=5 // pred_check
      _
    $region30: #{critic_forward.7} parent=5 // pred_check_branch
      %141 = sbr.rel (%p138) target = $region32
    $region31: #{critic_forward.7} parent=5 // pred_region
      %s142 = ssub.s32 %s9, 1
      %p143 = scmp.lt.s32.totalorder %s14, 1
      %s144 = scalar_select %p143, %s14, 1
      %s145 = smul.addr %s144, 20
      %s146 = smul.addr %s145, 4
      %s147 = scalar_lea.vmem %s0, %s146
      %p148 = pneg %p35
      %p149 = pneg %p32
      %p150 = pneg %p56
      %p151 = pneg %p53
      %p152 = pneg %p77
      %p153 = pneg %p74
      %p154 = pneg %p103
      %p155 = pneg %p100
      %p156 = scmp.lt.s32.totalorder %s14, 1
      %s157 = scalar_select %p156, %s14, 1
      %s158 = smul.addr %s157, 2
      %s159 = smul.addr %s158, 4
      %s160 = scalar_lea.vmem %s3, %s159
      %p161 = scmp.lt.s32.totalorder %s14, 1
      %s162 = scalar_select %p161, %s14, 1
      %s163 = smul.addr %s162, 20
      %s164 = smul.addr %s163, 4
      %s165 = scalar_lea.vmem %s0, %s164
      %p166 = scmp.lt.s32.totalorder %s14, 1
      %s167 = scalar_select %p166, %s14, 1
      %s168 = smul.addr %s167, 2
      %s169 = smul.addr %s168, 4
      %s170 = scalar_lea.vmem %s3, %s169
      %v172 = vld [vmem:[%s165] sm:$0x3]
      %v173 = vld [vmem:[%s165 + $0x4] sm:$0x3]
      %v174 = vld [vmem:[%s165 + $0x8] sm:$0x3]
      %v175 = vld [vmem:[%s165 + $0xc] sm:$0x3]
      %v176 = vld [vmem:[%s1] sm:$0xf]
      %v177 = vld [vmem:[%s1 + $0x4] sm:$0xf]
      %v178 = vld [vmem:[%s1 + $0x8] sm:$0xf]
      %v179 = vld [vmem:[%s1 + $0xc] sm:$0xf]
      %v180 = vld [vmem:[%s1 + $0x10] sm:$0xf]
      %v181 = vld [vmem:[%s1 + $0x14] sm:$0xf]
      %v182 = vld [vmem:[%s1 + $0x18] sm:$0xf]
      %v183 = vld [vmem:[%s1 + $0x1c] sm:$0xf]
      %s184 = scalar_lea.vmem %s165, 20
      %v185 = vld [vmem:[%s184] sm:$0x3]
      %v186 = vld [vmem:[%s184 + $0x4] sm:$0x3]
      %v187 = vld [vmem:[%s184 + $0x8] sm:$0x3]
      %v188 = vld [vmem:[%s184 + $0xc] sm:$0x3]
      %s189 = scalar_lea.vmem %s1, 32
      %v190 = vld [vmem:[%s189] sm:$0xf]
      %v191 = vld [vmem:[%s189 + $0x4] sm:$0xf]
      %v192 = vld [vmem:[%s189 + $0x8] sm:$0xf]
      %v193 = vld [vmem:[%s189 + $0xc] sm:$0xf]
      %v194 = vld [vmem:[%s189 + $0x10] sm:$0xf]
      %v195 = vld [vmem:[%s189 + $0x14] sm:$0xf]
      %v196 = vld [vmem:[%s189 + $0x18] sm:$0xf]
      %v197 = vld [vmem:[%s189 + $0x1c] sm:$0xf]
      %v202 = vcombine.low %v185, %v186
      %v203 = vcombine.low %v187, %v188
      %v205 = vunpack.c.l.s4 1983009808
      %v206 = vunpack.c.0.s8 %v205
      %v207 = vlaneseq
      %v208 = vshrl.u32 %v207, 7
      %v209 = vsub.s32 %v206, %v208
      %v210 = vrot.slane %v202, %v209
      %v212 = vunpack.c.l.s4 1983009808
      %v213 = vunpack.c.0.s8 %v212
      %v214 = vlaneseq
      %v215 = vshrl.u32 %v214, 7
      %v216 = vsub.s32 %v213, %v215
      %v217 = vrot.slane %v203, %v216
      %v218 = vcombine.low %v210, %v217
      %v227 = vunpack.c.l.b16 %v190
      %v228 = vunpack.c.l.b16 %v191
      %v229 = vunpack.c.l.b16 %v192
      %v230 = vunpack.c.l.b16 %v193
      %v231 = vunpack.c.l.b16 %v194
      %v232 = vunpack.c.l.b16 %v195
      %v233 = vunpack.c.l.b16 %v196
      %v234 = vunpack.c.l.b16 %v197
      %v235 = vpack.c.b16 %v228, %v227
      %v236 = vpack.c.b16 %v230, %v229
      %v237 = vpack.c.b16 %v232, %v231
      %v238 = vpack.c.b16 %v234, %v233
      %vm243 = vcmask 523264
      %v245 = vsel %vm243, %v218, 0
      %247 = vmatprep.subr.bf16.mxu0 0
      %248 = vmatpush1.bf16.msra.mxu0 %v235
      %249 = vmatprep.subr.bf16.mxu0 0
      %250 = vmatpush1.bf16.msra.mxu0 %v236
      %251 = vmatprep.subr.bf16.mxu0 0
      %252 = vmatpush1.bf16.msra.mxu0 %v237
      %253 = vmatprep.subr.bf16.mxu0 0
      %254 = vmatpush1.bf16.msra.mxu0 %v238
      %255 = vmatprep.subr.bf16.mxu0 0
      %256 = vmatpush1.bf16.msra.mxu0 0
      %257 = vmatprep.subr.bf16.mxu0 0
      %258 = vmatpush1.bf16.msra.mxu0 0
      %259 = vmatprep.subr.bf16.mxu0 0
      %260 = vmatpush1.bf16.msra.mxu0 0
      %261 = vmatprep.subr.bf16.mxu0 0
      %262 = vmatpush1.bf16.msra.mxu0 0
      %263 = vmatprep.subr.bf16.mxu0 0
      %264 = vmatpush1.bf16.msra.mxu0 0
      %265 = vmatprep.subr.bf16.mxu0 0
      %266 = vmatpush1.bf16.msra.mxu0 0
      %267 = vmatprep.subr.bf16.mxu0 0
      %268 = vmatpush1.bf16.msra.mxu0 0
      %269 = vmatprep.subr.bf16.mxu0 0
      %270 = vmatpush1.bf16.msra.mxu0 0
      %271 = vmatprep.subr.bf16.mxu0 0
      %272 = vmatpush1.bf16.msra.mxu0 0
      %273 = vmatprep.subr.bf16.mxu0 0
      %274 = vmatpush1.bf16.msra.mxu0 0
      %275 = vmatprep.subr.bf16.mxu0 0
      %276 = vmatpush1.bf16.msra.mxu0 0
      %277 = vmatprep.subr.bf16.mxu0 0
      %278 = vmatpush1.bf16.msra.mxu0 0
      %279 = vmatprep.mubr.bf16.mxu0 0
      %280 = vmatmul.mubr.bf16.gmra.mrb[0].mxu0 %v245
      %v281 = vpop.f32.mrb[0].mxu0
      %v282 = vadd.f32 0.0, %v281
      %v283 = vpop.f32.mrb[0].mxu0
      %v284 = vpop.f32.mrb[0].mxu0
      %v285 = vadd.f32 0.0, %v284
      %v286 = vpop.f32.mrb[0].mxu0
      %287 = vdwg.mxu0
      %v292 = vcombine.low %v172, %v173
      %v293 = vcombine.low %v174, %v175
      %v295 = vunpack.c.l.s4 1983009808
      %v296 = vunpack.c.0.s8 %v295
      %v297 = vlaneseq
      %v298 = vshrl.u32 %v297, 7
      %v299 = vsub.s32 %v296, %v298
      %v300 = vrot.slane %v292, %v299
      %v302 = vunpack.c.l.s4 1983009808
      %v303 = vunpack.c.0.s8 %v302
      %v304 = vlaneseq
      %v305 = vshrl.u32 %v304, 7
      %v306 = vsub.s32 %v303, %v305
      %v307 = vrot.slane %v293, %v306
      %v308 = vcombine.low %v300, %v307
      %v317 = vunpack.c.l.b16 %v176
      %v318 = vunpack.c.l.b16 %v177
      %v319 = vunpack.c.l.b16 %v178
      %v320 = vunpack.c.l.b16 %v179
      %v321 = vunpack.c.l.b16 %v180
      %v322 = vunpack.c.l.b16 %v181
      %v323 = vunpack.c.l.b16 %v182
      %v324 = vunpack.c.l.b16 %v183
      %v325 = vpack.c.b16 %v318, %v317
      %v326 = vpack.c.b16 %v320, %v319
      %v327 = vpack.c.b16 %v322, %v321
      %v328 = vpack.c.b16 %v324, %v323
      %v334 = vsel %vm243, %v308, 0
      %336 = vmatprep.subr.bf16.mxu0 0
      %337 = vmatpush1.bf16.msra.mxu0 %v325
      %338 = vmatprep.subr.bf16.mxu0 0
      %339 = vmatpush1.bf16.msra.mxu0 %v326
      %340 = vmatprep.subr.bf16.mxu0 0
      %341 = vmatpush1.bf16.msra.mxu0 %v327
      %342 = vmatprep.subr.bf16.mxu0 0
      %343 = vmatpush1.bf16.msra.mxu0 %v328
      %344 = vmatprep.subr.bf16.mxu0 0
      %345 = vmatpush1.bf16.msra.mxu0 0
      %346 = vmatprep.subr.bf16.mxu0 0
      %347 = vmatpush1.bf16.msra.mxu0 0
      %348 = vmatprep.subr.bf16.mxu0 0
      %349 = vmatpush1.bf16.msra.mxu0 0
      %350 = vmatprep.subr.bf16.mxu0 0
      %351 = vmatpush1.bf16.msra.mxu0 0
      %352 = vmatprep.subr.bf16.mxu0 0
      %353 = vmatpush1.bf16.msra.mxu0 0
      %354 = vmatprep.subr.bf16.mxu0 0
      %355 = vmatpush1.bf16.msra.mxu0 0
      %356 = vmatprep.subr.bf16.mxu0 0
      %357 = vmatpush1.bf16.msra.mxu0 0
      %358 = vmatprep.subr.bf16.mxu0 0
      %359 = vmatpush1.bf16.msra.mxu0 0
      %360 = vmatprep.subr.bf16.mxu0 0
      %361 = vmatpush1.bf16.msra.mxu0 0
      %362 = vmatprep.subr.bf16.mxu0 0
      %363 = vmatpush1.bf16.msra.mxu0 0
      %364 = vmatprep.subr.bf16.mxu0 0
      %365 = vmatpush1.bf16.msra.mxu0 0
      %366 = vmatprep.subr.bf16.mxu0 0
      %367 = vmatpush1.bf16.msra.mxu0 0
      %368 = vmatprep.mubr.bf16.mxu0 0
      %369 = vmatmul.mubr.bf16.gmra.mrb[0].mxu0 %v334
      %v370 = vpop.f32.mrb[0].mxu0
      %v371 = vadd.f32 %v282, %v370
      %v372 = vpop.f32.mrb[0].mxu0
      %v373 = vpop.f32.mrb[0].mxu0
      %v374 = vadd.f32 %v285, %v373
      %v375 = vpop.f32.mrb[0].mxu0
      %376 = vdwg.mxu0
      %v377 = vld [vmem:[%s165] sm:$0x7]
      %v378 = vld [vmem:[%s165 + $0x4] sm:$0x7]
      %v379 = vld [vmem:[%s165 + $0x8] sm:$0x7]
      %v380 = vld [vmem:[%s165 + $0xc] sm:$0x7]
      %v386 = vunpack.c.l.s4 1983009808
      %v387 = vunpack.c.0.s8 %v386
      %v388 = vlaneseq
      %v389 = vshrl.u32 %v388, 7
      %v390 = vsub.s32 %v387, %v389
      %v391 = vrot.slane %v377, %v390
      %v392 = vcombine.high %v391, %v391
      %v394 = vunpack.c.l.s4 1983009808
      %v395 = vunpack.c.0.s8 %v394
      %v396 = vlaneseq
      %v397 = vshrl.u32 %v396, 7
      %v398 = vsub.s32 %v395, %v397
      %v399 = vrot.slane %v378, %v398
      %v400 = vcombine.high %v399, %v399
      %v402 = vunpack.c.l.s4 1983009808
      %v403 = vunpack.c.0.s8 %v402
      %v404 = vlaneseq
      %v405 = vshrl.u32 %v404, 7
      %v406 = vsub.s32 %v403, %v405
      %v407 = vrot.slane %v379, %v406
      %v408 = vcombine.high %v407, %v407
      %v410 = vunpack.c.l.s4 1983009808
      %v411 = vunpack.c.0.s8 %v410
      %v412 = vlaneseq
      %v413 = vshrl.u32 %v412, 7
      %v414 = vsub.s32 %v411, %v413
      %v415 = vrot.slane %v380, %v414
      %v416 = vcombine.high %v415, %v415
      %vm417 = vsmask.f32 1280
      %vm418 = vsmask.f32 3336
      %vm419 = vmor %vm417, %vm418
      %vm420 = vsmask.f32 5392
      %vm421 = vmor %vm419, %vm420
      %vm422 = vsmask.f32 7448
      %vm423 = vmor %vm421, %vm422
      %v425 = vshrl.u32 %v391, 16
      %v427 = vrot.slane %v425, 6
      %v428 = vshll.u32 %v391, 16
      %v430 = vrot.slane %v428, 7
      %v431 = vor.u32 %v427, %v430
      %v432 = vrot.slane %v431, 2
      %v434 = vshll.u32 %v392, 16
      %v436 = vrot.slane %v434, 7
      %v437 = vsel %vm423, %v432, %v436
      %v439 = vshrl.u32 %v399, 16
      %v441 = vrot.slane %v439, 6
      %v442 = vshll.u32 %v399, 16
      %v444 = vrot.slane %v442, 7
      %v445 = vor.u32 %v441, %v444
      %v446 = vrot.slane %v445, 2
      %v448 = vshll.u32 %v400, 16
      %v450 = vrot.slane %v448, 7
      %v451 = vsel %vm423, %v446, %v450
      %v453 = vshrl.u32 %v407, 16
      %v455 = vrot.slane %v453, 6
      %v456 = vshll.u32 %v407, 16
      %v458 = vrot.slane %v456, 7
      %v459 = vor.u32 %v455, %v458
      %v460 = vrot.slane %v459, 2
      %v462 = vshll.u32 %v408, 16
      %v464 = vrot.slane %v462, 7
      %v465 = vsel %vm423, %v460, %v464
      %v467 = vshrl.u32 %v415, 16
      %v469 = vrot.slane %v467, 6
      %v470 = vshll.u32 %v415, 16
      %v472 = vrot.slane %v470, 7
      %v473 = vor.u32 %v469, %v472
      %v474 = vrot.slane %v473, 2
      %v476 = vshll.u32 %v416, 16
      %v478 = vrot.slane %v476, 7
      %v479 = vsel %vm423, %v474, %v478
      %s480 = scalar_lea.vmem %s1, 64
      %v481 = vld [vmem:[%s480] sm:$0xf]
      %v482 = vld [vmem:[%s480 + $0x4] sm:$0xf]
      %v483 = vld [vmem:[%s480 + $0x8] sm:$0xf]
      %v484 = vld [vmem:[%s480 + $0xc] sm:$0xf]
      %v485 = vld [vmem:[%s480 + $0x10] sm:$0xf]
      %v486 = vld [vmem:[%s480 + $0x14] sm:$0xf]
      %v487 = vld [vmem:[%s480 + $0x18] sm:$0xf]
      %v488 = vld [vmem:[%s480 + $0x1c] sm:$0xf]
      %v489 = vcombine.low %v437, %v451
      %v490 = vcombine.low %v465, %v479
      %v492 = vunpack.c.l.s4 1983009808
      %v493 = vunpack.c.0.s8 %v492
      %v494 = vlaneseq
      %v495 = vshrl.u32 %v494, 7
      %v496 = vsub.s32 %v493, %v495
      %v497 = vrot.slane %v489, %v496
      %v499 = vunpack.c.l.s4 1983009808
      %v500 = vunpack.c.0.s8 %v499
      %v501 = vlaneseq
      %v502 = vshrl.u32 %v501, 7
      %v503 = vsub.s32 %v500, %v502
      %v504 = vrot.slane %v490, %v503
      %v505 = vcombine.low %v497, %v504
      %v514 = vunpack.c.l.b16 %v481
      %v515 = vunpack.c.l.b16 %v482
      %v516 = vunpack.c.l.b16 %v483
      %v517 = vunpack.c.l.b16 %v484
      %v518 = vunpack.c.l.b16 %v485
      %v519 = vunpack.c.l.b16 %v486
      %v520 = vunpack.c.l.b16 %v487
      %v521 = vunpack.c.l.b16 %v488
      %v522 = vpack.c.b16 %v515, %v514
      %v523 = vpack.c.b16 %v517, %v516
      %v524 = vpack.c.b16 %v519, %v518
      %v525 = vpack.c.b16 %v521, %v520
      %v531 = vsel %vm243, %v505, 0
      %533 = vmatprep.subr.bf16.mxu0 0
      %534 = vmatpush1.bf16.msra.mxu0 %v522
      %535 = vmatprep.subr.bf16.mxu0 0
      %536 = vmatpush1.bf16.msra.mxu0 %v523
      %537 = vmatprep.subr.bf16.mxu0 0
      %538 = vmatpush1.bf16.msra.mxu0 %v524
      %539 = vmatprep.subr.bf16.mxu0 0
      %540 = vmatpush1.bf16.msra.mxu0 %v525
      %541 = vmatprep.subr.bf16.mxu0 0
      %542 = vmatpush1.bf16.msra.mxu0 0
      %543 = vmatprep.subr.bf16.mxu0 0
      %544 = vmatpush1.bf16.msra.mxu0 0
      %545 = vmatprep.subr.bf16.mxu0 0
      %546 = vmatpush1.bf16.msra.mxu0 0
      %547 = vmatprep.subr.bf16.mxu0 0
      %548 = vmatpush1.bf16.msra.mxu0 0
      %549 = vmatprep.subr.bf16.mxu0 0
      %550 = vmatpush1.bf16.msra.mxu0 0
      %551 = vmatprep.subr.bf16.mxu0 0
      %552 = vmatpush1.bf16.msra.mxu0 0
      %553 = vmatprep.subr.bf16.mxu0 0
      %554 = vmatpush1.bf16.msra.mxu0 0
      %555 = vmatprep.subr.bf16.mxu0 0
      %556 = vmatpush1.bf16.msra.mxu0 0
      %557 = vmatprep.subr.bf16.mxu0 0
      %558 = vmatpush1.bf16.msra.mxu0 0
      %559 = vmatprep.subr.bf16.mxu0 0
      %560 = vmatpush1.bf16.msra.mxu0 0
      %561 = vmatprep.subr.bf16.mxu0 0
      %562 = vmatpush1.bf16.msra.mxu0 0
      %563 = vmatprep.subr.bf16.mxu0 0
      %564 = vmatpush1.bf16.msra.mxu0 0
      %565 = vmatprep.mubr.bf16.mxu0 0
      %566 = vmatmul.mubr.bf16.gmra.mrb[0].mxu0 %v531
      %v567 = vpop.f32.mrb[0].mxu0
      %v568 = vadd.f32 0.0, %v567
      %v569 = vpop.f32.mrb[0].mxu0
      %v570 = vpop.f32.mrb[0].mxu0
      %v571 = vadd.f32 0.0, %v570
      %v572 = vpop.f32.mrb[0].mxu0
      %573 = vdwg.mxu0
      %v574 = vadd.f32 %v371, %v568
      %v575 = vadd.f32 %v374, %v571
      %s576 = scalar_lea.vmem %s165, 40
      %v577 = vld [vmem:[%s576] sm:$0x3]
      %v578 = vld [vmem:[%s576 + $0x4] sm:$0x3]
      %v579 = vld [vmem:[%s576 + $0x8] sm:$0x3]
      %v580 = vld [vmem:[%s576 + $0xc] sm:$0x3]
      %s581 = scalar_lea.vmem %s1, 96
      %v582 = vld [vmem:[%s581] sm:$0xf]
      %v583 = vld [vmem:[%s581 + $0x4] sm:$0xf]
      %v584 = vld [vmem:[%s581 + $0x8] sm:$0xf]
      %v585 = vld [vmem:[%s581 + $0xc] sm:$0xf]
      %v586 = vld [vmem:[%s581 + $0x10] sm:$0xf]
      %v587 = vld [vmem:[%s581 + $0x14] sm:$0xf]
      %v588 = vld [vmem:[%s581 + $0x18] sm:$0xf]
      %v589 = vld [vmem:[%s581 + $0x1c] sm:$0xf]
      %v594 = vcombine.low %v577, %v578
      %v595 = vcombine.low %v579, %v580
      %v597 = vunpack.c.l.s4 1983009808
      %v598 = vunpack.c.0.s8 %v597
      %v599 = vlaneseq
      %v600 = vshrl.u32 %v599, 7
      %v601 = vsub.s32 %v598, %v600
      %v602 = vrot.slane %v594, %v601
      %v604 = vunpack.c.l.s4 1983009808
      %v605 = vunpack.c.0.s8 %v604
      %v606 = vlaneseq
      %v607 = vshrl.u32 %v606, 7
      %v608 = vsub.s32 %v605, %v607
      %v609 = vrot.slane %v595, %v608
      %v610 = vcombine.low %v602, %v609
      %v619 = vunpack.c.l.b16 %v582
      %v620 = vunpack.c.l.b16 %v583
      %v621 = vunpack.c.l.b16 %v584
      %v622 = vunpack.c.l.b16 %v585
      %v623 = vunpack.c.l.b16 %v586
      %v624 = vunpack.c.l.b16 %v587
      %v625 = vunpack.c.l.b16 %v588
      %v626 = vunpack.c.l.b16 %v589
      %v627 = vpack.c.b16 %v620, %v619
      %v628 = vpack.c.b16 %v622, %v621
      %v629 = vpack.c.b16 %v624, %v623
      %v630 = vpack.c.b16 %v626, %v625
      %v636 = vsel %vm243, %v610, 0
      %638 = vmatprep.subr.bf16.mxu0 0
      %639 = vmatpush1.bf16.msra.mxu0 %v627
      %640 = vmatprep.subr.bf16.mxu0 0
      %641 = vmatpush1.bf16.msra.mxu0 %v628
      %642 = vmatprep.subr.bf16.mxu0 0
      %643 = vmatpush1.bf16.msra.mxu0 %v629
      %644 = vmatprep.subr.bf16.mxu0 0
      %645 = vmatpush1.bf16.msra.mxu0 %v630
      %646 = vmatprep.subr.bf16.mxu0 0
      %647 = vmatpush1.bf16.msra.mxu0 0
      %648 = vmatprep.subr.bf16.mxu0 0
      %649 = vmatpush1.bf16.msra.mxu0 0
      %650 = vmatprep.subr.bf16.mxu0 0
      %651 = vmatpush1.bf16.msra.mxu0 0
      %652 = vmatprep.subr.bf16.mxu0 0
      %653 = vmatpush1.bf16.msra.mxu0 0
      %654 = vmatprep.subr.bf16.mxu0 0
      %655 = vmatpush1.bf16.msra.mxu0 0
      %656 = vmatprep.subr.bf16.mxu0 0
      %657 = vmatpush1.bf16.msra.mxu0 0
      %658 = vmatprep.subr.bf16.mxu0 0
      %659 = vmatpush1.bf16.msra.mxu0 0
      %660 = vmatprep.subr.bf16.mxu0 0
      %661 = vmatpush1.bf16.msra.mxu0 0
      %662 = vmatprep.subr.bf16.mxu0 0
      %663 = vmatpush1.bf16.msra.mxu0 0
      %664 = vmatprep.subr.bf16.mxu0 0
      %665 = vmatpush1.bf16.msra.mxu0 0
      %666 = vmatprep.subr.bf16.mxu0 0
      %667 = vmatpush1.bf16.msra.mxu0 0
      %668 = vmatprep.subr.bf16.mxu0 0
      %669 = vmatpush1.bf16.msra.mxu0 0
      %670 = vmatprep.mubr.bf16.mxu0 0
      %671 = vmatmul.mubr.bf16.gmra.mrb[0].mxu0 %v636
      %v672 = vpop.f32.mrb[0].mxu0
      %v673 = vadd.f32 0.0, %v672
      %v674 = vpop.f32.mrb[0].mxu0
      %v675 = vpop.f32.mrb[0].mxu0
      %v676 = vadd.f32 0.0, %v675
      %v677 = vpop.f32.mrb[0].mxu0
      %678 = vdwg.mxu0
      %v679 = vadd.f32 %v574, %v673
      %v680 = vadd.f32 %v575, %v676
      %s681 = scalar_lea.vmem %s165, 60
      %v682 = vld [vmem:[%s681] sm:$0x3]
      %v683 = vld [vmem:[%s681 + $0x4] sm:$0x3]
      %v684 = vld [vmem:[%s681 + $0x8] sm:$0x3]
      %v685 = vld [vmem:[%s681 + $0xc] sm:$0x3]
      %s686 = scalar_lea.vmem %s1, 128
      %v687 = vld [vmem:[%s686] sm:$0xf]
      %v688 = vld [vmem:[%s686 + $0x4] sm:$0xf]
      %v689 = vld [vmem:[%s686 + $0x8] sm:$0xf]
      %v690 = vld [vmem:[%s686 + $0xc] sm:$0xf]
      %v691 = vld [vmem:[%s686 + $0x10] sm:$0xf]
      %v692 = vld [vmem:[%s686 + $0x14] sm:$0xf]
      %v693 = vld [vmem:[%s686 + $0x18] sm:$0xf]
      %v694 = vld [vmem:[%s686 + $0x1c] sm:$0xf]
      %v699 = vcombine.low %v682, %v683
      %v700 = vcombine.low %v684, %v685
      %v702 = vunpack.c.l.s4 1983009808
      %v703 = vunpack.c.0.s8 %v702
      %v704 = vlaneseq
      %v705 = vshrl.u32 %v704, 7
      %v706 = vsub.s32 %v703, %v705
      %v707 = vrot.slane %v699, %v706
      %v709 = vunpack.c.l.s4 1983009808
      %v710 = vunpack.c.0.s8 %v709
      %v711 = vlaneseq
      %v712 = vshrl.u32 %v711, 7
      %v713 = vsub.s32 %v710, %v712
      %v714 = vrot.slane %v700, %v713
      %v715 = vcombine.low %v707, %v714
      %v724 = vunpack.c.l.b16 %v687
      %v725 = vunpack.c.l.b16 %v688
      %v726 = vunpack.c.l.b16 %v689
      %v727 = vunpack.c.l.b16 %v690
      %v728 = vunpack.c.l.b16 %v691
      %v729 = vunpack.c.l.b16 %v692
      %v730 = vunpack.c.l.b16 %v693
      %v731 = vunpack.c.l.b16 %v694
      %v732 = vpack.c.b16 %v725, %v724
      %v733 = vpack.c.b16 %v727, %v726
      %v734 = vpack.c.b16 %v729, %v728
      %v735 = vpack.c.b16 %v731, %v730
      %v741 = vsel %vm243, %v715, 0
      %743 = vmatprep.subr.bf16.mxu0 0
      %744 = vmatpush1.bf16.msra.mxu0 %v732
      %745 = vmatprep.subr.bf16.mxu0 0
      %746 = vmatpush1.bf16.msra.mxu0 %v733
      %747 = vmatprep.subr.bf16.mxu0 0
      %748 = vmatpush1.bf16.msra.mxu0 %v734
      %749 = vmatprep.subr.bf16.mxu0 0
      %750 = vmatpush1.bf16.msra.mxu0 %v735
      %751 = vmatprep.subr.bf16.mxu0 0
      %752 = vmatpush1.bf16.msra.mxu0 0
      %753 = vmatprep.subr.bf16.mxu0 0
      %754 = vmatpush1.bf16.msra.mxu0 0
      %755 = vmatprep.subr.bf16.mxu0 0
      %756 = vmatpush1.bf16.msra.mxu0 0
      %757 = vmatprep.subr.bf16.mxu0 0
      %758 = vmatpush1.bf16.msra.mxu0 0
      %759 = vmatprep.subr.bf16.mxu0 0
      %760 = vmatpush1.bf16.msra.mxu0 0
      %761 = vmatprep.subr.bf16.mxu0 0
      %762 = vmatpush1.bf16.msra.mxu0 0
      %763 = vmatprep.subr.bf16.mxu0 0
      %764 = vmatpush1.bf16.msra.mxu0 0
      %765 = vmatprep.subr.bf16.mxu0 0
      %766 = vmatpush1.bf16.msra.mxu0 0
      %767 = vmatprep.subr.bf16.mxu0 0
      %768 = vmatpush1.bf16.msra.mxu0 0
      %769 = vmatprep.subr.bf16.mxu0 0
      %770 = vmatpush1.bf16.msra.mxu0 0
      %771 = vmatprep.subr.bf16.mxu0 0
      %772 = vmatpush1.bf16.msra.mxu0 0
      %773 = vmatprep.subr.bf16.mxu0 0
      %774 = vmatpush1.bf16.msra.mxu0 0
      %775 = vmatprep.mubr.bf16.mxu0 0
      %776 = vmatmul.mubr.bf16.gmra.mrb[0].mxu0 %v741
      %v777 = vpop.f32.mrb[0].mxu0
      %v778 = vadd.f32 0.0, %v777
      %v779 = vpop.f32.mrb[0].mxu0
      %v780 = vpop.f32.mrb[0].mxu0
      %v781 = vadd.f32 0.0, %v780
      %v782 = vpop.f32.mrb[0].mxu0
      %783 = vdwg.mxu0
      %v784 = vadd.f32 %v679, %v778
      %v785 = vadd.f32 %v680, %v781
      %v786 = vld [vmem:[%s576] sm:$0x7]
      %v787 = vld [vmem:[%s576 + $0x4] sm:$0x7]
      %v788 = vld [vmem:[%s576 + $0x8] sm:$0x7]
      %v789 = vld [vmem:[%s576 + $0xc] sm:$0x7]
      %v795 = vunpack.c.l.s4 1983009808
      %v796 = vunpack.c.0.s8 %v795
      %v797 = vlaneseq
      %v798 = vshrl.u32 %v797, 7
      %v799 = vsub.s32 %v796, %v798
      %v800 = vrot.slane %v786, %v799
      %v801 = vcombine.high %v800, %v800
      %v803 = vunpack.c.l.s4 1983009808
      %v804 = vunpack.c.0.s8 %v803
      %v805 = vlaneseq
      %v806 = vshrl.u32 %v805, 7
      %v807 = vsub.s32 %v804, %v806
      %v808 = vrot.slane %v787, %v807
      %v809 = vcombine.high %v808, %v808
      %v811 = vunpack.c.l.s4 1983009808
      %v812 = vunpack.c.0.s8 %v811
      %v813 = vlaneseq
      %v814 = vshrl.u32 %v813, 7
      %v815 = vsub.s32 %v812, %v814
      %v816 = vrot.slane %v788, %v815
      %v817 = vcombine.high %v816, %v816
      %v819 = vunpack.c.l.s4 1983009808
      %v820 = vunpack.c.0.s8 %v819
      %v821 = vlaneseq
      %v822 = vshrl.u32 %v821, 7
      %v823 = vsub.s32 %v820, %v822
      %v824 = vrot.slane %v789, %v823
      %v825 = vcombine.high %v824, %v824
      %v827 = vshrl.u32 %v800, 16
      %v829 = vrot.slane %v827, 6
      %v830 = vshll.u32 %v800, 16
      %v832 = vrot.slane %v830, 7
      %v833 = vor.u32 %v829, %v832
      %v834 = vrot.slane %v833, 2
      %v836 = vshll.u32 %v801, 16
      %v838 = vrot.slane %v836, 7
      %v839 = vsel %vm423, %v834, %v838
      %v841 = vshrl.u32 %v808, 16
      %v843 = vrot.slane %v841, 6
      %v844 = vshll.u32 %v808, 16
      %v846 = vrot.slane %v844, 7
      %v847 = vor.u32 %v843, %v846
      %v848 = vrot.slane %v847, 2
      %v850 = vshll.u32 %v809, 16
      %v852 = vrot.slane %v850, 7
      %v853 = vsel %vm423, %v848, %v852
      %v855 = vshrl.u32 %v816, 16
      %v857 = vrot.slane %v855, 6
      %v858 = vshll.u32 %v816, 16
      %v860 = vrot.slane %v858, 7
      %v861 = vor.u32 %v857, %v860
      %v862 = vrot.slane %v861, 2
      %v864 = vshll.u32 %v817, 16
      %v866 = vrot.slane %v864, 7
      %v867 = vsel %vm423, %v862, %v866
      %v869 = vshrl.u32 %v824, 16
      %v871 = vrot.slane %v869, 6
      %v872 = vshll.u32 %v824, 16
      %v874 = vrot.slane %v872, 7
      %v875 = vor.u32 %v871, %v874
      %v876 = vrot.slane %v875, 2
      %v878 = vshll.u32 %v825, 16
      %v880 = vrot.slane %v878, 7
      %v881 = vsel %vm423, %v876, %v880
      %s882 = scalar_lea.vmem %s1, 160
      %v883 = vld [vmem:[%s882] sm:$0xf]
      %v884 = vld [vmem:[%s882 + $0x4] sm:$0xf]
      %v885 = vld [vmem:[%s882 + $0x8] sm:$0xf]
      %v886 = vld [vmem:[%s882 + $0xc] sm:$0xf]
      %v887 = vld [vmem:[%s882 + $0x10] sm:$0xf]
      %v888 = vld [vmem:[%s882 + $0x14] sm:$0xf]
      %v889 = vld [vmem:[%s882 + $0x18] sm:$0xf]
      %v890 = vld [vmem:[%s882 + $0x1c] sm:$0xf]
      %v891 = vcombine.low %v839, %v853
      %v892 = vcombine.low %v867, %v881
      %v894 = vunpack.c.l.s4 1983009808
      %v895 = vunpack.c.0.s8 %v894
      %v896 = vlaneseq
      %v897 = vshrl.u32 %v896, 7
      %v898 = vsub.s32 %v895, %v897
      %v899 = vrot.slane %v891, %v898
      %v901 = vunpack.c.l.s4 1983009808
      %v902 = vunpack.c.0.s8 %v901
      %v903 = vlaneseq
      %v904 = vshrl.u32 %v903, 7
      %v905 = vsub.s32 %v902, %v904
      %v906 = vrot.slane %v892, %v905
      %v907 = vcombine.low %v899, %v906
      %v916 = vunpack.c.l.b16 %v883
      %v917 = vunpack.c.l.b16 %v884
      %v918 = vunpack.c.l.b16 %v885
      %v919 = vunpack.c.l.b16 %v886
      %v920 = vunpack.c.l.b16 %v887
      %v921 = vunpack.c.l.b16 %v888
      %v922 = vunpack.c.l.b16 %v889
      %v923 = vunpack.c.l.b16 %v890
      %v924 = vpack.c.b16 %v917, %v916
      %v925 = vpack.c.b16 %v919, %v918
      %v926 = vpack.c.b16 %v921, %v920
      %v927 = vpack.c.b16 %v923, %v922
      %v933 = vsel %vm243, %v907, 0
      %935 = vmatprep.subr.bf16.mxu0 0
      %936 = vmatpush1.bf16.msra.mxu0 %v924
      %937 = vmatprep.subr.bf16.mxu0 0
      %938 = vmatpush1.bf16.msra.mxu0 %v925
      %939 = vmatprep.subr.bf16.mxu0 0
      %940 = vmatpush1.bf16.msra.mxu0 %v926
      %941 = vmatprep.subr.bf16.mxu0 0
      %942 = vmatpush1.bf16.msra.mxu0 %v927
      %943 = vmatprep.subr.bf16.mxu0 0
      %944 = vmatpush1.bf16.msra.mxu0 0
      %945 = vmatprep.subr.bf16.mxu0 0
      %946 = vmatpush1.bf16.msra.mxu0 0
      %947 = vmatprep.subr.bf16.mxu0 0
      %948 = vmatpush1.bf16.msra.mxu0 0
      %949 = vmatprep.subr.bf16.mxu0 0
      %950 = vmatpush1.bf16.msra.mxu0 0
      %951 = vmatprep.subr.bf16.mxu0 0
      %952 = vmatpush1.bf16.msra.mxu0 0
      %953 = vmatprep.subr.bf16.mxu0 0
      %954 = vmatpush1.bf16.msra.mxu0 0
      %955 = vmatprep.subr.bf16.mxu0 0
      %956 = vmatpush1.bf16.msra.mxu0 0
      %957 = vmatprep.subr.bf16.mxu0 0
      %958 = vmatpush1.bf16.msra.mxu0 0
      %959 = vmatprep.subr.bf16.mxu0 0
      %960 = vmatpush1.bf16.msra.mxu0 0
      %961 = vmatprep.subr.bf16.mxu0 0
      %962 = vmatpush1.bf16.msra.mxu0 0
      %963 = vmatprep.subr.bf16.mxu0 0
      %964 = vmatpush1.bf16.msra.mxu0 0
      %965 = vmatprep.subr.bf16.mxu0 0
      %966 = vmatpush1.bf16.msra.mxu0 0
      %967 = vmatprep.mubr.bf16.mxu0 0
      %968 = vmatmul.mubr.bf16.gmra.mrb[0].mxu0 %v933
      %v969 = vpop.f32.mrb[0].mxu0
      %v970 = vadd.f32 0.0, %v969
      %v971 = vpop.f32.mrb[0].mxu0
      %v972 = vpop.f32.mrb[0].mxu0
      %v973 = vadd.f32 0.0, %v972
      %v974 = vpop.f32.mrb[0].mxu0
      %975 = vdwg.mxu0
      %v976 = vadd.f32 %v784, %v970
      %v977 = vadd.f32 %v785, %v973
      %s978 = scalar_lea.vmem %s165, 4
      %v979 = vld [vmem:[%s978] sm:$0x3]
      %v980 = vld [vmem:[%s978 + $0x4] sm:$0x3]
      %v981 = vld [vmem:[%s978 + $0x8] sm:$0x3]
      %v982 = vld [vmem:[%s978 + $0xc] sm:$0x3]
      %s983 = scalar_lea.vmem %s1, 192
      %v984 = vld [vmem:[%s983] sm:$0xf]
      %v985 = vld [vmem:[%s983 + $0x4] sm:$0xf]
      %v986 = vld [vmem:[%s983 + $0x8] sm:$0xf]
      %v987 = vld [vmem:[%s983 + $0xc] sm:$0xf]
      %v988 = vld [vmem:[%s983 + $0x10] sm:$0xf]
      %v989 = vld [vmem:[%s983 + $0x14] sm:$0xf]
      %v990 = vld [vmem:[%s983 + $0x18] sm:$0xf]
      %v991 = vld [vmem:[%s983 + $0x1c] sm:$0xf]
      %v996 = vcombine.low %v979, %v980
      %v997 = vcombine.low %v981, %v982
      %v999 = vunpack.c.l.s4 1983009808
      %v1000 = vunpack.c.0.s8 %v999
      %v1001 = vlaneseq
      %v1002 = vshrl.u32 %v1001, 7
      %v1003 = vsub.s32 %v1000, %v1002
      %v1004 = vrot.slane %v996, %v1003
      %v1006 = vunpack.c.l.s4 1983009808
      %v1007 = vunpack.c.0.s8 %v1006
      %v1008 = vlaneseq
      %v1009 = vshrl.u32 %v1008, 7
      %v1010 = vsub.s32 %v1007, %v1009
      %v1011 = vrot.slane %v997, %v1010
      %v1012 = vcombine.low %v1004, %v1011
      %v1021 = vunpack.c.l.b16 %v984
      %v1022 = vunpack.c.l.b16 %v985
      %v1023 = vunpack.c.l.b16 %v986
      %v1024 = vunpack.c.l.b16 %v987
      %v1025 = vunpack.c.l.b16 %v988
      %v1026 = vunpack.c.l.b16 %v989
      %v1027 = vunpack.c.l.b16 %v990
      %v1028 = vunpack.c.l.b16 %v991
      %v1029 = vpack.c.b16 %v1022, %v1021
      %v1030 = vpack.c.b16 %v1024, %v1023
      %v1031 = vpack.c.b16 %v1026, %v1025
      %v1032 = vpack.c.b16 %v1028, %v1027
      %v1038 = vsel %vm243, %v1012, 0
      %1040 = vmatprep.subr.bf16.mxu0 0
      %1041 = vmatpush1.bf16.msra.mxu0 %v1029
      %1042 = vmatprep.subr.bf16.mxu0 0
      %1043 = vmatpush1.bf16.msra.mxu0 %v1030
      %1044 = vmatprep.subr.bf16.mxu0 0
      %1045 = vmatpush1.bf16.msra.mxu0 %v1031
      %1046 = vmatprep.subr.bf16.mxu0 0
      %1047 = vmatpush1.bf16.msra.mxu0 %v1032
      %1048 = vmatprep.subr.bf16.mxu0 0
      %1049 = vmatpush1.bf16.msra.mxu0 0
      %1050 = vmatprep.subr.bf16.mxu0 0
      %1051 = vmatpush1.bf16.msra.mxu0 0
      %1052 = vmatprep.subr.bf16.mxu0 0
      %1053 = vmatpush1.bf16.msra.mxu0 0
      %1054 = vmatprep.subr.bf16.mxu0 0
      %1055 = vmatpush1.bf16.msra.mxu0 0
      %1056 = vmatprep.subr.bf16.mxu0 0
      %1057 = vmatpush1.bf16.msra.mxu0 0
      %1058 = vmatprep.subr.bf16.mxu0 0
      %1059 = vmatpush1.bf16.msra.mxu0 0
      %1060 = vmatprep.subr.bf16.mxu0 0
      %1061 = vmatpush1.bf16.msra.mxu0 0
      %1062 = vmatprep.subr.bf16.mxu0 0
      %1063 = vmatpush1.bf16.msra.mxu0 0
      %1064 = vmatprep.subr.bf16.mxu0 0
      %1065 = vmatpush1.bf16.msra.mxu0 0
      %1066 = vmatprep.subr.bf16.mxu0 0
      %1067 = vmatpush1.bf16.msra.mxu0 0
      %1068 = vmatprep.subr.bf16.mxu0 0
      %1069 = vmatpush1.bf16.msra.mxu0 0
      %1070 = vmatprep.subr.bf16.mxu0 0
      %1071 = vmatpush1.bf16.msra.mxu0 0
      %1072 = vmatprep.mubr.bf16.mxu0 0
      %1073 = vmatmul.mubr.bf16.gmra.mrb[0].mxu0 %v1038
      %v1074 = vpop.f32.mrb[0].mxu0
      %v1075 = vadd.f32 0.0, %v1074
      %v1076 = vpop.f32.mrb[0].mxu0
      %v1077 = vpop.f32.mrb[0].mxu0
      %v1078 = vadd.f32 0.0, %v1077
      %v1079 = vpop.f32.mrb[0].mxu0
      %1080 = vdwg.mxu0
      %v1081 = vadd.f32 %v976, %v1075
      %v1082 = vadd.f32 %v977, %v1078
      %s1083 = scalar_lea.vmem %s165, 24
      %v1084 = vld [vmem:[%s1083] sm:$0x3]
      %v1085 = vld [vmem:[%s1083 + $0x4] sm:$0x3]
      %v1086 = vld [vmem:[%s1083 + $0x8] sm:$0x3]
      %v1087 = vld [vmem:[%s1083 + $0xc] sm:$0x3]
      %s1088 = scalar_lea.vmem %s1, 224
      %v1089 = vld [vmem:[%s1088] sm:$0xf]
      %v1090 = vld [vmem:[%s1088 + $0x4] sm:$0xf]
      %v1091 = vld [vmem:[%s1088 + $0x8] sm:$0xf]
      %v1092 = vld [vmem:[%s1088 + $0xc] sm:$0xf]
      %v1093 = vld [vmem:[%s1088 + $0x10] sm:$0xf]
      %v1094 = vld [vmem:[%s1088 + $0x14] sm:$0xf]
      %v1095 = vld [vmem:[%s1088 + $0x18] sm:$0xf]
      %v1096 = vld [vmem:[%s1088 + $0x1c] sm:$0xf]
      %v1101 = vcombine.low %v1084, %v1085
      %v1102 = vcombine.low %v1086, %v1087
      %v1104 = vunpack.c.l.s4 1983009808
      %v1105 = vunpack.c.0.s8 %v1104
      %v1106 = vlaneseq
      %v1107 = vshrl.u32 %v1106, 7
      %v1108 = vsub.s32 %v1105, %v1107
      %v1109 = vrot.slane %v1101, %v1108
      %v1111 = vunpack.c.l.s4 1983009808
      %v1112 = vunpack.c.0.s8 %v1111
      %v1113 = vlaneseq
      %v1114 = vshrl.u32 %v1113, 7
      %v1115 = vsub.s32 %v1112, %v1114
      %v1116 = vrot.slane %v1102, %v1115
      %v1117 = vcombine.low %v1109, %v1116
      %v1126 = vunpack.c.l.b16 %v1089
      %v1127 = vunpack.c.l.b16 %v1090
      %v1128 = vunpack.c.l.b16 %v1091
      %v1129 = vunpack.c.l.b16 %v1092
      %v1130 = vunpack.c.l.b16 %v1093
      %v1131 = vunpack.c.l.b16 %v1094
      %v1132 = vunpack.c.l.b16 %v1095
      %v1133 = vunpack.c.l.b16 %v1096
      %v1134 = vpack.c.b16 %v1127, %v1126
      %v1135 = vpack.c.b16 %v1129, %v1128
      %v1136 = vpack.c.b16 %v1131, %v1130
      %v1137 = vpack.c.b16 %v1133, %v1132
      %v1143 = vsel %vm243, %v1117, 0
      %1145 = vmatprep.subr.bf16.mxu0 0
      %1146 = vmatpush1.bf16.msra.mxu0 %v1134
      %1147 = vmatprep.subr.bf16.mxu0 0
      %1148 = vmatpush1.bf16.msra.mxu0 %v1135
      %1149 = vmatprep.subr.bf16.mxu0 0
      %1150 = vmatpush1.bf16.msra.mxu0 %v1136
      %1151 = vmatprep.subr.bf16.mxu0 0
      %1152 = vmatpush1.bf16.msra.mxu0 %v1137
      %1153 = vmatprep.subr.bf16.mxu0 0
      %1154 = vmatpush1.bf16.msra.mxu0 0
      %1155 = vmatprep.subr.bf16.mxu0 0
      %1156 = vmatpush1.bf16.msra.mxu0 0
      %1157 = vmatprep.subr.bf16.mxu0 0
      %1158 = vmatpush1.bf16.msra.mxu0 0
      %1159 = vmatprep.subr.bf16.mxu0 0
      %1160 = vmatpush1.bf16.msra.mxu0 0
      %1161 = vmatprep.subr.bf16.mxu0 0
      %1162 = vmatpush1.bf16.msra.mxu0 0
      %1163 = vmatprep.subr.bf16.mxu0 0
      %1164 = vmatpush1.bf16.msra.mxu0 0
      %1165 = vmatprep.subr.bf16.mxu0 0
      %1166 = vmatpush1.bf16.msra.mxu0 0
      %1167 = vmatprep.subr.bf16.mxu0 0
      %1168 = vmatpush1.bf16.msra.mxu0 0
      %1169 = vmatprep.subr.bf16.mxu0 0
      %1170 = vmatpush1.bf16.msra.mxu0 0
      %1171 = vmatprep.subr.bf16.mxu0 0
      %1172 = vmatpush1.bf16.msra.mxu0 0
      %1173 = vmatprep.subr.bf16.mxu0 0
      %1174 = vmatpush1.bf16.msra.mxu0 0
      %1175 = vmatprep.subr.bf16.mxu0 0
      %1176 = vmatpush1.bf16.msra.mxu0 0
      %1177 = vmatprep.mubr.bf16.mxu0 0
      %1178 = vmatmul.mubr.bf16.gmra.mrb[0].mxu0 %v1143
      %v1179 = vpop.f32.mrb[0].mxu0
      %v1180 = vadd.f32 0.0, %v1179
      %v1181 = vpop.f32.mrb[0].mxu0
      %v1182 = vpop.f32.mrb[0].mxu0
      %v1183 = vadd.f32 0.0, %v1182
      %v1184 = vpop.f32.mrb[0].mxu0
      %1185 = vdwg.mxu0
      %v1186 = vadd.f32 %v1081, %v1180
      %v1187 = vadd.f32 %v1082, %v1183
      %v1188 = vld [vmem:[%s978] sm:$0x7]
      %v1189 = vld [vmem:[%s978 + $0x4] sm:$0x7]
      %v1190 = vld [vmem:[%s978 + $0x8] sm:$0x7]
      %v1191 = vld [vmem:[%s978 + $0xc] sm:$0x7]
      %v1197 = vunpack.c.l.s4 1983009808
      %v1198 = vunpack.c.0.s8 %v1197
      %v1199 = vlaneseq
      %v1200 = vshrl.u32 %v1199, 7
      %v1201 = vsub.s32 %v1198, %v1200
      %v1202 = vrot.slane %v1188, %v1201
      %v1203 = vcombine.high %v1202, %v1202
      %v1205 = vunpack.c.l.s4 1983009808
      %v1206 = vunpack.c.0.s8 %v1205
      %v1207 = vlaneseq
      %v1208 = vshrl.u32 %v1207, 7
      %v1209 = vsub.s32 %v1206, %v1208
      %v1210 = vrot.slane %v1189, %v1209
      %v1211 = vcombine.high %v1210, %v1210
      %v1213 = vunpack.c.l.s4 1983009808
      %v1214 = vunpack.c.0.s8 %v1213
      %v1215 = vlaneseq
      %v1216 = vshrl.u32 %v1215, 7
      %v1217 = vsub.s32 %v1214, %v1216
      %v1218 = vrot.slane %v1190, %v1217
      %v1219 = vcombine.high %v1218, %v1218
      %v1221 = vunpack.c.l.s4 1983009808
      %v1222 = vunpack.c.0.s8 %v1221
      %v1223 = vlaneseq
      %v1224 = vshrl.u32 %v1223, 7
      %v1225 = vsub.s32 %v1222, %v1224
      %v1226 = vrot.slane %v1191, %v1225
      %v1227 = vcombine.high %v1226, %v1226
      %v1229 = vshrl.u32 %v1202, 16
      %v1231 = vrot.slane %v1229, 6
      %v1232 = vshll.u32 %v1202, 16
      %v1234 = vrot.slane %v1232, 7
      %v1235 = vor.u32 %v1231, %v1234
      %v1236 = vrot.slane %v1235, 2
      %v1238 = vshll.u32 %v1203, 16
      %v1240 = vrot.slane %v1238, 7
      %v1241 = vsel %vm423, %v1236, %v1240
      %v1243 = vshrl.u32 %v1210, 16
      %v1245 = vrot.slane %v1243, 6
      %v1246 = vshll.u32 %v1210, 16
      %v1248 = vrot.slane %v1246, 7
      %v1249 = vor.u32 %v1245, %v1248
      %v1250 = vrot.slane %v1249, 2
      %v1252 = vshll.u32 %v1211, 16
      %v1254 = vrot.slane %v1252, 7
      %v1255 = vsel %vm423, %v1250, %v1254
      %v1257 = vshrl.u32 %v1218, 16
      %v1259 = vrot.slane %v1257, 6
      %v1260 = vshll.u32 %v1218, 16
      %v1262 = vrot.slane %v1260, 7
      %v1263 = vor.u32 %v1259, %v1262
      %v1264 = vrot.slane %v1263, 2
      %v1266 = vshll.u32 %v1219, 16
      %v1268 = vrot.slane %v1266, 7
      %v1269 = vsel %vm423, %v1264, %v1268
      %v1271 = vshrl.u32 %v1226, 16
      %v1273 = vrot.slane %v1271, 6
      %v1274 = vshll.u32 %v1226, 16
      %v1276 = vrot.slane %v1274, 7
      %v1277 = vor.u32 %v1273, %v1276
      %v1278 = vrot.slane %v1277, 2
      %v1280 = vshll.u32 %v1227, 16
      %v1282 = vrot.slane %v1280, 7
      %v1283 = vsel %vm423, %v1278, %v1282
      %s1284 = scalar_lea.vmem %s1, 256
      %v1285 = vld [vmem:[%s1284] sm:$0xf]
      %v1286 = vld [vmem:[%s1284 + $0x4] sm:$0xf]
      %v1287 = vld [vmem:[%s1284 + $0x8] sm:$0xf]
      %v1288 = vld [vmem:[%s1284 + $0xc] sm:$0xf]
      %v1289 = vld [vmem:[%s1284 + $0x10] sm:$0xf]
      %v1290 = vld [vmem:[%s1284 + $0x14] sm:$0xf]
      %v1291 = vld [vmem:[%s1284 + $0x18] sm:$0xf]
      %v1292 = vld [vmem:[%s1284 + $0x1c] sm:$0xf]
      %v1293 = vcombine.low %v1241, %v1255
      %v1294 = vcombine.low %v1269, %v1283
      %v1296 = vunpack.c.l.s4 1983009808
      %v1297 = vunpack.c.0.s8 %v1296
      %v1298 = vlaneseq
      %v1299 = vshrl.u32 %v1298, 7
      %v1300 = vsub.s32 %v1297, %v1299
      %v1301 = vrot.slane %v1293, %v1300
      %v1303 = vunpack.c.l.s4 1983009808
      %v1304 = vunpack.c.0.s8 %v1303
      %v1305 = vlaneseq
      %v1306 = vshrl.u32 %v1305, 7
      %v1307 = vsub.s32 %v1304, %v1306
      %v1308 = vrot.slane %v1294, %v1307
      %v1309 = vcombine.low %v1301, %v1308
      %v1318 = vunpack.c.l.b16 %v1285
      %v1319 = vunpack.c.l.b16 %v1286
      %v1320 = vunpack.c.l.b16 %v1287
      %v1321 = vunpack.c.l.b16 %v1288
      %v1322 = vunpack.c.l.b16 %v1289
      %v1323 = vunpack.c.l.b16 %v1290
      %v1324 = vunpack.c.l.b16 %v1291
      %v1325 = vunpack.c.l.b16 %v1292
      %v1326 = vpack.c.b16 %v1319, %v1318
      %v1327 = vpack.c.b16 %v1321, %v1320
      %v1328 = vpack.c.b16 %v1323, %v1322
      %v1329 = vpack.c.b16 %v1325, %v1324
      %v1335 = vsel %vm243, %v1309, 0
      %1337 = vmatprep.subr.bf16.mxu0 0
      %1338 = vmatpush1.bf16.msra.mxu0 %v1326
      %1339 = vmatprep.subr.bf16.mxu0 0
      %1340 = vmatpush1.bf16.msra.mxu0 %v1327
      %1341 = vmatprep.subr.bf16.mxu0 0
      %1342 = vmatpush1.bf16.msra.mxu0 %v1328
      %1343 = vmatprep.subr.bf16.mxu0 0
      %1344 = vmatpush1.bf16.msra.mxu0 %v1329
      %1345 = vmatprep.subr.bf16.mxu0 0
      %1346 = vmatpush1.bf16.msra.mxu0 0
      %1347 = vmatprep.subr.bf16.mxu0 0
      %1348 = vmatpush1.bf16.msra.mxu0 0
      %1349 = vmatprep.subr.bf16.mxu0 0
      %1350 = vmatpush1.bf16.msra.mxu0 0
      %1351 = vmatprep.subr.bf16.mxu0 0
      %1352 = vmatpush1.bf16.msra.mxu0 0
      %1353 = vmatprep.subr.bf16.mxu0 0
      %1354 = vmatpush1.bf16.msra.mxu0 0
      %1355 = vmatprep.subr.bf16.mxu0 0
      %1356 = vmatpush1.bf16.msra.mxu0 0
      %1357 = vmatprep.subr.bf16.mxu0 0
      %1358 = vmatpush1.bf16.msra.mxu0 0
      %1359 = vmatprep.subr.bf16.mxu0 0
      %1360 = vmatpush1.bf16.msra.mxu0 0
      %1361 = vmatprep.subr.bf16.mxu0 0
      %1362 = vmatpush1.bf16.msra.mxu0 0
      %1363 = vmatprep.subr.bf16.mxu0 0
      %1364 = vmatpush1.bf16.msra.mxu0 0
      %1365 = vmatprep.subr.bf16.mxu0 0
      %1366 = vmatpush1.bf16.msra.mxu0 0
      %1367 = vmatprep.subr.bf16.mxu0 0
      %1368 = vmatpush1.bf16.msra.mxu0 0
      %1369 = vmatprep.mubr.bf16.mxu0 0
      %1370 = vmatmul.mubr.bf16.gmra.mrb[0].mxu0 %v1335
      %v1371 = vpop.f32.mrb[0].mxu0
      %v1372 = vadd.f32 0.0, %v1371
      %v1373 = vpop.f32.mrb[0].mxu0
      %v1374 = vpop.f32.mrb[0].mxu0
      %v1375 = vadd.f32 0.0, %v1374
      %v1376 = vpop.f32.mrb[0].mxu0
      %1377 = vdwg.mxu0
      %v1378 = vadd.f32 %v1186, %v1372
      %v1379 = vadd.f32 %v1187, %v1375
      %v1380 = vld [vmem:[%s2] sm:$0x1]
      %v1382 = vlaneseq
      %v1383 = vshrl.u32 %v1382, 7
      %v1384 = vsub.s32 0, %v1383
      %v1385 = vrot.slane %v1380, %v1384
      %v1387 = vadd.f32 %v1378, %v1385
      %v1388 = vadd.f32 %v1379, %v1385
      %v1389 = vmax.f32 %v1387, 0.0
      %v1390 = vmax.f32 %v1388, 0.0
      %v1391 = vpack.c.bf16 %v1390, %v1389
      %v1393 = vunpack.c.l.b16 %v1391
      %v1394 = vunpack.c.h.b16 %v1391
      %v1395 = vpack.c.b16 %v1393, %v1393
      %v1396 = vpack.c.b16 %v1394, %v1394
      %1399 = vst [vmem:[%s170] sm:$0xf] %v1395
      %1400 = vst [vmem:[%s170 + $0x4] sm:$0xf] %v1396
      %p1401 = scmp.lt.s32.totalorder %s14, 1
      %s1402 = scalar_select %p1401, %s14, 1
      %s1403 = smul.addr %s1402, 2
      %s1404 = smul.addr %s1403, 4
      %s1405 = scalar_lea.vmem %s3, %s1404
      // Predicated region
      $region33: #{critic_forward.7} parent=31 // pred_check
        %p1406 = pneg %p100
      $region34: #{critic_forward.7} parent=31 // pred_check_branch
        %1408 = sbr.rel (%p1406) target = $region36
      $region35: #{critic_forward.7} parent=31 // pred_region
        _
      $region36: #{critic_forward.7} parent=31 // pred_fallthru
        _
    $region32: #{critic_forward.7} parent=5 // pred_fallthru
      _
    %p1409 = scmp.le.s32.totalorder 2, %s9
    // Predicated region
    $region37: #{critic_forward.7} parent=5 // pred_check
      %p1410 = pneg %p1409
    $region38: #{critic_forward.7} parent=5 // pred_check_branch
      %1412 = sbr.rel (%p1410) target = $region40
    $region39: #{critic_forward.7} parent=5 // pred_region
      %s1413 = ssub.s32 %s9, 2
      // Predicated region
      $region41: #{critic_forward.7} parent=39 // pred_check
        %p1414 = pneg %p106
      $region42: #{critic_forward.7} parent=39 // pred_check_branch
        %1416 = sbr.rel (%p1414) target = $region44
      $region43: #{critic_forward.7} parent=39 // pred_region
        %p1417 = scmp.lt.s32.totalorder %s15, 1
        %s1418 = scalar_select %p1417, %s15, 1
        %s1419 = smul.addr %s1418, 2
        %s1420 = smul.addr %s1419, 4
        %s1421 = scalar_lea.vmem %s3, %s1420
      $region44: #{critic_forward.7} parent=39 // pred_fallthru
        _
    $region40: #{critic_forward.7} parent=5 // pred_fallthru
      _
  $region6: #{critic_forward.7} parent=0 // loop_footer
    %s13 = sadd.s32 1, %s9
  $region7: #{critic_forward.7} parent=0 // loop_footer_branch
    %8 = sbr.rel target = $region3
  $region8: #{critic_forward.7} parent=0 // loop_exit
    _

// kernel: critic_forward.8
$region0: #{critic_forward.8}
  #allocation0 [shape = 'u32[]', space=smem, size = 0x4, offset = 0x4, fixed_abs, tag = 'smem constant byte address 0x4 - core index']
  #allocation1 [shape = 'u32[144,128]{1,0:T(1,128)}', space=vmem, size = 0x12000, scoped, tag = 'internal scratch']
  %s0 = inlined_call_operand.vmem [shape: bf16[2,12,3,128], index: 0, kind: input, shape index: {}]
  %s1 = inlined_call_operand.vmem [shape: bf16[9,128,256], index: 1, kind: input, shape index: {}]
  %s2 = inlined_call_operand.vmem [shape: f32[1,256], index: 2, kind: input, shape index: {}]
  %s3 = inlined_call_operand.vmem [shape: bf16[2,4,256], index: 3, kind: output, shape index: {}]
  %s4 = sld [smem:[#allocation0]]
  $region45: #{critic_forward.8} parent=0
    _
  %s6 = ssub.s32 1, %s4
  %s7 = scalar_select 0, %s6, %s4
  loop: start=0, step=1, limit=4
  $region2: #{critic_forward.8} parent=0 // loop_pre_header
    _
  $region3: #{critic_forward.8} parent=0 // loop_header
    %s9 = sphi 0, %s13
    %p10 = scmp.ge.s32.totalorder %s9, 4
    %s19 = sphi 0, %s21
    %s22 = sphi 0, %s19
    %s23 = sphi 0, %s22
    %s39 = sphi 0, %s23
    %s43 = sphi 0, %s43
    %s45 = sphi 0, %s43
    %s46 = sphi 0, %s45
    %s60 = sphi 0, %s46
    %s64 = sphi 0, %s64
    %s66 = sphi 0, %s64
    %s67 = sphi 0, %s66
    %s81 = sphi 0, %s67
    %s87 = sphi 0, %s89
    %s90 = sphi 0, %s87
    %s91 = sphi 0, %s90
    %s107 = sphi 0, %s91
  $region4: #{critic_forward.8} parent=0 // loop_header_branch
    %12 = sbr.rel (%p10) target = $region8
  $region5: #{critic_forward.8} parent=0 // loop_body
    %s14 = ssub.s32 %s9, 1
    %s15 = ssub.s32 %s9, 2
    %s16 = sadd.s32 %s9, 1
    %s17 = ssub.s32 %s9, %s16
    %p18 = scmp.eq.s32.totalorder %s17, 0
    %s20 = sadd.s32 %s19, 1
    %s21 = scalar_select %p18, %s19, %s20
    %p24 = pneg %p18
    %p25 = scmp.eq.s32.totalorder %s9, 1
    %p26 = por %p24, %p25
    %p27 = scmp.ne.s32.totalorder %s19, %s22
    %p28 = scmp.eq.s32.totalorder %s9, 0
    %p29 = por %p27, %p28
    %p30 = scmp.ne.s32.totalorder %s19, %s22
    %p31 = scmp.eq.s32.totalorder %s14, 1
    %p32 = por %p30, %p31
    %p33 = scmp.ne.s32.totalorder %s22, %s23
    %p34 = scmp.eq.s32.totalorder %s14, 0
    %p35 = por %p33, %p34
    %p36 = scmp.ne.s32.totalorder %s22, %s23
    %p37 = scmp.eq.s32.totalorder %s15, 1
    %p38 = por %p36, %p37
    %p40 = scmp.ne.s32.totalorder %s23, %s39
    %p41 = scmp.eq.s32.totalorder %s15, 0
    %p42 = por %p40, %p41
    %s44 = sadd.s32 %s43, 1
    %p47 = scmp.eq.s32.totalorder %s9, 1
    %p48 = scmp.ne.s32.totalorder %s43, %s45
    %p49 = scmp.eq.s32.totalorder %s9, 0
    %p50 = por %p48, %p49
    %p51 = scmp.ne.s32.totalorder %s43, %s45
    %p52 = scmp.eq.s32.totalorder %s14, 1
    %p53 = por %p51, %p52
    %p54 = scmp.ne.s32.totalorder %s45, %s46
    %p55 = scmp.eq.s32.totalorder %s14, 0
    %p56 = por %p54, %p55
    %p57 = scmp.ne.s32.totalorder %s45, %s46
    %p58 = scmp.eq.s32.totalorder %s15, 1
    %p59 = por %p57, %p58
    %p61 = scmp.ne.s32.totalorder %s46, %s60
    %p62 = scmp.eq.s32.totalorder %s15, 0
    %p63 = por %p61, %p62
    %s65 = sadd.s32 %s64, 1
    %p68 = scmp.eq.s32.totalorder %s9, 1
    %p69 = scmp.ne.s32.totalorder %s64, %s66
    %p70 = scmp.eq.s32.totalorder %s9, 0
    %p71 = por %p69, %p70
    %p72 = scmp.ne.s32.totalorder %s64, %s66
    %p73 = scmp.eq.s32.totalorder %s14, 1
    %p74 = por %p72, %p73
    %p75 = scmp.ne.s32.totalorder %s66, %s67
    %p76 = scmp.eq.s32.totalorder %s14, 0
    %p77 = por %p75, %p76
    %p78 = scmp.ne.s32.totalorder %s66, %s67
    %p79 = scmp.eq.s32.totalorder %s15, 1
    %p80 = por %p78, %p79
    %p82 = scmp.ne.s32.totalorder %s67, %s81
    %p83 = scmp.eq.s32.totalorder %s15, 0
    %p84 = por %p82, %p83
    %s85 = ssub.s32 %s9, %s16
    %p86 = scmp.eq.s32.totalorder %s85, 0
    %s88 = sadd.s32 %s87, 1
    %s89 = scalar_select %p86, %s87, %s88
    %p92 = pneg %p86
    %p93 = scmp.eq.s32.totalorder %s9, 1
    %p94 = por %p92, %p93
    %p95 = scmp.ne.s32.totalorder %s87, %s90
    %p96 = scmp.eq.s32.totalorder %s9, 0
    %p97 = por %p95, %p96
    %p98 = scmp.ne.s32.totalorder %s87, %s90
    %p99 = scmp.eq.s32.totalorder %s14, 1
    %p100 = por %p98, %p99
    %p101 = scmp.ne.s32.totalorder %s90, %s91
    %p102 = scmp.eq.s32.totalorder %s14, 0
    %p103 = por %p101, %p102
    %p104 = scmp.ne.s32.totalorder %s90, %s91
    %p105 = scmp.eq.s32.totalorder %s15, 1
    %p106 = por %p104, %p105
    %p108 = scmp.ne.s32.totalorder %s91, %s107
    %p109 = scmp.eq.s32.totalorder %s15, 0
    %p110 = por %p108, %p109
    %p111 = scmp.le.s32.totalorder 1, %s9
    %p112 = scmp.lt.s32.totalorder %s9, 3
    %p113 = pnand %p111, %p112
    %p114 = pneg %p113
    // Predicated region
    $region9: #{critic_forward.8} parent=5 // pred_check
      _
    $region10: #{critic_forward.8} parent=5 // pred_check_branch
      %116 = sbr.rel (%p113) target = $region12
    $region11: #{critic_forward.8} parent=5 // pred_region
      %s117 = ssub.s32 %s9, 1
      // Predicated region
      $region13: #{critic_forward.8} parent=11 // pred_check
        %p118 = pneg %p56
      $region14: #{critic_forward.8} parent=11 // pred_check_branch
        %120 = sbr.rel (%p118) target = $region16
      $region15: #{critic_forward.8} parent=11 // pred_region
        _
      $region16: #{critic_forward.8} parent=11 // pred_fallthru
        _
      // Predicated region
      $region17: #{critic_forward.8} parent=11 // pred_check
        %p121 = pneg %p77
      $region18: #{critic_forward.8} parent=11 // pred_check_branch
        %123 = sbr.rel (%p121) target = $region20
      $region19: #{critic_forward.8} parent=11 // pred_region
        _
      $region20: #{critic_forward.8} parent=11 // pred_fallthru
        _
    $region12: #{critic_forward.8} parent=5 // pred_fallthru
      _
    %p124 = scmp.lt.s32.totalorder %s9, 2
    // Predicated region
    $region21: #{critic_forward.8} parent=5 // pred_check
      %p125 = pneg %p124
    $region22: #{critic_forward.8} parent=5 // pred_check_branch
      %127 = sbr.rel (%p125) target = $region24
    $region23: #{critic_forward.8} parent=5 // pred_region
      // Predicated region
      $region25: #{critic_forward.8} parent=23 // pred_check
        %p128 = pneg %p29
      $region26: #{critic_forward.8} parent=23 // pred_check_branch
        %130 = sbr.rel (%p128) target = $region28
      $region27: #{critic_forward.8} parent=23 // pred_region
        %p131 = scmp.lt.s32.totalorder %s9, 1
        %s132 = scalar_select %p131, %s9, 1
        %s133 = smul.addr %s132, 12
        %s134 = smul.addr %s133, 2
        %s135 = scalar_lea.vmem %s0, %s134
      $region28: #{critic_forward.8} parent=23 // pred_fallthru
        _
    $region24: #{critic_forward.8} parent=5 // pred_fallthru
      _
    %p136 = scmp.le.s32.totalorder 1, %s9
    %p137 = scmp.lt.s32.totalorder %s9, 3
    %p138 = pnand %p136, %p137
    %p139 = pneg %p138
    // Predicated region
    $region29: #{critic_forward.8} parent=5 // pred_check
      _
    $region30: #{critic_forward.8} parent=5 // pred_check_branch
      %141 = sbr.rel (%p138) target = $region32
    $region31: #{critic_forward.8} parent=5 // pred_region
      %s142 = ssub.s32 %s9, 1
      %p143 = scmp.lt.s32.totalorder %s14, 1
      %s144 = scalar_select %p143, %s14, 1
      %s145 = smul.addr %s144, 12
      %s146 = smul.addr %s145, 2
      %s147 = scalar_lea.vmem %s0, %s146
      %p148 = pneg %p35
      %p149 = pneg %p32
      %p150 = pneg %p56
      %p151 = pneg %p53
      %p152 = pneg %p77
      %p153 = pneg %p74
      %p154 = pneg %p103
      %p155 = pneg %p100
      %p156 = scmp.lt.s32.totalorder %s14, 1
      %s157 = scalar_select %p156, %s14, 1
      %s158 = smul.addr %s157, 2
      %s159 = smul.addr %s158, 2
      %s160 = scalar_lea.vmem %s3, %s159
      %p161 = scmp.lt.s32.totalorder %s14, 1
      %s162 = scalar_select %p161, %s14, 1
      %s163 = smul.addr %s162, 12
      %s164 = smul.addr %s163, 2
      %s165 = scalar_lea.vmem %s0, %s164
      %p166 = scmp.lt.s32.totalorder %s14, 1
      %s167 = scalar_select %p166, %s14, 1
      %s168 = smul.addr %s167, 2
      %s169 = smul.addr %s168, 2
      %s170 = scalar_lea.vmem %s3, %s169
      %v172 = vld [vmem:[%s165] sm:$0x1]
      %v173 = vld [vmem:[%s165 + $0x2] sm:$0x1]
      %v174 = vld [vmem:[%s1] sm:$0xff]
      %v175 = vld [vmem:[%s1 + $0x8] sm:$0xff]
      %v176 = vld [vmem:[%s1 + $0x10] sm:$0xff]
      %v177 = vld [vmem:[%s1 + $0x18] sm:$0xff]
      %v178 = vld [vmem:[%s1 + $0x20] sm:$0xff]
      %v179 = vld [vmem:[%s1 + $0x28] sm:$0xff]
      %v180 = vld [vmem:[%s1 + $0x30] sm:$0xff]
      %v181 = vld [vmem:[%s1 + $0x38] sm:$0xff]
      %v182 = vld [vmem:[%s1 + $0x40] sm:$0xff]
      %v183 = vld [vmem:[%s1 + $0x48] sm:$0xff]
      %v184 = vld [vmem:[%s1 + $0x50] sm:$0xff]
      %v185 = vld [vmem:[%s1 + $0x58] sm:$0xff]
      %v186 = vld [vmem:[%s1 + $0x60] sm:$0xff]
      %v187 = vld [vmem:[%s1 + $0x68] sm:$0xff]
      %v188 = vld [vmem:[%s1 + $0x70] sm:$0xff]
      %v189 = vld [vmem:[%s1 + $0x78] sm:$0xff]
      %s190 = scalar_lea.vmem %s165, 6
      %v191 = vld [vmem:[%s190] sm:$0x1]
      %v192 = vld [vmem:[%s190 + $0x2] sm:$0x1]
      %s193 = scalar_lea.vmem %s1, 128
      %v194 = vld [vmem:[%s193] sm:$0xff]
      %v195 = vld [vmem:[%s193 + $0x8] sm:$0xff]
      %v196 = vld [vmem:[%s193 + $0x10] sm:$0xff]
      %v197 = vld [vmem:[%s193 + $0x18] sm:$0xff]
      %v198 = vld [vmem:[%s193 + $0x20] sm:$0xff]
      %v199 = vld [vmem:[%s193 + $0x28] sm:$0xff]
      %v200 = vld [vmem:[%s193 + $0x30] sm:$0xff]
      %v201 = vld [vmem:[%s193 + $0x38] sm:$0xff]
      %v202 = vld [vmem:[%s193 + $0x40] sm:$0xff]
      %v203 = vld [vmem:[%s193 + $0x48] sm:$0xff]
      %v204 = vld [vmem:[%s193 + $0x50] sm:$0xff]
      %v205 = vld [vmem:[%s193 + $0x58] sm:$0xff]
      %v206 = vld [vmem:[%s193 + $0x60] sm:$0xff]
      %v207 = vld [vmem:[%s193 + $0x68] sm:$0xff]
      %v208 = vld [vmem:[%s193 + $0x70] sm:$0xff]
      %v209 = vld [vmem:[%s193 + $0x78] sm:$0xff]
      %v212 = vcombine.low %v191, %v192
      %v214 = vunpack.c.l.s4 1966171168
      %v215 = vunpack.c.0.s8 %v214
      %v216 = vlaneseq
      %v217 = vshrl.u32 %v216, 7
      %v218 = vsub.s32 %v215, %v217
      %v219 = vrot.slane %v212, %v218
      %v221 = vunpack.c.l.s4 1966171168
      %v222 = vunpack.c.0.s8 %v221
      %v223 = vlaneseq
      %v224 = vshrl.u32 %v223, 7
      %v225 = vsub.s32 %v222, %v224
      %v226 = vrot.slane %v219, %v225
      %v244 = vunpack.c.l.b16 %v194
      %v245 = vunpack.c.h.b16 %v194
      %v246 = vunpack.c.l.b16 %v195
      %v247 = vunpack.c.h.b16 %v195
      %v248 = vunpack.c.l.b16 %v196
      %v249 = vunpack.c.h.b16 %v196
      %v250 = vunpack.c.l.b16 %v197
      %v251 = vunpack.c.h.b16 %v197
      %v252 = vunpack.c.l.b16 %v198
      %v253 = vunpack.c.h.b16 %v198
      %v254 = vunpack.c.l.b16 %v199
      %v255 = vunpack.c.h.b16 %v199
      %v256 = vunpack.c.l.b16 %v200
      %v257 = vunpack.c.h.b16 %v200
      %v258 = vunpack.c.l.b16 %v201
      %v259 = vunpack.c.h.b16 %v201
      %v260 = vunpack.c.l.b16 %v202
      %v261 = vunpack.c.h.b16 %v202
      %v262 = vunpack.c.l.b16 %v203
      %v263 = vunpack.c.h.b16 %v203
      %v264 = vunpack.c.l.b16 %v204
      %v265 = vunpack.c.h.b16 %v204
      %v266 = vunpack.c.l.b16 %v205
      %v267 = vunpack.c.h.b16 %v205
      %v268 = vunpack.c.l.b16 %v206
      %v269 = vunpack.c.h.b16 %v206
      %v270 = vunpack.c.l.b16 %v207
      %v271 = vunpack.c.h.b16 %v207
      %v272 = vunpack.c.l.b16 %v208
      %v273 = vunpack.c.h.b16 %v208
      %v274 = vunpack.c.l.b16 %v209
      %v275 = vunpack.c.h.b16 %v209
      %v276 = vpack.c.b16 %v246, %v244
      %v277 = vpack.c.b16 %v247, %v245
      %v278 = vpack.c.b16 %v250, %v248
      %v279 = vpack.c.b16 %v251, %v249
      %v280 = vpack.c.b16 %v254, %v252
      %v281 = vpack.c.b16 %v255, %v253
      %v282 = vpack.c.b16 %v258, %v256
      %v283 = vpack.c.b16 %v259, %v257
      %v284 = vpack.c.b16 %v262, %v260
      %v285 = vpack.c.b16 %v263, %v261
      %v286 = vpack.c.b16 %v266, %v264
      %v287 = vpack.c.b16 %v267, %v265
      %v288 = vpack.c.b16 %v270, %v268
      %v289 = vpack.c.b16 %v271, %v269
      %v290 = vpack.c.b16 %v274, %v272
      %v291 = vpack.c.b16 %v275, %v273
      %308 = vmatprep.subr.bf16.mxu0 %v277
      %309 = vmatpush1.bf16.msra.mxu0 %v276
      %310 = vmatprep.subr.bf16.mxu0 %v279
      %311 = vmatpush1.bf16.msra.mxu0 %v278
      %312 = vmatprep.subr.bf16.mxu0 %v281
      %313 = vmatpush1.bf16.msra.mxu0 %v280
      %314 = vmatprep.subr.bf16.mxu0 %v283
      %315 = vmatpush1.bf16.msra.mxu0 %v282
      %316 = vmatprep.subr.bf16.mxu0 %v285
      %317 = vmatpush1.bf16.msra.mxu0 %v284
      %318 = vmatprep.subr.bf16.mxu0 %v287
      %319 = vmatpush1.bf16.msra.mxu0 %v286
      %320 = vmatprep.subr.bf16.mxu0 %v289
      %321 = vmatpush1.bf16.msra.mxu0 %v288
      %322 = vmatprep.subr.bf16.mxu0 %v291
      %323 = vmatpush1.bf16.msra.mxu0 %v290
      %324 = vmatprep.subr.bf16.mxu0 0
      %325 = vmatpush1.bf16.msra.mxu0 0
      %326 = vmatprep.subr.bf16.mxu0 0
      %327 = vmatpush1.bf16.msra.mxu0 0
      %328 = vmatprep.subr.bf16.mxu0 0
      %329 = vmatpush1.bf16.msra.mxu0 0
      %330 = vmatprep.subr.bf16.mxu0 0
      %331 = vmatpush1.bf16.msra.mxu0 0
      %332 = vmatprep.subr.bf16.mxu0 0
      %333 = vmatpush1.bf16.msra.mxu0 0
      %334 = vmatprep.subr.bf16.mxu0 0
      %335 = vmatpush1.bf16.msra.mxu0 0
      %336 = vmatprep.subr.bf16.mxu0 0
      %337 = vmatpush1.bf16.msra.mxu0 0
      %338 = vmatprep.subr.bf16.mxu0 0
      %339 = vmatpush1.bf16.msra.mxu0 0
      %340 = vmatprep.mubr.bf16.mxu0 0
      %341 = vmatmul.mubr.bf16.gmra.mrb[0].mxu0 %v226
      %v342 = vpop.f32.mrb[0].mxu0
      %v343 = vadd.f32 0.0, %v342
      %v344 = vpop.f32.mrb[0].mxu0
      %v345 = vadd.f32 0.0, %v344
      %v346 = vpop.f32.mrb[0].mxu0
      %v347 = vpop.f32.mrb[0].mxu0
      %348 = vdwg.mxu0
      %v351 = vcombine.low %v172, %v173
      %v353 = vunpack.c.l.s4 1966171168
      %v354 = vunpack.c.0.s8 %v353
      %v355 = vlaneseq
      %v356 = vshrl.u32 %v355, 7
      %v357 = vsub.s32 %v354, %v356
      %v358 = vrot.slane %v351, %v357
      %v360 = vunpack.c.l.s4 1966171168
      %v361 = vunpack.c.0.s8 %v360
      %v362 = vlaneseq
      %v363 = vshrl.u32 %v362, 7
      %v364 = vsub.s32 %v361, %v363
      %v365 = vrot.slane %v358, %v364
      %v383 = vunpack.c.l.b16 %v174
      %v384 = vunpack.c.h.b16 %v174
      %v385 = vunpack.c.l.b16 %v175
      %v386 = vunpack.c.h.b16 %v175
      %v387 = vunpack.c.l.b16 %v176
      %v388 = vunpack.c.h.b16 %v176
      %v389 = vunpack.c.l.b16 %v177
      %v390 = vunpack.c.h.b16 %v177
      %v391 = vunpack.c.l.b16 %v178
      %v392 = vunpack.c.h.b16 %v178
      %v393 = vunpack.c.l.b16 %v179
      %v394 = vunpack.c.h.b16 %v179
      %v395 = vunpack.c.l.b16 %v180
      %v396 = vunpack.c.h.b16 %v180
      %v397 = vunpack.c.l.b16 %v181
      %v398 = vunpack.c.h.b16 %v181
      %v399 = vunpack.c.l.b16 %v182
      %v400 = vunpack.c.h.b16 %v182
      %v401 = vunpack.c.l.b16 %v183
      %v402 = vunpack.c.h.b16 %v183
      %v403 = vunpack.c.l.b16 %v184
      %v404 = vunpack.c.h.b16 %v184
      %v405 = vunpack.c.l.b16 %v185
      %v406 = vunpack.c.h.b16 %v185
      %v407 = vunpack.c.l.b16 %v186
      %v408 = vunpack.c.h.b16 %v186
      %v409 = vunpack.c.l.b16 %v187
      %v410 = vunpack.c.h.b16 %v187
      %v411 = vunpack.c.l.b16 %v188
      %v412 = vunpack.c.h.b16 %v188
      %v413 = vunpack.c.l.b16 %v189
      %v414 = vunpack.c.h.b16 %v189
      %v415 = vpack.c.b16 %v385, %v383
      %v416 = vpack.c.b16 %v386, %v384
      %v417 = vpack.c.b16 %v389, %v387
      %v418 = vpack.c.b16 %v390, %v388
      %v419 = vpack.c.b16 %v393, %v391
      %v420 = vpack.c.b16 %v394, %v392
      %v421 = vpack.c.b16 %v397, %v395
      %v422 = vpack.c.b16 %v398, %v396
      %v423 = vpack.c.b16 %v401, %v399
      %v424 = vpack.c.b16 %v402, %v400
      %v425 = vpack.c.b16 %v405, %v403
      %v426 = vpack.c.b16 %v406, %v404
      %v427 = vpack.c.b16 %v409, %v407
      %v428 = vpack.c.b16 %v410, %v408
      %v429 = vpack.c.b16 %v413, %v411
      %v430 = vpack.c.b16 %v414, %v412
      %447 = vmatprep.subr.bf16.mxu0 %v416
      %448 = vmatpush1.bf16.msra.mxu0 %v415
      %449 = vmatprep.subr.bf16.mxu0 %v418
      %450 = vmatpush1.bf16.msra.mxu0 %v417
      %451 = vmatprep.subr.bf16.mxu0 %v420
      %452 = vmatpush1.bf16.msra.mxu0 %v419
      %453 = vmatprep.subr.bf16.mxu0 %v422
      %454 = vmatpush1.bf16.msra.mxu0 %v421
      %455 = vmatprep.subr.bf16.mxu0 %v424
      %456 = vmatpush1.bf16.msra.mxu0 %v423
      %457 = vmatprep.subr.bf16.mxu0 %v426
      %458 = vmatpush1.bf16.msra.mxu0 %v425
      %459 = vmatprep.subr.bf16.mxu0 %v428
      %460 = vmatpush1.bf16.msra.mxu0 %v427
      %461 = vmatprep.subr.bf16.mxu0 %v430
      %462 = vmatpush1.bf16.msra.mxu0 %v429
      %463 = vmatprep.subr.bf16.mxu0 0
      %464 = vmatpush1.bf16.msra.mxu0 0
      %465 = vmatprep.subr.bf16.mxu0 0
      %466 = vmatpush1.bf16.msra.mxu0 0
      %467 = vmatprep.subr.bf16.mxu0 0
      %468 = vmatpush1.bf16.msra.mxu0 0
      %469 = vmatprep.subr.bf16.mxu0 0
      %470 = vmatpush1.bf16.msra.mxu0 0
      %471 = vmatprep.subr.bf16.mxu0 0
      %472 = vmatpush1.bf16.msra.mxu0 0
      %473 = vmatprep.subr.bf16.mxu0 0
      %474 = vmatpush1.bf16.msra.mxu0 0
      %475 = vmatprep.subr.bf16.mxu0 0
      %476 = vmatpush1.bf16.msra.mxu0 0
      %477 = vmatprep.subr.bf16.mxu0 0
      %478 = vmatpush1.bf16.msra.mxu0 0
      %479 = vmatprep.mubr.bf16.mxu0 0
      %480 = vmatmul.mubr.bf16.gmra.mrb[0].mxu0 %v365
      %v481 = vpop.f32.mrb[0].mxu0
      %v482 = vadd.f32 %v343, %v481
      %v483 = vpop.f32.mrb[0].mxu0
      %v484 = vadd.f32 %v345, %v483
      %v485 = vpop.f32.mrb[0].mxu0
      %v486 = vpop.f32.mrb[0].mxu0
      %487 = vdwg.mxu0
      %v488 = vld [vmem:[%s165] sm:$0x3]
      %v489 = vld [vmem:[%s165 + $0x2] sm:$0x3]
      %v493 = vunpack.c.l.s4 1966171168
      %v494 = vunpack.c.0.s8 %v493
      %v495 = vlaneseq
      %v496 = vshrl.u32 %v495, 7
      %v497 = vsub.s32 %v494, %v496
      %v498 = vrot.slane %v488, %v497
      %v499 = vcombine.high %v498, %v498
      %v501 = vunpack.c.l.s4 1966171168
      %v502 = vunpack.c.0.s8 %v501
      %v503 = vlaneseq
      %v504 = vshrl.u32 %v503, 7
      %v505 = vsub.s32 %v502, %v504
      %v506 = vrot.slane %v489, %v505
      %v507 = vcombine.high %v506, %v506
      %vm508 = vsmask.f32 256
      %vm509 = vsmask.f32 1284
      %vm510 = vmor %vm508, %vm509
      %vm511 = vsmask.f32 2312
      %vm512 = vmor %vm510, %vm511
      %vm513 = vsmask.f32 3340
      %vm514 = vmor %vm512, %vm513
      %vm515 = vsmask.f32 4368
      %vm516 = vmor %vm514, %vm515
      %vm517 = vsmask.f32 5396
      %vm518 = vmor %vm516, %vm517
      %vm519 = vsmask.f32 6424
      %vm520 = vmor %vm518, %vm519
      %vm521 = vsmask.f32 7452
      %vm522 = vmor %vm520, %vm521
      %v524 = vshrl.u32 %v498, 16
      %v526 = vrot.slane %v524, 7
      %v527 = vrot.slane %v526, 1
      %v529 = vshll.u32 %v499, 16
      %v531 = vsel %vm522, %v527, %v529
      %v533 = vshrl.u32 %v506, 16
      %v535 = vrot.slane %v533, 7
      %v536 = vrot.slane %v535, 1
      %v538 = vshll.u32 %v507, 16
      %v540 = vsel %vm522, %v536, %v538
      %s541 = scalar_lea.vmem %s1, 256
      %v542 = vld [vmem:[%s541] sm:$0xff]
      %v543 = vld [vmem:[%s541 + $0x8] sm:$0xff]
      %v544 = vld [vmem:[%s541 + $0x10] sm:$0xff]
      %v545 = vld [vmem:[%s541 + $0x18] sm:$0xff]
      %v546 = vld [vmem:[%s541 + $0x20] sm:$0xff]
      %v547 = vld [vmem:[%s541 + $0x28] sm:$0xff]
      %v548 = vld [vmem:[%s541 + $0x30] sm:$0xff]
      %v549 = vld [vmem:[%s541 + $0x38] sm:$0xff]
      %v550 = vld [vmem:[%s541 + $0x40] sm:$0xff]
      %v551 = vld [vmem:[%s541 + $0x48] sm:$0xff]
      %v552 = vld [vmem:[%s541 + $0x50] sm:$0xff]
      %v553 = vld [vmem:[%s541 + $0x58] sm:$0xff]
      %v554 = vld [vmem:[%s541 + $0x60] sm:$0xff]
      %v555 = vld [vmem:[%s541 + $0x68] sm:$0xff]
      %v556 = vld [vmem:[%s541 + $0x70] sm:$0xff]
      %v557 = vld [vmem:[%s541 + $0x78] sm:$0xff]
      %v558 = vcombine.low %v531, %v540
      %v560 = vunpack.c.l.s4 1966171168
      %v561 = vunpack.c.0.s8 %v560
      %v562 = vlaneseq
      %v563 = vshrl.u32 %v562, 7
      %v564 = vsub.s32 %v561, %v563
      %v565 = vrot.slane %v558, %v564
      %v567 = vunpack.c.l.s4 1966171168
      %v568 = vunpack.c.0.s8 %v567
      %v569 = vlaneseq
      %v570 = vshrl.u32 %v569, 7
      %v571 = vsub.s32 %v568, %v570
      %v572 = vrot.slane %v565, %v571
      %v590 = vunpack.c.l.b16 %v542
      %v591 = vunpack.c.h.b16 %v542
      %v592 = vunpack.c.l.b16 %v543
      %v593 = vunpack.c.h.b16 %v543
      %v594 = vunpack.c.l.b16 %v544
      %v595 = vunpack.c.h.b16 %v544
      %v596 = vunpack.c.l.b16 %v545
      %v597 = vunpack.c.h.b16 %v545
      %v598 = vunpack.c.l.b16 %v546
      %v599 = vunpack.c.h.b16 %v546
      %v600 = vunpack.c.l.b16 %v547
      %v601 = vunpack.c.h.b16 %v547
      %v602 = vunpack.c.l.b16 %v548
      %v603 = vunpack.c.h.b16 %v548
      %v604 = vunpack.c.l.b16 %v549
      %v605 = vunpack.c.h.b16 %v549
      %v606 = vunpack.c.l.b16 %v550
      %v607 = vunpack.c.h.b16 %v550
      %v608 = vunpack.c.l.b16 %v551
      %v609 = vunpack.c.h.b16 %v551
      %v610 = vunpack.c.l.b16 %v552
      %v611 = vunpack.c.h.b16 %v552
      %v612 = vunpack.c.l.b16 %v553
      %v613 = vunpack.c.h.b16 %v553
      %v614 = vunpack.c.l.b16 %v554
      %v615 = vunpack.c.h.b16 %v554
      %v616 = vunpack.c.l.b16 %v555
      %v617 = vunpack.c.h.b16 %v555
      %v618 = vunpack.c.l.b16 %v556
      %v619 = vunpack.c.h.b16 %v556
      %v620 = vunpack.c.l.b16 %v557
      %v621 = vunpack.c.h.b16 %v557
      %v622 = vpack.c.b16 %v592, %v590
      %v623 = vpack.c.b16 %v593, %v591
      %v624 = vpack.c.b16 %v596, %v594
      %v625 = vpack.c.b16 %v597, %v595
      %v626 = vpack.c.b16 %v600, %v598
      %v627 = vpack.c.b16 %v601, %v599
      %v628 = vpack.c.b16 %v604, %v602
      %v629 = vpack.c.b16 %v605, %v603
      %v630 = vpack.c.b16 %v608, %v606
      %v631 = vpack.c.b16 %v609, %v607
      %v632 = vpack.c.b16 %v612, %v610
      %v633 = vpack.c.b16 %v613, %v611
      %v634 = vpack.c.b16 %v616, %v614
      %v635 = vpack.c.b16 %v617, %v615
      %v636 = vpack.c.b16 %v620, %v618
      %v637 = vpack.c.b16 %v621, %v619
      %654 = vmatprep.subr.bf16.mxu0 %v623
      %655 = vmatpush1.bf16.msra.mxu0 %v622
      %656 = vmatprep.subr.bf16.mxu0 %v625
      %657 = vmatpush1.bf16.msra.mxu0 %v624
      %658 = vmatprep.subr.bf16.mxu0 %v627
      %659 = vmatpush1.bf16.msra.mxu0 %v626
      %660 = vmatprep.subr.bf16.mxu0 %v629
      %661 = vmatpush1.bf16.msra.mxu0 %v628
      %662 = vmatprep.subr.bf16.mxu0 %v631
      %663 = vmatpush1.bf16.msra.mxu0 %v630
      %664 = vmatprep.subr.bf16.mxu0 %v633
      %665 = vmatpush1.bf16.msra.mxu0 %v632
      %666 = vmatprep.subr.bf16.mxu0 %v635
      %667 = vmatpush1.bf16.msra.mxu0 %v634
      %668 = vmatprep.subr.bf16.mxu0 %v637
      %669 = vmatpush1.bf16.msra.mxu0 %v636
      %670 = vmatprep.subr.bf16.mxu0 0
      %671 = vmatpush1.bf16.msra.mxu0 0
      %672 = vmatprep.subr.bf16.mxu0 0
      %673 = vmatpush1.bf16.msra.mxu0 0
      %674 = vmatprep.subr.bf16.mxu0 0
      %675 = vmatpush1.bf16.msra.mxu0 0
      %676 = vmatprep.subr.bf16.mxu0 0
      %677 = vmatpush1.bf16.msra.mxu0 0
      %678 = vmatprep.subr.bf16.mxu0 0
      %679 = vmatpush1.bf16.msra.mxu0 0
      %680 = vmatprep.subr.bf16.mxu0 0
      %681 = vmatpush1.bf16.msra.mxu0 0
      %682 = vmatprep.subr.bf16.mxu0 0
      %683 = vmatpush1.bf16.msra.mxu0 0
      %684 = vmatprep.subr.bf16.mxu0 0
      %685 = vmatpush1.bf16.msra.mxu0 0
      %686 = vmatprep.mubr.bf16.mxu0 0
      %687 = vmatmul.mubr.bf16.gmra.mrb[0].mxu0 %v572
      %v688 = vpop.f32.mrb[0].mxu0
      %v689 = vadd.f32 0.0, %v688
      %v690 = vpop.f32.mrb[0].mxu0
      %v691 = vadd.f32 0.0, %v690
      %v692 = vpop.f32.mrb[0].mxu0
      %v693 = vpop.f32.mrb[0].mxu0
      %694 = vdwg.mxu0
      %v695 = vadd.f32 %v482, %v689
      %v696 = vadd.f32 %v484, %v691
      %s697 = scalar_lea.vmem %s165, 12
      %v698 = vld [vmem:[%s697] sm:$0x1]
      %v699 = vld [vmem:[%s697 + $0x2] sm:$0x1]
      %s700 = scalar_lea.vmem %s1, 384
      %v701 = vld [vmem:[%s700] sm:$0xff]
      %v702 = vld [vmem:[%s700 + $0x8] sm:$0xff]
      %v703 = vld [vmem:[%s700 + $0x10] sm:$0xff]
      %v704 = vld [vmem:[%s700 + $0x18] sm:$0xff]
      %v705 = vld [vmem:[%s700 + $0x20] sm:$0xff]
      %v706 = vld [vmem:[%s700 + $0x28] sm:$0xff]
      %v707 = vld [vmem:[%s700 + $0x30] sm:$0xff]
      %v708 = vld [vmem:[%s700 + $0x38] sm:$0xff]
      %v709 = vld [vmem:[%s700 + $0x40] sm:$0xff]
      %v710 = vld [vmem:[%s700 + $0x48] sm:$0xff]
      %v711 = vld [vmem:[%s700 + $0x50] sm:$0xff]
      %v712 = vld [vmem:[%s700 + $0x58] sm:$0xff]
      %v713 = vld [vmem:[%s700 + $0x60] sm:$0xff]
      %v714 = vld [vmem:[%s700 + $0x68] sm:$0xff]
      %v715 = vld [vmem:[%s700 + $0x70] sm:$0xff]
      %v716 = vld [vmem:[%s700 + $0x78] sm:$0xff]
      %v719 = vcombine.low %v698, %v699
      %v721 = vunpack.c.l.s4 1966171168
      %v722 = vunpack.c.0.s8 %v721
      %v723 = vlaneseq
      %v724 = vshrl.u32 %v723, 7
      %v725 = vsub.s32 %v722, %v724
      %v726 = vrot.slane %v719, %v725
      %v728 = vunpack.c.l.s4 1966171168
      %v729 = vunpack.c.0.s8 %v728
      %v730 = vlaneseq
      %v731 = vshrl.u32 %v730, 7
      %v732 = vsub.s32 %v729, %v731
      %v733 = vrot.slane %v726, %v732
      %v751 = vunpack.c.l.b16 %v701
      %v752 = vunpack.c.h.b16 %v701
      %v753 = vunpack.c.l.b16 %v702
      %v754 = vunpack.c.h.b16 %v702
      %v755 = vunpack.c.l.b16 %v703
      %v756 = vunpack.c.h.b16 %v703
      %v757 = vunpack.c.l.b16 %v704
      %v758 = vunpack.c.h.b16 %v704
      %v759 = vunpack.c.l.b16 %v705
      %v760 = vunpack.c.h.b16 %v705
      %v761 = vunpack.c.l.b16 %v706
      %v762 = vunpack.c.h.b16 %v706
      %v763 = vunpack.c.l.b16 %v707
      %v764 = vunpack.c.h.b16 %v707
      %v765 = vunpack.c.l.b16 %v708
      %v766 = vunpack.c.h.b16 %v708
      %v767 = vunpack.c.l.b16 %v709
      %v768 = vunpack.c.h.b16 %v709
      %v769 = vunpack.c.l.b16 %v710
      %v770 = vunpack.c.h.b16 %v710
      %v771 = vunpack.c.l.b16 %v711
      %v772 = vunpack.c.h.b16 %v711
      %v773 = vunpack.c.l.b16 %v712
      %v774 = vunpack.c.h.b16 %v712
      %v775 = vunpack.c.l.b16 %v713
      %v776 = vunpack.c.h.b16 %v713
      %v777 = vunpack.c.l.b16 %v714
      %v778 = vunpack.c.h.b16 %v714
      %v779 = vunpack.c.l.b16 %v715
      %v780 = vunpack.c.h.b16 %v715
      %v781 = vunpack.c.l.b16 %v716
      %v782 = vunpack.c.h.b16 %v716
      %v783 = vpack.c.b16 %v753, %v751
      %v784 = vpack.c.b16 %v754, %v752
      %v785 = vpack.c.b16 %v757, %v755
      %v786 = vpack.c.b16 %v758, %v756
      %v787 = vpack.c.b16 %v761, %v759
      %v788 = vpack.c.b16 %v762, %v760
      %v789 = vpack.c.b16 %v765, %v763
      %v790 = vpack.c.b16 %v766, %v764
      %v791 = vpack.c.b16 %v769, %v767
      %v792 = vpack.c.b16 %v770, %v768
      %v793 = vpack.c.b16 %v773, %v771
      %v794 = vpack.c.b16 %v774, %v772
      %v795 = vpack.c.b16 %v777, %v775
      %v796 = vpack.c.b16 %v778, %v776
      %v797 = vpack.c.b16 %v781, %v779
      %v798 = vpack.c.b16 %v782, %v780
      %815 = vmatprep.subr.bf16.mxu0 %v784
      %816 = vmatpush1.bf16.msra.mxu0 %v783
      %817 = vmatprep.subr.bf16.mxu0 %v786
      %818 = vmatpush1.bf16.msra.mxu0 %v785
      %819 = vmatprep.subr.bf16.mxu0 %v788
      %820 = vmatpush1.bf16.msra.mxu0 %v787
      %821 = vmatprep.subr.bf16.mxu0 %v790
      %822 = vmatpush1.bf16.msra.mxu0 %v789
      %823 = vmatprep.subr.bf16.mxu0 %v792
      %824 = vmatpush1.bf16.msra.mxu0 %v791
      %825 = vmatprep.subr.bf16.mxu0 %v794
      %826 = vmatpush1.bf16.msra.mxu0 %v793
      %827 = vmatprep.subr.bf16.mxu0 %v796
      %828 = vmatpush1.bf16.msra.mxu0 %v795
      %829 = vmatprep.subr.bf16.mxu0 %v798
      %830 = vmatpush1.bf16.msra.mxu0 %v797
      %831 = vmatprep.subr.bf16.mxu0 0
      %832 = vmatpush1.bf16.msra.mxu0 0
      %833 = vmatprep.subr.bf16.mxu0 0
      %834 = vmatpush1.bf16.msra.mxu0 0
      %835 = vmatprep.subr.bf16.mxu0 0
      %836 = vmatpush1.bf16.msra.mxu0 0
      %837 = vmatprep.subr.bf16.mxu0 0
      %838 = vmatpush1.bf16.msra.mxu0 0
      %839 = vmatprep.subr.bf16.mxu0 0
      %840 = vmatpush1.bf16.msra.mxu0 0
      %841 = vmatprep.subr.bf16.mxu0 0
      %842 = vmatpush1.bf16.msra.mxu0 0
      %843 = vmatprep.subr.bf16.mxu0 0
      %844 = vmatpush1.bf16.msra.mxu0 0
      %845 = vmatprep.subr.bf16.mxu0 0
      %846 = vmatpush1.bf16.msra.mxu0 0
      %847 = vmatprep.mubr.bf16.mxu0 0
      %848 = vmatmul.mubr.bf16.gmra.mrb[0].mxu0 %v733
      %v849 = vpop.f32.mrb[0].mxu0
      %v850 = vadd.f32 0.0, %v849
      %v851 = vpop.f32.mrb[0].mxu0
      %v852 = vadd.f32 0.0, %v851
      %v853 = vpop.f32.mrb[0].mxu0
      %v854 = vpop.f32.mrb[0].mxu0
      %855 = vdwg.mxu0
      %v856 = vadd.f32 %v695, %v850
      %v857 = vadd.f32 %v696, %v852
      %s858 = scalar_lea.vmem %s165, 18
      %v859 = vld [vmem:[%s858] sm:$0x1]
      %v860 = vld [vmem:[%s858 + $0x2] sm:$0x1]
      %s861 = scalar_lea.vmem %s1, 512
      %v862 = vld [vmem:[%s861] sm:$0xff]
      %v863 = vld [vmem:[%s861 + $0x8] sm:$0xff]
      %v864 = vld [vmem:[%s861 + $0x10] sm:$0xff]
      %v865 = vld [vmem:[%s861 + $0x18] sm:$0xff]
      %v866 = vld [vmem:[%s861 + $0x20] sm:$0xff]
      %v867 = vld [vmem:[%s861 + $0x28] sm:$0xff]
      %v868 = vld [vmem:[%s861 + $0x30] sm:$0xff]
      %v869 = vld [vmem:[%s861 + $0x38] sm:$0xff]
      %v870 = vld [vmem:[%s861 + $0x40] sm:$0xff]
      %v871 = vld [vmem:[%s861 + $0x48] sm:$0xff]
      %v872 = vld [vmem:[%s861 + $0x50] sm:$0xff]
      %v873 = vld [vmem:[%s861 + $0x58] sm:$0xff]
      %v874 = vld [vmem:[%s861 + $0x60] sm:$0xff]
      %v875 = vld [vmem:[%s861 + $0x68] sm:$0xff]
      %v876 = vld [vmem:[%s861 + $0x70] sm:$0xff]
      %v877 = vld [vmem:[%s861 + $0x78] sm:$0xff]
      %v880 = vcombine.low %v859, %v860
      %v882 = vunpack.c.l.s4 1966171168
      %v883 = vunpack.c.0.s8 %v882
      %v884 = vlaneseq
      %v885 = vshrl.u32 %v884, 7
      %v886 = vsub.s32 %v883, %v885
      %v887 = vrot.slane %v880, %v886
      %v889 = vunpack.c.l.s4 1966171168
      %v890 = vunpack.c.0.s8 %v889
      %v891 = vlaneseq
      %v892 = vshrl.u32 %v891, 7
      %v893 = vsub.s32 %v890, %v892
      %v894 = vrot.slane %v887, %v893
      %v912 = vunpack.c.l.b16 %v862
      %v913 = vunpack.c.h.b16 %v862
      %v914 = vunpack.c.l.b16 %v863
      %v915 = vunpack.c.h.b16 %v863
      %v916 = vunpack.c.l.b16 %v864
      %v917 = vunpack.c.h.b16 %v864
      %v918 = vunpack.c.l.b16 %v865
      %v919 = vunpack.c.h.b16 %v865
      %v920 = vunpack.c.l.b16 %v866
      %v921 = vunpack.c.h.b16 %v866
      %v922 = vunpack.c.l.b16 %v867
      %v923 = vunpack.c.h.b16 %v867
      %v924 = vunpack.c.l.b16 %v868
      %v925 = vunpack.c.h.b16 %v868
      %v926 = vunpack.c.l.b16 %v869
      %v927 = vunpack.c.h.b16 %v869
      %v928 = vunpack.c.l.b16 %v870
      %v929 = vunpack.c.h.b16 %v870
      %v930 = vunpack.c.l.b16 %v871
      %v931 = vunpack.c.h.b16 %v871
      %v932 = vunpack.c.l.b16 %v872
      %v933 = vunpack.c.h.b16 %v872
      %v934 = vunpack.c.l.b16 %v873
      %v935 = vunpack.c.h.b16 %v873
      %v936 = vunpack.c.l.b16 %v874
      %v937 = vunpack.c.h.b16 %v874
      %v938 = vunpack.c.l.b16 %v875
      %v939 = vunpack.c.h.b16 %v875
      %v940 = vunpack.c.l.b16 %v876
      %v941 = vunpack.c.h.b16 %v876
      %v942 = vunpack.c.l.b16 %v877
      %v943 = vunpack.c.h.b16 %v877
      %v944 = vpack.c.b16 %v914, %v912
      %v945 = vpack.c.b16 %v915, %v913
      %v946 = vpack.c.b16 %v918, %v916
      %v947 = vpack.c.b16 %v919, %v917
      %v948 = vpack.c.b16 %v922, %v920
      %v949 = vpack.c.b16 %v923, %v921
      %v950 = vpack.c.b16 %v926, %v924
      %v951 = vpack.c.b16 %v927, %v925
      %v952 = vpack.c.b16 %v930, %v928
      %v953 = vpack.c.b16 %v931, %v929
      %v954 = vpack.c.b16 %v934, %v932
      %v955 = vpack.c.b16 %v935, %v933
      %v956 = vpack.c.b16 %v938, %v936
      %v957 = vpack.c.b16 %v939, %v937
      %v958 = vpack.c.b16 %v942, %v940
      %v959 = vpack.c.b16 %v943, %v941
      %976 = vmatprep.subr.bf16.mxu0 %v945
      %977 = vmatpush1.bf16.msra.mxu0 %v944
      %978 = vmatprep.subr.bf16.mxu0 %v947
      %979 = vmatpush1.bf16.msra.mxu0 %v946
      %980 = vmatprep.subr.bf16.mxu0 %v949
      %981 = vmatpush1.bf16.msra.mxu0 %v948
      %982 = vmatprep.subr.bf16.mxu0 %v951
      %983 = vmatpush1.bf16.msra.mxu0 %v950
      %984 = vmatprep.subr.bf16.mxu0 %v953
      %985 = vmatpush1.bf16.msra.mxu0 %v952
      %986 = vmatprep.subr.bf16.mxu0 %v955
      %987 = vmatpush1.bf16.msra.mxu0 %v954
      %988 = vmatprep.subr.bf16.mxu0 %v957
      %989 = vmatpush1.bf16.msra.mxu0 %v956
      %990 = vmatprep.subr.bf16.mxu0 %v959
      %991 = vmatpush1.bf16.msra.mxu0 %v958
      %992 = vmatprep.subr.bf16.mxu0 0
      %993 = vmatpush1.bf16.msra.mxu0 0
      %994 = vmatprep.subr.bf16.mxu0 0
      %995 = vmatpush1.bf16.msra.mxu0 0
      %996 = vmatprep.subr.bf16.mxu0 0
      %997 = vmatpush1.bf16.msra.mxu0 0
      %998 = vmatprep.subr.bf16.mxu0 0
      %999 = vmatpush1.bf16.msra.mxu0 0
      %1000 = vmatprep.subr.bf16.mxu0 0
      %1001 = vmatpush1.bf16.msra.mxu0 0
      %1002 = vmatprep.subr.bf16.mxu0 0
      %1003 = vmatpush1.bf16.msra.mxu0 0
      %1004 = vmatprep.subr.bf16.mxu0 0
      %1005 = vmatpush1.bf16.msra.mxu0 0
      %1006 = vmatprep.subr.bf16.mxu0 0
      %1007 = vmatpush1.bf16.msra.mxu0 0
      %1008 = vmatprep.mubr.bf16.mxu0 0
      %1009 = vmatmul.mubr.bf16.gmra.mrb[0].mxu0 %v894
      %v1010 = vpop.f32.mrb[0].mxu0
      %v1011 = vadd.f32 0.0, %v1010
      %v1012 = vpop.f32.mrb[0].mxu0
      %v1013 = vadd.f32 0.0, %v1012
      %v1014 = vpop.f32.mrb[0].mxu0
      %v1015 = vpop.f32.mrb[0].mxu0
      %1016 = vdwg.mxu0
      %v1017 = vadd.f32 %v856, %v1011
      %v1018 = vadd.f32 %v857, %v1013
      %v1019 = vld [vmem:[%s697] sm:$0x3]
      %v1020 = vld [vmem:[%s697 + $0x2] sm:$0x3]
      %v1024 = vunpack.c.l.s4 1966171168
      %v1025 = vunpack.c.0.s8 %v1024
      %v1026 = vlaneseq
      %v1027 = vshrl.u32 %v1026, 7
      %v1028 = vsub.s32 %v1025, %v1027
      %v1029 = vrot.slane %v1019, %v1028
      %v1030 = vcombine.high %v1029, %v1029
      %v1032 = vunpack.c.l.s4 1966171168
      %v1033 = vunpack.c.0.s8 %v1032
      %v1034 = vlaneseq
      %v1035 = vshrl.u32 %v1034, 7
      %v1036 = vsub.s32 %v1033, %v1035
      %v1037 = vrot.slane %v1020, %v1036
      %v1038 = vcombine.high %v1037, %v1037
      %v1040 = vshrl.u32 %v1029, 16
      %v1042 = vrot.slane %v1040, 7
      %v1043 = vrot.slane %v1042, 1
      %v1045 = vshll.u32 %v1030, 16
      %v1047 = vsel %vm522, %v1043, %v1045
      %v1049 = vshrl.u32 %v1037, 16
      %v1051 = vrot.slane %v1049, 7
      %v1052 = vrot.slane %v1051, 1
      %v1054 = vshll.u32 %v1038, 16
      %v1056 = vsel %vm522, %v1052, %v1054
      %s1057 = scalar_lea.vmem %s1, 640
      %v1058 = vld [vmem:[%s1057] sm:$0xff]
      %v1059 = vld [vmem:[%s1057 + $0x8] sm:$0xff]
      %v1060 = vld [vmem:[%s1057 + $0x10] sm:$0xff]
      %v1061 = vld [vmem:[%s1057 + $0x18] sm:$0xff]
      %v1062 = vld [vmem:[%s1057 + $0x20] sm:$0xff]
      %v1063 = vld [vmem:[%s1057 + $0x28] sm:$0xff]
      %v1064 = vld [vmem:[%s1057 + $0x30] sm:$0xff]
      %v1065 = vld [vmem:[%s1057 + $0x38] sm:$0xff]
      %v1066 = vld [vmem:[%s1057 + $0x40] sm:$0xff]
      %v1067 = vld [vmem:[%s1057 + $0x48] sm:$0xff]
      %v1068 = vld [vmem:[%s1057 + $0x50] sm:$0xff]
      %v1069 = vld [vmem:[%s1057 + $0x58] sm:$0xff]
      %v1070 = vld [vmem:[%s1057 + $0x60] sm:$0xff]
      %v1071 = vld [vmem:[%s1057 + $0x68] sm:$0xff]
      %v1072 = vld [vmem:[%s1057 + $0x70] sm:$0xff]
      %v1073 = vld [vmem:[%s1057 + $0x78] sm:$0xff]
      %v1074 = vcombine.low %v1047, %v1056
      %v1076 = vunpack.c.l.s4 1966171168
      %v1077 = vunpack.c.0.s8 %v1076
      %v1078 = vlaneseq
      %v1079 = vshrl.u32 %v1078, 7
      %v1080 = vsub.s32 %v1077, %v1079
      %v1081 = vrot.slane %v1074, %v1080
      %v1083 = vunpack.c.l.s4 1966171168
      %v1084 = vunpack.c.0.s8 %v1083
      %v1085 = vlaneseq
      %v1086 = vshrl.u32 %v1085, 7
      %v1087 = vsub.s32 %v1084, %v1086
      %v1088 = vrot.slane %v1081, %v1087
      %v1106 = vunpack.c.l.b16 %v1058
      %v1107 = vunpack.c.h.b16 %v1058
      %v1108 = vunpack.c.l.b16 %v1059
      %v1109 = vunpack.c.h.b16 %v1059
      %v1110 = vunpack.c.l.b16 %v1060
      %v1111 = vunpack.c.h.b16 %v1060
      %v1112 = vunpack.c.l.b16 %v1061
      %v1113 = vunpack.c.h.b16 %v1061
      %v1114 = vunpack.c.l.b16 %v1062
      %v1115 = vunpack.c.h.b16 %v1062
      %v1116 = vunpack.c.l.b16 %v1063
      %v1117 = vunpack.c.h.b16 %v1063
      %v1118 = vunpack.c.l.b16 %v1064
      %v1119 = vunpack.c.h.b16 %v1064
      %v1120 = vunpack.c.l.b16 %v1065
      %v1121 = vunpack.c.h.b16 %v1065
      %v1122 = vunpack.c.l.b16 %v1066
      %v1123 = vunpack.c.h.b16 %v1066
      %v1124 = vunpack.c.l.b16 %v1067
      %v1125 = vunpack.c.h.b16 %v1067
      %v1126 = vunpack.c.l.b16 %v1068
      %v1127 = vunpack.c.h.b16 %v1068
      %v1128 = vunpack.c.l.b16 %v1069
      %v1129 = vunpack.c.h.b16 %v1069
      %v1130 = vunpack.c.l.b16 %v1070
      %v1131 = vunpack.c.h.b16 %v1070
      %v1132 = vunpack.c.l.b16 %v1071
      %v1133 = vunpack.c.h.b16 %v1071
      %v1134 = vunpack.c.l.b16 %v1072
      %v1135 = vunpack.c.h.b16 %v1072
      %v1136 = vunpack.c.l.b16 %v1073
      %v1137 = vunpack.c.h.b16 %v1073
      %v1138 = vpack.c.b16 %v1108, %v1106
      %v1139 = vpack.c.b16 %v1109, %v1107
      %v1140 = vpack.c.b16 %v1112, %v1110
      %v1141 = vpack.c.b16 %v1113, %v1111
      %v1142 = vpack.c.b16 %v1116, %v1114
      %v1143 = vpack.c.b16 %v1117, %v1115
      %v1144 = vpack.c.b16 %v1120, %v1118
      %v1145 = vpack.c.b16 %v1121, %v1119
      %v1146 = vpack.c.b16 %v1124, %v1122
      %v1147 = vpack.c.b16 %v1125, %v1123
      %v1148 = vpack.c.b16 %v1128, %v1126
      %v1149 = vpack.c.b16 %v1129, %v1127
      %v1150 = vpack.c.b16 %v1132, %v1130
      %v1151 = vpack.c.b16 %v1133, %v1131
      %v1152 = vpack.c.b16 %v1136, %v1134
      %v1153 = vpack.c.b16 %v1137, %v1135
      %1170 = vmatprep.subr.bf16.mxu0 %v1139
      %1171 = vmatpush1.bf16.msra.mxu0 %v1138
      %1172 = vmatprep.subr.bf16.mxu0 %v1141
      %1173 = vmatpush1.bf16.msra.mxu0 %v1140
      %1174 = vmatprep.subr.bf16.mxu0 %v1143
      %1175 = vmatpush1.bf16.msra.mxu0 %v1142
      %1176 = vmatprep.subr.bf16.mxu0 %v1145
      %1177 = vmatpush1.bf16.msra.mxu0 %v1144
      %1178 = vmatprep.subr.bf16.mxu0 %v1147
      %1179 = vmatpush1.bf16.msra.mxu0 %v1146
      %1180 = vmatprep.subr.bf16.mxu0 %v1149
      %1181 = vmatpush1.bf16.msra.mxu0 %v1148
      %1182 = vmatprep.subr.bf16.mxu0 %v1151
      %1183 = vmatpush1.bf16.msra.mxu0 %v1150
      %1184 = vmatprep.subr.bf16.mxu0 %v1153
      %1185 = vmatpush1.bf16.msra.mxu0 %v1152
      %1186 = vmatprep.subr.bf16.mxu0 0
      %1187 = vmatpush1.bf16.msra.mxu0 0
      %1188 = vmatprep.subr.bf16.mxu0 0
      %1189 = vmatpush1.bf16.msra.mxu0 0
      %1190 = vmatprep.subr.bf16.mxu0 0
      %1191 = vmatpush1.bf16.msra.mxu0 0
      %1192 = vmatprep.subr.bf16.mxu0 0
      %1193 = vmatpush1.bf16.msra.mxu0 0
      %1194 = vmatprep.subr.bf16.mxu0 0
      %1195 = vmatpush1.bf16.msra.mxu0 0
      %1196 = vmatprep.subr.bf16.mxu0 0
      %1197 = vmatpush1.bf16.msra.mxu0 0
      %1198 = vmatprep.subr.bf16.mxu0 0
      %1199 = vmatpush1.bf16.msra.mxu0 0
      %1200 = vmatprep.subr.bf16.mxu0 0
      %1201 = vmatpush1.bf16.msra.mxu0 0
      %1202 = vmatprep.mubr.bf16.mxu0 0
      %1203 = vmatmul.mubr.bf16.gmra.mrb[0].mxu0 %v1088
      %v1204 = vpop.f32.mrb[0].mxu0
      %v1205 = vadd.f32 0.0, %v1204
      %v1206 = vpop.f32.mrb[0].mxu0
      %v1207 = vadd.f32 0.0, %v1206
      %v1208 = vpop.f32.mrb[0].mxu0
      %v1209 = vpop.f32.mrb[0].mxu0
      %1210 = vdwg.mxu0
      %v1211 = vadd.f32 %v1017, %v1205
      %v1212 = vadd.f32 %v1018, %v1207
      %s1213 = scalar_lea.vmem %s165, 2
      %v1214 = vld [vmem:[%s1213] sm:$0x1]
      %v1215 = vld [vmem:[%s1213 + $0x2] sm:$0x1]
      %s1216 = scalar_lea.vmem %s1, 768
      %v1217 = vld [vmem:[%s1216] sm:$0xff]
      %v1218 = vld [vmem:[%s1216 + $0x8] sm:$0xff]
      %v1219 = vld [vmem:[%s1216 + $0x10] sm:$0xff]
      %v1220 = vld [vmem:[%s1216 + $0x18] sm:$0xff]
      %v1221 = vld [vmem:[%s1216 + $0x20] sm:$0xff]
      %v1222 = vld [vmem:[%s1216 + $0x28] sm:$0xff]
      %v1223 = vld [vmem:[%s1216 + $0x30] sm:$0xff]
      %v1224 = vld [vmem:[%s1216 + $0x38] sm:$0xff]
      %v1225 = vld [vmem:[%s1216 + $0x40] sm:$0xff]
      %v1226 = vld [vmem:[%s1216 + $0x48] sm:$0xff]
      %v1227 = vld [vmem:[%s1216 + $0x50] sm:$0xff]
      %v1228 = vld [vmem:[%s1216 + $0x58] sm:$0xff]
      %v1229 = vld [vmem:[%s1216 + $0x60] sm:$0xff]
      %v1230 = vld [vmem:[%s1216 + $0x68] sm:$0xff]
      %v1231 = vld [vmem:[%s1216 + $0x70] sm:$0xff]
      %v1232 = vld [vmem:[%s1216 + $0x78] sm:$0xff]
      %v1235 = vcombine.low %v1214, %v1215
      %v1237 = vunpack.c.l.s4 1966171168
      %v1238 = vunpack.c.0.s8 %v1237
      %v1239 = vlaneseq
      %v1240 = vshrl.u32 %v1239, 7
      %v1241 = vsub.s32 %v1238, %v1240
      %v1242 = vrot.slane %v1235, %v1241
      %v1244 = vunpack.c.l.s4 1966171168
      %v1245 = vunpack.c.0.s8 %v1244
      %v1246 = vlaneseq
      %v1247 = vshrl.u32 %v1246, 7
      %v1248 = vsub.s32 %v1245, %v1247
      %v1249 = vrot.slane %v1242, %v1248
      %v1267 = vunpack.c.l.b16 %v1217
      %v1268 = vunpack.c.h.b16 %v1217
      %v1269 = vunpack.c.l.b16 %v1218
      %v1270 = vunpack.c.h.b16 %v1218
      %v1271 = vunpack.c.l.b16 %v1219
      %v1272 = vunpack.c.h.b16 %v1219
      %v1273 = vunpack.c.l.b16 %v1220
      %v1274 = vunpack.c.h.b16 %v1220
      %v1275 = vunpack.c.l.b16 %v1221
      %v1276 = vunpack.c.h.b16 %v1221
      %v1277 = vunpack.c.l.b16 %v1222
      %v1278 = vunpack.c.h.b16 %v1222
      %v1279 = vunpack.c.l.b16 %v1223
      %v1280 = vunpack.c.h.b16 %v1223
      %v1281 = vunpack.c.l.b16 %v1224
      %v1282 = vunpack.c.h.b16 %v1224
      %v1283 = vunpack.c.l.b16 %v1225
      %v1284 = vunpack.c.h.b16 %v1225
      %v1285 = vunpack.c.l.b16 %v1226
      %v1286 = vunpack.c.h.b16 %v1226
      %v1287 = vunpack.c.l.b16 %v1227
      %v1288 = vunpack.c.h.b16 %v1227
      %v1289 = vunpack.c.l.b16 %v1228
      %v1290 = vunpack.c.h.b16 %v1228
      %v1291 = vunpack.c.l.b16 %v1229
      %v1292 = vunpack.c.h.b16 %v1229
      %v1293 = vunpack.c.l.b16 %v1230
      %v1294 = vunpack.c.h.b16 %v1230
      %v1295 = vunpack.c.l.b16 %v1231
      %v1296 = vunpack.c.h.b16 %v1231
      %v1297 = vunpack.c.l.b16 %v1232
      %v1298 = vunpack.c.h.b16 %v1232
      %v1299 = vpack.c.b16 %v1269, %v1267
      %v1300 = vpack.c.b16 %v1270, %v1268
      %v1301 = vpack.c.b16 %v1273, %v1271
      %v1302 = vpack.c.b16 %v1274, %v1272
      %v1303 = vpack.c.b16 %v1277, %v1275
      %v1304 = vpack.c.b16 %v1278, %v1276
      %v1305 = vpack.c.b16 %v1281, %v1279
      %v1306 = vpack.c.b16 %v1282, %v1280
      %v1307 = vpack.c.b16 %v1285, %v1283
      %v1308 = vpack.c.b16 %v1286, %v1284
      %v1309 = vpack.c.b16 %v1289, %v1287
      %v1310 = vpack.c.b16 %v1290, %v1288
      %v1311 = vpack.c.b16 %v1293, %v1291
      %v1312 = vpack.c.b16 %v1294, %v1292
      %v1313 = vpack.c.b16 %v1297, %v1295
      %v1314 = vpack.c.b16 %v1298, %v1296
      %1331 = vmatprep.subr.bf16.mxu0 %v1300
      %1332 = vmatpush1.bf16.msra.mxu0 %v1299
      %1333 = vmatprep.subr.bf16.mxu0 %v1302
      %1334 = vmatpush1.bf16.msra.mxu0 %v1301
      %1335 = vmatprep.subr.bf16.mxu0 %v1304
      %1336 = vmatpush1.bf16.msra.mxu0 %v1303
      %1337 = vmatprep.subr.bf16.mxu0 %v1306
      %1338 = vmatpush1.bf16.msra.mxu0 %v1305
      %1339 = vmatprep.subr.bf16.mxu0 %v1308
      %1340 = vmatpush1.bf16.msra.mxu0 %v1307
      %1341 = vmatprep.subr.bf16.mxu0 %v1310
      %1342 = vmatpush1.bf16.msra.mxu0 %v1309
      %1343 = vmatprep.subr.bf16.mxu0 %v1312
      %1344 = vmatpush1.bf16.msra.mxu0 %v1311
      %1345 = vmatprep.subr.bf16.mxu0 %v1314
      %1346 = vmatpush1.bf16.msra.mxu0 %v1313
      %1347 = vmatprep.subr.bf16.mxu0 0
      %1348 = vmatpush1.bf16.msra.mxu0 0
      %1349 = vmatprep.subr.bf16.mxu0 0
      %1350 = vmatpush1.bf16.msra.mxu0 0
      %1351 = vmatprep.subr.bf16.mxu0 0
      %1352 = vmatpush1.bf16.msra.mxu0 0
      %1353 = vmatprep.subr.bf16.mxu0 0
      %1354 = vmatpush1.bf16.msra.mxu0 0
      %1355 = vmatprep.subr.bf16.mxu0 0
      %1356 = vmatpush1.bf16.msra.mxu0 0
      %1357 = vmatprep.subr.bf16.mxu0 0
      %1358 = vmatpush1.bf16.msra.mxu0 0
      %1359 = vmatprep.subr.bf16.mxu0 0
      %1360 = vmatpush1.bf16.msra.mxu0 0
      %1361 = vmatprep.subr.bf16.mxu0 0
      %1362 = vmatpush1.bf16.msra.mxu0 0
      %1363 = vmatprep.mubr.bf16.mxu0 0
      %1364 = vmatmul.mubr.bf16.gmra.mrb[0].mxu0 %v1249
      %v1365 = vpop.f32.mrb[0].mxu0
      %v1366 = vadd.f32 0.0, %v1365
      %v1367 = vpop.f32.mrb[0].mxu0
      %v1368 = vadd.f32 0.0, %v1367
      %v1369 = vpop.f32.mrb[0].mxu0
      %v1370 = vpop.f32.mrb[0].mxu0
      %1371 = vdwg.mxu0
      %v1372 = vadd.f32 %v1211, %v1366
      %v1373 = vadd.f32 %v1212, %v1368
      %s1374 = scalar_lea.vmem %s165, 8
      %v1375 = vld [vmem:[%s1374] sm:$0x1]
      %v1376 = vld [vmem:[%s1374 + $0x2] sm:$0x1]
      %s1377 = scalar_lea.vmem %s1, 896
      %v1378 = vld [vmem:[%s1377] sm:$0xff]
      %v1379 = vld [vmem:[%s1377 + $0x8] sm:$0xff]
      %v1380 = vld [vmem:[%s1377 + $0x10] sm:$0xff]
      %v1381 = vld [vmem:[%s1377 + $0x18] sm:$0xff]
      %v1382 = vld [vmem:[%s1377 + $0x20] sm:$0xff]
      %v1383 = vld [vmem:[%s1377 + $0x28] sm:$0xff]
      %v1384 = vld [vmem:[%s1377 + $0x30] sm:$0xff]
      %v1385 = vld [vmem:[%s1377 + $0x38] sm:$0xff]
      %v1386 = vld [vmem:[%s1377 + $0x40] sm:$0xff]
      %v1387 = vld [vmem:[%s1377 + $0x48] sm:$0xff]
      %v1388 = vld [vmem:[%s1377 + $0x50] sm:$0xff]
      %v1389 = vld [vmem:[%s1377 + $0x58] sm:$0xff]
      %v1390 = vld [vmem:[%s1377 + $0x60] sm:$0xff]
      %v1391 = vld [vmem:[%s1377 + $0x68] sm:$0xff]
      %v1392 = vld [vmem:[%s1377 + $0x70] sm:$0xff]
      %v1393 = vld [vmem:[%s1377 + $0x78] sm:$0xff]
      %v1396 = vcombine.low %v1375, %v1376
      %v1398 = vunpack.c.l.s4 1966171168
      %v1399 = vunpack.c.0.s8 %v1398
      %v1400 = vlaneseq
      %v1401 = vshrl.u32 %v1400, 7
      %v1402 = vsub.s32 %v1399, %v1401
      %v1403 = vrot.slane %v1396, %v1402
      %v1405 = vunpack.c.l.s4 1966171168
      %v1406 = vunpack.c.0.s8 %v1405
      %v1407 = vlaneseq
      %v1408 = vshrl.u32 %v1407, 7
      %v1409 = vsub.s32 %v1406, %v1408
      %v1410 = vrot.slane %v1403, %v1409
      %v1428 = vunpack.c.l.b16 %v1378
      %v1429 = vunpack.c.h.b16 %v1378
      %v1430 = vunpack.c.l.b16 %v1379
      %v1431 = vunpack.c.h.b16 %v1379
      %v1432 = vunpack.c.l.b16 %v1380
      %v1433 = vunpack.c.h.b16 %v1380
      %v1434 = vunpack.c.l.b16 %v1381
      %v1435 = vunpack.c.h.b16 %v1381
      %v1436 = vunpack.c.l.b16 %v1382
      %v1437 = vunpack.c.h.b16 %v1382
      %v1438 = vunpack.c.l.b16 %v1383
      %v1439 = vunpack.c.h.b16 %v1383
      %v1440 = vunpack.c.l.b16 %v1384
      %v1441 = vunpack.c.h.b16 %v1384
      %v1442 = vunpack.c.l.b16 %v1385
      %v1443 = vunpack.c.h.b16 %v1385
      %v1444 = vunpack.c.l.b16 %v1386
      %v1445 = vunpack.c.h.b16 %v1386
      %v1446 = vunpack.c.l.b16 %v1387
      %v1447 = vunpack.c.h.b16 %v1387
      %v1448 = vunpack.c.l.b16 %v1388
      %v1449 = vunpack.c.h.b16 %v1388
      %v1450 = vunpack.c.l.b16 %v1389
      %v1451 = vunpack.c.h.b16 %v1389
      %v1452 = vunpack.c.l.b16 %v1390
      %v1453 = vunpack.c.h.b16 %v1390
      %v1454 = vunpack.c.l.b16 %v1391
      %v1455 = vunpack.c.h.b16 %v1391
      %v1456 = vunpack.c.l.b16 %v1392
      %v1457 = vunpack.c.h.b16 %v1392
      %v1458 = vunpack.c.l.b16 %v1393
      %v1459 = vunpack.c.h.b16 %v1393
      %v1460 = vpack.c.b16 %v1430, %v1428
      %v1461 = vpack.c.b16 %v1431, %v1429
      %v1462 = vpack.c.b16 %v1434, %v1432
      %v1463 = vpack.c.b16 %v1435, %v1433
      %v1464 = vpack.c.b16 %v1438, %v1436
      %v1465 = vpack.c.b16 %v1439, %v1437
      %v1466 = vpack.c.b16 %v1442, %v1440
      %v1467 = vpack.c.b16 %v1443, %v1441
      %v1468 = vpack.c.b16 %v1446, %v1444
      %v1469 = vpack.c.b16 %v1447, %v1445
      %v1470 = vpack.c.b16 %v1450, %v1448
      %v1471 = vpack.c.b16 %v1451, %v1449
      %v1472 = vpack.c.b16 %v1454, %v1452
      %v1473 = vpack.c.b16 %v1455, %v1453
      %v1474 = vpack.c.b16 %v1458, %v1456
      %v1475 = vpack.c.b16 %v1459, %v1457
      %1492 = vmatprep.subr.bf16.mxu0 %v1461
      %1493 = vmatpush1.bf16.msra.mxu0 %v1460
      %1494 = vmatprep.subr.bf16.mxu0 %v1463
      %1495 = vmatpush1.bf16.msra.mxu0 %v1462
      %1496 = vmatprep.subr.bf16.mxu0 %v1465
      %1497 = vmatpush1.bf16.msra.mxu0 %v1464
      %1498 = vmatprep.subr.bf16.mxu0 %v1467
      %1499 = vmatpush1.bf16.msra.mxu0 %v1466
      %1500 = vmatprep.subr.bf16.mxu0 %v1469
      %1501 = vmatpush1.bf16.msra.mxu0 %v1468
      %1502 = vmatprep.subr.bf16.mxu0 %v1471
      %1503 = vmatpush1.bf16.msra.mxu0 %v1470
      %1504 = vmatprep.subr.bf16.mxu0 %v1473
      %1505 = vmatpush1.bf16.msra.mxu0 %v1472
      %1506 = vmatprep.subr.bf16.mxu0 %v1475
      %1507 = vmatpush1.bf16.msra.mxu0 %v1474
      %1508 = vmatprep.subr.bf16.mxu0 0
      %1509 = vmatpush1.bf16.msra.mxu0 0
      %1510 = vmatprep.subr.bf16.mxu0 0
      %1511 = vmatpush1.bf16.msra.mxu0 0
      %1512 = vmatprep.subr.bf16.mxu0 0
      %1513 = vmatpush1.bf16.msra.mxu0 0
      %1514 = vmatprep.subr.bf16.mxu0 0
      %1515 = vmatpush1.bf16.msra.mxu0 0
      %1516 = vmatprep.subr.bf16.mxu0 0
      %1517 = vmatpush1.bf16.msra.mxu0 0
      %1518 = vmatprep.subr.bf16.mxu0 0
      %1519 = vmatpush1.bf16.msra.mxu0 0
      %1520 = vmatprep.subr.bf16.mxu0 0
      %1521 = vmatpush1.bf16.msra.mxu0 0
      %1522 = vmatprep.subr.bf16.mxu0 0
      %1523 = vmatpush1.bf16.msra.mxu0 0
      %1524 = vmatprep.mubr.bf16.mxu0 0
      %1525 = vmatmul.mubr.bf16.gmra.mrb[0].mxu0 %v1410
      %v1526 = vpop.f32.mrb[0].mxu0
      %v1527 = vadd.f32 0.0, %v1526
      %v1528 = vpop.f32.mrb[0].mxu0
      %v1529 = vadd.f32 0.0, %v1528
      %v1530 = vpop.f32.mrb[0].mxu0
      %v1531 = vpop.f32.mrb[0].mxu0
      %1532 = vdwg.mxu0
      %v1533 = vadd.f32 %v1372, %v1527
      %v1534 = vadd.f32 %v1373, %v1529
      %v1535 = vld [vmem:[%s1213] sm:$0x3]
      %v1536 = vld [vmem:[%s1213 + $0x2] sm:$0x3]
      %v1540 = vunpack.c.l.s4 1966171168
      %v1541 = vunpack.c.0.s8 %v1540
      %v1542 = vlaneseq
      %v1543 = vshrl.u32 %v1542, 7
      %v1544 = vsub.s32 %v1541, %v1543
      %v1545 = vrot.slane %v1535, %v1544
      %v1546 = vcombine.high %v1545, %v1545
      %v1548 = vunpack.c.l.s4 1966171168
      %v1549 = vunpack.c.0.s8 %v1548
      %v1550 = vlaneseq
      %v1551 = vshrl.u32 %v1550, 7
      %v1552 = vsub.s32 %v1549, %v1551
      %v1553 = vrot.slane %v1536, %v1552
      %v1554 = vcombine.high %v1553, %v1553
      %v1556 = vshrl.u32 %v1545, 16
      %v1558 = vrot.slane %v1556, 7
      %v1559 = vrot.slane %v1558, 1
      %v1561 = vshll.u32 %v1546, 16
      %v1563 = vsel %vm522, %v1559, %v1561
      %v1565 = vshrl.u32 %v1553, 16
      %v1567 = vrot.slane %v1565, 7
      %v1568 = vrot.slane %v1567, 1
      %v1570 = vshll.u32 %v1554, 16
      %v1572 = vsel %vm522, %v1568, %v1570
      %s1573 = scalar_lea.vmem %s1, 1024
      %v1574 = vld [vmem:[%s1573] sm:$0xff]
      %v1575 = vld [vmem:[%s1573 + $0x8] sm:$0xff]
      %v1576 = vld [vmem:[%s1573 + $0x10] sm:$0xff]
      %v1577 = vld [vmem:[%s1573 + $0x18] sm:$0xff]
      %v1578 = vld [vmem:[%s1573 + $0x20] sm:$0xff]
      %v1579 = vld [vmem:[%s1573 + $0x28] sm:$0xff]
      %v1580 = vld [vmem:[%s1573 + $0x30] sm:$0xff]
      %v1581 = vld [vmem:[%s1573 + $0x38] sm:$0xff]
      %v1582 = vld [vmem:[%s1573 + $0x40] sm:$0xff]
      %v1583 = vld [vmem:[%s1573 + $0x48] sm:$0xff]
      %v1584 = vld [vmem:[%s1573 + $0x50] sm:$0xff]
      %v1585 = vld [vmem:[%s1573 + $0x58] sm:$0xff]
      %v1586 = vld [vmem:[%s1573 + $0x60] sm:$0xff]
      %v1587 = vld [vmem:[%s1573 + $0x68] sm:$0xff]
      %v1588 = vld [vmem:[%s1573 + $0x70] sm:$0xff]
      %v1589 = vld [vmem:[%s1573 + $0x78] sm:$0xff]
      %v1590 = vcombine.low %v1563, %v1572
      %v1592 = vunpack.c.l.s4 1966171168
      %v1593 = vunpack.c.0.s8 %v1592
      %v1594 = vlaneseq
      %v1595 = vshrl.u32 %v1594, 7
      %v1596 = vsub.s32 %v1593, %v1595
      %v1597 = vrot.slane %v1590, %v1596
      %v1599 = vunpack.c.l.s4 1966171168
      %v1600 = vunpack.c.0.s8 %v1599
      %v1601 = vlaneseq
      %v1602 = vshrl.u32 %v1601, 7
      %v1603 = vsub.s32 %v1600, %v1602
      %v1604 = vrot.slane %v1597, %v1603
      %v1622 = vunpack.c.l.b16 %v1574
      %v1623 = vunpack.c.h.b16 %v1574
      %v1624 = vunpack.c.l.b16 %v1575
      %v1625 = vunpack.c.h.b16 %v1575
      %v1626 = vunpack.c.l.b16 %v1576
      %v1627 = vunpack.c.h.b16 %v1576
      %v1628 = vunpack.c.l.b16 %v1577
      %v1629 = vunpack.c.h.b16 %v1577
      %v1630 = vunpack.c.l.b16 %v1578
      %v1631 = vunpack.c.h.b16 %v1578
      %v1632 = vunpack.c.l.b16 %v1579
      %v1633 = vunpack.c.h.b16 %v1579
      %v1634 = vunpack.c.l.b16 %v1580
      %v1635 = vunpack.c.h.b16 %v1580
      %v1636 = vunpack.c.l.b16 %v1581
      %v1637 = vunpack.c.h.b16 %v1581
      %v1638 = vunpack.c.l.b16 %v1582
      %v1639 = vunpack.c.h.b16 %v1582
      %v1640 = vunpack.c.l.b16 %v1583
      %v1641 = vunpack.c.h.b16 %v1583
      %v1642 = vunpack.c.l.b16 %v1584
      %v1643 = vunpack.c.h.b16 %v1584
      %v1644 = vunpack.c.l.b16 %v1585
      %v1645 = vunpack.c.h.b16 %v1585
      %v1646 = vunpack.c.l.b16 %v1586
      %v1647 = vunpack.c.h.b16 %v1586
      %v1648 = vunpack.c.l.b16 %v1587
      %v1649 = vunpack.c.h.b16 %v1587
      %v1650 = vunpack.c.l.b16 %v1588
      %v1651 = vunpack.c.h.b16 %v1588
      %v1652 = vunpack.c.l.b16 %v1589
      %v1653 = vunpack.c.h.b16 %v1589
      %v1654 = vpack.c.b16 %v1624, %v1622
      %v1655 = vpack.c.b16 %v1625, %v1623
      %v1656 = vpack.c.b16 %v1628, %v1626
      %v1657 = vpack.c.b16 %v1629, %v1627
      %v1658 = vpack.c.b16 %v1632, %v1630
      %v1659 = vpack.c.b16 %v1633, %v1631
      %v1660 = vpack.c.b16 %v1636, %v1634
      %v1661 = vpack.c.b16 %v1637, %v1635
      %v1662 = vpack.c.b16 %v1640, %v1638
      %v1663 = vpack.c.b16 %v1641, %v1639
      %v1664 = vpack.c.b16 %v1644, %v1642
      %v1665 = vpack.c.b16 %v1645, %v1643
      %v1666 = vpack.c.b16 %v1648, %v1646
      %v1667 = vpack.c.b16 %v1649, %v1647
      %v1668 = vpack.c.b16 %v1652, %v1650
      %v1669 = vpack.c.b16 %v1653, %v1651
      %1686 = vmatprep.subr.bf16.mxu0 %v1655
      %1687 = vmatpush1.bf16.msra.mxu0 %v1654
      %1688 = vmatprep.subr.bf16.mxu0 %v1657
      %1689 = vmatpush1.bf16.msra.mxu0 %v1656
      %1690 = vmatprep.subr.bf16.mxu0 %v1659
      %1691 = vmatpush1.bf16.msra.mxu0 %v1658
      %1692 = vmatprep.subr.bf16.mxu0 %v1661
      %1693 = vmatpush1.bf16.msra.mxu0 %v1660
      %1694 = vmatprep.subr.bf16.mxu0 %v1663
      %1695 = vmatpush1.bf16.msra.mxu0 %v1662
      %1696 = vmatprep.subr.bf16.mxu0 %v1665
      %1697 = vmatpush1.bf16.msra.mxu0 %v1664
      %1698 = vmatprep.subr.bf16.mxu0 %v1667
      %1699 = vmatpush1.bf16.msra.mxu0 %v1666
      %1700 = vmatprep.subr.bf16.mxu0 %v1669
      %1701 = vmatpush1.bf16.msra.mxu0 %v1668
      %1702 = vmatprep.subr.bf16.mxu0 0
      %1703 = vmatpush1.bf16.msra.mxu0 0
      %1704 = vmatprep.subr.bf16.mxu0 0
      %1705 = vmatpush1.bf16.msra.mxu0 0
      %1706 = vmatprep.subr.bf16.mxu0 0
      %1707 = vmatpush1.bf16.msra.mxu0 0
      %1708 = vmatprep.subr.bf16.mxu0 0
      %1709 = vmatpush1.bf16.msra.mxu0 0
      %1710 = vmatprep.subr.bf16.mxu0 0
      %1711 = vmatpush1.bf16.msra.mxu0 0
      %1712 = vmatprep.subr.bf16.mxu0 0
      %1713 = vmatpush1.bf16.msra.mxu0 0
      %1714 = vmatprep.subr.bf16.mxu0 0
      %1715 = vmatpush1.bf16.msra.mxu0 0
      %1716 = vmatprep.subr.bf16.mxu0 0
      %1717 = vmatpush1.bf16.msra.mxu0 0
      %1718 = vmatprep.mubr.bf16.mxu0 0
      %1719 = vmatmul.mubr.bf16.gmra.mrb[0].mxu0 %v1604
      %v1720 = vpop.f32.mrb[0].mxu0
      %v1721 = vadd.f32 0.0, %v1720
      %v1722 = vpop.f32.mrb[0].mxu0
      %v1723 = vadd.f32 0.0, %v1722
      %v1724 = vpop.f32.mrb[0].mxu0
      %v1725 = vpop.f32.mrb[0].mxu0
      %1726 = vdwg.mxu0
      %v1727 = vadd.f32 %v1533, %v1721
      %v1728 = vadd.f32 %v1534, %v1723
      %v1729 = vld [vmem:[%s2] sm:$0x3]
      %v1731 = vlaneseq
      %v1732 = vshrl.u32 %v1731, 7
      %v1733 = vsub.s32 0, %v1732
      %v1734 = vrot.slane %v1729, %v1733
      %v1735 = vlaneseq
      %v1736 = vshrl.u32 %v1735, 7
      %v1737 = vsub.s32 1, %v1736
      %v1738 = vrot.slane %v1729, %v1737
      %v1741 = vadd.f32 %v1727, %v1734
      %v1742 = vadd.f32 %v1728, %v1738
      %v1743 = vmax.f32 %v1741, 0.0
      %v1744 = vmax.f32 %v1742, 0.0
      %v1745 = vpack.c.bf16 %v1743, %v1743
      %v1746 = vpack.c.bf16 %v1744, %v1744
      %v1749 = vcombine.low %v1745, %v1746
      %v1751 = vunpack.c.l.s4 1983009808
      %v1752 = vunpack.c.0.s8 %v1751
      %v1753 = vlaneseq
      %v1754 = vshrl.u32 %v1753, 7
      %v1755 = vsub.s32 %v1752, %v1754
      %v1756 = vrot.slane %v1749, %v1755
      %1758 = vst [vmem:[%s170] sm:$0xf] %v1756
      %p1759 = scmp.lt.s32.totalorder %s14, 1
      %s1760 = scalar_select %p1759, %s14, 1
      %s1761 = smul.addr %s1760, 2
      %s1762 = smul.addr %s1761, 2
      %s1763 = scalar_lea.vmem %s3, %s1762
      // Predicated region
      $region33: #{critic_forward.8} parent=31 // pred_check
        %p1764 = pneg %p100
      $region34: #{critic_forward.8} parent=31 // pred_check_branch
        %1766 = sbr.rel (%p1764) target = $region36
      $region35: #{critic_forward.8} parent=31 // pred_region
        _
      $region36: #{critic_forward.8} parent=31 // pred_fallthru
        _
    $region32: #{critic_forward.8} parent=5 // pred_fallthru
      _
    %p1767 = scmp.le.s32.totalorder 2, %s9
    // Predicated region
    $region37: #{critic_forward.8} parent=5 // pred_check
      %p1768 = pneg %p1767
    $region38: #{critic_forward.8} parent=5 // pred_check_branch
      %1770 = sbr.rel (%p1768) target = $region40
    $region39: #{critic_forward.8} parent=5 // pred_region
      %s1771 = ssub.s32 %s9, 2
      // Predicated region
      $region41: #{critic_forward.8} parent=39 // pred_check
        %p1772 = pneg %p106
      $region42: #{critic_forward.8} parent=39 // pred_check_branch
        %1774 = sbr.rel (%p1772) target = $region44
      $region43: #{critic_forward.8} parent=39 // pred_region
        %p1775 = scmp.lt.s32.totalorder %s15, 1
        %s1776 = scalar_select %p1775, %s15, 1
        %s1777 = smul.addr %s1776, 2
        %s1778 = smul.addr %s1777, 2
        %s1779 = scalar_lea.vmem %s3, %s1778
      $region44: #{critic_forward.8} parent=39 // pred_fallthru
        _
    $region40: #{critic_forward.8} parent=5 // pred_fallthru
      _
  $region6: #{critic_forward.8} parent=0 // loop_footer
    %s13 = sadd.s32 1, %s9
  $region7: #{critic_forward.8} parent=0 // loop_footer_branch
    %8 = sbr.rel target = $region3
  $region8: #{critic_forward.8} parent=0 // loop_exit
    _

// kernel: critic_forward.9
$region0: #{critic_forward.9}
  #allocation0 [shape = 'u32[]', space=smem, size = 0x4, offset = 0x4, fixed_abs, tag = 'smem constant byte address 0x4 - core index']
  #allocation1 [shape = 'u32[144,128]{1,0:T(1,128)}', space=vmem, size = 0x12000, scoped, tag = 'internal scratch']
  #allocation2 [shape = 'f32[2,128]{1,0:T(2,128)}', space=vmem, size = 0x400, scoped, tag = 'scratch operand']
  #allocation3 [shape = 'f32[1,1]{1,0:T(1,128)S(1)}', space=vmem, size = 0x200, scoped, tag = 'scoped memory for critic_forward.9']
  %s0 = inlined_call_operand.vmem [shape: bf16[2,1024], index: 0, kind: input, shape index: {}]
  %s1 = inlined_call_operand.vmem [shape: bf16[1024,128], index: 1, kind: input, shape index: {}]
  %s2 = inlined_call_operand.vmem [shape: f32[1,128], index: 2, kind: input, shape index: {}]
  %s3 = inlined_call_operand.vmem [shape: f32[128,1], index: 3, kind: input, shape index: {}]
  %s4 = inlined_call_operand.<no memory space> [shape: f32[1,1], index: 4, kind: input, shape index: {}]
  %s5 = inlined_call_operand.vmem [shape: f32[2,1], index: 5, kind: output, shape index: {}]
  %s6 = sld [smem:[#allocation0]]
  $region61: #{critic_forward.9} parent=0
    _
  %s8 = ssub.s32 1, %s6
  %s9 = scalar_select 0, %s8, %s6
  %v10 = vstv %s4
  %11 = vst [vmem:[#allocation3] sm:$0x1] %v10
  loop: start=0, step=1, limit=6
  $region2: #{critic_forward.9} parent=0 // loop_pre_header
    _
  $region3: #{critic_forward.9} parent=0 // loop_header
    %s13 = sphi 0, %s17
    %p14 = scmp.ge.s32.totalorder %s13, 6
    %s23 = sphi 0, %s25
    %s26 = sphi 0, %s23
    %s27 = sphi 0, %s26
    %s43 = sphi 0, %s27
    %s49 = sphi 0, %s51
    %s52 = sphi 0, %s49
    %s53 = sphi 0, %s52
    %s69 = sphi 0, %s53
    %s73 = sphi 0, %s73
    %s75 = sphi 0, %s73
    %s76 = sphi 0, %s75
    %s90 = sphi 0, %s76
    %s94 = sphi 0, %s94
    %s96 = sphi 0, %s94
    %s97 = sphi 0, %s96
    %s111 = sphi 0, %s97
    %s115 = sphi 0, %s115
    %s117 = sphi 0, %s115
    %s118 = sphi 0, %s117
    %s132 = sphi 0, %s118
    %s136 = sphi 0, %s136
    %s138 = sphi 0, %s136
    %s139 = sphi 0, %s138
    %s153 = sphi 0, %s139
  $region4: #{critic_forward.9} parent=0 // loop_header_branch
    %16 = sbr.rel (%p14) target = $region8
  $region5: #{critic_forward.9} parent=0 // loop_body
    %s18 = ssub.s32 %s13, 1
    %s19 = ssub.s32 %s13, 2
    %s20 = sadd.s32 %s13, 1
    %s21 = ssub.s32 %s13, %s20
    %p22 = scmp.eq.s32.totalorder %s21, 0
    %s24 = sadd.s32 %s23, 1
    %s25 = scalar_select %p22, %s23, %s24
    %p28 = pneg %p22
    %p29 = scmp.eq.s32.totalorder %s13, 3
    %p30 = por %p28, %p29
    %p31 = scmp.ne.s32.totalorder %s23, %s26
    %p32 = scmp.eq.s32.totalorder %s13, 0
    %p33 = por %p31, %p32
    %p34 = scmp.ne.s32.totalorder %s23, %s26
    %p35 = scmp.eq.s32.totalorder %s18, 3
    %p36 = por %p34, %p35
    %p37 = scmp.ne.s32.totalorder %s26, %s27
    %p38 = scmp.eq.s32.totalorder %s18, 0
    %p39 = por %p37, %p38
    %p40 = scmp.ne.s32.totalorder %s26, %s27
    %p41 = scmp.eq.s32.totalorder %s19, 3
    %p42 = por %p40, %p41
    %p44 = scmp.ne.s32.totalorder %s27, %s43
    %p45 = scmp.eq.s32.totalorder %s19, 0
    %p46 = por %p44, %p45
    %s47 = ssub.s32 %s13, %s20
    %p48 = scmp.eq.s32.totalorder %s47, 0
    %s50 = sadd.s32 %s49, 1
    %s51 = scalar_select %p48, %s49, %s50
    %p54 = pneg %p48
    %p55 = scmp.eq.s32.totalorder %s13, 3
    %p56 = por %p54, %p55
    %p57 = scmp.ne.s32.totalorder %s49, %s52
    %p58 = scmp.eq.s32.totalorder %s13, 0
    %p59 = por %p57, %p58
    %p60 = scmp.ne.s32.totalorder %s49, %s52
    %p61 = scmp.eq.s32.totalorder %s18, 3
    %p62 = por %p60, %p61
    %p63 = scmp.ne.s32.totalorder %s52, %s53
    %p64 = scmp.eq.s32.totalorder %s18, 0
    %p65 = por %p63, %p64
    %p66 = scmp.ne.s32.totalorder %s52, %s53
    %p67 = scmp.eq.s32.totalorder %s19, 3
    %p68 = por %p66, %p67
    %p70 = scmp.ne.s32.totalorder %s53, %s69
    %p71 = scmp.eq.s32.totalorder %s19, 0
    %p72 = por %p70, %p71
    %s74 = sadd.s32 %s73, 1
    %p77 = scmp.eq.s32.totalorder %s13, 3
    %p78 = scmp.ne.s32.totalorder %s73, %s75
    %p79 = scmp.eq.s32.totalorder %s13, 0
    %p80 = por %p78, %p79
    %p81 = scmp.ne.s32.totalorder %s73, %s75
    %p82 = scmp.eq.s32.totalorder %s18, 3
    %p83 = por %p81, %p82
    %p84 = scmp.ne.s32.totalorder %s75, %s76
    %p85 = scmp.eq.s32.totalorder %s18, 0
    %p86 = por %p84, %p85
    %p87 = scmp.ne.s32.totalorder %s75, %s76
    %p88 = scmp.eq.s32.totalorder %s19, 3
    %p89 = por %p87, %p88
    %p91 = scmp.ne.s32.totalorder %s76, %s90
    %p92 = scmp.eq.s32.totalorder %s19, 0
    %p93 = por %p91, %p92
    %s95 = sadd.s32 %s94, 1
    %p98 = scmp.eq.s32.totalorder %s13, 3
    %p99 = scmp.ne.s32.totalorder %s94, %s96
    %p100 = scmp.eq.s32.totalorder %s13, 0
    %p101 = por %p99, %p100
    %p102 = scmp.ne.s32.totalorder %s94, %s96
    %p103 = scmp.eq.s32.totalorder %s18, 3
    %p104 = por %p102, %p103
    %p105 = scmp.ne.s32.totalorder %s96, %s97
    %p106 = scmp.eq.s32.totalorder %s18, 0
    %p107 = por %p105, %p106
    %p108 = scmp.ne.s32.totalorder %s96, %s97
    %p109 = scmp.eq.s32.totalorder %s19, 3
    %p110 = por %p108, %p109
    %p112 = scmp.ne.s32.totalorder %s97, %s111
    %p113 = scmp.eq.s32.totalorder %s19, 0
    %p114 = por %p112, %p113
    %s116 = sadd.s32 %s115, 1
    %p119 = scmp.eq.s32.totalorder %s13, 3
    %p120 = scmp.ne.s32.totalorder %s115, %s117
    %p121 = scmp.eq.s32.totalorder %s13, 0
    %p122 = por %p120, %p121
    %p123 = scmp.ne.s32.totalorder %s115, %s117
    %p124 = scmp.eq.s32.totalorder %s18, 3
    %p125 = por %p123, %p124
    %p126 = scmp.ne.s32.totalorder %s117, %s118
    %p127 = scmp.eq.s32.totalorder %s18, 0
    %p128 = por %p126, %p127
    %p129 = scmp.ne.s32.totalorder %s117, %s118
    %p130 = scmp.eq.s32.totalorder %s19, 3
    %p131 = por %p129, %p130
    %p133 = scmp.ne.s32.totalorder %s118, %s132
    %p134 = scmp.eq.s32.totalorder %s19, 0
    %p135 = por %p133, %p134
    %s137 = sadd.s32 %s136, 1
    %p140 = scmp.eq.s32.totalorder %s13, 3
    %p141 = scmp.ne.s32.totalorder %s136, %s138
    %p142 = scmp.eq.s32.totalorder %s13, 0
    %p143 = por %p141, %p142
    %p144 = scmp.ne.s32.totalorder %s136, %s138
    %p145 = scmp.eq.s32.totalorder %s18, 3
    %p146 = por %p144, %p145
    %p147 = scmp.ne.s32.totalorder %s138, %s139
    %p148 = scmp.eq.s32.totalorder %s18, 0
    %p149 = por %p147, %p148
    %p150 = scmp.ne.s32.totalorder %s138, %s139
    %p151 = scmp.eq.s32.totalorder %s19, 3
    %p152 = por %p150, %p151
    %p154 = scmp.ne.s32.totalorder %s139, %s153
    %p155 = scmp.eq.s32.totalorder %s19, 0
    %p156 = por %p154, %p155
    %p157 = scmp.le.s32.totalorder 1, %s13
    %p158 = scmp.lt.s32.totalorder %s13, 5
    %p159 = pnand %p157, %p158
    %p160 = pneg %p159
    // Predicated region
    $region9: #{critic_forward.9} parent=5 // pred_check
      _
    $region10: #{critic_forward.9} parent=5 // pred_check_branch
      %162 = sbr.rel (%p159) target = $region12
    $region11: #{critic_forward.9} parent=5 // pred_region
      %s163 = ssub.s32 %s13, 1
      // Predicated region
      $region13: #{critic_forward.9} parent=11 // pred_check
        %p164 = pneg %p86
      $region14: #{critic_forward.9} parent=11 // pred_check_branch
        %166 = sbr.rel (%p164) target = $region16
      $region15: #{critic_forward.9} parent=11 // pred_region
        _
      $region16: #{critic_forward.9} parent=11 // pred_fallthru
        _
      // Predicated region
      $region17: #{critic_forward.9} parent=11 // pred_check
        %p167 = pneg %p107
      $region18: #{critic_forward.9} parent=11 // pred_check_branch
        %169 = sbr.rel (%p167) target = $region20
      $region19: #{critic_forward.9} parent=11 // pred_region
        _
      $region20: #{critic_forward.9} parent=11 // pred_fallthru
        _
      // Predicated region
      $region21: #{critic_forward.9} parent=11 // pred_check
        %p170 = pneg %p128
      $region22: #{critic_forward.9} parent=11 // pred_check_branch
        %172 = sbr.rel (%p170) target = $region24
      $region23: #{critic_forward.9} parent=11 // pred_region
        _
      $region24: #{critic_forward.9} parent=11 // pred_fallthru
        _
    $region12: #{critic_forward.9} parent=5 // pred_fallthru
      _
    %p173 = scmp.lt.s32.totalorder %s13, 4
    // Predicated region
    $region25: #{critic_forward.9} parent=5 // pred_check
      %p174 = pneg %p173
    $region26: #{critic_forward.9} parent=5 // pred_check_branch
      %176 = sbr.rel (%p174) target = $region28
    $region27: #{critic_forward.9} parent=5 // pred_region
      // Predicated region
      $region29: #{critic_forward.9} parent=27 // pred_check
        %p177 = pneg %p33
      $region30: #{critic_forward.9} parent=27 // pred_check_branch
        %179 = sbr.rel (%p177) target = $region32
      $region31: #{critic_forward.9} parent=27 // pred_region
        %s180 = smul.u32 2, %s13
        %p181 = scmp.lt.s32.totalorder %s180, 7
        %s182 = scalar_select %p181, %s180, 7
        %s183 = scalar_lea.vmem %s0, %s182
        %s184 = smul.u32 2, %s13
      $region32: #{critic_forward.9} parent=27 // pred_fallthru
        _
      // Predicated region
      $region33: #{critic_forward.9} parent=27 // pred_check
        %p185 = pneg %p59
      $region34: #{critic_forward.9} parent=27 // pred_check_branch
        %187 = sbr.rel (%p185) target = $region36
      $region35: #{critic_forward.9} parent=27 // pred_region
        %s188 = smul.u32 32, %s13
        %p189 = scmp.lt.s32.totalorder %s188, 127
        %s190 = scalar_select %p189, %s188, 127
        %s191 = smul.addr %s190, 4
        %s192 = scalar_lea.vmem %s1, %s191
        %s193 = smul.u32 32, %s13
      $region36: #{critic_forward.9} parent=27 // pred_fallthru
        _
    $region28: #{critic_forward.9} parent=5 // pred_fallthru
      _
    %p194 = scmp.le.s32.totalorder 1, %s13
    %p195 = scmp.lt.s32.totalorder %s13, 5
    %p196 = pnand %p194, %p195
    %p197 = pneg %p196
    // Predicated region
    $region37: #{critic_forward.9} parent=5 // pred_check
      _
    $region38: #{critic_forward.9} parent=5 // pred_check_branch
      %199 = sbr.rel (%p196) target = $region40
    $region39: #{critic_forward.9} parent=5 // pred_region
      %s200 = ssub.s32 %s13, 1
      %s201 = smul.u32 2, %s18
      %p202 = scmp.lt.s32.totalorder %s201, 7
      %s203 = scalar_select %p202, %s201, 7
      %s204 = scalar_lea.vmem %s0, %s203
      %p205 = pneg %p39
      %p206 = pneg %p36
      %s207 = smul.u32 32, %s18
      %p208 = scmp.lt.s32.totalorder %s207, 127
      %s209 = scalar_select %p208, %s207, 127
      %s210 = smul.addr %s209, 4
      %s211 = scalar_lea.vmem %s1, %s210
      %p212 = pneg %p65
      %p213 = pneg %p62
      %p214 = pneg %p86
      %p215 = pneg %p83
      %p216 = pneg %p107
      %p217 = pneg %p104
      %p218 = pneg %p128
      %p219 = pneg %p125
      %p220 = pneg %p149
      %p221 = pneg %p146
      %s222 = smul.u32 2, %s18
      %p223 = scmp.lt.s32.totalorder %s222, 7
      %s224 = scalar_select %p223, %s222, 7
      %s225 = scalar_lea.vmem %s0, %s224
      %s226 = smul.u32 2, %s18
      %s227 = smul.u32 32, %s18
      %p228 = scmp.lt.s32.totalorder %s227, 127
      %s229 = scalar_select %p228, %s227, 127
      %s230 = smul.addr %s229, 4
      %s231 = scalar_lea.vmem %s1, %s230
      %s232 = smul.u32 32, %s18
      %p234 = scmp.eq.s32.totalorder %s18, 0
      // Predicated region
      $region41: #{critic_forward.9} parent=39 // pred_check
        %p235 = pneg %p234
      $region42: #{critic_forward.9} parent=39 // pred_check_branch
        %237 = sbr.rel (%p235) target = $region44
      $region43: #{critic_forward.9} parent=39 // pred_region
        %238 = vst [vmem:[#allocation2] sm:$0x3] 0.0
      $region44: #{critic_forward.9} parent=39 // pred_fallthru
        _
      %v239 = vld [vmem:[#allocation2] sm:$0x3]
      %v240 = vld [vmem:[%s225] sm:$0x3]
      %v241 = vld [vmem:[%s231] sm:$0xf]
      %v242 = vld [vmem:[%s231 + $0x4] sm:$0xf]
      %v243 = vld [vmem:[%s231 + $0x8] sm:$0xf]
      %v244 = vld [vmem:[%s231 + $0xc] sm:$0xf]
      %v245 = vld [vmem:[%s231 + $0x10] sm:$0xf]
      %v246 = vld [vmem:[%s231 + $0x14] sm:$0xf]
      %v247 = vld [vmem:[%s231 + $0x18] sm:$0xf]
      %v248 = vld [vmem:[%s231 + $0x1c] sm:$0xf]
      %v249 = vld [vmem:[%s231 + $0x20] sm:$0xf]
      %v250 = vld [vmem:[%s231 + $0x24] sm:$0xf]
      %v251 = vld [vmem:[%s231 + $0x28] sm:$0xf]
      %v252 = vld [vmem:[%s231 + $0x2c] sm:$0xf]
      %v253 = vld [vmem:[%s231 + $0x30] sm:$0xf]
      %v254 = vld [vmem:[%s231 + $0x34] sm:$0xf]
      %v255 = vld [vmem:[%s231 + $0x38] sm:$0xf]
      %v256 = vld [vmem:[%s231 + $0x3c] sm:$0xf]
      %v257 = vld [vmem:[%s231 + $0x40] sm:$0xf]
      %v258 = vld [vmem:[%s231 + $0x44] sm:$0xf]
      %v259 = vld [vmem:[%s231 + $0x48] sm:$0xf]
      %v260 = vld [vmem:[%s231 + $0x4c] sm:$0xf]
      %v261 = vld [vmem:[%s231 + $0x50] sm:$0xf]
      %v262 = vld [vmem:[%s231 + $0x54] sm:$0xf]
      %v263 = vld [vmem:[%s231 + $0x58] sm:$0xf]
      %v264 = vld [vmem:[%s231 + $0x5c] sm:$0xf]
      %v265 = vld [vmem:[%s231 + $0x60] sm:$0xf]
      %v266 = vld [vmem:[%s231 + $0x64] sm:$0xf]
      %v267 = vld [vmem:[%s231 + $0x68] sm:$0xf]
      %v268 = vld [vmem:[%s231 + $0x6c] sm:$0xf]
      %v269 = vld [vmem:[%s231 + $0x70] sm:$0xf]
      %v270 = vld [vmem:[%s231 + $0x74] sm:$0xf]
      %v271 = vld [vmem:[%s231 + $0x78] sm:$0xf]
      %v272 = vld [vmem:[%s231 + $0x7c] sm:$0xf]
      %v275 = vunpack.c.l.s4 1966171168
      %v276 = vunpack.c.0.s8 %v275
      %v277 = vlaneseq
      %v278 = vshrl.u32 %v277, 7
      %v279 = vsub.s32 %v276, %v278
      %v280 = vrot.slane %v240, %v279
      %v281 = vcombine.high %v280, %v280
      %v283 = vunpack.c.l.s4 1966171168
      %v284 = vunpack.c.0.s8 %v283
      %v285 = vlaneseq
      %v286 = vshrl.u32 %v285, 7
      %v287 = vsub.s32 %v284, %v286
      %v288 = vrot.slane %v280, %v287
      %v290 = vunpack.c.l.s4 1966171168
      %v291 = vunpack.c.0.s8 %v290
      %v292 = vlaneseq
      %v293 = vshrl.u32 %v292, 7
      %v294 = vsub.s32 %v291, %v293
      %v295 = vrot.slane %v281, %v294
      %v330 = vunpack.c.l.b16 %v241
      %v331 = vunpack.c.l.b16 %v242
      %v332 = vunpack.c.l.b16 %v243
      %v333 = vunpack.c.l.b16 %v244
      %v334 = vunpack.c.l.b16 %v245
      %v335 = vunpack.c.l.b16 %v246
      %v336 = vunpack.c.l.b16 %v247
      %v337 = vunpack.c.l.b16 %v248
      %v338 = vunpack.c.l.b16 %v249
      %v339 = vunpack.c.l.b16 %v250
      %v340 = vunpack.c.l.b16 %v251
      %v341 = vunpack.c.l.b16 %v252
      %v342 = vunpack.c.l.b16 %v253
      %v343 = vunpack.c.l.b16 %v254
      %v344 = vunpack.c.l.b16 %v255
      %v345 = vunpack.c.l.b16 %v256
      %v346 = vunpack.c.l.b16 %v257
      %v347 = vunpack.c.l.b16 %v258
      %v348 = vunpack.c.l.b16 %v259
      %v349 = vunpack.c.l.b16 %v260
      %v350 = vunpack.c.l.b16 %v261
      %v351 = vunpack.c.l.b16 %v262
      %v352 = vunpack.c.l.b16 %v263
      %v353 = vunpack.c.l.b16 %v264
      %v354 = vunpack.c.l.b16 %v265
      %v355 = vunpack.c.l.b16 %v266
      %v356 = vunpack.c.l.b16 %v267
      %v357 = vunpack.c.l.b16 %v268
      %v358 = vunpack.c.l.b16 %v269
      %v359 = vunpack.c.l.b16 %v270
      %v360 = vunpack.c.l.b16 %v271
      %v361 = vunpack.c.l.b16 %v272
      %v362 = vpack.c.b16 %v331, %v330
      %v363 = vpack.c.b16 %v333, %v332
      %v364 = vpack.c.b16 %v335, %v334
      %v365 = vpack.c.b16 %v337, %v336
      %v366 = vpack.c.b16 %v339, %v338
      %v367 = vpack.c.b16 %v341, %v340
      %v368 = vpack.c.b16 %v343, %v342
      %v369 = vpack.c.b16 %v345, %v344
      %v370 = vpack.c.b16 %v347, %v346
      %v371 = vpack.c.b16 %v349, %v348
      %v372 = vpack.c.b16 %v351, %v350
      %v373 = vpack.c.b16 %v353, %v352
      %v374 = vpack.c.b16 %v355, %v354
      %v375 = vpack.c.b16 %v357, %v356
      %v376 = vpack.c.b16 %v359, %v358
      %v377 = vpack.c.b16 %v361, %v360
      %394 = vmatprep.subr.bf16.mxu0 0
      %395 = vmatpush1.bf16.msra.mxu0 %v362
      %396 = vmatprep.subr.bf16.mxu0 0
      %397 = vmatpush1.bf16.msra.mxu0 %v363
      %398 = vmatprep.subr.bf16.mxu0 0
      %399 = vmatpush1.bf16.msra.mxu0 %v364
      %400 = vmatprep.subr.bf16.mxu0 0
      %401 = vmatpush1.bf16.msra.mxu0 %v365
      %402 = vmatprep.subr.bf16.mxu0 0
      %403 = vmatpush1.bf16.msra.mxu0 %v366
      %404 = vmatprep.subr.bf16.mxu0 0
      %405 = vmatpush1.bf16.msra.mxu0 %v367
      %406 = vmatprep.subr.bf16.mxu0 0
      %407 = vmatpush1.bf16.msra.mxu0 %v368
      %408 = vmatprep.subr.bf16.mxu0 0
      %409 = vmatpush1.bf16.msra.mxu0 %v369
      %410 = vmatprep.subr.bf16.mxu0 0
      %411 = vmatpush1.bf16.msra.mxu0 %v370
      %412 = vmatprep.subr.bf16.mxu0 0
      %413 = vmatpush1.bf16.msra.mxu0 %v371
      %414 = vmatprep.subr.bf16.mxu0 0
      %415 = vmatpush1.bf16.msra.mxu0 %v372
      %416 = vmatprep.subr.bf16.mxu0 0
      %417 = vmatpush1.bf16.msra.mxu0 %v373
      %418 = vmatprep.subr.bf16.mxu0 0
      %419 = vmatpush1.bf16.msra.mxu0 %v374
      %420 = vmatprep.subr.bf16.mxu0 0
      %421 = vmatpush1.bf16.msra.mxu0 %v375
      %422 = vmatprep.subr.bf16.mxu0 0
      %423 = vmatpush1.bf16.msra.mxu0 %v376
      %424 = vmatprep.subr.bf16.mxu0 0
      %425 = vmatpush1.bf16.msra.mxu0 %v377
      %426 = vmatprep.mubr.bf16.mxu0 %v295
      %427 = vmatmul.mubr.bf16.gmra.mrb[0].mxu0 %v288
      %v428 = vpop.f32.mrb[0].mxu0
      %v429 = vadd.f32 0.0, %v428
      %v430 = vpop.f32.mrb[0].mxu0
      %v431 = vpop.f32.mrb[0].mxu0
      %v432 = vpop.f32.mrb[0].mxu0
      %433 = vdwg.mxu0
      %v434 = vadd.f32 %v239, %v429
      %435 = vst [vmem:[#allocation2] sm:$0x3] %v434
      %p436 = scmp.eq.s32.totalorder %s18, 3
      // Predicated region
      $region45: #{critic_forward.9} parent=39 // pred_check
        %p437 = pneg %p436
      $region46: #{critic_forward.9} parent=39 // pred_check_branch
        %439 = sbr.rel (%p437) target = $region48
      $region47: #{critic_forward.9} parent=39 // pred_region
        %v440 = vld [vmem:[#allocation2] sm:$0x3]
        %v441 = vld [vmem:[%s2] sm:$0x1]
        %v443 = vlaneseq
        %v444 = vshrl.u32 %v443, 7
        %v445 = vsub.s32 0, %v444
        %v446 = vrot.slane %v441, %v445
        %v448 = vadd.f32 %v440, %v446
        %v449 = vmax.f32 %v448, 0.0
        %v450 = vld [vmem:[%s3] sm:$0xff]
        %v451 = vld [vmem:[%s3 + $0x8] sm:$0xff]
        %v452 = vld [vmem:[%s3 + $0x10] sm:$0xff]
        %v453 = vld [vmem:[%s3 + $0x18] sm:$0xff]
        %v454 = vld [vmem:[%s3 + $0x20] sm:$0xff]
        %v455 = vld [vmem:[%s3 + $0x28] sm:$0xff]
        %v456 = vld [vmem:[%s3 + $0x30] sm:$0xff]
        %v457 = vld [vmem:[%s3 + $0x38] sm:$0xff]
        %v458 = vld [vmem:[%s3 + $0x40] sm:$0xff]
        %v459 = vld [vmem:[%s3 + $0x48] sm:$0xff]
        %v460 = vld [vmem:[%s3 + $0x50] sm:$0xff]
        %v461 = vld [vmem:[%s3 + $0x58] sm:$0xff]
        %v462 = vld [vmem:[%s3 + $0x60] sm:$0xff]
        %v463 = vld [vmem:[%s3 + $0x68] sm:$0xff]
        %v464 = vld [vmem:[%s3 + $0x70] sm:$0xff]
        %v465 = vld [vmem:[%s3 + $0x78] sm:$0xff]
        %v466 = vld [vmem:[#allocation3] sm:$0x1]
        %v468 = vlaneseq
        %v469 = vshrl.u32 %v468, 7
        %v470 = vsub.s32 0, %v469
        %v471 = vrot.slane %v466, %v470
        %473 = vmatprep.subr.mxu0 0.0
        %474 = vmatpush1.msra.mxu0 %v450
        %475 = vmatprep.subr.mxu0 0.0
        %476 = vmatpush1.msra.mxu0 %v451
        %477 = vmatprep.subr.mxu0 0.0
        %478 = vmatpush1.msra.mxu0 %v452
        %479 = vmatprep.subr.mxu0 0.0
        %480 = vmatpush1.msra.mxu0 %v453
        %481 = vmatprep.subr.mxu0 0.0
        %482 = vmatpush1.msra.mxu0 %v454
        %483 = vmatprep.subr.mxu0 0.0
        %484 = vmatpush1.msra.mxu0 %v455
        %485 = vmatprep.subr.mxu0 0.0
        %486 = vmatpush1.msra.mxu0 %v456
        %487 = vmatprep.subr.mxu0 0.0
        %488 = vmatpush1.msra.mxu0 %v457
        %489 = vmatprep.subr.mxu0 0.0
        %490 = vmatpush1.msra.mxu0 %v458
        %491 = vmatprep.subr.mxu0 0.0
        %492 = vmatpush1.msra.mxu0 %v459
        %493 = vmatprep.subr.mxu0 0.0
        %494 = vmatpush1.msra.mxu0 %v460
        %495 = vmatprep.subr.mxu0 0.0
        %496 = vmatpush1.msra.mxu0 %v461
        %497 = vmatprep.subr.mxu0 0.0
        %498 = vmatpush1.msra.mxu0 %v462
        %499 = vmatprep.subr.mxu0 0.0
        %500 = vmatpush1.msra.mxu0 %v463
        %501 = vmatprep.subr.mxu0 0.0
        %502 = vmatpush1.msra.mxu0 %v464
        %503 = vmatprep.subr.mxu0 0.0
        %504 = vmatpush1.msra.mxu0 %v465
        %505 = vmatprep.subr.mxu0 0.0
        %506 = vmatpush1.msra.mxu0 0.0
        %507 = vmatprep.subr.mxu0 0.0
        %508 = vmatpush1.msra.mxu0 0.0
        %509 = vmatprep.subr.mxu0 0.0
        %510 = vmatpush1.msra.mxu0 0.0
        %511 = vmatprep.subr.mxu0 0.0
        %512 = vmatpush1.msra.mxu0 0.0
        %513 = vmatprep.subr.mxu0 0.0
        %514 = vmatpush1.msra.mxu0 0.0
        %515 = vmatprep.subr.mxu0 0.0
        %516 = vmatpush1.msra.mxu0 0.0
        %517 = vmatprep.subr.mxu0 0.0
        %518 = vmatpush1.msra.mxu0 0.0
        %519 = vmatprep.subr.mxu0 0.0
        %520 = vmatpush1.msra.mxu0 0.0
        %521 = vmatprep.subr.mxu0 0.0
        %522 = vmatpush1.msra.mxu0 0.0
        %523 = vmatprep.subr.mxu0 0.0
        %524 = vmatpush1.msra.mxu0 0.0
        %525 = vmatprep.subr.mxu0 0.0
        %526 = vmatpush1.msra.mxu0 0.0
        %527 = vmatprep.subr.mxu0 0.0
        %528 = vmatpush1.msra.mxu0 0.0
        %529 = vmatprep.subr.mxu0 0.0
        %530 = vmatpush1.msra.mxu0 0.0
        %531 = vmatprep.subr.mxu0 0.0
        %532 = vmatpush1.msra.mxu0 0.0
        %533 = vmatprep.subr.mxu0 0.0
        %534 = vmatpush1.msra.mxu0 0.0
        %535 = vmatprep.subr.mxu0 0.0
        %536 = vmatpush1.msra.mxu0 0.0
        %537 = vmatprep.mubr.f32.mxu0 0.0
        %538 = vmatmul.mubr.f32.gmra.mrb[0].mxu0 %v449
        %v539 = vpop.f32.mrb[0].mxu0
        %v540 = vadd.f32 %v471, %v539
        %v541 = vpop.f32.mrb[0].mxu0
        %542 = vdwg.mxu0
        %vm543 = vcmask 1024
        %544 = vst.msk [vmem:[%s5] sm:$0x3] %vm543, %v540
      $region48: #{critic_forward.9} parent=39 // pred_fallthru
        _
      // Predicated region
      $region49: #{critic_forward.9} parent=39 // pred_check
        %p545 = pneg %p146
      $region50: #{critic_forward.9} parent=39 // pred_check_branch
        %547 = sbr.rel (%p545) target = $region52
      $region51: #{critic_forward.9} parent=39 // pred_region
        _
      $region52: #{critic_forward.9} parent=39 // pred_fallthru
        _
      // Predicated region
      $region53: #{critic_forward.9} parent=39 // pred_check
        %p548 = pneg %p146
      $region54: #{critic_forward.9} parent=39 // pred_check_branch
        %550 = sbr.rel (%p548) target = $region56
      $region55: #{critic_forward.9} parent=39 // pred_region
        _
      $region56: #{critic_forward.9} parent=39 // pred_fallthru
        _
    $region40: #{critic_forward.9} parent=5 // pred_fallthru
      _
    %p551 = scmp.le.s32.totalorder 2, %s13
    // Predicated region
    $region57: #{critic_forward.9} parent=5 // pred_check
      %p552 = pneg %p551
    $region58: #{critic_forward.9} parent=5 // pred_check_branch
      %554 = sbr.rel (%p552) target = $region60
    $region59: #{critic_forward.9} parent=5 // pred_region
      %s555 = ssub.s32 %s13, 2
    $region60: #{critic_forward.9} parent=5 // pred_fallthru
      _
  $region6: #{critic_forward.9} parent=0 // loop_footer
    %s17 = sadd.s32 1, %s13
  $region7: #{critic_forward.9} parent=0 // loop_footer_branch
    %12 = sbr.rel target = $region3
  $region8: #{critic_forward.9} parent=0 // loop_exit
    _

</llo_original>
